<compile_context>
chip_gen: v6e
topology: v6e:2x2x1
jax: 0.10.0
libtpu: 0.0.40
codegen_flags: <defaults>
</compile_context>

<pallas_src>
import numpy as np
import jax
import jax.numpy as jnp
from jax import lax
from jax.experimental import pallas as pl
from jax.experimental.pallas import tpu as pltpu


# ------------------------ host-side weight packing ------------------------- #

def _pack_convT_combined(Wt, bt, W):
    """ConvTranspose2d(k=2, s=2) weights -> ONE block matrix, both row parities
    packed along N.

    Wt: [Cin, Cup, 2, 2] (PyTorch layout), bt: [Cup].
    Returns
      M    : [W*Cin, 4*W*Cup] with
             (x_row_h @ M)[kh*(2*W*Cup) + (2*w+kw)*Cup + o]
                 = sum_i x[h, w, i] * Wt[i, o, kh, kw],
             so reshape(x_rows @ M + bias, (2*H, 2*W*Cup)) is the row-interleaved
             upsample in lane-flattened NHWC form.
      brow : [1, 4*W*Cup] bias tiled to match that column order.
    """
    Wt = np.asarray(Wt, np.float32)
    Cin, Cup = Wt.shape[0], Wt.shape[1]
    OWC = 2 * W * Cup
    M = np.zeros((W * Cin, 2 * OWC), np.float32)
    for kh in range(2):
        for w in range(W):
            for kw in range(2):
                col = kh * OWC + (2 * w + kw) * Cup
                M[w * Cin:(w + 1) * Cin, col:col + Cup] = Wt[:, :, kh, kw]
    brow = np.tile(np.asarray(bt, np.float32), 4 * W)[None, :]
    return M, brow


def _pack_conv3x3_toeplitz(w_slab, OW):
    """3x3 conv weight slab (PyTorch OIHW slice) -> row-Toeplitz matrices.

    For a lane-flattened row buffer buf of shape [OH+2, OW*Csl] (zero halo rows),
        out_rows = sum_kh  buf[kh:kh+OH, :] @ T[kh]      # [OH, OW*Cout]
    equals the 3x3 'same' convolution restricted to this input-channel slab.
    """
    w_slab = np.asarray(w_slab, np.float32)
    Cout, Csl = w_slab.shape[0], w_slab.shape[1]
    T = np.zeros((3, OW * Csl, OW * Cout), np.float32)
    for kh in range(3):
        for kw in range(3):
            wm = w_slab[:, :, kh, kw].T                     # [Csl, Cout]
            for s in range(OW):
                t = s + kw - 1                              # input column (pad outside)
                if 0 <= t < OW:
                    T[kh, t * Csl:(t + 1) * Csl, s * Cout:(s + 1) * Cout] = wm
    return T


def _bn_rows(scale, bias, OW):
    s = np.tile(np.asarray(scale, np.float32), OW)[None, :]
    b = np.tile(np.asarray(bias, np.float32), OW)[None, :]
    return s, b


def pack_up_block_params(Wt, bt, W1, W2, s1, b1, s2, b2, *, cup, cs, ce, W,
                         compute_dtype=jnp.float32):
    """Pack all Up_Block_A parameters for the fused kernel.

    compute_dtype: dtype of the MXU operands (weights + staged activations).
      Use jnp.bfloat16 on v6e/v7x for full-rate MXU; accumulation and the
      BN/ReLU epilogue stay in f32 either way.
    """
    OW = 2 * W
    W1 = np.asarray(W1, np.float32)
    wt, bt_row = _pack_convT_combined(Wt, bt, W)
    # conv1: the three concat slabs (up | shortcut | enc) stacked along K so the
    # column-block layout of the single concat buffer matches one fat Toeplitz.
    t1 = np.concatenate(
        [_pack_conv3x3_toeplitz(W1[:, :cup], OW),
         _pack_conv3x3_toeplitz(W1[:, cup:cup + cs], OW),
         _pack_conv3x3_toeplitz(W1[:, cup + cs:cup + cs + ce], OW)],
        axis=1)
    t2 = _pack_conv3x3_toeplitz(W2, OW)
    s1r, b1r = _bn_rows(s1, b1, OW)
    s2r, b2r = _bn_rows(s2, b2, OW)
    return dict(
        wt=jnp.asarray(wt, compute_dtype),
        bt_row=jnp.asarray(bt_row, jnp.float32),
        t1=jnp.asarray(t1, compute_dtype),
        t2=jnp.asarray(t2, compute_dtype),
        s1=jnp.asarray(s1r), b1=jnp.asarray(b1r),
        s2=jnp.asarray(s2r), b2=jnp.asarray(b2r),
    )


# ------------------------------ fused kernel ------------------------------- #

def up_block_a_forward(x_nchw, shortcut_nchw, enc_nchw, packed):
    """Fused Up_Block_A forward.  Inputs/outputs are NCHW (PyTorch convention)."""
    N, Cin, H, W = x_nchw.shape
    Cs = shortcut_nchw.shape[1]
    Ce = enc_nchw.shape[1]
    OH, OW = 2 * H, 2 * W
    Cup = packed["wt"].shape[1] // (2 * OW)
    Cout = packed["s1"].shape[1] // OW
    Ccat = Cup + Cs + Ce
    f32 = jnp.float32
    cdt = packed["t1"].dtype                     # MXU operand dtype (f32 or bf16)
    prec = lax.Precision.HIGHEST if cdt == f32 else lax.Precision.DEFAULT
    out_dtype = x_nchw.dtype

    # NCHW -> lane-flattened NHWC rows (n, h, w*c); memory-identical to NHWC.
    x_rows = jnp.transpose(x_nchw, (0, 2, 3, 1)).reshape(N, H, W * Cin)
    sc_rows = jnp.transpose(shortcut_nchw, (0, 2, 3, 1)).reshape(N, OH, OW * Cs)
    enc_rows = jnp.transpose(enc_nchw, (0, 2, 3, 1)).reshape(N, OH, OW * Ce)

    def kernel(x_ref, sc_ref, enc_ref,
               wt_ref, bt_ref, t1_ref, s1_ref, b1_ref, t2_ref, s2_ref, b2_ref,
               o_ref, cat_pad, h1_pad):
        # ---- zero ONLY the halo rows (interior rows are fully overwritten) ---
        cat_pad[0:1, :] = jnp.zeros((1, OW * Ccat), cdt)
        cat_pad[OH + 1:OH + 2, :] = jnp.zeros((1, OW * Ccat), cdt)
        h1_pad[0:1, :] = jnp.zeros((1, OW * Cout), cdt)
        h1_pad[OH + 1:OH + 2, :] = jnp.zeros((1, OW * Cout), cdt)

        # ---- torch.cat eliminated: skip features land in their own 128-aligned
        #      column blocks of the single padded concat buffer ----------------
        cat_pad[1:1 + OH, OW * Cup:OW * (Cup + Cs)] = sc_ref[...].astype(cdt)
        cat_pad[1:1 + OH, OW * (Cup + Cs):OW * Ccat] = enc_ref[...].astype(cdt)

        # ---- ConvTranspose2d(k=2, s=2): ONE lane-dense dot with both row
        #      parities packed along N; reshape interleaves the rows and ONE
        #      contiguous block store writes them into the concat buffer -------
        y_up = jnp.dot(x_ref[...].astype(cdt), wt_ref[...],
                       preferred_element_type=f32, precision=prec) + bt_ref[...]
        cat_pad[1:1 + OH, 0:OW * Cup] = (
            y_up.reshape(OH, OW * Cup).astype(cdt))

        # ---- conv1 (3x3, pad 1, bias=False) + folded BN + ReLU:
        #      3 fat dots, K = OW*Ccat, N = OW*Cout; acc init from first dot ---
        acc = jnp.dot(cat_pad[0:OH, :], t1_ref[0],
                      preferred_element_type=f32, precision=prec)
        for kh in range(1, 3):
            acc = acc + jnp.dot(cat_pad[kh:kh + OH, :], t1_ref[kh],
                                preferred_element_type=f32, precision=prec)
        h1 = jnp.maximum(acc * s1_ref[...] + b1_ref[...], 0.0)
        h1_pad[1:1 + OH, :] = h1.astype(cdt)

        # ---- conv2 (3x3, pad 1, bias=False) + folded BN + ReLU ---------------
        acc2 = jnp.dot(h1_pad[0:OH, :], t2_ref[0],
                       preferred_element_type=f32, precision=prec)
        for kh in range(1, 3):
            acc2 = acc2 + jnp.dot(h1_pad[kh:kh + OH, :], t2_ref[kh],
                                  preferred_element_type=f32, precision=prec)
        y = jnp.maximum(acc2 * s2_ref[...] + b2_ref[...], 0.0)
        o_ref[...] = y.astype(o_ref.dtype)       # lane-dense (OW*Cout = 128) store

    def _full(a):
        nd = a.ndim
        return pl.BlockSpec(a.shape, lambda n: (0,) * nd)

    out_rows = pl.pallas_call(
        kernel,
        out_shape=jax.ShapeDtypeStruct((N, OH, OW * Cout), out_dtype),
        grid=(N,),                    # batch axis parallel -> both v7x TCs busy
        in_specs=[
            pl.BlockSpec((None, H, W * Cin), lambda n: (n, 0, 0)),
            pl.BlockSpec((None, OH, OW * Cs), lambda n: (n, 0, 0)),
            pl.BlockSpec((None, OH, OW * Ce), lambda n: (n, 0, 0)),
            _full(packed["wt"]), _full(packed["bt_row"]),
            _full(packed["t1"]), _full(packed["s1"]), _full(packed["b1"]),
            _full(packed["t2"]), _full(packed["s2"]), _full(packed["b2"]),
        ],
        out_specs=pl.BlockSpec((None, OH, OW * Cout), lambda n: (n, 0, 0)),
        scratch_shapes=[
            pltpu.VMEM((OH + 2, OW * Ccat), cdt),   # padded concat buffer (+halo)
            pltpu.VMEM((OH + 2, OW * Cout), cdt),   # padded conv1 output (+halo)
        ],
        compiler_params=pltpu.CompilerParams(
            dimension_semantics=("parallel",),
            vmem_limit_bytes=32 * 1024 * 1024),
    )(x_rows, sc_rows, enc_rows,
      packed["wt"], packed["bt_row"],
      packed["t1"], packed["s1"], packed["b1"],
      packed["t2"], packed["s2"], packed["b2"])

    # (N, OH, OW*Cout) is memory-identical to NHWC; back to NCHW for the caller.
    return jnp.transpose(out_rows.reshape(N, OH, OW, Cout), (0, 3, 1, 2))


# --------------------------- pure-JAX reference ----------------------------- #

def _reference(x_nchw, sc_nchw, enc_nchw, raw):
    HI = lax.Precision.HIGHEST
    x = jnp.transpose(x_nchw, (0, 2, 3, 1))
    sc = jnp.transpose(sc_nchw, (0, 2, 3, 1))
    enc = jnp.transpose(enc_nchw, (0, 2, 3, 1))
    N, H, W, _ = x.shape
    Cup = raw["Wt"].shape[1]
    # ConvTranspose2d: up[n,2h+k,2w+l,o] = sum_i x[n,h,w,i] * Wt[i,o,k,l] + bt[o]
    y6 = jnp.einsum("nhwi,iokl->nhwklo", x, raw["Wt"], precision=HI)
    up = y6.transpose(0, 1, 3, 2, 4, 5).reshape(N, 2 * H, 2 * W, Cup) + raw["bt"]
    cat = jnp.concatenate([up, sc, enc], axis=-1)

    def cbr(z, w_oihw, s, b):
        w_hwio = jnp.transpose(w_oihw, (2, 3, 1, 0))
        y = lax.conv_general_dilated(z, w_hwio, (1, 1), ((1, 1), (1, 1)),
                                     dimension_numbers=("NHWC", "HWIO", "NHWC"),
                                     precision=HI)
        return jnp.maximum(y * s + b, 0.0)

    h = cbr(cat, raw["W1"], raw["s1"], raw["b1"])
    h = cbr(h, raw["W2"], raw["s2"], raw["b2"])
    return jnp.transpose(h, (0, 3, 1, 2))


# --------------------------------- main ------------------------------------ #

if __name__ == "__main__":
    # Small shapes consistent with Up_Block_A usage inside Unet_B's decoder
    # (three-way concat: upsample + shortcut + enc_feature), scaled down but
    # chosen so every lane dimension is 128-aligned:
    # in=8, up=8, shortcut=8, enc=8 -> concat=24, out=8; x spatial 8 -> out 16.
    N, Cin, H, W = 2, 8, 8, 8
    Cup, Cs, Ce = 8, 8, 8
    Ccat = Cup + Cs + Ce
    Cout = 8
    OH, OW = 2 * H, 2 * W
    eps = 1e-5

    key = jax.random.PRNGKey(0)
    ks = jax.random.split(key, 9)

    x = jax.random.normal(ks[0], (N, Cin, H, W), jnp.float32)
    shortcut = jax.random.normal(ks[1], (N, Cs, OH, OW), jnp.float32)
    enc_feat = jax.random.normal(ks[2], (N, Ce, OH, OW), jnp.float32)

    # ConvTranspose2d weights: PyTorch layout [Cin, Cup, kH, kW], bias [Cup].
    Wt = 0.1 * jax.random.normal(ks[3], (Cin, Cup, 2, 2), jnp.float32)
    bt = 0.1 * jax.random.normal(ks[4], (Cup,), jnp.float32)

    # Conv2d weights: PyTorch OIHW, bias=False.
    W1 = 0.1 * jax.random.normal(ks[5], (Cout, Ccat, 3, 3), jnp.float32)
    W2 = 0.1 * jax.random.normal(ks[6], (Cout, Cout, 3, 3), jnp.float32)

    # BatchNorm2d params (inference mode), folded into per-channel scale/bias.
    def bn_params(k):
        k1, k2, k3, k4 = jax.random.split(k, 4)
        gamma = 1.0 + 0.1 * jax.random.normal(k1, (Cout,), jnp.float32)
        beta = 0.1 * jax.random.normal(k2, (Cout,), jnp.float32)
        mean = 0.1 * jax.random.normal(k3, (Cout,), jnp.float32)
        var = 0.5 + jnp.abs(jax.random.normal(k4, (Cout,), jnp.float32))
        scale = gamma / jnp.sqrt(var + eps)
        bias = beta - mean * scale
        return scale, bias

    s1, b1 = bn_params(ks[7])
    s2, b2 = bn_params(ks[8])

    packed = pack_up_block_params(Wt, bt, W1, W2, s1, b1, s2, b2,
                                  cup=Cup, cs=Cs, ce=Ce, W=W,
                                  compute_dtype=jnp.float32)

    out = jax.block_until_ready(
        jax.jit(up_block_a_forward)(x, shortcut, enc_feat, packed))

    raw = dict(Wt=Wt, bt=bt, W1=W1, s1=s1, b1=b1, W2=W2, s2=s2, b2=b2)
    ref = jax.block_until_ready(_reference(x, shortcut, enc_feat, raw))

    assert out.shape == (N, Cout, OH, OW), out.shape
    np.testing.assert_allclose(np.asarray(out), np.asarray(ref),
                               rtol=5e-4, atol=5e-4)
    print("KERNEL_OK")
</pallas_src>

<mosaic_0001>
module attributes {stable_mosaic.version = 11 : i64} {
  func.func @kernel(%arg0: i32, %arg1: memref<1x8x64xf32, #tpu.memory_space<vmem>>, %arg2: memref<1x16x128xf32, #tpu.memory_space<vmem>>, %arg3: memref<1x16x128xf32, #tpu.memory_space<vmem>>, %arg4: memref<64x256xf32, #tpu.memory_space<vmem>>, %arg5: memref<1x256xf32, #tpu.memory_space<vmem>>, %arg6: memref<3x384x128xf32, #tpu.memory_space<vmem>>, %arg7: memref<1x128xf32, #tpu.memory_space<vmem>>, %arg8: memref<1x128xf32, #tpu.memory_space<vmem>>, %arg9: memref<3x128x128xf32, #tpu.memory_space<vmem>>, %arg10: memref<1x128xf32, #tpu.memory_space<vmem>>, %arg11: memref<1x128xf32, #tpu.memory_space<vmem>>, %arg12: memref<1x16x128xf32, #tpu.memory_space<vmem>>, %arg13: memref<18x384xf32, #tpu.memory_space<vmem>>, %arg14: memref<18x128xf32, #tpu.memory_space<vmem>>) attributes {dimension_semantics = [#tpu.dimension_semantics<parallel>], iteration_bounds = array<i64: 2>, scalar_prefetch = 0 : i64, scratch_operands = 2 : i64, tpu.core_type = #tpu.core_type<tc>, window_params = [{transform_indices = @transform_0, window_bounds = array<i64: 1, 8, 64>}, {transform_indices = @transform_1, window_bounds = array<i64: 1, 16, 128>}, {transform_indices = @transform_2, window_bounds = array<i64: 1, 16, 128>}, {pipeline_mode = #tpu.pipeline_mode<synchronous>, transform_indices = @transform_3, window_bounds = array<i64: 64, 256>}, {pipeline_mode = #tpu.pipeline_mode<synchronous>, transform_indices = @transform_4, window_bounds = array<i64: 1, 256>}, {pipeline_mode = #tpu.pipeline_mode<synchronous>, transform_indices = @transform_5, window_bounds = array<i64: 3, 384, 128>}, {pipeline_mode = #tpu.pipeline_mode<synchronous>, transform_indices = @transform_6, window_bounds = array<i64: 1, 128>}, {pipeline_mode = #tpu.pipeline_mode<synchronous>, transform_indices = @transform_7, window_bounds = array<i64: 1, 128>}, {pipeline_mode = #tpu.pipeline_mode<synchronous>, transform_indices = @transform_8, window_bounds = array<i64: 3, 128, 128>}, {pipeline_mode = #tpu.pipeline_mode<synchronous>, transform_indices = @transform_9, window_bounds = array<i64: 1, 128>}, {pipeline_mode = #tpu.pipeline_mode<synchronous>, transform_indices = @transform_10, window_bounds = array<i64: 1, 128>}, {transform_indices = @transform_11, window_bounds = array<i64: 1, 16, 128>}]} {
    %cst = arith.constant 0.000000e+00 : f32
    %0 = vector.broadcast %cst : f32 to vector<1x384xf32>
    %c0 = arith.constant 0 : index
    %c0_0 = arith.constant 0 : index
    %1 = vector.load %arg13[%c0, %c0_0] : memref<18x384xf32, #tpu.memory_space<vmem>>, vector<1x384xf32>
    tpu.vector_store %arg13[%c0, %c0_0], %0 {strides = array<i32>} : memref<18x384xf32, #tpu.memory_space<vmem>>, vector<1x384xf32>,
    %cst_1 = arith.constant 0.000000e+00 : f32
    %2 = vector.broadcast %cst_1 : f32 to vector<1x384xf32>
    %c17 = arith.constant 17 : index
    %c0_2 = arith.constant 0 : index
    %3 = vector.load %arg13[%c17, %c0_2] : memref<18x384xf32, #tpu.memory_space<vmem>>, vector<1x384xf32>
    tpu.vector_store %arg13[%c17, %c0_2], %2 {strides = array<i32>} : memref<18x384xf32, #tpu.memory_space<vmem>>, vector<1x384xf32>,
    %cst_3 = arith.constant 0.000000e+00 : f32
    %4 = vector.broadcast %cst_3 : f32 to vector<1x128xf32>
    %c0_4 = arith.constant 0 : index
    %c0_5 = arith.constant 0 : index
    %5 = vector.load %arg14[%c0_4, %c0_5] : memref<18x128xf32, #tpu.memory_space<vmem>>, vector<1x128xf32>
    tpu.vector_store %arg14[%c0_4, %c0_5], %4 {strides = array<i32>} : memref<18x128xf32, #tpu.memory_space<vmem>>, vector<1x128xf32>,
    %cst_6 = arith.constant 0.000000e+00 : f32
    %6 = vector.broadcast %cst_6 : f32 to vector<1x128xf32>
    %c17_7 = arith.constant 17 : index
    %c0_8 = arith.constant 0 : index
    %7 = vector.load %arg14[%c17_7, %c0_8] : memref<18x128xf32, #tpu.memory_space<vmem>>, vector<1x128xf32>
    tpu.vector_store %arg14[%c17_7, %c0_8], %6 {strides = array<i32>} : memref<18x128xf32, #tpu.memory_space<vmem>>, vector<1x128xf32>,
    %c0_9 = arith.constant 0 : index
    %c0_10 = arith.constant 0 : index
    %c0_11 = arith.constant 0 : index
    %8 = vector.load %arg2[%c0_9, %c0_10, %c0_11] : memref<1x16x128xf32, #tpu.memory_space<vmem>>, vector<1x16x128xf32>
    %9 = vector.shape_cast %8 : vector<1x16x128xf32> to vector<16x128xf32>
    %c1 = arith.constant 1 : index
    %c128 = arith.constant 128 : index
    %10 = vector.load %arg13[%c1, %c128] : memref<18x384xf32, #tpu.memory_space<vmem>>, vector<16x128xf32>
    tpu.vector_store %arg13[%c1, %c128], %9 {strides = array<i32>} : memref<18x384xf32, #tpu.memory_space<vmem>>, vector<16x128xf32>,
    %c0_12 = arith.constant 0 : index
    %c0_13 = arith.constant 0 : index
    %c0_14 = arith.constant 0 : index
    %11 = vector.load %arg3[%c0_12, %c0_13, %c0_14] : memref<1x16x128xf32, #tpu.memory_space<vmem>>, vector<1x16x128xf32>
    %12 = vector.shape_cast %11 : vector<1x16x128xf32> to vector<16x128xf32>
    %c1_15 = arith.constant 1 : index
    %c256 = arith.constant 256 : index
    %13 = vector.load %arg13[%c1_15, %c256] : memref<18x384xf32, #tpu.memory_space<vmem>>, vector<16x128xf32>
    tpu.vector_store %arg13[%c1_15, %c256], %12 {strides = array<i32>} : memref<18x384xf32, #tpu.memory_space<vmem>>, vector<16x128xf32>,
    %c0_16 = arith.constant 0 : index
    %c0_17 = arith.constant 0 : index
    %c0_18 = arith.constant 0 : index
    %14 = vector.load %arg1[%c0_16, %c0_17, %c0_18] : memref<1x8x64xf32, #tpu.memory_space<vmem>>, vector<1x8x64xf32>
    %15 = vector.shape_cast %14 : vector<1x8x64xf32> to vector<8x64xf32>
    %c0_19 = arith.constant 0 : index
    %c0_20 = arith.constant 0 : index
    %16 = vector.load %arg4[%c0_19, %c0_20] : memref<64x256xf32, #tpu.memory_space<vmem>>, vector<64x256xf32>
    %cst_21 = arith.constant dense<0.000000e+00> : vector<8x256xf32>
    %17 = tpu.matmul %15, %16, %cst_21 {dimension_numbers = #tpu.dot_dimension_numbers<[1], [0], [0], [1], [0, 0, 1, 1], [], []>, precision = #tpu.contract_precision<fp32>} : vector<8x64xf32>, vector<64x256xf32>, vector<8x256xf32> -> vector<8x256xf32>
    %c0_22 = arith.constant 0 : index
    %c0_23 = arith.constant 0 : index
    %18 = vector.load %arg5[%c0_22, %c0_23] : memref<1x256xf32, #tpu.memory_space<vmem>>, vector<1x256xf32>
    %19 = vector.broadcast %18 : vector<1x256xf32> to vector<8x256xf32>
    %20 = arith.addf %17, %19 : vector<8x256xf32>
    %21 = vector.shape_cast %20 : vector<8x256xf32> to vector<16x128xf32>
    %c1_24 = arith.constant 1 : index
    %c0_25 = arith.constant 0 : index
    %22 = vector.load %arg13[%c1_24, %c0_25] : memref<18x384xf32, #tpu.memory_space<vmem>>, vector<16x128xf32>
    tpu.vector_store %arg13[%c1_24, %c0_25], %21 {strides = array<i32>} : memref<18x384xf32, #tpu.memory_space<vmem>>, vector<16x128xf32>,
    %c0_26 = arith.constant 0 : index
    %c0_27 = arith.constant 0 : index
    %23 = vector.load %arg13[%c0_26, %c0_27] : memref<18x384xf32, #tpu.memory_space<vmem>>, vector<16x384xf32>
    %c0_28 = arith.constant 0 : index
    %c0_29 = arith.constant 0 : index
    %c0_30 = arith.constant 0 : index
    %24 = vector.load %arg6[%c0_28, %c0_29, %c0_30] : memref<3x384x128xf32, #tpu.memory_space<vmem>>, vector<1x384x128xf32>
    %25 = vector.shape_cast %24 : vector<1x384x128xf32> to vector<384x128xf32>
    %cst_31 = arith.constant dense<0.000000e+00> : vector<16x128xf32>
    %26 = tpu.matmul %23, %25, %cst_31 {dimension_numbers = #tpu.dot_dimension_numbers<[1], [0], [0], [1], [0, 0, 1, 1], [], []>, precision = #tpu.contract_precision<fp32>} : vector<16x384xf32>, vector<384x128xf32>, vector<16x128xf32> -> vector<16x128xf32>
    %c1_32 = arith.constant 1 : index
    %c0_33 = arith.constant 0 : index
    %27 = vector.load %arg13[%c1_32, %c0_33] : memref<18x384xf32, #tpu.memory_space<vmem>>, vector<16x384xf32>
    %c1_34 = arith.constant 1 : index
    %c0_35 = arith.constant 0 : index
    %c0_36 = arith.constant 0 : index
    %28 = vector.load %arg6[%c1_34, %c0_35, %c0_36] : memref<3x384x128xf32, #tpu.memory_space<vmem>>, vector<1x384x128xf32>
    %29 = vector.shape_cast %28 : vector<1x384x128xf32> to vector<384x128xf32>
    %cst_37 = arith.constant dense<0.000000e+00> : vector<16x128xf32>
    %30 = tpu.matmul %27, %29, %cst_37 {dimension_numbers = #tpu.dot_dimension_numbers<[1], [0], [0], [1], [0, 0, 1, 1], [], []>, precision = #tpu.contract_precision<fp32>} : vector<16x384xf32>, vector<384x128xf32>, vector<16x128xf32> -> vector<16x128xf32>
    %31 = arith.addf %26, %30 : vector<16x128xf32>
    %c2 = arith.constant 2 : index
    %c0_38 = arith.constant 0 : index
    %32 = vector.load %arg13[%c2, %c0_38] : memref<18x384xf32, #tpu.memory_space<vmem>>, vector<16x384xf32>
    %c2_39 = arith.constant 2 : index
    %c0_40 = arith.constant 0 : index
    %c0_41 = arith.constant 0 : index
    %33 = vector.load %arg6[%c2_39, %c0_40, %c0_41] : memref<3x384x128xf32, #tpu.memory_space<vmem>>, vector<1x384x128xf32>
    %34 = vector.shape_cast %33 : vector<1x384x128xf32> to vector<384x128xf32>
    %cst_42 = arith.constant dense<0.000000e+00> : vector<16x128xf32>
    %35 = tpu.matmul %32, %34, %cst_42 {dimension_numbers = #tpu.dot_dimension_numbers<[1], [0], [0], [1], [0, 0, 1, 1], [], []>, precision = #tpu.contract_precision<fp32>} : vector<16x384xf32>, vector<384x128xf32>, vector<16x128xf32> -> vector<16x128xf32>
    %36 = arith.addf %31, %35 : vector<16x128xf32>
    %c0_43 = arith.constant 0 : index
    %c0_44 = arith.constant 0 : index
    %37 = vector.load %arg7[%c0_43, %c0_44] : memref<1x128xf32, #tpu.memory_space<vmem>>, vector<1x128xf32>
    %38 = vector.broadcast %37 : vector<1x128xf32> to vector<16x128xf32>
    %39 = arith.mulf %36, %38 : vector<16x128xf32>
    %c0_45 = arith.constant 0 : index
    %c0_46 = arith.constant 0 : index
    %40 = vector.load %arg8[%c0_45, %c0_46] : memref<1x128xf32, #tpu.memory_space<vmem>>, vector<1x128xf32>
    %41 = vector.broadcast %40 : vector<1x128xf32> to vector<16x128xf32>
    %42 = arith.addf %39, %41 : vector<16x128xf32>
    %cst_47 = arith.constant 0.000000e+00 : f32
    %43 = vector.broadcast %cst_47 : f32 to vector<16x128xf32>
    %44 = arith.maximumf %42, %43 : vector<16x128xf32>
    %c1_48 = arith.constant 1 : index
    %c0_49 = arith.constant 0 : index
    %45 = vector.load %arg14[%c1_48, %c0_49] : memref<18x128xf32, #tpu.memory_space<vmem>>, vector<16x128xf32>
    tpu.vector_store %arg14[%c1_48, %c0_49], %44 {strides = array<i32>} : memref<18x128xf32, #tpu.memory_space<vmem>>, vector<16x128xf32>,
    %c0_50 = arith.constant 0 : index
    %c0_51 = arith.constant 0 : index
    %46 = vector.load %arg14[%c0_50, %c0_51] : memref<18x128xf32, #tpu.memory_space<vmem>>, vector<16x128xf32>
    %c0_52 = arith.constant 0 : index
    %c0_53 = arith.constant 0 : index
    %c0_54 = arith.constant 0 : index
    %47 = vector.load %arg9[%c0_52, %c0_53, %c0_54] : memref<3x128x128xf32, #tpu.memory_space<vmem>>, vector<1x128x128xf32>
    %48 = vector.shape_cast %47 : vector<1x128x128xf32> to vector<128x128xf32>
    %cst_55 = arith.constant dense<0.000000e+00> : vector<16x128xf32>
    %49 = tpu.matmul %46, %48, %cst_55 {dimension_numbers = #tpu.dot_dimension_numbers<[1], [0], [0], [1], [0, 0, 1, 1], [], []>, precision = #tpu.contract_precision<fp32>} : vector<16x128xf32>, vector<128x128xf32>, vector<16x128xf32> -> vector<16x128xf32>
    %c1_56 = arith.constant 1 : index
    %c0_57 = arith.constant 0 : index
    %50 = vector.load %arg14[%c1_56, %c0_57] : memref<18x128xf32, #tpu.memory_space<vmem>>, vector<16x128xf32>
    %c1_58 = arith.constant 1 : index
    %c0_59 = arith.constant 0 : index
    %c0_60 = arith.constant 0 : index
    %51 = vector.load %arg9[%c1_58, %c0_59, %c0_60] : memref<3x128x128xf32, #tpu.memory_space<vmem>>, vector<1x128x128xf32>
    %52 = vector.shape_cast %51 : vector<1x128x128xf32> to vector<128x128xf32>
    %cst_61 = arith.constant dense<0.000000e+00> : vector<16x128xf32>
    %53 = tpu.matmul %50, %52, %cst_61 {dimension_numbers = #tpu.dot_dimension_numbers<[1], [0], [0], [1], [0, 0, 1, 1], [], []>, precision = #tpu.contract_precision<fp32>} : vector<16x128xf32>, vector<128x128xf32>, vector<16x128xf32> -> vector<16x128xf32>
    %54 = arith.addf %49, %53 : vector<16x128xf32>
    %c2_62 = arith.constant 2 : index
    %c0_63 = arith.constant 0 : index
    %55 = vector.load %arg14[%c2_62, %c0_63] : memref<18x128xf32, #tpu.memory_space<vmem>>, vector<16x128xf32>
    %c2_64 = arith.constant 2 : index
    %c0_65 = arith.constant 0 : index
    %c0_66 = arith.constant 0 : index
    %56 = vector.load %arg9[%c2_64, %c0_65, %c0_66] : memref<3x128x128xf32, #tpu.memory_space<vmem>>, vector<1x128x128xf32>
    %57 = vector.shape_cast %56 : vector<1x128x128xf32> to vector<128x128xf32>
    %cst_67 = arith.constant dense<0.000000e+00> : vector<16x128xf32>
    %58 = tpu.matmul %55, %57, %cst_67 {dimension_numbers = #tpu.dot_dimension_numbers<[1], [0], [0], [1], [0, 0, 1, 1], [], []>, precision = #tpu.contract_precision<fp32>} : vector<16x128xf32>, vector<128x128xf32>, vector<16x128xf32> -> vector<16x128xf32>
    %59 = arith.addf %54, %58 : vector<16x128xf32>
    %c0_68 = arith.constant 0 : index
    %c0_69 = arith.constant 0 : index
    %60 = vector.load %arg10[%c0_68, %c0_69] : memref<1x128xf32, #tpu.memory_space<vmem>>, vector<1x128xf32>
    %61 = vector.broadcast %60 : vector<1x128xf32> to vector<16x128xf32>
    %62 = arith.mulf %59, %61 : vector<16x128xf32>
    %c0_70 = arith.constant 0 : index
    %c0_71 = arith.constant 0 : index
    %63 = vector.load %arg11[%c0_70, %c0_71] : memref<1x128xf32, #tpu.memory_space<vmem>>, vector<1x128xf32>
    %64 = vector.broadcast %63 : vector<1x128xf32> to vector<16x128xf32>
    %65 = arith.addf %62, %64 : vector<16x128xf32>
    %cst_72 = arith.constant 0.000000e+00 : f32
    %66 = vector.broadcast %cst_72 : f32 to vector<16x128xf32>
    %67 = arith.maximumf %65, %66 : vector<16x128xf32>
    %c0_73 = arith.constant 0 : index
    %c0_74 = arith.constant 0 : index
    %c0_75 = arith.constant 0 : index
    %68 = vector.load %arg12[%c0_73, %c0_74, %c0_75] : memref<1x16x128xf32, #tpu.memory_space<vmem>>, vector<1x16x128xf32>
    %69 = vector.shape_cast %68 : vector<1x16x128xf32> to vector<16x128xf32>
    %70 = vector.shape_cast %67 : vector<16x128xf32> to vector<1x16x128xf32>
    tpu.vector_store %arg12[%c0_73, %c0_74, %c0_75], %70 {strides = array<i32>} : memref<1x16x128xf32, #tpu.memory_space<vmem>>, vector<1x16x128xf32>,
    return
  }
  func.func @transform_0(%arg0: i32) -> (i32, i32, i32) {
    %c0_i32 = arith.constant 0 : i32
    %c0_i32_0 = arith.constant 0 : i32
    %c0_i32_1 = arith.constant 0 : i32
    return %arg0, %c0_i32, %c0_i32_0 : i32, i32, i32
  }
  func.func @transform_1(%arg0: i32) -> (i32, i32, i32) {
    %c0_i32 = arith.constant 0 : i32
    %c0_i32_0 = arith.constant 0 : i32
    %c0_i32_1 = arith.constant 0 : i32
    return %arg0, %c0_i32, %c0_i32_0 : i32, i32, i32
  }
  func.func @transform_2(%arg0: i32) -> (i32, i32, i32) {
    %c0_i32 = arith.constant 0 : i32
    %c0_i32_0 = arith.constant 0 : i32
    %c0_i32_1 = arith.constant 0 : i32
    return %arg0, %c0_i32, %c0_i32_0 : i32, i32, i32
  }
  func.func @transform_3(%arg0: i32) -> (i32, i32) {
    %c0_i32 = arith.constant 0 : i32
    %c0_i32_0 = arith.constant 0 : i32
    %c0_i32_1 = arith.constant 0 : i32
    return %c0_i32, %c0_i32_0 : i32, i32
  }
  func.func @transform_4(%arg0: i32) -> (i32, i32) {
    %c0_i32 = arith.constant 0 : i32
    %c0_i32_0 = arith.constant 0 : i32
    %c0_i32_1 = arith.constant 0 : i32
    return %c0_i32, %c0_i32_0 : i32, i32
  }
  func.func @transform_5(%arg0: i32) -> (i32, i32, i32) {
    %c0_i32 = arith.constant 0 : i32
    %c0_i32_0 = arith.constant 0 : i32
    %c0_i32_1 = arith.constant 0 : i32
    %c0_i32_2 = arith.constant 0 : i32
    return %c0_i32, %c0_i32_0, %c0_i32_1 : i32, i32, i32
  }
  func.func @transform_6(%arg0: i32) -> (i32, i32) {
    %c0_i32 = arith.constant 0 : i32
    %c0_i32_0 = arith.constant 0 : i32
    %c0_i32_1 = arith.constant 0 : i32
    return %c0_i32, %c0_i32_0 : i32, i32
  }
  func.func @transform_7(%arg0: i32) -> (i32, i32) {
    %c0_i32 = arith.constant 0 : i32
    %c0_i32_0 = arith.constant 0 : i32
    %c0_i32_1 = arith.constant 0 : i32
    return %c0_i32, %c0_i32_0 : i32, i32
  }
  func.func @transform_8(%arg0: i32) -> (i32, i32, i32) {
    %c0_i32 = arith.constant 0 : i32
    %c0_i32_0 = arith.constant 0 : i32
    %c0_i32_1 = arith.constant 0 : i32
    %c0_i32_2 = arith.constant 0 : i32
    return %c0_i32, %c0_i32_0, %c0_i32_1 : i32, i32, i32
  }
  func.func @transform_9(%arg0: i32) -> (i32, i32) {
    %c0_i32 = arith.constant 0 : i32
    %c0_i32_0 = arith.constant 0 : i32
    %c0_i32_1 = arith.constant 0 : i32
    return %c0_i32, %c0_i32_0 : i32, i32
  }
  func.func @transform_10(%arg0: i32) -> (i32, i32) {
    %c0_i32 = arith.constant 0 : i32
    %c0_i32_0 = arith.constant 0 : i32
    %c0_i32_1 = arith.constant 0 : i32
    return %c0_i32, %c0_i32_0 : i32, i32
  }
  func.func @transform_11(%arg0: i32) -> (i32, i32, i32) {
    %c0_i32 = arith.constant 0 : i32
    %c0_i32_0 = arith.constant 0 : i32
    %c0_i32_1 = arith.constant 0 : i32
    return %arg0, %c0_i32, %c0_i32_0 : i32, i32, i32
  }
}

</mosaic_0001>

<llo_original>
// kernel: up_block_a_forward.1
$region0: #{up_block_a_forward.1}
  #allocation0 [shape = 'u32[]', space=smem, size = 0x4, offset = 0x4, fixed_abs, tag = 'smem constant byte address 0x4 - core index']
  #allocation1 [shape = 'u32[144,128]{1,0:T(1,128)}', space=vmem, size = 0x12000, scoped, tag = 'internal scratch']
  #allocation2 [shape = 'f32[18,384]{1,0:T(8,128)}', space=vmem, size = 0x9000, scoped, tag = 'scratch operand']
  #allocation3 [shape = 'f32[18,128]{1,0:T(8,128)}', space=vmem, size = 0x3000, scoped, tag = 'scratch operand']
  %s0 = inlined_call_operand.vmem [shape: f32[2,8,64], index: 0, kind: input, shape index: {}]
  %s1 = inlined_call_operand.vmem [shape: f32[2,16,128], index: 1, kind: input, shape index: {}]
  %s2 = inlined_call_operand.vmem [shape: f32[2,16,128], index: 2, kind: input, shape index: {}]
  %s3 = inlined_call_operand.vmem [shape: f32[64,256], index: 3, kind: input, shape index: {}]
  %s4 = inlined_call_operand.vmem [shape: f32[1,256], index: 4, kind: input, shape index: {}]
  %s5 = inlined_call_operand.vmem [shape: f32[3,384,128], index: 5, kind: input, shape index: {}]
  %s6 = inlined_call_operand.vmem [shape: f32[1,128], index: 6, kind: input, shape index: {}]
  %s7 = inlined_call_operand.vmem [shape: f32[1,128], index: 7, kind: input, shape index: {}]
  %s8 = inlined_call_operand.vmem [shape: f32[3,128,128], index: 8, kind: input, shape index: {}]
  %s9 = inlined_call_operand.vmem [shape: f32[1,128], index: 9, kind: input, shape index: {}]
  %s10 = inlined_call_operand.vmem [shape: f32[1,128], index: 10, kind: input, shape index: {}]
  %s11 = inlined_call_operand.vmem [shape: f32[2,16,128], index: 11, kind: output, shape index: {}]
  %s12 = sld [smem:[#allocation0]]
  $region77: #{up_block_a_forward.1} parent=0
    _
  %s14 = ssub.s32 1, %s12
  %s15 = scalar_select 0, %s14, %s12
  loop: start=0, step=1, limit=4
  $region2: #{up_block_a_forward.1} parent=0 // loop_pre_header
    _
  $region3: #{up_block_a_forward.1} parent=0 // loop_header
    %s17 = sphi 0, %s21
    %p18 = scmp.ge.s32.totalorder %s17, 4
    %s27 = sphi 0, %s29
    %s30 = sphi 0, %s27
    %s31 = sphi 0, %s30
    %s47 = sphi 0, %s31
    %s53 = sphi 0, %s55
    %s56 = sphi 0, %s53
    %s57 = sphi 0, %s56
    %s73 = sphi 0, %s57
    %s79 = sphi 0, %s81
    %s82 = sphi 0, %s79
    %s83 = sphi 0, %s82
    %s99 = sphi 0, %s83
    %s103 = sphi 0, %s103
    %s105 = sphi 0, %s103
    %s106 = sphi 0, %s105
    %s120 = sphi 0, %s106
    %s124 = sphi 0, %s124
    %s126 = sphi 0, %s124
    %s127 = sphi 0, %s126
    %s141 = sphi 0, %s127
    %s145 = sphi 0, %s145
    %s147 = sphi 0, %s145
    %s148 = sphi 0, %s147
    %s162 = sphi 0, %s148
    %s166 = sphi 0, %s166
    %s168 = sphi 0, %s166
    %s169 = sphi 0, %s168
    %s183 = sphi 0, %s169
    %s187 = sphi 0, %s187
    %s189 = sphi 0, %s187
    %s190 = sphi 0, %s189
    %s204 = sphi 0, %s190
    %s208 = sphi 0, %s208
    %s210 = sphi 0, %s208
    %s211 = sphi 0, %s210
    %s225 = sphi 0, %s211
    %s229 = sphi 0, %s229
    %s231 = sphi 0, %s229
    %s232 = sphi 0, %s231
    %s246 = sphi 0, %s232
    %s250 = sphi 0, %s250
    %s252 = sphi 0, %s250
    %s253 = sphi 0, %s252
    %s267 = sphi 0, %s253
    %s273 = sphi 0, %s275
    %s276 = sphi 0, %s273
    %s277 = sphi 0, %s276
    %s293 = sphi 0, %s277
  $region4: #{up_block_a_forward.1} parent=0 // loop_header_branch
    %20 = sbr.rel (%p18) target = $region8
  $region5: #{up_block_a_forward.1} parent=0 // loop_body
    %s22 = ssub.s32 %s17, 1
    %s23 = ssub.s32 %s17, 2
    %s24 = sadd.s32 %s17, 1
    %s25 = ssub.s32 %s17, %s24
    %p26 = scmp.eq.s32.totalorder %s25, 0
    %s28 = sadd.s32 %s27, 1
    %s29 = scalar_select %p26, %s27, %s28
    %p32 = pneg %p26
    %p33 = scmp.eq.s32.totalorder %s17, 1
    %p34 = por %p32, %p33
    %p35 = scmp.ne.s32.totalorder %s27, %s30
    %p36 = scmp.eq.s32.totalorder %s17, 0
    %p37 = por %p35, %p36
    %p38 = scmp.ne.s32.totalorder %s27, %s30
    %p39 = scmp.eq.s32.totalorder %s22, 1
    %p40 = por %p38, %p39
    %p41 = scmp.ne.s32.totalorder %s30, %s31
    %p42 = scmp.eq.s32.totalorder %s22, 0
    %p43 = por %p41, %p42
    %p44 = scmp.ne.s32.totalorder %s30, %s31
    %p45 = scmp.eq.s32.totalorder %s23, 1
    %p46 = por %p44, %p45
    %p48 = scmp.ne.s32.totalorder %s31, %s47
    %p49 = scmp.eq.s32.totalorder %s23, 0
    %p50 = por %p48, %p49
    %s51 = ssub.s32 %s17, %s24
    %p52 = scmp.eq.s32.totalorder %s51, 0
    %s54 = sadd.s32 %s53, 1
    %s55 = scalar_select %p52, %s53, %s54
    %p58 = pneg %p52
    %p59 = scmp.eq.s32.totalorder %s17, 1
    %p60 = por %p58, %p59
    %p61 = scmp.ne.s32.totalorder %s53, %s56
    %p62 = scmp.eq.s32.totalorder %s17, 0
    %p63 = por %p61, %p62
    %p64 = scmp.ne.s32.totalorder %s53, %s56
    %p65 = scmp.eq.s32.totalorder %s22, 1
    %p66 = por %p64, %p65
    %p67 = scmp.ne.s32.totalorder %s56, %s57
    %p68 = scmp.eq.s32.totalorder %s22, 0
    %p69 = por %p67, %p68
    %p70 = scmp.ne.s32.totalorder %s56, %s57
    %p71 = scmp.eq.s32.totalorder %s23, 1
    %p72 = por %p70, %p71
    %p74 = scmp.ne.s32.totalorder %s57, %s73
    %p75 = scmp.eq.s32.totalorder %s23, 0
    %p76 = por %p74, %p75
    %s77 = ssub.s32 %s17, %s24
    %p78 = scmp.eq.s32.totalorder %s77, 0
    %s80 = sadd.s32 %s79, 1
    %s81 = scalar_select %p78, %s79, %s80
    %p84 = pneg %p78
    %p85 = scmp.eq.s32.totalorder %s17, 1
    %p86 = por %p84, %p85
    %p87 = scmp.ne.s32.totalorder %s79, %s82
    %p88 = scmp.eq.s32.totalorder %s17, 0
    %p89 = por %p87, %p88
    %p90 = scmp.ne.s32.totalorder %s79, %s82
    %p91 = scmp.eq.s32.totalorder %s22, 1
    %p92 = por %p90, %p91
    %p93 = scmp.ne.s32.totalorder %s82, %s83
    %p94 = scmp.eq.s32.totalorder %s22, 0
    %p95 = por %p93, %p94
    %p96 = scmp.ne.s32.totalorder %s82, %s83
    %p97 = scmp.eq.s32.totalorder %s23, 1
    %p98 = por %p96, %p97
    %p100 = scmp.ne.s32.totalorder %s83, %s99
    %p101 = scmp.eq.s32.totalorder %s23, 0
    %p102 = por %p100, %p101
    %s104 = sadd.s32 %s103, 1
    %p107 = scmp.eq.s32.totalorder %s17, 1
    %p108 = scmp.ne.s32.totalorder %s103, %s105
    %p109 = scmp.eq.s32.totalorder %s17, 0
    %p110 = por %p108, %p109
    %p111 = scmp.ne.s32.totalorder %s103, %s105
    %p112 = scmp.eq.s32.totalorder %s22, 1
    %p113 = por %p111, %p112
    %p114 = scmp.ne.s32.totalorder %s105, %s106
    %p115 = scmp.eq.s32.totalorder %s22, 0
    %p116 = por %p114, %p115
    %p117 = scmp.ne.s32.totalorder %s105, %s106
    %p118 = scmp.eq.s32.totalorder %s23, 1
    %p119 = por %p117, %p118
    %p121 = scmp.ne.s32.totalorder %s106, %s120
    %p122 = scmp.eq.s32.totalorder %s23, 0
    %p123 = por %p121, %p122
    %s125 = sadd.s32 %s124, 1
    %p128 = scmp.eq.s32.totalorder %s17, 1
    %p129 = scmp.ne.s32.totalorder %s124, %s126
    %p130 = scmp.eq.s32.totalorder %s17, 0
    %p131 = por %p129, %p130
    %p132 = scmp.ne.s32.totalorder %s124, %s126
    %p133 = scmp.eq.s32.totalorder %s22, 1
    %p134 = por %p132, %p133
    %p135 = scmp.ne.s32.totalorder %s126, %s127
    %p136 = scmp.eq.s32.totalorder %s22, 0
    %p137 = por %p135, %p136
    %p138 = scmp.ne.s32.totalorder %s126, %s127
    %p139 = scmp.eq.s32.totalorder %s23, 1
    %p140 = por %p138, %p139
    %p142 = scmp.ne.s32.totalorder %s127, %s141
    %p143 = scmp.eq.s32.totalorder %s23, 0
    %p144 = por %p142, %p143
    %s146 = sadd.s32 %s145, 1
    %p149 = scmp.eq.s32.totalorder %s17, 1
    %p150 = scmp.ne.s32.totalorder %s145, %s147
    %p151 = scmp.eq.s32.totalorder %s17, 0
    %p152 = por %p150, %p151
    %p153 = scmp.ne.s32.totalorder %s145, %s147
    %p154 = scmp.eq.s32.totalorder %s22, 1
    %p155 = por %p153, %p154
    %p156 = scmp.ne.s32.totalorder %s147, %s148
    %p157 = scmp.eq.s32.totalorder %s22, 0
    %p158 = por %p156, %p157
    %p159 = scmp.ne.s32.totalorder %s147, %s148
    %p160 = scmp.eq.s32.totalorder %s23, 1
    %p161 = por %p159, %p160
    %p163 = scmp.ne.s32.totalorder %s148, %s162
    %p164 = scmp.eq.s32.totalorder %s23, 0
    %p165 = por %p163, %p164
    %s167 = sadd.s32 %s166, 1
    %p170 = scmp.eq.s32.totalorder %s17, 1
    %p171 = scmp.ne.s32.totalorder %s166, %s168
    %p172 = scmp.eq.s32.totalorder %s17, 0
    %p173 = por %p171, %p172
    %p174 = scmp.ne.s32.totalorder %s166, %s168
    %p175 = scmp.eq.s32.totalorder %s22, 1
    %p176 = por %p174, %p175
    %p177 = scmp.ne.s32.totalorder %s168, %s169
    %p178 = scmp.eq.s32.totalorder %s22, 0
    %p179 = por %p177, %p178
    %p180 = scmp.ne.s32.totalorder %s168, %s169
    %p181 = scmp.eq.s32.totalorder %s23, 1
    %p182 = por %p180, %p181
    %p184 = scmp.ne.s32.totalorder %s169, %s183
    %p185 = scmp.eq.s32.totalorder %s23, 0
    %p186 = por %p184, %p185
    %s188 = sadd.s32 %s187, 1
    %p191 = scmp.eq.s32.totalorder %s17, 1
    %p192 = scmp.ne.s32.totalorder %s187, %s189
    %p193 = scmp.eq.s32.totalorder %s17, 0
    %p194 = por %p192, %p193
    %p195 = scmp.ne.s32.totalorder %s187, %s189
    %p196 = scmp.eq.s32.totalorder %s22, 1
    %p197 = por %p195, %p196
    %p198 = scmp.ne.s32.totalorder %s189, %s190
    %p199 = scmp.eq.s32.totalorder %s22, 0
    %p200 = por %p198, %p199
    %p201 = scmp.ne.s32.totalorder %s189, %s190
    %p202 = scmp.eq.s32.totalorder %s23, 1
    %p203 = por %p201, %p202
    %p205 = scmp.ne.s32.totalorder %s190, %s204
    %p206 = scmp.eq.s32.totalorder %s23, 0
    %p207 = por %p205, %p206
    %s209 = sadd.s32 %s208, 1
    %p212 = scmp.eq.s32.totalorder %s17, 1
    %p213 = scmp.ne.s32.totalorder %s208, %s210
    %p214 = scmp.eq.s32.totalorder %s17, 0
    %p215 = por %p213, %p214
    %p216 = scmp.ne.s32.totalorder %s208, %s210
    %p217 = scmp.eq.s32.totalorder %s22, 1
    %p218 = por %p216, %p217
    %p219 = scmp.ne.s32.totalorder %s210, %s211
    %p220 = scmp.eq.s32.totalorder %s22, 0
    %p221 = por %p219, %p220
    %p222 = scmp.ne.s32.totalorder %s210, %s211
    %p223 = scmp.eq.s32.totalorder %s23, 1
    %p224 = por %p222, %p223
    %p226 = scmp.ne.s32.totalorder %s211, %s225
    %p227 = scmp.eq.s32.totalorder %s23, 0
    %p228 = por %p226, %p227
    %s230 = sadd.s32 %s229, 1
    %p233 = scmp.eq.s32.totalorder %s17, 1
    %p234 = scmp.ne.s32.totalorder %s229, %s231
    %p235 = scmp.eq.s32.totalorder %s17, 0
    %p236 = por %p234, %p235
    %p237 = scmp.ne.s32.totalorder %s229, %s231
    %p238 = scmp.eq.s32.totalorder %s22, 1
    %p239 = por %p237, %p238
    %p240 = scmp.ne.s32.totalorder %s231, %s232
    %p241 = scmp.eq.s32.totalorder %s22, 0
    %p242 = por %p240, %p241
    %p243 = scmp.ne.s32.totalorder %s231, %s232
    %p244 = scmp.eq.s32.totalorder %s23, 1
    %p245 = por %p243, %p244
    %p247 = scmp.ne.s32.totalorder %s232, %s246
    %p248 = scmp.eq.s32.totalorder %s23, 0
    %p249 = por %p247, %p248
    %s251 = sadd.s32 %s250, 1
    %p254 = scmp.eq.s32.totalorder %s17, 1
    %p255 = scmp.ne.s32.totalorder %s250, %s252
    %p256 = scmp.eq.s32.totalorder %s17, 0
    %p257 = por %p255, %p256
    %p258 = scmp.ne.s32.totalorder %s250, %s252
    %p259 = scmp.eq.s32.totalorder %s22, 1
    %p260 = por %p258, %p259
    %p261 = scmp.ne.s32.totalorder %s252, %s253
    %p262 = scmp.eq.s32.totalorder %s22, 0
    %p263 = por %p261, %p262
    %p264 = scmp.ne.s32.totalorder %s252, %s253
    %p265 = scmp.eq.s32.totalorder %s23, 1
    %p266 = por %p264, %p265
    %p268 = scmp.ne.s32.totalorder %s253, %s267
    %p269 = scmp.eq.s32.totalorder %s23, 0
    %p270 = por %p268, %p269
    %s271 = ssub.s32 %s17, %s24
    %p272 = scmp.eq.s32.totalorder %s271, 0
    %s274 = sadd.s32 %s273, 1
    %s275 = scalar_select %p272, %s273, %s274
    %p278 = pneg %p272
    %p279 = scmp.eq.s32.totalorder %s17, 1
    %p280 = por %p278, %p279
    %p281 = scmp.ne.s32.totalorder %s273, %s276
    %p282 = scmp.eq.s32.totalorder %s17, 0
    %p283 = por %p281, %p282
    %p284 = scmp.ne.s32.totalorder %s273, %s276
    %p285 = scmp.eq.s32.totalorder %s22, 1
    %p286 = por %p284, %p285
    %p287 = scmp.ne.s32.totalorder %s276, %s277
    %p288 = scmp.eq.s32.totalorder %s22, 0
    %p289 = por %p287, %p288
    %p290 = scmp.ne.s32.totalorder %s276, %s277
    %p291 = scmp.eq.s32.totalorder %s23, 1
    %p292 = por %p290, %p291
    %p294 = scmp.ne.s32.totalorder %s277, %s293
    %p295 = scmp.eq.s32.totalorder %s23, 0
    %p296 = por %p294, %p295
    %p297 = scmp.le.s32.totalorder 1, %s17
    %p298 = scmp.lt.s32.totalorder %s17, 3
    %p299 = pnand %p297, %p298
    %p300 = pneg %p299
    // Predicated region
    $region9: #{up_block_a_forward.1} parent=5 // pred_check
      _
    $region10: #{up_block_a_forward.1} parent=5 // pred_check_branch
      %302 = sbr.rel (%p299) target = $region12
    $region11: #{up_block_a_forward.1} parent=5 // pred_region
      %s303 = ssub.s32 %s17, 1
      // Predicated region
      $region13: #{up_block_a_forward.1} parent=11 // pred_check
        %p304 = pneg %p116
      $region14: #{up_block_a_forward.1} parent=11 // pred_check_branch
        %306 = sbr.rel (%p304) target = $region16
      $region15: #{up_block_a_forward.1} parent=11 // pred_region
        _
      $region16: #{up_block_a_forward.1} parent=11 // pred_fallthru
        _
      // Predicated region
      $region17: #{up_block_a_forward.1} parent=11 // pred_check
        %p307 = pneg %p137
      $region18: #{up_block_a_forward.1} parent=11 // pred_check_branch
        %309 = sbr.rel (%p307) target = $region20
      $region19: #{up_block_a_forward.1} parent=11 // pred_region
        _
      $region20: #{up_block_a_forward.1} parent=11 // pred_fallthru
        _
      // Predicated region
      $region21: #{up_block_a_forward.1} parent=11 // pred_check
        %p310 = pneg %p158
      $region22: #{up_block_a_forward.1} parent=11 // pred_check_branch
        %312 = sbr.rel (%p310) target = $region24
      $region23: #{up_block_a_forward.1} parent=11 // pred_region
        _
      $region24: #{up_block_a_forward.1} parent=11 // pred_fallthru
        _
      // Predicated region
      $region25: #{up_block_a_forward.1} parent=11 // pred_check
        %p313 = pneg %p179
      $region26: #{up_block_a_forward.1} parent=11 // pred_check_branch
        %315 = sbr.rel (%p313) target = $region28
      $region27: #{up_block_a_forward.1} parent=11 // pred_region
        _
      $region28: #{up_block_a_forward.1} parent=11 // pred_fallthru
        _
      // Predicated region
      $region29: #{up_block_a_forward.1} parent=11 // pred_check
        %p316 = pneg %p200
      $region30: #{up_block_a_forward.1} parent=11 // pred_check_branch
        %318 = sbr.rel (%p316) target = $region32
      $region31: #{up_block_a_forward.1} parent=11 // pred_region
        _
      $region32: #{up_block_a_forward.1} parent=11 // pred_fallthru
        _
      // Predicated region
      $region33: #{up_block_a_forward.1} parent=11 // pred_check
        %p319 = pneg %p221
      $region34: #{up_block_a_forward.1} parent=11 // pred_check_branch
        %321 = sbr.rel (%p319) target = $region36
      $region35: #{up_block_a_forward.1} parent=11 // pred_region
        _
      $region36: #{up_block_a_forward.1} parent=11 // pred_fallthru
        _
      // Predicated region
      $region37: #{up_block_a_forward.1} parent=11 // pred_check
        %p322 = pneg %p242
      $region38: #{up_block_a_forward.1} parent=11 // pred_check_branch
        %324 = sbr.rel (%p322) target = $region40
      $region39: #{up_block_a_forward.1} parent=11 // pred_region
        _
      $region40: #{up_block_a_forward.1} parent=11 // pred_fallthru
        _
      // Predicated region
      $region41: #{up_block_a_forward.1} parent=11 // pred_check
        %p325 = pneg %p263
      $region42: #{up_block_a_forward.1} parent=11 // pred_check_branch
        %327 = sbr.rel (%p325) target = $region44
      $region43: #{up_block_a_forward.1} parent=11 // pred_region
        _
      $region44: #{up_block_a_forward.1} parent=11 // pred_fallthru
        _
    $region12: #{up_block_a_forward.1} parent=5 // pred_fallthru
      _
    %p328 = scmp.lt.s32.totalorder %s17, 2
    // Predicated region
    $region45: #{up_block_a_forward.1} parent=5 // pred_check
      %p329 = pneg %p328
    $region46: #{up_block_a_forward.1} parent=5 // pred_check_branch
      %331 = sbr.rel (%p329) target = $region48
    $region47: #{up_block_a_forward.1} parent=5 // pred_region
      // Predicated region
      $region49: #{up_block_a_forward.1} parent=47 // pred_check
        %p332 = pneg %p37
      $region50: #{up_block_a_forward.1} parent=47 // pred_check_branch
        %334 = sbr.rel (%p332) target = $region52
      $region51: #{up_block_a_forward.1} parent=47 // pred_region
        %p335 = scmp.lt.s32.totalorder %s17, 1
        %s336 = scalar_select %p335, %s17, 1
        %s337 = smul.addr %s336, 8
        %s338 = scalar_lea.vmem %s0, %s337
      $region52: #{up_block_a_forward.1} parent=47 // pred_fallthru
        _
      // Predicated region
      $region53: #{up_block_a_forward.1} parent=47 // pred_check
        %p339 = pneg %p63
      $region54: #{up_block_a_forward.1} parent=47 // pred_check_branch
        %341 = sbr.rel (%p339) target = $region56
      $region55: #{up_block_a_forward.1} parent=47 // pred_region
        %p342 = scmp.lt.s32.totalorder %s17, 1
        %s343 = scalar_select %p342, %s17, 1
        %s344 = smul.addr %s343, 2
        %s345 = smul.addr %s344, 8
        %s346 = scalar_lea.vmem %s1, %s345
      $region56: #{up_block_a_forward.1} parent=47 // pred_fallthru
        _
      // Predicated region
      $region57: #{up_block_a_forward.1} parent=47 // pred_check
        %p347 = pneg %p89
      $region58: #{up_block_a_forward.1} parent=47 // pred_check_branch
        %349 = sbr.rel (%p347) target = $region60
      $region59: #{up_block_a_forward.1} parent=47 // pred_region
        %p350 = scmp.lt.s32.totalorder %s17, 1
        %s351 = scalar_select %p350, %s17, 1
        %s352 = smul.addr %s351, 2
        %s353 = smul.addr %s352, 8
        %s354 = scalar_lea.vmem %s2, %s353
      $region60: #{up_block_a_forward.1} parent=47 // pred_fallthru
        _
    $region48: #{up_block_a_forward.1} parent=5 // pred_fallthru
      _
    %p355 = scmp.le.s32.totalorder 1, %s17
    %p356 = scmp.lt.s32.totalorder %s17, 3
    %p357 = pnand %p355, %p356
    %p358 = pneg %p357
    // Predicated region
    $region61: #{up_block_a_forward.1} parent=5 // pred_check
      _
    $region62: #{up_block_a_forward.1} parent=5 // pred_check_branch
      %360 = sbr.rel (%p357) target = $region64
    $region63: #{up_block_a_forward.1} parent=5 // pred_region
      %s361 = ssub.s32 %s17, 1
      %p362 = scmp.lt.s32.totalorder %s22, 1
      %s363 = scalar_select %p362, %s22, 1
      %s364 = smul.addr %s363, 8
      %s365 = scalar_lea.vmem %s0, %s364
      %p366 = pneg %p43
      %p367 = pneg %p40
      %p368 = scmp.lt.s32.totalorder %s22, 1
      %s369 = scalar_select %p368, %s22, 1
      %s370 = smul.addr %s369, 2
      %s371 = smul.addr %s370, 8
      %s372 = scalar_lea.vmem %s1, %s371
      %p373 = pneg %p69
      %p374 = pneg %p66
      %p375 = scmp.lt.s32.totalorder %s22, 1
      %s376 = scalar_select %p375, %s22, 1
      %s377 = smul.addr %s376, 2
      %s378 = smul.addr %s377, 8
      %s379 = scalar_lea.vmem %s2, %s378
      %p380 = pneg %p95
      %p381 = pneg %p92
      %p382 = pneg %p116
      %p383 = pneg %p113
      %p384 = pneg %p137
      %p385 = pneg %p134
      %p386 = pneg %p158
      %p387 = pneg %p155
      %p388 = pneg %p179
      %p389 = pneg %p176
      %p390 = pneg %p200
      %p391 = pneg %p197
      %p392 = pneg %p221
      %p393 = pneg %p218
      %p394 = pneg %p242
      %p395 = pneg %p239
      %p396 = pneg %p263
      %p397 = pneg %p260
      %p398 = pneg %p289
      %p399 = pneg %p286
      %p400 = scmp.lt.s32.totalorder %s22, 1
      %s401 = scalar_select %p400, %s22, 1
      %s402 = smul.addr %s401, 2
      %s403 = smul.addr %s402, 8
      %s404 = scalar_lea.vmem %s11, %s403
      %p405 = scmp.lt.s32.totalorder %s22, 1
      %s406 = scalar_select %p405, %s22, 1
      %s407 = smul.addr %s406, 8
      %s408 = scalar_lea.vmem %s0, %s407
      %p409 = scmp.lt.s32.totalorder %s22, 1
      %s410 = scalar_select %p409, %s22, 1
      %s411 = smul.addr %s410, 2
      %s412 = smul.addr %s411, 8
      %s413 = scalar_lea.vmem %s1, %s412
      %p414 = scmp.lt.s32.totalorder %s22, 1
      %s415 = scalar_select %p414, %s22, 1
      %s416 = smul.addr %s415, 2
      %s417 = smul.addr %s416, 8
      %s418 = scalar_lea.vmem %s2, %s417
      %p419 = scmp.lt.s32.totalorder %s22, 1
      %s420 = scalar_select %p419, %s22, 1
      %s421 = smul.addr %s420, 2
      %s422 = smul.addr %s421, 8
      %s423 = scalar_lea.vmem %s11, %s422
      %v424 = vlaneseq
      %vm425 = vcmp.ge.s32.totalorder %v424, 0
      %vm426 = vcmp.lt.s32.totalorder %v424, 384
      %vm427 = vmand %vm425, %vm426
      %428 = vst.msk [vmem:[#allocation2] ss:$8 sm:$0x7] %vm427, 0.0
      %429 = vst.msk [vmem:[#allocation2] ss:$8 sm:$0x0] %vm427, 0.0
      %s430 = scalar_lea.vmem [#allocation2], 49
      %431 = vst.msk [vmem:[%s430] ss:$8 sm:$0x7] %vm427, 0.0
      %432 = vst.msk [vmem:[%s430] ss:$8 sm:$0x0] %vm427, 0.0
      %433 = vst [vmem:[#allocation3] sm:$0x1] 0.0
      %434 = vst [vmem:[#allocation3 + $0x11] sm:$0x1] 0.0
      %v435 = vld [vmem:[%s413] sm:$0xff]
      %v436 = vld [vmem:[%s413 + $0x8] sm:$0xff]
      %vm439 = vcmask 1040384
      %v440 = vrot.slane %v435, 7
      %v441 = vrot.slane %v436, 7
      %v442 = vsel %vm439, %v440, %v441
      %446 = vst [vmem:[#allocation2 + $0x8] sm:$0xfe] %v440
      %447 = vst [vmem:[#allocation2 + $0x20] sm:$0xff] %v442
      %448 = vst [vmem:[#allocation2 + $0x38] sm:$0x1] %v441
      %v449 = vld [vmem:[%s418] sm:$0xff]
      %v450 = vld [vmem:[%s418 + $0x8] sm:$0xff]
      %v453 = vrot.slane %v449, 7
      %v454 = vrot.slane %v450, 7
      %v455 = vsel %vm439, %v453, %v454
      %459 = vst [vmem:[#allocation2 + $0x10] sm:$0xfe] %v453
      %460 = vst [vmem:[#allocation2 + $0x28] sm:$0xff] %v455
      %461 = vst [vmem:[#allocation2 + $0x40] sm:$0x1] %v454
      %v462 = vld [vmem:[%s408] sm:$0xff]
      %v463 = vld [vmem:[%s3] sm:$0xff]
      %v464 = vld [vmem:[%s3 + $0x8] sm:$0xff]
      %v465 = vld [vmem:[%s3 + $0x10] sm:$0xff]
      %v466 = vld [vmem:[%s3 + $0x18] sm:$0xff]
      %v467 = vld [vmem:[%s3 + $0x20] sm:$0xff]
      %v468 = vld [vmem:[%s3 + $0x28] sm:$0xff]
      %v469 = vld [vmem:[%s3 + $0x30] sm:$0xff]
      %v470 = vld [vmem:[%s3 + $0x38] sm:$0xff]
      %v471 = vld [vmem:[%s3 + $0x40] sm:$0xff]
      %v472 = vld [vmem:[%s3 + $0x48] sm:$0xff]
      %v473 = vld [vmem:[%s3 + $0x50] sm:$0xff]
      %v474 = vld [vmem:[%s3 + $0x58] sm:$0xff]
      %v475 = vld [vmem:[%s3 + $0x60] sm:$0xff]
      %v476 = vld [vmem:[%s3 + $0x68] sm:$0xff]
      %v477 = vld [vmem:[%s3 + $0x70] sm:$0xff]
      %v478 = vld [vmem:[%s3 + $0x78] sm:$0xff]
      %v479 = vld [vmem:[%s4] sm:$0x3]
      %v481 = vlaneseq
      %v482 = vshrl.u32 %v481, 7
      %v483 = vsub.s32 0, %v482
      %v484 = vrot.slane %v479, %v483
      %v485 = vlaneseq
      %v486 = vshrl.u32 %v485, 7
      %v487 = vsub.s32 1, %v486
      %v488 = vrot.slane %v479, %v487
      %vm491 = vcmask 523264
      %v493 = vsel %vm491, %v462, 0
      %495 = vmatprep.subr.mxu0 0.0
      %496 = vmatpush1.msra.mxu0 0.0
      %497 = vmatprep.subr.mxu0 0.0
      %498 = vmatpush1.msra.mxu0 0.0
      %499 = vmatprep.subr.mxu0 0.0
      %500 = vmatpush1.msra.mxu0 0.0
      %501 = vmatprep.subr.mxu0 0.0
      %502 = vmatpush1.msra.mxu0 0.0
      %503 = vmatprep.subr.mxu0 0.0
      %504 = vmatpush1.msra.mxu0 0.0
      %505 = vmatprep.subr.mxu0 0.0
      %506 = vmatpush1.msra.mxu0 0.0
      %507 = vmatprep.subr.mxu0 0.0
      %508 = vmatpush1.msra.mxu0 0.0
      %509 = vmatprep.subr.mxu0 0.0
      %510 = vmatpush1.msra.mxu0 0.0
      %v511 = vand.u32 %v478, 4294901760
      %512 = vmatprep.subr.mxu0 %v511
      %v513 = vand.u32 %v477, 4294901760
      %514 = vmatpush1.msra.mxu0 %v513
      %v515 = vand.u32 %v476, 4294901760
      %516 = vmatprep.subr.mxu0 %v515
      %v517 = vand.u32 %v475, 4294901760
      %518 = vmatpush1.msra.mxu0 %v517
      %v519 = vand.u32 %v474, 4294901760
      %520 = vmatprep.subr.mxu0 %v519
      %v521 = vand.u32 %v473, 4294901760
      %522 = vmatpush1.msra.mxu0 %v521
      %v523 = vand.u32 %v472, 4294901760
      %524 = vmatprep.subr.mxu0 %v523
      %v525 = vand.u32 %v471, 4294901760
      %526 = vmatpush1.msra.mxu0 %v525
      %v527 = vand.u32 %v470, 4294901760
      %528 = vmatprep.subr.mxu0 %v527
      %v529 = vand.u32 %v469, 4294901760
      %530 = vmatpush1.msra.mxu0 %v529
      %v531 = vand.u32 %v468, 4294901760
      %532 = vmatprep.subr.mxu0 %v531
      %v533 = vand.u32 %v467, 4294901760
      %534 = vmatpush1.msra.mxu0 %v533
      %v535 = vand.u32 %v466, 4294901760
      %536 = vmatprep.subr.mxu0 %v535
      %v537 = vand.u32 %v465, 4294901760
      %538 = vmatpush1.msra.mxu0 %v537
      %v539 = vand.u32 %v464, 4294901760
      %540 = vmatprep.subr.mxu0 %v539
      %v541 = vand.u32 %v463, 4294901760
      %542 = vmatpush1.msra.mxu0 %v541
      %543 = vmatprep.subr.mxu0 0.0
      %544 = vmatpush2.msra.mxu0 0.0
      %545 = vmatprep.subr.mxu0 0.0
      %546 = vmatpush2.msra.mxu0 0.0
      %547 = vmatprep.subr.mxu0 0.0
      %548 = vmatpush2.msra.mxu0 0.0
      %549 = vmatprep.subr.mxu0 0.0
      %550 = vmatpush2.msra.mxu0 0.0
      %551 = vmatprep.subr.mxu0 0.0
      %552 = vmatpush2.msra.mxu0 0.0
      %553 = vmatprep.subr.mxu0 0.0
      %554 = vmatpush2.msra.mxu0 0.0
      %555 = vmatprep.subr.mxu0 0.0
      %556 = vmatpush2.msra.mxu0 0.0
      %557 = vmatprep.subr.mxu0 0.0
      %558 = vmatpush2.msra.mxu0 0.0
      %559 = vmatprep.subr.mxu0 0.0
      %560 = vmatpush2.msra.mxu0 0.0
      %561 = vmatprep.subr.mxu0 0.0
      %562 = vmatpush2.msra.mxu0 0.0
      %563 = vmatprep.subr.mxu0 0.0
      %564 = vmatpush2.msra.mxu0 0.0
      %565 = vmatprep.subr.mxu0 0.0
      %566 = vmatpush2.msra.mxu0 0.0
      %567 = vmatprep.subr.mxu0 0.0
      %568 = vmatpush2.msra.mxu0 0.0
      %569 = vmatprep.subr.mxu0 0.0
      %570 = vmatpush2.msra.mxu0 0.0
      %571 = vmatprep.subr.mxu0 0.0
      %572 = vmatpush2.msra.mxu0 0.0
      %573 = vmatprep.subr.mxu0 0.0
      %574 = vmatpush2.msra.mxu0 0.0
      %575 = vmatprep.mubr.f32.mxu0 0.0
      %v576 = vand.u32 %v493, 4294901760
      %v577 = vsub.f32 %v493, %v576
      %v578 = vand.u32 %v577, 4294901760
      %v579 = vsub.f32 %v577, %v578
      %v580 = vand.u32 %v579, 4294901760
      %581 = vmatmul.mubr.f32.gmra.mxu0 %v580
      %v582 = vpop.f32.mrf.mxu0
      %v583 = vadd.f32 %v484, %v582
      %v584 = vpop.f32.mrf.mxu0
      %v585 = vadd.f32 %v488, %v584
      %586 = vdwg.mxu0
      %587 = vmatprep.subr.mxu0 0.0
      %588 = vmatpush1.msra.mxu0 0.0
      %589 = vmatprep.subr.mxu0 0.0
      %590 = vmatpush1.msra.mxu0 0.0
      %591 = vmatprep.subr.mxu0 0.0
      %592 = vmatpush1.msra.mxu0 0.0
      %593 = vmatprep.subr.mxu0 0.0
      %594 = vmatpush1.msra.mxu0 0.0
      %595 = vmatprep.subr.mxu0 0.0
      %596 = vmatpush1.msra.mxu0 0.0
      %597 = vmatprep.subr.mxu0 0.0
      %598 = vmatpush1.msra.mxu0 0.0
      %599 = vmatprep.subr.mxu0 0.0
      %600 = vmatpush1.msra.mxu0 0.0
      %601 = vmatprep.subr.mxu0 0.0
      %602 = vmatpush1.msra.mxu0 0.0
      %v603 = vand.u32 %v478, 4294901760
      %v604 = vsub.f32 %v478, %v603
      %v605 = vand.u32 %v604, 4294901760
      %v606 = vsub.f32 %v604, %v605
      %v607 = vand.u32 %v606, 4294901760
      %608 = vmatprep.subr.mxu0 %v607
      %v609 = vand.u32 %v477, 4294901760
      %v610 = vsub.f32 %v477, %v609
      %v611 = vand.u32 %v610, 4294901760
      %v612 = vsub.f32 %v610, %v611
      %v613 = vand.u32 %v612, 4294901760
      %614 = vmatpush1.msra.mxu0 %v613
      %v615 = vand.u32 %v476, 4294901760
      %v616 = vsub.f32 %v476, %v615
      %v617 = vand.u32 %v616, 4294901760
      %v618 = vsub.f32 %v616, %v617
      %v619 = vand.u32 %v618, 4294901760
      %620 = vmatprep.subr.mxu0 %v619
      %v621 = vand.u32 %v475, 4294901760
      %v622 = vsub.f32 %v475, %v621
      %v623 = vand.u32 %v622, 4294901760
      %v624 = vsub.f32 %v622, %v623
      %v625 = vand.u32 %v624, 4294901760
      %626 = vmatpush1.msra.mxu0 %v625
      %v627 = vand.u32 %v474, 4294901760
      %v628 = vsub.f32 %v474, %v627
      %v629 = vand.u32 %v628, 4294901760
      %v630 = vsub.f32 %v628, %v629
      %v631 = vand.u32 %v630, 4294901760
      %632 = vmatprep.subr.mxu0 %v631
      %v633 = vand.u32 %v473, 4294901760
      %v634 = vsub.f32 %v473, %v633
      %v635 = vand.u32 %v634, 4294901760
      %v636 = vsub.f32 %v634, %v635
      %v637 = vand.u32 %v636, 4294901760
      %638 = vmatpush1.msra.mxu0 %v637
      %v639 = vand.u32 %v472, 4294901760
      %v640 = vsub.f32 %v472, %v639
      %v641 = vand.u32 %v640, 4294901760
      %v642 = vsub.f32 %v640, %v641
      %v643 = vand.u32 %v642, 4294901760
      %644 = vmatprep.subr.mxu0 %v643
      %v645 = vand.u32 %v471, 4294901760
      %v646 = vsub.f32 %v471, %v645
      %v647 = vand.u32 %v646, 4294901760
      %v648 = vsub.f32 %v646, %v647
      %v649 = vand.u32 %v648, 4294901760
      %650 = vmatpush1.msra.mxu0 %v649
      %v651 = vand.u32 %v470, 4294901760
      %v652 = vsub.f32 %v470, %v651
      %v653 = vand.u32 %v652, 4294901760
      %v654 = vsub.f32 %v652, %v653
      %v655 = vand.u32 %v654, 4294901760
      %656 = vmatprep.subr.mxu0 %v655
      %v657 = vand.u32 %v469, 4294901760
      %v658 = vsub.f32 %v469, %v657
      %v659 = vand.u32 %v658, 4294901760
      %v660 = vsub.f32 %v658, %v659
      %v661 = vand.u32 %v660, 4294901760
      %662 = vmatpush1.msra.mxu0 %v661
      %v663 = vand.u32 %v468, 4294901760
      %v664 = vsub.f32 %v468, %v663
      %v665 = vand.u32 %v664, 4294901760
      %v666 = vsub.f32 %v664, %v665
      %v667 = vand.u32 %v666, 4294901760
      %668 = vmatprep.subr.mxu0 %v667
      %v669 = vand.u32 %v467, 4294901760
      %v670 = vsub.f32 %v467, %v669
      %v671 = vand.u32 %v670, 4294901760
      %v672 = vsub.f32 %v670, %v671
      %v673 = vand.u32 %v672, 4294901760
      %674 = vmatpush1.msra.mxu0 %v673
      %v675 = vand.u32 %v466, 4294901760
      %v676 = vsub.f32 %v466, %v675
      %v677 = vand.u32 %v676, 4294901760
      %v678 = vsub.f32 %v676, %v677
      %v679 = vand.u32 %v678, 4294901760
      %680 = vmatprep.subr.mxu0 %v679
      %v681 = vand.u32 %v465, 4294901760
      %v682 = vsub.f32 %v465, %v681
      %v683 = vand.u32 %v682, 4294901760
      %v684 = vsub.f32 %v682, %v683
      %v685 = vand.u32 %v684, 4294901760
      %686 = vmatpush1.msra.mxu0 %v685
      %v687 = vand.u32 %v464, 4294901760
      %v688 = vsub.f32 %v464, %v687
      %v689 = vand.u32 %v688, 4294901760
      %v690 = vsub.f32 %v688, %v689
      %v691 = vand.u32 %v690, 4294901760
      %692 = vmatprep.subr.mxu0 %v691
      %v693 = vand.u32 %v463, 4294901760
      %v694 = vsub.f32 %v463, %v693
      %v695 = vand.u32 %v694, 4294901760
      %v696 = vsub.f32 %v694, %v695
      %v697 = vand.u32 %v696, 4294901760
      %698 = vmatpush1.msra.mxu0 %v697
      %699 = vmatprep.subr.mxu0 0.0
      %700 = vmatpush2.msra.mxu0 0.0
      %701 = vmatprep.subr.mxu0 0.0
      %702 = vmatpush2.msra.mxu0 0.0
      %703 = vmatprep.subr.mxu0 0.0
      %704 = vmatpush2.msra.mxu0 0.0
      %705 = vmatprep.subr.mxu0 0.0
      %706 = vmatpush2.msra.mxu0 0.0
      %707 = vmatprep.subr.mxu0 0.0
      %708 = vmatpush2.msra.mxu0 0.0
      %709 = vmatprep.subr.mxu0 0.0
      %710 = vmatpush2.msra.mxu0 0.0
      %711 = vmatprep.subr.mxu0 0.0
      %712 = vmatpush2.msra.mxu0 0.0
      %713 = vmatprep.subr.mxu0 0.0
      %714 = vmatpush2.msra.mxu0 0.0
      %715 = vmatprep.subr.mxu0 0.0
      %716 = vmatpush2.msra.mxu0 0.0
      %717 = vmatprep.subr.mxu0 0.0
      %718 = vmatpush2.msra.mxu0 0.0
      %719 = vmatprep.subr.mxu0 0.0
      %720 = vmatpush2.msra.mxu0 0.0
      %721 = vmatprep.subr.mxu0 0.0
      %722 = vmatpush2.msra.mxu0 0.0
      %723 = vmatprep.subr.mxu0 0.0
      %724 = vmatpush2.msra.mxu0 0.0
      %725 = vmatprep.subr.mxu0 0.0
      %726 = vmatpush2.msra.mxu0 0.0
      %727 = vmatprep.subr.mxu0 0.0
      %728 = vmatpush2.msra.mxu0 0.0
      %729 = vmatprep.subr.mxu0 0.0
      %730 = vmatpush2.msra.mxu0 0.0
      %731 = vmatprep.mubr.f32.mxu0 0.0
      %v732 = vand.u32 %v493, 4294901760
      %733 = vmatmul.mubr.f32.gmra.mxu0 %v732
      %v734 = vpop.f32.mrf.mxu0
      %v735 = vadd.f32 %v583, %v734
      %v736 = vpop.f32.mrf.mxu0
      %v737 = vadd.f32 %v585, %v736
      %738 = vdwg.mxu0
      %739 = vmatprep.subr.mxu0 0.0
      %740 = vmatpush1.msra.mxu0 0.0
      %741 = vmatprep.subr.mxu0 0.0
      %742 = vmatpush1.msra.mxu0 0.0
      %743 = vmatprep.subr.mxu0 0.0
      %744 = vmatpush1.msra.mxu0 0.0
      %745 = vmatprep.subr.mxu0 0.0
      %746 = vmatpush1.msra.mxu0 0.0
      %747 = vmatprep.subr.mxu0 0.0
      %748 = vmatpush1.msra.mxu0 0.0
      %749 = vmatprep.subr.mxu0 0.0
      %750 = vmatpush1.msra.mxu0 0.0
      %751 = vmatprep.subr.mxu0 0.0
      %752 = vmatpush1.msra.mxu0 0.0
      %753 = vmatprep.subr.mxu0 0.0
      %754 = vmatpush1.msra.mxu0 0.0
      %v755 = vand.u32 %v478, 4294901760
      %v756 = vsub.f32 %v478, %v755
      %757 = vmatprep.subr.mxu0 %v756
      %v758 = vand.u32 %v477, 4294901760
      %v759 = vsub.f32 %v477, %v758
      %760 = vmatpush1.msra.mxu0 %v759
      %v761 = vand.u32 %v476, 4294901760
      %v762 = vsub.f32 %v476, %v761
      %763 = vmatprep.subr.mxu0 %v762
      %v764 = vand.u32 %v475, 4294901760
      %v765 = vsub.f32 %v475, %v764
      %766 = vmatpush1.msra.mxu0 %v765
      %v767 = vand.u32 %v474, 4294901760
      %v768 = vsub.f32 %v474, %v767
      %769 = vmatprep.subr.mxu0 %v768
      %v770 = vand.u32 %v473, 4294901760
      %v771 = vsub.f32 %v473, %v770
      %772 = vmatpush1.msra.mxu0 %v771
      %v773 = vand.u32 %v472, 4294901760
      %v774 = vsub.f32 %v472, %v773
      %775 = vmatprep.subr.mxu0 %v774
      %v776 = vand.u32 %v471, 4294901760
      %v777 = vsub.f32 %v471, %v776
      %778 = vmatpush1.msra.mxu0 %v777
      %v779 = vand.u32 %v470, 4294901760
      %v780 = vsub.f32 %v470, %v779
      %781 = vmatprep.subr.mxu0 %v780
      %v782 = vand.u32 %v469, 4294901760
      %v783 = vsub.f32 %v469, %v782
      %784 = vmatpush1.msra.mxu0 %v783
      %v785 = vand.u32 %v468, 4294901760
      %v786 = vsub.f32 %v468, %v785
      %787 = vmatprep.subr.mxu0 %v786
      %v788 = vand.u32 %v467, 4294901760
      %v789 = vsub.f32 %v467, %v788
      %790 = vmatpush1.msra.mxu0 %v789
      %v791 = vand.u32 %v466, 4294901760
      %v792 = vsub.f32 %v466, %v791
      %793 = vmatprep.subr.mxu0 %v792
      %v794 = vand.u32 %v465, 4294901760
      %v795 = vsub.f32 %v465, %v794
      %796 = vmatpush1.msra.mxu0 %v795
      %v797 = vand.u32 %v464, 4294901760
      %v798 = vsub.f32 %v464, %v797
      %799 = vmatprep.subr.mxu0 %v798
      %v800 = vand.u32 %v463, 4294901760
      %v801 = vsub.f32 %v463, %v800
      %802 = vmatpush1.msra.mxu0 %v801
      %803 = vmatprep.subr.mxu0 0.0
      %804 = vmatpush2.msra.mxu0 0.0
      %805 = vmatprep.subr.mxu0 0.0
      %806 = vmatpush2.msra.mxu0 0.0
      %807 = vmatprep.subr.mxu0 0.0
      %808 = vmatpush2.msra.mxu0 0.0
      %809 = vmatprep.subr.mxu0 0.0
      %810 = vmatpush2.msra.mxu0 0.0
      %811 = vmatprep.subr.mxu0 0.0
      %812 = vmatpush2.msra.mxu0 0.0
      %813 = vmatprep.subr.mxu0 0.0
      %814 = vmatpush2.msra.mxu0 0.0
      %815 = vmatprep.subr.mxu0 0.0
      %816 = vmatpush2.msra.mxu0 0.0
      %817 = vmatprep.subr.mxu0 0.0
      %818 = vmatpush2.msra.mxu0 0.0
      %819 = vmatprep.subr.mxu0 0.0
      %820 = vmatpush2.msra.mxu0 0.0
      %821 = vmatprep.subr.mxu0 0.0
      %822 = vmatpush2.msra.mxu0 0.0
      %823 = vmatprep.subr.mxu0 0.0
      %824 = vmatpush2.msra.mxu0 0.0
      %825 = vmatprep.subr.mxu0 0.0
      %826 = vmatpush2.msra.mxu0 0.0
      %827 = vmatprep.subr.mxu0 0.0
      %828 = vmatpush2.msra.mxu0 0.0
      %829 = vmatprep.subr.mxu0 0.0
      %830 = vmatpush2.msra.mxu0 0.0
      %831 = vmatprep.subr.mxu0 0.0
      %832 = vmatpush2.msra.mxu0 0.0
      %833 = vmatprep.subr.mxu0 0.0
      %834 = vmatpush2.msra.mxu0 0.0
      %835 = vmatprep.mubr.f32.mxu0 0.0
      %v836 = vand.u32 %v493, 4294901760
      %v837 = vsub.f32 %v493, %v836
      %838 = vmatmul.mubr.f32.gmra.mxu0 %v837
      %v839 = vpop.f32.mrf.mxu0
      %v840 = vadd.f32 %v735, %v839
      %v841 = vpop.f32.mrf.mxu0
      %v842 = vadd.f32 %v737, %v841
      %843 = vdwg.mxu0
      %844 = vmatprep.subr.mxu0 0.0
      %845 = vmatpush1.msra.mxu0 0.0
      %846 = vmatprep.subr.mxu0 0.0
      %847 = vmatpush1.msra.mxu0 0.0
      %848 = vmatprep.subr.mxu0 0.0
      %849 = vmatpush1.msra.mxu0 0.0
      %850 = vmatprep.subr.mxu0 0.0
      %851 = vmatpush1.msra.mxu0 0.0
      %852 = vmatprep.subr.mxu0 0.0
      %853 = vmatpush1.msra.mxu0 0.0
      %854 = vmatprep.subr.mxu0 0.0
      %855 = vmatpush1.msra.mxu0 0.0
      %856 = vmatprep.subr.mxu0 0.0
      %857 = vmatpush1.msra.mxu0 0.0
      %858 = vmatprep.subr.mxu0 0.0
      %859 = vmatpush1.msra.mxu0 0.0
      %v860 = vand.u32 %v478, 4294901760
      %861 = vmatprep.subr.mxu0 %v860
      %v862 = vand.u32 %v477, 4294901760
      %863 = vmatpush1.msra.mxu0 %v862
      %v864 = vand.u32 %v476, 4294901760
      %865 = vmatprep.subr.mxu0 %v864
      %v866 = vand.u32 %v475, 4294901760
      %867 = vmatpush1.msra.mxu0 %v866
      %v868 = vand.u32 %v474, 4294901760
      %869 = vmatprep.subr.mxu0 %v868
      %v870 = vand.u32 %v473, 4294901760
      %871 = vmatpush1.msra.mxu0 %v870
      %v872 = vand.u32 %v472, 4294901760
      %873 = vmatprep.subr.mxu0 %v872
      %v874 = vand.u32 %v471, 4294901760
      %875 = vmatpush1.msra.mxu0 %v874
      %v876 = vand.u32 %v470, 4294901760
      %877 = vmatprep.subr.mxu0 %v876
      %v878 = vand.u32 %v469, 4294901760
      %879 = vmatpush1.msra.mxu0 %v878
      %v880 = vand.u32 %v468, 4294901760
      %881 = vmatprep.subr.mxu0 %v880
      %v882 = vand.u32 %v467, 4294901760
      %883 = vmatpush1.msra.mxu0 %v882
      %v884 = vand.u32 %v466, 4294901760
      %885 = vmatprep.subr.mxu0 %v884
      %v886 = vand.u32 %v465, 4294901760
      %887 = vmatpush1.msra.mxu0 %v886
      %v888 = vand.u32 %v464, 4294901760
      %889 = vmatprep.subr.mxu0 %v888
      %v890 = vand.u32 %v463, 4294901760
      %891 = vmatpush1.msra.mxu0 %v890
      %892 = vmatprep.subr.mxu0 0.0
      %893 = vmatpush2.msra.mxu0 0.0
      %894 = vmatprep.subr.mxu0 0.0
      %895 = vmatpush2.msra.mxu0 0.0
      %896 = vmatprep.subr.mxu0 0.0
      %897 = vmatpush2.msra.mxu0 0.0
      %898 = vmatprep.subr.mxu0 0.0
      %899 = vmatpush2.msra.mxu0 0.0
      %900 = vmatprep.subr.mxu0 0.0
      %901 = vmatpush2.msra.mxu0 0.0
      %902 = vmatprep.subr.mxu0 0.0
      %903 = vmatpush2.msra.mxu0 0.0
      %904 = vmatprep.subr.mxu0 0.0
      %905 = vmatpush2.msra.mxu0 0.0
      %906 = vmatprep.subr.mxu0 0.0
      %907 = vmatpush2.msra.mxu0 0.0
      %908 = vmatprep.subr.mxu0 0.0
      %909 = vmatpush2.msra.mxu0 0.0
      %910 = vmatprep.subr.mxu0 0.0
      %911 = vmatpush2.msra.mxu0 0.0
      %912 = vmatprep.subr.mxu0 0.0
      %913 = vmatpush2.msra.mxu0 0.0
      %914 = vmatprep.subr.mxu0 0.0
      %915 = vmatpush2.msra.mxu0 0.0
      %916 = vmatprep.subr.mxu0 0.0
      %917 = vmatpush2.msra.mxu0 0.0
      %918 = vmatprep.subr.mxu0 0.0
      %919 = vmatpush2.msra.mxu0 0.0
      %920 = vmatprep.subr.mxu0 0.0
      %921 = vmatpush2.msra.mxu0 0.0
      %922 = vmatprep.subr.mxu0 0.0
      %923 = vmatpush2.msra.mxu0 0.0
      %924 = vmatprep.mubr.f32.mxu0 0.0
      %v925 = vand.u32 %v493, 4294901760
      %v926 = vsub.f32 %v493, %v925
      %v927 = vand.u32 %v926, 4294901760
      %928 = vmatmul.mubr.f32.gmra.mxu0 %v927
      %v929 = vpop.f32.mrf.mxu0
      %v930 = vadd.f32 %v840, %v929
      %v931 = vpop.f32.mrf.mxu0
      %v932 = vadd.f32 %v842, %v931
      %933 = vdwg.mxu0
      %934 = vmatprep.subr.mxu0 0.0
      %935 = vmatpush1.msra.mxu0 0.0
      %936 = vmatprep.subr.mxu0 0.0
      %937 = vmatpush1.msra.mxu0 0.0
      %938 = vmatprep.subr.mxu0 0.0
      %939 = vmatpush1.msra.mxu0 0.0
      %940 = vmatprep.subr.mxu0 0.0
      %941 = vmatpush1.msra.mxu0 0.0
      %942 = vmatprep.subr.mxu0 0.0
      %943 = vmatpush1.msra.mxu0 0.0
      %944 = vmatprep.subr.mxu0 0.0
      %945 = vmatpush1.msra.mxu0 0.0
      %946 = vmatprep.subr.mxu0 0.0
      %947 = vmatpush1.msra.mxu0 0.0
      %948 = vmatprep.subr.mxu0 0.0
      %949 = vmatpush1.msra.mxu0 0.0
      %v950 = vand.u32 %v478, 4294901760
      %v951 = vsub.f32 %v478, %v950
      %v952 = vand.u32 %v951, 4294901760
      %953 = vmatprep.subr.mxu0 %v952
      %v954 = vand.u32 %v477, 4294901760
      %v955 = vsub.f32 %v477, %v954
      %v956 = vand.u32 %v955, 4294901760
      %957 = vmatpush1.msra.mxu0 %v956
      %v958 = vand.u32 %v476, 4294901760
      %v959 = vsub.f32 %v476, %v958
      %v960 = vand.u32 %v959, 4294901760
      %961 = vmatprep.subr.mxu0 %v960
      %v962 = vand.u32 %v475, 4294901760
      %v963 = vsub.f32 %v475, %v962
      %v964 = vand.u32 %v963, 4294901760
      %965 = vmatpush1.msra.mxu0 %v964
      %v966 = vand.u32 %v474, 4294901760
      %v967 = vsub.f32 %v474, %v966
      %v968 = vand.u32 %v967, 4294901760
      %969 = vmatprep.subr.mxu0 %v968
      %v970 = vand.u32 %v473, 4294901760
      %v971 = vsub.f32 %v473, %v970
      %v972 = vand.u32 %v971, 4294901760
      %973 = vmatpush1.msra.mxu0 %v972
      %v974 = vand.u32 %v472, 4294901760
      %v975 = vsub.f32 %v472, %v974
      %v976 = vand.u32 %v975, 4294901760
      %977 = vmatprep.subr.mxu0 %v976
      %v978 = vand.u32 %v471, 4294901760
      %v979 = vsub.f32 %v471, %v978
      %v980 = vand.u32 %v979, 4294901760
      %981 = vmatpush1.msra.mxu0 %v980
      %v982 = vand.u32 %v470, 4294901760
      %v983 = vsub.f32 %v470, %v982
      %v984 = vand.u32 %v983, 4294901760
      %985 = vmatprep.subr.mxu0 %v984
      %v986 = vand.u32 %v469, 4294901760
      %v987 = vsub.f32 %v469, %v986
      %v988 = vand.u32 %v987, 4294901760
      %989 = vmatpush1.msra.mxu0 %v988
      %v990 = vand.u32 %v468, 4294901760
      %v991 = vsub.f32 %v468, %v990
      %v992 = vand.u32 %v991, 4294901760
      %993 = vmatprep.subr.mxu0 %v992
      %v994 = vand.u32 %v467, 4294901760
      %v995 = vsub.f32 %v467, %v994
      %v996 = vand.u32 %v995, 4294901760
      %997 = vmatpush1.msra.mxu0 %v996
      %v998 = vand.u32 %v466, 4294901760
      %v999 = vsub.f32 %v466, %v998
      %v1000 = vand.u32 %v999, 4294901760
      %1001 = vmatprep.subr.mxu0 %v1000
      %v1002 = vand.u32 %v465, 4294901760
      %v1003 = vsub.f32 %v465, %v1002
      %v1004 = vand.u32 %v1003, 4294901760
      %1005 = vmatpush1.msra.mxu0 %v1004
      %v1006 = vand.u32 %v464, 4294901760
      %v1007 = vsub.f32 %v464, %v1006
      %v1008 = vand.u32 %v1007, 4294901760
      %1009 = vmatprep.subr.mxu0 %v1008
      %v1010 = vand.u32 %v463, 4294901760
      %v1011 = vsub.f32 %v463, %v1010
      %v1012 = vand.u32 %v1011, 4294901760
      %1013 = vmatpush1.msra.mxu0 %v1012
      %1014 = vmatprep.subr.mxu0 0.0
      %1015 = vmatpush2.msra.mxu0 0.0
      %1016 = vmatprep.subr.mxu0 0.0
      %1017 = vmatpush2.msra.mxu0 0.0
      %1018 = vmatprep.subr.mxu0 0.0
      %1019 = vmatpush2.msra.mxu0 0.0
      %1020 = vmatprep.subr.mxu0 0.0
      %1021 = vmatpush2.msra.mxu0 0.0
      %1022 = vmatprep.subr.mxu0 0.0
      %1023 = vmatpush2.msra.mxu0 0.0
      %1024 = vmatprep.subr.mxu0 0.0
      %1025 = vmatpush2.msra.mxu0 0.0
      %1026 = vmatprep.subr.mxu0 0.0
      %1027 = vmatpush2.msra.mxu0 0.0
      %1028 = vmatprep.subr.mxu0 0.0
      %1029 = vmatpush2.msra.mxu0 0.0
      %1030 = vmatprep.subr.mxu0 0.0
      %1031 = vmatpush2.msra.mxu0 0.0
      %1032 = vmatprep.subr.mxu0 0.0
      %1033 = vmatpush2.msra.mxu0 0.0
      %1034 = vmatprep.subr.mxu0 0.0
      %1035 = vmatpush2.msra.mxu0 0.0
      %1036 = vmatprep.subr.mxu0 0.0
      %1037 = vmatpush2.msra.mxu0 0.0
      %1038 = vmatprep.subr.mxu0 0.0
      %1039 = vmatpush2.msra.mxu0 0.0
      %1040 = vmatprep.subr.mxu0 0.0
      %1041 = vmatpush2.msra.mxu0 0.0
      %1042 = vmatprep.subr.mxu0 0.0
      %1043 = vmatpush2.msra.mxu0 0.0
      %1044 = vmatprep.subr.mxu0 0.0
      %1045 = vmatpush2.msra.mxu0 0.0
      %1046 = vmatprep.mubr.f32.mxu0 0.0
      %v1047 = vand.u32 %v493, 4294901760
      %1048 = vmatmul.mubr.f32.gmra.mxu0 %v1047
      %v1049 = vpop.f32.mrf.mxu0
      %v1050 = vadd.f32 %v930, %v1049
      %v1051 = vpop.f32.mrf.mxu0
      %v1052 = vadd.f32 %v932, %v1051
      %1053 = vdwg.mxu0
      %1054 = vmatprep.subr.mxu0 0.0
      %1055 = vmatpush1.msra.mxu0 0.0
      %1056 = vmatprep.subr.mxu0 0.0
      %1057 = vmatpush1.msra.mxu0 0.0
      %1058 = vmatprep.subr.mxu0 0.0
      %1059 = vmatpush1.msra.mxu0 0.0
      %1060 = vmatprep.subr.mxu0 0.0
      %1061 = vmatpush1.msra.mxu0 0.0
      %1062 = vmatprep.subr.mxu0 0.0
      %1063 = vmatpush1.msra.mxu0 0.0
      %1064 = vmatprep.subr.mxu0 0.0
      %1065 = vmatpush1.msra.mxu0 0.0
      %1066 = vmatprep.subr.mxu0 0.0
      %1067 = vmatpush1.msra.mxu0 0.0
      %1068 = vmatprep.subr.mxu0 0.0
      %1069 = vmatpush1.msra.mxu0 0.0
      %v1070 = vand.u32 %v478, 4294901760
      %1071 = vmatprep.subr.mxu0 %v1070
      %v1072 = vand.u32 %v477, 4294901760
      %1073 = vmatpush1.msra.mxu0 %v1072
      %v1074 = vand.u32 %v476, 4294901760
      %1075 = vmatprep.subr.mxu0 %v1074
      %v1076 = vand.u32 %v475, 4294901760
      %1077 = vmatpush1.msra.mxu0 %v1076
      %v1078 = vand.u32 %v474, 4294901760
      %1079 = vmatprep.subr.mxu0 %v1078
      %v1080 = vand.u32 %v473, 4294901760
      %1081 = vmatpush1.msra.mxu0 %v1080
      %v1082 = vand.u32 %v472, 4294901760
      %1083 = vmatprep.subr.mxu0 %v1082
      %v1084 = vand.u32 %v471, 4294901760
      %1085 = vmatpush1.msra.mxu0 %v1084
      %v1086 = vand.u32 %v470, 4294901760
      %1087 = vmatprep.subr.mxu0 %v1086
      %v1088 = vand.u32 %v469, 4294901760
      %1089 = vmatpush1.msra.mxu0 %v1088
      %v1090 = vand.u32 %v468, 4294901760
      %1091 = vmatprep.subr.mxu0 %v1090
      %v1092 = vand.u32 %v467, 4294901760
      %1093 = vmatpush1.msra.mxu0 %v1092
      %v1094 = vand.u32 %v466, 4294901760
      %1095 = vmatprep.subr.mxu0 %v1094
      %v1096 = vand.u32 %v465, 4294901760
      %1097 = vmatpush1.msra.mxu0 %v1096
      %v1098 = vand.u32 %v464, 4294901760
      %1099 = vmatprep.subr.mxu0 %v1098
      %v1100 = vand.u32 %v463, 4294901760
      %1101 = vmatpush1.msra.mxu0 %v1100
      %1102 = vmatprep.subr.mxu0 0.0
      %1103 = vmatpush2.msra.mxu0 0.0
      %1104 = vmatprep.subr.mxu0 0.0
      %1105 = vmatpush2.msra.mxu0 0.0
      %1106 = vmatprep.subr.mxu0 0.0
      %1107 = vmatpush2.msra.mxu0 0.0
      %1108 = vmatprep.subr.mxu0 0.0
      %1109 = vmatpush2.msra.mxu0 0.0
      %1110 = vmatprep.subr.mxu0 0.0
      %1111 = vmatpush2.msra.mxu0 0.0
      %1112 = vmatprep.subr.mxu0 0.0
      %1113 = vmatpush2.msra.mxu0 0.0
      %1114 = vmatprep.subr.mxu0 0.0
      %1115 = vmatpush2.msra.mxu0 0.0
      %1116 = vmatprep.subr.mxu0 0.0
      %1117 = vmatpush2.msra.mxu0 0.0
      %1118 = vmatprep.subr.mxu0 0.0
      %1119 = vmatpush2.msra.mxu0 0.0
      %1120 = vmatprep.subr.mxu0 0.0
      %1121 = vmatpush2.msra.mxu0 0.0
      %1122 = vmatprep.subr.mxu0 0.0
      %1123 = vmatpush2.msra.mxu0 0.0
      %1124 = vmatprep.subr.mxu0 0.0
      %1125 = vmatpush2.msra.mxu0 0.0
      %1126 = vmatprep.subr.mxu0 0.0
      %1127 = vmatpush2.msra.mxu0 0.0
      %1128 = vmatprep.subr.mxu0 0.0
      %1129 = vmatpush2.msra.mxu0 0.0
      %1130 = vmatprep.subr.mxu0 0.0
      %1131 = vmatpush2.msra.mxu0 0.0
      %1132 = vmatprep.subr.mxu0 0.0
      %1133 = vmatpush2.msra.mxu0 0.0
      %1134 = vmatprep.mubr.f32.mxu0 0.0
      %v1135 = vand.u32 %v493, 4294901760
      %1136 = vmatmul.mubr.f32.gmra.mxu0 %v1135
      %v1137 = vpop.f32.mrf.mxu0
      %v1138 = vadd.f32 %v1050, %v1137
      %v1139 = vpop.f32.mrf.mxu0
      %v1140 = vadd.f32 %v1052, %v1139
      %1141 = vdwg.mxu0
      %v1144 = vcombine.low %v1138, %v1140
      %v1145 = vcombine.high %v1138, %v1140
      %v1149 = vunpack.c.l.s4 1935823168
      %v1150 = vunpack.c.0.s8 %v1149
      %v1151 = vlaneseq
      %v1152 = vshrl.u32 %v1151, 7
      %v1153 = vsub.s32 %v1150, %v1152
      %v1154 = vrot.slane %v1144, %v1153
      %v1156 = vunpack.c.l.s4 1935823168
      %v1157 = vunpack.c.0.s8 %v1156
      %v1158 = vlaneseq
      %v1159 = vshrl.u32 %v1158, 7
      %v1160 = vsub.s32 %v1157, %v1159
      %v1161 = vrot.slane %v1145, %v1160
      %v1164 = vrot.slane %v1154, 7
      %v1165 = vrot.slane %v1161, 7
      %v1166 = vsel %vm439, %v1164, %v1165
      %1170 = vst [vmem:[#allocation2] sm:$0xfe] %v1164
      %1171 = vst [vmem:[#allocation2 + $0x18] sm:$0xff] %v1166
      %1172 = vst [vmem:[#allocation2 + $0x30] sm:$0x1] %v1165
      %v1173 = vld [vmem:[#allocation2] sm:$0xff]
      %v1174 = vld [vmem:[#allocation2 + $0x8] sm:$0xff]
      %v1175 = vld [vmem:[#allocation2 + $0x10] sm:$0xff]
      %v1176 = vld [vmem:[#allocation2 + $0x18] sm:$0xff]
      %v1177 = vld [vmem:[#allocation2 + $0x20] sm:$0xff]
      %v1178 = vld [vmem:[#allocation2 + $0x28] sm:$0xff]
      %v1179 = vld [vmem:[%s5] sm:$0xff]
      %v1180 = vld [vmem:[%s5 + $0x8] sm:$0xff]
      %v1181 = vld [vmem:[%s5 + $0x10] sm:$0xff]
      %v1182 = vld [vmem:[%s5 + $0x18] sm:$0xff]
      %v1183 = vld [vmem:[%s5 + $0x20] sm:$0xff]
      %v1184 = vld [vmem:[%s5 + $0x28] sm:$0xff]
      %v1185 = vld [vmem:[%s5 + $0x30] sm:$0xff]
      %v1186 = vld [vmem:[%s5 + $0x38] sm:$0xff]
      %v1187 = vld [vmem:[%s5 + $0x40] sm:$0xff]
      %v1188 = vld [vmem:[%s5 + $0x48] sm:$0xff]
      %v1189 = vld [vmem:[%s5 + $0x50] sm:$0xff]
      %v1190 = vld [vmem:[%s5 + $0x58] sm:$0xff]
      %v1191 = vld [vmem:[%s5 + $0x60] sm:$0xff]
      %v1192 = vld [vmem:[%s5 + $0x68] sm:$0xff]
      %v1193 = vld [vmem:[%s5 + $0x70] sm:$0xff]
      %v1194 = vld [vmem:[%s5 + $0x78] sm:$0xff]
      %v1195 = vld [vmem:[%s5 + $0x80] sm:$0xff]
      %v1196 = vld [vmem:[%s5 + $0x88] sm:$0xff]
      %v1197 = vld [vmem:[%s5 + $0x90] sm:$0xff]
      %v1198 = vld [vmem:[%s5 + $0x98] sm:$0xff]
      %v1199 = vld [vmem:[%s5 + $0xa0] sm:$0xff]
      %v1200 = vld [vmem:[%s5 + $0xa8] sm:$0xff]
      %v1201 = vld [vmem:[%s5 + $0xb0] sm:$0xff]
      %v1202 = vld [vmem:[%s5 + $0xb8] sm:$0xff]
      %v1203 = vld [vmem:[%s5 + $0xc0] sm:$0xff]
      %v1204 = vld [vmem:[%s5 + $0xc8] sm:$0xff]
      %v1205 = vld [vmem:[%s5 + $0xd0] sm:$0xff]
      %v1206 = vld [vmem:[%s5 + $0xd8] sm:$0xff]
      %v1207 = vld [vmem:[%s5 + $0xe0] sm:$0xff]
      %v1208 = vld [vmem:[%s5 + $0xe8] sm:$0xff]
      %v1209 = vld [vmem:[%s5 + $0xf0] sm:$0xff]
      %v1210 = vld [vmem:[%s5 + $0xf8] sm:$0xff]
      %v1211 = vld [vmem:[%s5 + $0x100] sm:$0xff]
      %v1212 = vld [vmem:[%s5 + $0x108] sm:$0xff]
      %v1213 = vld [vmem:[%s5 + $0x110] sm:$0xff]
      %v1214 = vld [vmem:[%s5 + $0x118] sm:$0xff]
      %v1215 = vld [vmem:[%s5 + $0x120] sm:$0xff]
      %v1216 = vld [vmem:[%s5 + $0x128] sm:$0xff]
      %v1217 = vld [vmem:[%s5 + $0x130] sm:$0xff]
      %v1218 = vld [vmem:[%s5 + $0x138] sm:$0xff]
      %v1219 = vld [vmem:[%s5 + $0x140] sm:$0xff]
      %v1220 = vld [vmem:[%s5 + $0x148] sm:$0xff]
      %v1221 = vld [vmem:[%s5 + $0x150] sm:$0xff]
      %v1222 = vld [vmem:[%s5 + $0x158] sm:$0xff]
      %v1223 = vld [vmem:[%s5 + $0x160] sm:$0xff]
      %v1224 = vld [vmem:[%s5 + $0x168] sm:$0xff]
      %v1225 = vld [vmem:[%s5 + $0x170] sm:$0xff]
      %v1226 = vld [vmem:[%s5 + $0x178] sm:$0xff]
      %v1227 = vld [vmem:[#allocation2] sm:$0xfe]
      %v1228 = vld [vmem:[#allocation2 + $0x8] sm:$0xfe]
      %v1229 = vld [vmem:[#allocation2 + $0x10] sm:$0xfe]
      %v1230 = vld [vmem:[#allocation2 + $0x30] sm:$0x1]
      %v1231 = vld [vmem:[#allocation2 + $0x38] sm:$0x1]
      %v1232 = vld [vmem:[#allocation2 + $0x40] sm:$0x1]
      %s1233 = scalar_lea.vmem %s5, 384
      %v1234 = vld [vmem:[%s1233] sm:$0xff]
      %v1235 = vld [vmem:[%s1233 + $0x8] sm:$0xff]
      %v1236 = vld [vmem:[%s1233 + $0x10] sm:$0xff]
      %v1237 = vld [vmem:[%s1233 + $0x18] sm:$0xff]
      %v1238 = vld [vmem:[%s1233 + $0x20] sm:$0xff]
      %v1239 = vld [vmem:[%s1233 + $0x28] sm:$0xff]
      %v1240 = vld [vmem:[%s1233 + $0x30] sm:$0xff]
      %v1241 = vld [vmem:[%s1233 + $0x38] sm:$0xff]
      %v1242 = vld [vmem:[%s1233 + $0x40] sm:$0xff]
      %v1243 = vld [vmem:[%s1233 + $0x48] sm:$0xff]
      %v1244 = vld [vmem:[%s1233 + $0x50] sm:$0xff]
      %v1245 = vld [vmem:[%s1233 + $0x58] sm:$0xff]
      %v1246 = vld [vmem:[%s1233 + $0x60] sm:$0xff]
      %v1247 = vld [vmem:[%s1233 + $0x68] sm:$0xff]
      %v1248 = vld [vmem:[%s1233 + $0x70] sm:$0xff]
      %v1249 = vld [vmem:[%s1233 + $0x78] sm:$0xff]
      %v1250 = vld [vmem:[%s1233 + $0x80] sm:$0xff]
      %v1251 = vld [vmem:[%s1233 + $0x88] sm:$0xff]
      %v1252 = vld [vmem:[%s1233 + $0x90] sm:$0xff]
      %v1253 = vld [vmem:[%s1233 + $0x98] sm:$0xff]
      %v1254 = vld [vmem:[%s1233 + $0xa0] sm:$0xff]
      %v1255 = vld [vmem:[%s1233 + $0xa8] sm:$0xff]
      %v1256 = vld [vmem:[%s1233 + $0xb0] sm:$0xff]
      %v1257 = vld [vmem:[%s1233 + $0xb8] sm:$0xff]
      %v1258 = vld [vmem:[%s1233 + $0xc0] sm:$0xff]
      %v1259 = vld [vmem:[%s1233 + $0xc8] sm:$0xff]
      %v1260 = vld [vmem:[%s1233 + $0xd0] sm:$0xff]
      %v1261 = vld [vmem:[%s1233 + $0xd8] sm:$0xff]
      %v1262 = vld [vmem:[%s1233 + $0xe0] sm:$0xff]
      %v1263 = vld [vmem:[%s1233 + $0xe8] sm:$0xff]
      %v1264 = vld [vmem:[%s1233 + $0xf0] sm:$0xff]
      %v1265 = vld [vmem:[%s1233 + $0xf8] sm:$0xff]
      %v1266 = vld [vmem:[%s1233 + $0x100] sm:$0xff]
      %v1267 = vld [vmem:[%s1233 + $0x108] sm:$0xff]
      %v1268 = vld [vmem:[%s1233 + $0x110] sm:$0xff]
      %v1269 = vld [vmem:[%s1233 + $0x118] sm:$0xff]
      %v1270 = vld [vmem:[%s1233 + $0x120] sm:$0xff]
      %v1271 = vld [vmem:[%s1233 + $0x128] sm:$0xff]
      %v1272 = vld [vmem:[%s1233 + $0x130] sm:$0xff]
      %v1273 = vld [vmem:[%s1233 + $0x138] sm:$0xff]
      %v1274 = vld [vmem:[%s1233 + $0x140] sm:$0xff]
      %v1275 = vld [vmem:[%s1233 + $0x148] sm:$0xff]
      %v1276 = vld [vmem:[%s1233 + $0x150] sm:$0xff]
      %v1277 = vld [vmem:[%s1233 + $0x158] sm:$0xff]
      %v1278 = vld [vmem:[%s1233 + $0x160] sm:$0xff]
      %v1279 = vld [vmem:[%s1233 + $0x168] sm:$0xff]
      %v1280 = vld [vmem:[%s1233 + $0x170] sm:$0xff]
      %v1281 = vld [vmem:[%s1233 + $0x178] sm:$0xff]
      %vm1291 = vcmask 1046528
      %v1292 = vrot.slane %v1227, 1
      %v1293 = vrot.slane %v1176, 1
      %v1294 = vsel %vm1291, %v1292, %v1293
      %v1295 = vrot.slane %v1228, 1
      %v1296 = vrot.slane %v1177, 1
      %v1297 = vsel %vm1291, %v1295, %v1296
      %v1298 = vrot.slane %v1229, 1
      %v1299 = vrot.slane %v1178, 1
      %v1300 = vsel %vm1291, %v1298, %v1299
      %v1301 = vrot.slane %v1230, 1
      %v1302 = vsel %vm1291, %v1293, %v1301
      %v1303 = vrot.slane %v1231, 1
      %v1304 = vsel %vm1291, %v1296, %v1303
      %v1305 = vrot.slane %v1232, 1
      %v1306 = vsel %vm1291, %v1299, %v1305
      %1313 = vmatprep.subr.mxu0 0.0
      %v1314 = vand.u32 %v1249, 4294901760
      %1315 = vmatpush1.msra.mxu0 %v1314
      %1316 = vmatprep.subr.mxu0 0.0
      %v1317 = vand.u32 %v1248, 4294901760
      %1318 = vmatpush1.msra.mxu0 %v1317
      %1319 = vmatprep.subr.mxu0 0.0
      %v1320 = vand.u32 %v1247, 4294901760
      %1321 = vmatpush1.msra.mxu0 %v1320
      %1322 = vmatprep.subr.mxu0 0.0
      %v1323 = vand.u32 %v1246, 4294901760
      %1324 = vmatpush1.msra.mxu0 %v1323
      %1325 = vmatprep.subr.mxu0 0.0
      %v1326 = vand.u32 %v1245, 4294901760
      %1327 = vmatpush1.msra.mxu0 %v1326
      %1328 = vmatprep.subr.mxu0 0.0
      %v1329 = vand.u32 %v1244, 4294901760
      %1330 = vmatpush1.msra.mxu0 %v1329
      %1331 = vmatprep.subr.mxu0 0.0
      %v1332 = vand.u32 %v1243, 4294901760
      %1333 = vmatpush1.msra.mxu0 %v1332
      %1334 = vmatprep.subr.mxu0 0.0
      %v1335 = vand.u32 %v1242, 4294901760
      %1336 = vmatpush1.msra.mxu0 %v1335
      %1337 = vmatprep.subr.mxu0 0.0
      %v1338 = vand.u32 %v1241, 4294901760
      %1339 = vmatpush1.msra.mxu0 %v1338
      %1340 = vmatprep.subr.mxu0 0.0
      %v1341 = vand.u32 %v1240, 4294901760
      %1342 = vmatpush1.msra.mxu0 %v1341
      %1343 = vmatprep.subr.mxu0 0.0
      %v1344 = vand.u32 %v1239, 4294901760
      %1345 = vmatpush1.msra.mxu0 %v1344
      %1346 = vmatprep.subr.mxu0 0.0
      %v1347 = vand.u32 %v1238, 4294901760
      %1348 = vmatpush1.msra.mxu0 %v1347
      %1349 = vmatprep.subr.mxu0 0.0
      %v1350 = vand.u32 %v1237, 4294901760
      %1351 = vmatpush1.msra.mxu0 %v1350
      %1352 = vmatprep.subr.mxu0 0.0
      %v1353 = vand.u32 %v1236, 4294901760
      %1354 = vmatpush1.msra.mxu0 %v1353
      %1355 = vmatprep.subr.mxu0 0.0
      %v1356 = vand.u32 %v1235, 4294901760
      %1357 = vmatpush1.msra.mxu0 %v1356
      %1358 = vmatprep.subr.mxu0 0.0
      %v1359 = vand.u32 %v1234, 4294901760
      %1360 = vmatpush1.msra.mxu0 %v1359
      %1361 = vmatprep.subr.mxu0 0.0
      %v1362 = vand.u32 %v1265, 4294901760
      %1363 = vmatpush2.msra.mxu0 %v1362
      %1364 = vmatprep.subr.mxu0 0.0
      %v1365 = vand.u32 %v1264, 4294901760
      %1366 = vmatpush2.msra.mxu0 %v1365
      %1367 = vmatprep.subr.mxu0 0.0
      %v1368 = vand.u32 %v1263, 4294901760
      %1369 = vmatpush2.msra.mxu0 %v1368
      %1370 = vmatprep.subr.mxu0 0.0
      %v1371 = vand.u32 %v1262, 4294901760
      %1372 = vmatpush2.msra.mxu0 %v1371
      %1373 = vmatprep.subr.mxu0 0.0
      %v1374 = vand.u32 %v1261, 4294901760
      %1375 = vmatpush2.msra.mxu0 %v1374
      %1376 = vmatprep.subr.mxu0 0.0
      %v1377 = vand.u32 %v1260, 4294901760
      %1378 = vmatpush2.msra.mxu0 %v1377
      %1379 = vmatprep.subr.mxu0 0.0
      %v1380 = vand.u32 %v1259, 4294901760
      %1381 = vmatpush2.msra.mxu0 %v1380
      %1382 = vmatprep.subr.mxu0 0.0
      %v1383 = vand.u32 %v1258, 4294901760
      %1384 = vmatpush2.msra.mxu0 %v1383
      %1385 = vmatprep.subr.mxu0 0.0
      %v1386 = vand.u32 %v1257, 4294901760
      %1387 = vmatpush2.msra.mxu0 %v1386
      %1388 = vmatprep.subr.mxu0 0.0
      %v1389 = vand.u32 %v1256, 4294901760
      %1390 = vmatpush2.msra.mxu0 %v1389
      %1391 = vmatprep.subr.mxu0 0.0
      %v1392 = vand.u32 %v1255, 4294901760
      %1393 = vmatpush2.msra.mxu0 %v1392
      %1394 = vmatprep.subr.mxu0 0.0
      %v1395 = vand.u32 %v1254, 4294901760
      %1396 = vmatpush2.msra.mxu0 %v1395
      %1397 = vmatprep.subr.mxu0 0.0
      %v1398 = vand.u32 %v1253, 4294901760
      %1399 = vmatpush2.msra.mxu0 %v1398
      %1400 = vmatprep.subr.mxu0 0.0
      %v1401 = vand.u32 %v1252, 4294901760
      %1402 = vmatpush2.msra.mxu0 %v1401
      %1403 = vmatprep.subr.mxu0 0.0
      %v1404 = vand.u32 %v1251, 4294901760
      %1405 = vmatpush2.msra.mxu0 %v1404
      %1406 = vmatprep.subr.mxu0 0.0
      %v1407 = vand.u32 %v1250, 4294901760
      %1408 = vmatpush2.msra.mxu0 %v1407
      %v1409 = vand.u32 %v1297, 4294901760
      %v1410 = vsub.f32 %v1297, %v1409
      %v1411 = vand.u32 %v1410, 4294901760
      %v1412 = vsub.f32 %v1410, %v1411
      %v1413 = vand.u32 %v1412, 4294901760
      %1414 = vmatprep.mubr.f32.mxu0 %v1413
      %v1415 = vand.u32 %v1294, 4294901760
      %v1416 = vsub.f32 %v1294, %v1415
      %v1417 = vand.u32 %v1416, 4294901760
      %v1418 = vsub.f32 %v1416, %v1417
      %v1419 = vand.u32 %v1418, 4294901760
      %1420 = vmatmul.mubr.f32.gmra.mxu0 %v1419
      %v1421 = vpop.f32.mrf.mxu0
      %v1422 = vadd.f32 0.0, %v1421
      %v1423 = vpop.f32.mrf.mxu0
      %v1424 = vand.u32 %v1304, 4294901760
      %v1425 = vsub.f32 %v1304, %v1424
      %v1426 = vand.u32 %v1425, 4294901760
      %v1427 = vsub.f32 %v1425, %v1426
      %v1428 = vand.u32 %v1427, 4294901760
      %1429 = vmatprep.mubr.f32.mxu0 %v1428
      %v1430 = vand.u32 %v1302, 4294901760
      %v1431 = vsub.f32 %v1302, %v1430
      %v1432 = vand.u32 %v1431, 4294901760
      %v1433 = vsub.f32 %v1431, %v1432
      %v1434 = vand.u32 %v1433, 4294901760
      %1435 = vmatmul.mubr.f32.gmra.mxu0 %v1434
      %v1436 = vpop.f32.mrf.mxu0
      %v1437 = vadd.f32 0.0, %v1436
      %v1438 = vpop.f32.mrf.mxu0
      %1439 = vdwg.mxu0
      %1440 = vmatprep.subr.mxu0 0.0
      %v1441 = vand.u32 %v1249, 4294901760
      %v1442 = vsub.f32 %v1249, %v1441
      %v1443 = vand.u32 %v1442, 4294901760
      %v1444 = vsub.f32 %v1442, %v1443
      %v1445 = vand.u32 %v1444, 4294901760
      %1446 = vmatpush1.msra.mxu0 %v1445
      %1447 = vmatprep.subr.mxu0 0.0
      %v1448 = vand.u32 %v1248, 4294901760
      %v1449 = vsub.f32 %v1248, %v1448
      %v1450 = vand.u32 %v1449, 4294901760
      %v1451 = vsub.f32 %v1449, %v1450
      %v1452 = vand.u32 %v1451, 4294901760
      %1453 = vmatpush1.msra.mxu0 %v1452
      %1454 = vmatprep.subr.mxu0 0.0
      %v1455 = vand.u32 %v1247, 4294901760
      %v1456 = vsub.f32 %v1247, %v1455
      %v1457 = vand.u32 %v1456, 4294901760
      %v1458 = vsub.f32 %v1456, %v1457
      %v1459 = vand.u32 %v1458, 4294901760
      %1460 = vmatpush1.msra.mxu0 %v1459
      %1461 = vmatprep.subr.mxu0 0.0
      %v1462 = vand.u32 %v1246, 4294901760
      %v1463 = vsub.f32 %v1246, %v1462
      %v1464 = vand.u32 %v1463, 4294901760
      %v1465 = vsub.f32 %v1463, %v1464
      %v1466 = vand.u32 %v1465, 4294901760
      %1467 = vmatpush1.msra.mxu0 %v1466
      %1468 = vmatprep.subr.mxu0 0.0
      %v1469 = vand.u32 %v1245, 4294901760
      %v1470 = vsub.f32 %v1245, %v1469
      %v1471 = vand.u32 %v1470, 4294901760
      %v1472 = vsub.f32 %v1470, %v1471
      %v1473 = vand.u32 %v1472, 4294901760
      %1474 = vmatpush1.msra.mxu0 %v1473
      %1475 = vmatprep.subr.mxu0 0.0
      %v1476 = vand.u32 %v1244, 4294901760
      %v1477 = vsub.f32 %v1244, %v1476
      %v1478 = vand.u32 %v1477, 4294901760
      %v1479 = vsub.f32 %v1477, %v1478
      %v1480 = vand.u32 %v1479, 4294901760
      %1481 = vmatpush1.msra.mxu0 %v1480
      %1482 = vmatprep.subr.mxu0 0.0
      %v1483 = vand.u32 %v1243, 4294901760
      %v1484 = vsub.f32 %v1243, %v1483
      %v1485 = vand.u32 %v1484, 4294901760
      %v1486 = vsub.f32 %v1484, %v1485
      %v1487 = vand.u32 %v1486, 4294901760
      %1488 = vmatpush1.msra.mxu0 %v1487
      %1489 = vmatprep.subr.mxu0 0.0
      %v1490 = vand.u32 %v1242, 4294901760
      %v1491 = vsub.f32 %v1242, %v1490
      %v1492 = vand.u32 %v1491, 4294901760
      %v1493 = vsub.f32 %v1491, %v1492
      %v1494 = vand.u32 %v1493, 4294901760
      %1495 = vmatpush1.msra.mxu0 %v1494
      %1496 = vmatprep.subr.mxu0 0.0
      %v1497 = vand.u32 %v1241, 4294901760
      %v1498 = vsub.f32 %v1241, %v1497
      %v1499 = vand.u32 %v1498, 4294901760
      %v1500 = vsub.f32 %v1498, %v1499
      %v1501 = vand.u32 %v1500, 4294901760
      %1502 = vmatpush1.msra.mxu0 %v1501
      %1503 = vmatprep.subr.mxu0 0.0
      %v1504 = vand.u32 %v1240, 4294901760
      %v1505 = vsub.f32 %v1240, %v1504
      %v1506 = vand.u32 %v1505, 4294901760
      %v1507 = vsub.f32 %v1505, %v1506
      %v1508 = vand.u32 %v1507, 4294901760
      %1509 = vmatpush1.msra.mxu0 %v1508
      %1510 = vmatprep.subr.mxu0 0.0
      %v1511 = vand.u32 %v1239, 4294901760
      %v1512 = vsub.f32 %v1239, %v1511
      %v1513 = vand.u32 %v1512, 4294901760
      %v1514 = vsub.f32 %v1512, %v1513
      %v1515 = vand.u32 %v1514, 4294901760
      %1516 = vmatpush1.msra.mxu0 %v1515
      %1517 = vmatprep.subr.mxu0 0.0
      %v1518 = vand.u32 %v1238, 4294901760
      %v1519 = vsub.f32 %v1238, %v1518
      %v1520 = vand.u32 %v1519, 4294901760
      %v1521 = vsub.f32 %v1519, %v1520
      %v1522 = vand.u32 %v1521, 4294901760
      %1523 = vmatpush1.msra.mxu0 %v1522
      %1524 = vmatprep.subr.mxu0 0.0
      %v1525 = vand.u32 %v1237, 4294901760
      %v1526 = vsub.f32 %v1237, %v1525
      %v1527 = vand.u32 %v1526, 4294901760
      %v1528 = vsub.f32 %v1526, %v1527
      %v1529 = vand.u32 %v1528, 4294901760
      %1530 = vmatpush1.msra.mxu0 %v1529
      %1531 = vmatprep.subr.mxu0 0.0
      %v1532 = vand.u32 %v1236, 4294901760
      %v1533 = vsub.f32 %v1236, %v1532
      %v1534 = vand.u32 %v1533, 4294901760
      %v1535 = vsub.f32 %v1533, %v1534
      %v1536 = vand.u32 %v1535, 4294901760
      %1537 = vmatpush1.msra.mxu0 %v1536
      %1538 = vmatprep.subr.mxu0 0.0
      %v1539 = vand.u32 %v1235, 4294901760
      %v1540 = vsub.f32 %v1235, %v1539
      %v1541 = vand.u32 %v1540, 4294901760
      %v1542 = vsub.f32 %v1540, %v1541
      %v1543 = vand.u32 %v1542, 4294901760
      %1544 = vmatpush1.msra.mxu0 %v1543
      %1545 = vmatprep.subr.mxu0 0.0
      %v1546 = vand.u32 %v1234, 4294901760
      %v1547 = vsub.f32 %v1234, %v1546
      %v1548 = vand.u32 %v1547, 4294901760
      %v1549 = vsub.f32 %v1547, %v1548
      %v1550 = vand.u32 %v1549, 4294901760
      %1551 = vmatpush1.msra.mxu0 %v1550
      %1552 = vmatprep.subr.mxu0 0.0
      %v1553 = vand.u32 %v1265, 4294901760
      %v1554 = vsub.f32 %v1265, %v1553
      %v1555 = vand.u32 %v1554, 4294901760
      %v1556 = vsub.f32 %v1554, %v1555
      %v1557 = vand.u32 %v1556, 4294901760
      %1558 = vmatpush2.msra.mxu0 %v1557
      %1559 = vmatprep.subr.mxu0 0.0
      %v1560 = vand.u32 %v1264, 4294901760
      %v1561 = vsub.f32 %v1264, %v1560
      %v1562 = vand.u32 %v1561, 4294901760
      %v1563 = vsub.f32 %v1561, %v1562
      %v1564 = vand.u32 %v1563, 4294901760
      %1565 = vmatpush2.msra.mxu0 %v1564
      %1566 = vmatprep.subr.mxu0 0.0
      %v1567 = vand.u32 %v1263, 4294901760
      %v1568 = vsub.f32 %v1263, %v1567
      %v1569 = vand.u32 %v1568, 4294901760
      %v1570 = vsub.f32 %v1568, %v1569
      %v1571 = vand.u32 %v1570, 4294901760
      %1572 = vmatpush2.msra.mxu0 %v1571
      %1573 = vmatprep.subr.mxu0 0.0
      %v1574 = vand.u32 %v1262, 4294901760
      %v1575 = vsub.f32 %v1262, %v1574
      %v1576 = vand.u32 %v1575, 4294901760
      %v1577 = vsub.f32 %v1575, %v1576
      %v1578 = vand.u32 %v1577, 4294901760
      %1579 = vmatpush2.msra.mxu0 %v1578
      %1580 = vmatprep.subr.mxu0 0.0
      %v1581 = vand.u32 %v1261, 4294901760
      %v1582 = vsub.f32 %v1261, %v1581
      %v1583 = vand.u32 %v1582, 4294901760
      %v1584 = vsub.f32 %v1582, %v1583
      %v1585 = vand.u32 %v1584, 4294901760
      %1586 = vmatpush2.msra.mxu0 %v1585
      %1587 = vmatprep.subr.mxu0 0.0
      %v1588 = vand.u32 %v1260, 4294901760
      %v1589 = vsub.f32 %v1260, %v1588
      %v1590 = vand.u32 %v1589, 4294901760
      %v1591 = vsub.f32 %v1589, %v1590
      %v1592 = vand.u32 %v1591, 4294901760
      %1593 = vmatpush2.msra.mxu0 %v1592
      %1594 = vmatprep.subr.mxu0 0.0
      %v1595 = vand.u32 %v1259, 4294901760
      %v1596 = vsub.f32 %v1259, %v1595
      %v1597 = vand.u32 %v1596, 4294901760
      %v1598 = vsub.f32 %v1596, %v1597
      %v1599 = vand.u32 %v1598, 4294901760
      %1600 = vmatpush2.msra.mxu0 %v1599
      %1601 = vmatprep.subr.mxu0 0.0
      %v1602 = vand.u32 %v1258, 4294901760
      %v1603 = vsub.f32 %v1258, %v1602
      %v1604 = vand.u32 %v1603, 4294901760
      %v1605 = vsub.f32 %v1603, %v1604
      %v1606 = vand.u32 %v1605, 4294901760
      %1607 = vmatpush2.msra.mxu0 %v1606
      %1608 = vmatprep.subr.mxu0 0.0
      %v1609 = vand.u32 %v1257, 4294901760
      %v1610 = vsub.f32 %v1257, %v1609
      %v1611 = vand.u32 %v1610, 4294901760
      %v1612 = vsub.f32 %v1610, %v1611
      %v1613 = vand.u32 %v1612, 4294901760
      %1614 = vmatpush2.msra.mxu0 %v1613
      %1615 = vmatprep.subr.mxu0 0.0
      %v1616 = vand.u32 %v1256, 4294901760
      %v1617 = vsub.f32 %v1256, %v1616
      %v1618 = vand.u32 %v1617, 4294901760
      %v1619 = vsub.f32 %v1617, %v1618
      %v1620 = vand.u32 %v1619, 4294901760
      %1621 = vmatpush2.msra.mxu0 %v1620
      %1622 = vmatprep.subr.mxu0 0.0
      %v1623 = vand.u32 %v1255, 4294901760
      %v1624 = vsub.f32 %v1255, %v1623
      %v1625 = vand.u32 %v1624, 4294901760
      %v1626 = vsub.f32 %v1624, %v1625
      %v1627 = vand.u32 %v1626, 4294901760
      %1628 = vmatpush2.msra.mxu0 %v1627
      %1629 = vmatprep.subr.mxu0 0.0
      %v1630 = vand.u32 %v1254, 4294901760
      %v1631 = vsub.f32 %v1254, %v1630
      %v1632 = vand.u32 %v1631, 4294901760
      %v1633 = vsub.f32 %v1631, %v1632
      %v1634 = vand.u32 %v1633, 4294901760
      %1635 = vmatpush2.msra.mxu0 %v1634
      %1636 = vmatprep.subr.mxu0 0.0
      %v1637 = vand.u32 %v1253, 4294901760
      %v1638 = vsub.f32 %v1253, %v1637
      %v1639 = vand.u32 %v1638, 4294901760
      %v1640 = vsub.f32 %v1638, %v1639
      %v1641 = vand.u32 %v1640, 4294901760
      %1642 = vmatpush2.msra.mxu0 %v1641
      %1643 = vmatprep.subr.mxu0 0.0
      %v1644 = vand.u32 %v1252, 4294901760
      %v1645 = vsub.f32 %v1252, %v1644
      %v1646 = vand.u32 %v1645, 4294901760
      %v1647 = vsub.f32 %v1645, %v1646
      %v1648 = vand.u32 %v1647, 4294901760
      %1649 = vmatpush2.msra.mxu0 %v1648
      %1650 = vmatprep.subr.mxu0 0.0
      %v1651 = vand.u32 %v1251, 4294901760
      %v1652 = vsub.f32 %v1251, %v1651
      %v1653 = vand.u32 %v1652, 4294901760
      %v1654 = vsub.f32 %v1652, %v1653
      %v1655 = vand.u32 %v1654, 4294901760
      %1656 = vmatpush2.msra.mxu0 %v1655
      %1657 = vmatprep.subr.mxu0 0.0
      %v1658 = vand.u32 %v1250, 4294901760
      %v1659 = vsub.f32 %v1250, %v1658
      %v1660 = vand.u32 %v1659, 4294901760
      %v1661 = vsub.f32 %v1659, %v1660
      %v1662 = vand.u32 %v1661, 4294901760
      %1663 = vmatpush2.msra.mxu0 %v1662
      %v1664 = vand.u32 %v1297, 4294901760
      %1665 = vmatprep.mubr.f32.mxu0 %v1664
      %v1666 = vand.u32 %v1294, 4294901760
      %1667 = vmatmul.mubr.f32.gmra.mxu0 %v1666
      %v1668 = vpop.f32.mrf.mxu0
      %v1669 = vadd.f32 %v1422, %v1668
      %v1670 = vpop.f32.mrf.mxu0
      %v1671 = vand.u32 %v1304, 4294901760
      %1672 = vmatprep.mubr.f32.mxu0 %v1671
      %v1673 = vand.u32 %v1302, 4294901760
      %1674 = vmatmul.mubr.f32.gmra.mxu0 %v1673
      %v1675 = vpop.f32.mrf.mxu0
      %v1676 = vadd.f32 %v1437, %v1675
      %v1677 = vpop.f32.mrf.mxu0
      %1678 = vdwg.mxu0
      %1679 = vmatprep.subr.mxu0 0.0
      %v1680 = vand.u32 %v1249, 4294901760
      %v1681 = vsub.f32 %v1249, %v1680
      %1682 = vmatpush1.msra.mxu0 %v1681
      %1683 = vmatprep.subr.mxu0 0.0
      %v1684 = vand.u32 %v1248, 4294901760
      %v1685 = vsub.f32 %v1248, %v1684
      %1686 = vmatpush1.msra.mxu0 %v1685
      %1687 = vmatprep.subr.mxu0 0.0
      %v1688 = vand.u32 %v1247, 4294901760
      %v1689 = vsub.f32 %v1247, %v1688
      %1690 = vmatpush1.msra.mxu0 %v1689
      %1691 = vmatprep.subr.mxu0 0.0
      %v1692 = vand.u32 %v1246, 4294901760
      %v1693 = vsub.f32 %v1246, %v1692
      %1694 = vmatpush1.msra.mxu0 %v1693
      %1695 = vmatprep.subr.mxu0 0.0
      %v1696 = vand.u32 %v1245, 4294901760
      %v1697 = vsub.f32 %v1245, %v1696
      %1698 = vmatpush1.msra.mxu0 %v1697
      %1699 = vmatprep.subr.mxu0 0.0
      %v1700 = vand.u32 %v1244, 4294901760
      %v1701 = vsub.f32 %v1244, %v1700
      %1702 = vmatpush1.msra.mxu0 %v1701
      %1703 = vmatprep.subr.mxu0 0.0
      %v1704 = vand.u32 %v1243, 4294901760
      %v1705 = vsub.f32 %v1243, %v1704
      %1706 = vmatpush1.msra.mxu0 %v1705
      %1707 = vmatprep.subr.mxu0 0.0
      %v1708 = vand.u32 %v1242, 4294901760
      %v1709 = vsub.f32 %v1242, %v1708
      %1710 = vmatpush1.msra.mxu0 %v1709
      %1711 = vmatprep.subr.mxu0 0.0
      %v1712 = vand.u32 %v1241, 4294901760
      %v1713 = vsub.f32 %v1241, %v1712
      %1714 = vmatpush1.msra.mxu0 %v1713
      %1715 = vmatprep.subr.mxu0 0.0
      %v1716 = vand.u32 %v1240, 4294901760
      %v1717 = vsub.f32 %v1240, %v1716
      %1718 = vmatpush1.msra.mxu0 %v1717
      %1719 = vmatprep.subr.mxu0 0.0
      %v1720 = vand.u32 %v1239, 4294901760
      %v1721 = vsub.f32 %v1239, %v1720
      %1722 = vmatpush1.msra.mxu0 %v1721
      %1723 = vmatprep.subr.mxu0 0.0
      %v1724 = vand.u32 %v1238, 4294901760
      %v1725 = vsub.f32 %v1238, %v1724
      %1726 = vmatpush1.msra.mxu0 %v1725
      %1727 = vmatprep.subr.mxu0 0.0
      %v1728 = vand.u32 %v1237, 4294901760
      %v1729 = vsub.f32 %v1237, %v1728
      %1730 = vmatpush1.msra.mxu0 %v1729
      %1731 = vmatprep.subr.mxu0 0.0
      %v1732 = vand.u32 %v1236, 4294901760
      %v1733 = vsub.f32 %v1236, %v1732
      %1734 = vmatpush1.msra.mxu0 %v1733
      %1735 = vmatprep.subr.mxu0 0.0
      %v1736 = vand.u32 %v1235, 4294901760
      %v1737 = vsub.f32 %v1235, %v1736
      %1738 = vmatpush1.msra.mxu0 %v1737
      %1739 = vmatprep.subr.mxu0 0.0
      %v1740 = vand.u32 %v1234, 4294901760
      %v1741 = vsub.f32 %v1234, %v1740
      %1742 = vmatpush1.msra.mxu0 %v1741
      %1743 = vmatprep.subr.mxu0 0.0
      %v1744 = vand.u32 %v1265, 4294901760
      %v1745 = vsub.f32 %v1265, %v1744
      %1746 = vmatpush2.msra.mxu0 %v1745
      %1747 = vmatprep.subr.mxu0 0.0
      %v1748 = vand.u32 %v1264, 4294901760
      %v1749 = vsub.f32 %v1264, %v1748
      %1750 = vmatpush2.msra.mxu0 %v1749
      %1751 = vmatprep.subr.mxu0 0.0
      %v1752 = vand.u32 %v1263, 4294901760
      %v1753 = vsub.f32 %v1263, %v1752
      %1754 = vmatpush2.msra.mxu0 %v1753
      %1755 = vmatprep.subr.mxu0 0.0
      %v1756 = vand.u32 %v1262, 4294901760
      %v1757 = vsub.f32 %v1262, %v1756
      %1758 = vmatpush2.msra.mxu0 %v1757
      %1759 = vmatprep.subr.mxu0 0.0
      %v1760 = vand.u32 %v1261, 4294901760
      %v1761 = vsub.f32 %v1261, %v1760
      %1762 = vmatpush2.msra.mxu0 %v1761
      %1763 = vmatprep.subr.mxu0 0.0
      %v1764 = vand.u32 %v1260, 4294901760
      %v1765 = vsub.f32 %v1260, %v1764
      %1766 = vmatpush2.msra.mxu0 %v1765
      %1767 = vmatprep.subr.mxu0 0.0
      %v1768 = vand.u32 %v1259, 4294901760
      %v1769 = vsub.f32 %v1259, %v1768
      %1770 = vmatpush2.msra.mxu0 %v1769
      %1771 = vmatprep.subr.mxu0 0.0
      %v1772 = vand.u32 %v1258, 4294901760
      %v1773 = vsub.f32 %v1258, %v1772
      %1774 = vmatpush2.msra.mxu0 %v1773
      %1775 = vmatprep.subr.mxu0 0.0
      %v1776 = vand.u32 %v1257, 4294901760
      %v1777 = vsub.f32 %v1257, %v1776
      %1778 = vmatpush2.msra.mxu0 %v1777
      %1779 = vmatprep.subr.mxu0 0.0
      %v1780 = vand.u32 %v1256, 4294901760
      %v1781 = vsub.f32 %v1256, %v1780
      %1782 = vmatpush2.msra.mxu0 %v1781
      %1783 = vmatprep.subr.mxu0 0.0
      %v1784 = vand.u32 %v1255, 4294901760
      %v1785 = vsub.f32 %v1255, %v1784
      %1786 = vmatpush2.msra.mxu0 %v1785
      %1787 = vmatprep.subr.mxu0 0.0
      %v1788 = vand.u32 %v1254, 4294901760
      %v1789 = vsub.f32 %v1254, %v1788
      %1790 = vmatpush2.msra.mxu0 %v1789
      %1791 = vmatprep.subr.mxu0 0.0
      %v1792 = vand.u32 %v1253, 4294901760
      %v1793 = vsub.f32 %v1253, %v1792
      %1794 = vmatpush2.msra.mxu0 %v1793
      %1795 = vmatprep.subr.mxu0 0.0
      %v1796 = vand.u32 %v1252, 4294901760
      %v1797 = vsub.f32 %v1252, %v1796
      %1798 = vmatpush2.msra.mxu0 %v1797
      %1799 = vmatprep.subr.mxu0 0.0
      %v1800 = vand.u32 %v1251, 4294901760
      %v1801 = vsub.f32 %v1251, %v1800
      %1802 = vmatpush2.msra.mxu0 %v1801
      %1803 = vmatprep.subr.mxu0 0.0
      %v1804 = vand.u32 %v1250, 4294901760
      %v1805 = vsub.f32 %v1250, %v1804
      %1806 = vmatpush2.msra.mxu0 %v1805
      %v1807 = vand.u32 %v1297, 4294901760
      %v1808 = vsub.f32 %v1297, %v1807
      %1809 = vmatprep.mubr.f32.mxu0 %v1808
      %v1810 = vand.u32 %v1294, 4294901760
      %v1811 = vsub.f32 %v1294, %v1810
      %1812 = vmatmul.mubr.f32.gmra.mxu0 %v1811
      %v1813 = vpop.f32.mrf.mxu0
      %v1814 = vadd.f32 %v1669, %v1813
      %v1815 = vpop.f32.mrf.mxu0
      %v1816 = vand.u32 %v1304, 4294901760
      %v1817 = vsub.f32 %v1304, %v1816
      %1818 = vmatprep.mubr.f32.mxu0 %v1817
      %v1819 = vand.u32 %v1302, 4294901760
      %v1820 = vsub.f32 %v1302, %v1819
      %1821 = vmatmul.mubr.f32.gmra.mxu0 %v1820
      %v1822 = vpop.f32.mrf.mxu0
      %v1823 = vadd.f32 %v1676, %v1822
      %v1824 = vpop.f32.mrf.mxu0
      %1825 = vdwg.mxu0
      %1826 = vmatprep.subr.mxu0 0.0
      %v1827 = vand.u32 %v1249, 4294901760
      %1828 = vmatpush1.msra.mxu0 %v1827
      %1829 = vmatprep.subr.mxu0 0.0
      %v1830 = vand.u32 %v1248, 4294901760
      %1831 = vmatpush1.msra.mxu0 %v1830
      %1832 = vmatprep.subr.mxu0 0.0
      %v1833 = vand.u32 %v1247, 4294901760
      %1834 = vmatpush1.msra.mxu0 %v1833
      %1835 = vmatprep.subr.mxu0 0.0
      %v1836 = vand.u32 %v1246, 4294901760
      %1837 = vmatpush1.msra.mxu0 %v1836
      %1838 = vmatprep.subr.mxu0 0.0
      %v1839 = vand.u32 %v1245, 4294901760
      %1840 = vmatpush1.msra.mxu0 %v1839
      %1841 = vmatprep.subr.mxu0 0.0
      %v1842 = vand.u32 %v1244, 4294901760
      %1843 = vmatpush1.msra.mxu0 %v1842
      %1844 = vmatprep.subr.mxu0 0.0
      %v1845 = vand.u32 %v1243, 4294901760
      %1846 = vmatpush1.msra.mxu0 %v1845
      %1847 = vmatprep.subr.mxu0 0.0
      %v1848 = vand.u32 %v1242, 4294901760
      %1849 = vmatpush1.msra.mxu0 %v1848
      %1850 = vmatprep.subr.mxu0 0.0
      %v1851 = vand.u32 %v1241, 4294901760
      %1852 = vmatpush1.msra.mxu0 %v1851
      %1853 = vmatprep.subr.mxu0 0.0
      %v1854 = vand.u32 %v1240, 4294901760
      %1855 = vmatpush1.msra.mxu0 %v1854
      %1856 = vmatprep.subr.mxu0 0.0
      %v1857 = vand.u32 %v1239, 4294901760
      %1858 = vmatpush1.msra.mxu0 %v1857
      %1859 = vmatprep.subr.mxu0 0.0
      %v1860 = vand.u32 %v1238, 4294901760
      %1861 = vmatpush1.msra.mxu0 %v1860
      %1862 = vmatprep.subr.mxu0 0.0
      %v1863 = vand.u32 %v1237, 4294901760
      %1864 = vmatpush1.msra.mxu0 %v1863
      %1865 = vmatprep.subr.mxu0 0.0
      %v1866 = vand.u32 %v1236, 4294901760
      %1867 = vmatpush1.msra.mxu0 %v1866
      %1868 = vmatprep.subr.mxu0 0.0
      %v1869 = vand.u32 %v1235, 4294901760
      %1870 = vmatpush1.msra.mxu0 %v1869
      %1871 = vmatprep.subr.mxu0 0.0
      %v1872 = vand.u32 %v1234, 4294901760
      %1873 = vmatpush1.msra.mxu0 %v1872
      %1874 = vmatprep.subr.mxu0 0.0
      %v1875 = vand.u32 %v1265, 4294901760
      %1876 = vmatpush2.msra.mxu0 %v1875
      %1877 = vmatprep.subr.mxu0 0.0
      %v1878 = vand.u32 %v1264, 4294901760
      %1879 = vmatpush2.msra.mxu0 %v1878
      %1880 = vmatprep.subr.mxu0 0.0
      %v1881 = vand.u32 %v1263, 4294901760
      %1882 = vmatpush2.msra.mxu0 %v1881
      %1883 = vmatprep.subr.mxu0 0.0
      %v1884 = vand.u32 %v1262, 4294901760
      %1885 = vmatpush2.msra.mxu0 %v1884
      %1886 = vmatprep.subr.mxu0 0.0
      %v1887 = vand.u32 %v1261, 4294901760
      %1888 = vmatpush2.msra.mxu0 %v1887
      %1889 = vmatprep.subr.mxu0 0.0
      %v1890 = vand.u32 %v1260, 4294901760
      %1891 = vmatpush2.msra.mxu0 %v1890
      %1892 = vmatprep.subr.mxu0 0.0
      %v1893 = vand.u32 %v1259, 4294901760
      %1894 = vmatpush2.msra.mxu0 %v1893
      %1895 = vmatprep.subr.mxu0 0.0
      %v1896 = vand.u32 %v1258, 4294901760
      %1897 = vmatpush2.msra.mxu0 %v1896
      %1898 = vmatprep.subr.mxu0 0.0
      %v1899 = vand.u32 %v1257, 4294901760
      %1900 = vmatpush2.msra.mxu0 %v1899
      %1901 = vmatprep.subr.mxu0 0.0
      %v1902 = vand.u32 %v1256, 4294901760
      %1903 = vmatpush2.msra.mxu0 %v1902
      %1904 = vmatprep.subr.mxu0 0.0
      %v1905 = vand.u32 %v1255, 4294901760
      %1906 = vmatpush2.msra.mxu0 %v1905
      %1907 = vmatprep.subr.mxu0 0.0
      %v1908 = vand.u32 %v1254, 4294901760
      %1909 = vmatpush2.msra.mxu0 %v1908
      %1910 = vmatprep.subr.mxu0 0.0
      %v1911 = vand.u32 %v1253, 4294901760
      %1912 = vmatpush2.msra.mxu0 %v1911
      %1913 = vmatprep.subr.mxu0 0.0
      %v1914 = vand.u32 %v1252, 4294901760
      %1915 = vmatpush2.msra.mxu0 %v1914
      %1916 = vmatprep.subr.mxu0 0.0
      %v1917 = vand.u32 %v1251, 4294901760
      %1918 = vmatpush2.msra.mxu0 %v1917
      %1919 = vmatprep.subr.mxu0 0.0
      %v1920 = vand.u32 %v1250, 4294901760
      %1921 = vmatpush2.msra.mxu0 %v1920
      %v1922 = vand.u32 %v1297, 4294901760
      %v1923 = vsub.f32 %v1297, %v1922
      %v1924 = vand.u32 %v1923, 4294901760
      %1925 = vmatprep.mubr.f32.mxu0 %v1924
      %v1926 = vand.u32 %v1294, 4294901760
      %v1927 = vsub.f32 %v1294, %v1926
      %v1928 = vand.u32 %v1927, 4294901760
      %1929 = vmatmul.mubr.f32.gmra.mxu0 %v1928
      %v1930 = vpop.f32.mrf.mxu0
      %v1931 = vadd.f32 %v1814, %v1930
      %v1932 = vpop.f32.mrf.mxu0
      %v1933 = vand.u32 %v1304, 4294901760
      %v1934 = vsub.f32 %v1304, %v1933
      %v1935 = vand.u32 %v1934, 4294901760
      %1936 = vmatprep.mubr.f32.mxu0 %v1935
      %v1937 = vand.u32 %v1302, 4294901760
      %v1938 = vsub.f32 %v1302, %v1937
      %v1939 = vand.u32 %v1938, 4294901760
      %1940 = vmatmul.mubr.f32.gmra.mxu0 %v1939
      %v1941 = vpop.f32.mrf.mxu0
      %v1942 = vadd.f32 %v1823, %v1941
      %v1943 = vpop.f32.mrf.mxu0
      %1944 = vdwg.mxu0
      %1945 = vmatprep.subr.mxu0 0.0
      %v1946 = vand.u32 %v1249, 4294901760
      %v1947 = vsub.f32 %v1249, %v1946
      %v1948 = vand.u32 %v1947, 4294901760
      %1949 = vmatpush1.msra.mxu0 %v1948
      %1950 = vmatprep.subr.mxu0 0.0
      %v1951 = vand.u32 %v1248, 4294901760
      %v1952 = vsub.f32 %v1248, %v1951
      %v1953 = vand.u32 %v1952, 4294901760
      %1954 = vmatpush1.msra.mxu0 %v1953
      %1955 = vmatprep.subr.mxu0 0.0
      %v1956 = vand.u32 %v1247, 4294901760
      %v1957 = vsub.f32 %v1247, %v1956
      %v1958 = vand.u32 %v1957, 4294901760
      %1959 = vmatpush1.msra.mxu0 %v1958
      %1960 = vmatprep.subr.mxu0 0.0
      %v1961 = vand.u32 %v1246, 4294901760
      %v1962 = vsub.f32 %v1246, %v1961
      %v1963 = vand.u32 %v1962, 4294901760
      %1964 = vmatpush1.msra.mxu0 %v1963
      %1965 = vmatprep.subr.mxu0 0.0
      %v1966 = vand.u32 %v1245, 4294901760
      %v1967 = vsub.f32 %v1245, %v1966
      %v1968 = vand.u32 %v1967, 4294901760
      %1969 = vmatpush1.msra.mxu0 %v1968
      %1970 = vmatprep.subr.mxu0 0.0
      %v1971 = vand.u32 %v1244, 4294901760
      %v1972 = vsub.f32 %v1244, %v1971
      %v1973 = vand.u32 %v1972, 4294901760
      %1974 = vmatpush1.msra.mxu0 %v1973
      %1975 = vmatprep.subr.mxu0 0.0
      %v1976 = vand.u32 %v1243, 4294901760
      %v1977 = vsub.f32 %v1243, %v1976
      %v1978 = vand.u32 %v1977, 4294901760
      %1979 = vmatpush1.msra.mxu0 %v1978
      %1980 = vmatprep.subr.mxu0 0.0
      %v1981 = vand.u32 %v1242, 4294901760
      %v1982 = vsub.f32 %v1242, %v1981
      %v1983 = vand.u32 %v1982, 4294901760
      %1984 = vmatpush1.msra.mxu0 %v1983
      %1985 = vmatprep.subr.mxu0 0.0
      %v1986 = vand.u32 %v1241, 4294901760
      %v1987 = vsub.f32 %v1241, %v1986
      %v1988 = vand.u32 %v1987, 4294901760
      %1989 = vmatpush1.msra.mxu0 %v1988
      %1990 = vmatprep.subr.mxu0 0.0
      %v1991 = vand.u32 %v1240, 4294901760
      %v1992 = vsub.f32 %v1240, %v1991
      %v1993 = vand.u32 %v1992, 4294901760
      %1994 = vmatpush1.msra.mxu0 %v1993
      %1995 = vmatprep.subr.mxu0 0.0
      %v1996 = vand.u32 %v1239, 4294901760
      %v1997 = vsub.f32 %v1239, %v1996
      %v1998 = vand.u32 %v1997, 4294901760
      %1999 = vmatpush1.msra.mxu0 %v1998
      %2000 = vmatprep.subr.mxu0 0.0
      %v2001 = vand.u32 %v1238, 4294901760
      %v2002 = vsub.f32 %v1238, %v2001
      %v2003 = vand.u32 %v2002, 4294901760
      %2004 = vmatpush1.msra.mxu0 %v2003
      %2005 = vmatprep.subr.mxu0 0.0
      %v2006 = vand.u32 %v1237, 4294901760
      %v2007 = vsub.f32 %v1237, %v2006
      %v2008 = vand.u32 %v2007, 4294901760
      %2009 = vmatpush1.msra.mxu0 %v2008
      %2010 = vmatprep.subr.mxu0 0.0
      %v2011 = vand.u32 %v1236, 4294901760
      %v2012 = vsub.f32 %v1236, %v2011
      %v2013 = vand.u32 %v2012, 4294901760
      %2014 = vmatpush1.msra.mxu0 %v2013
      %2015 = vmatprep.subr.mxu0 0.0
      %v2016 = vand.u32 %v1235, 4294901760
      %v2017 = vsub.f32 %v1235, %v2016
      %v2018 = vand.u32 %v2017, 4294901760
      %2019 = vmatpush1.msra.mxu0 %v2018
      %2020 = vmatprep.subr.mxu0 0.0
      %v2021 = vand.u32 %v1234, 4294901760
      %v2022 = vsub.f32 %v1234, %v2021
      %v2023 = vand.u32 %v2022, 4294901760
      %2024 = vmatpush1.msra.mxu0 %v2023
      %2025 = vmatprep.subr.mxu0 0.0
      %v2026 = vand.u32 %v1265, 4294901760
      %v2027 = vsub.f32 %v1265, %v2026
      %v2028 = vand.u32 %v2027, 4294901760
      %2029 = vmatpush2.msra.mxu0 %v2028
      %2030 = vmatprep.subr.mxu0 0.0
      %v2031 = vand.u32 %v1264, 4294901760
      %v2032 = vsub.f32 %v1264, %v2031
      %v2033 = vand.u32 %v2032, 4294901760
      %2034 = vmatpush2.msra.mxu0 %v2033
      %2035 = vmatprep.subr.mxu0 0.0
      %v2036 = vand.u32 %v1263, 4294901760
      %v2037 = vsub.f32 %v1263, %v2036
      %v2038 = vand.u32 %v2037, 4294901760
      %2039 = vmatpush2.msra.mxu0 %v2038
      %2040 = vmatprep.subr.mxu0 0.0
      %v2041 = vand.u32 %v1262, 4294901760
      %v2042 = vsub.f32 %v1262, %v2041
      %v2043 = vand.u32 %v2042, 4294901760
      %2044 = vmatpush2.msra.mxu0 %v2043
      %2045 = vmatprep.subr.mxu0 0.0
      %v2046 = vand.u32 %v1261, 4294901760
      %v2047 = vsub.f32 %v1261, %v2046
      %v2048 = vand.u32 %v2047, 4294901760
      %2049 = vmatpush2.msra.mxu0 %v2048
      %2050 = vmatprep.subr.mxu0 0.0
      %v2051 = vand.u32 %v1260, 4294901760
      %v2052 = vsub.f32 %v1260, %v2051
      %v2053 = vand.u32 %v2052, 4294901760
      %2054 = vmatpush2.msra.mxu0 %v2053
      %2055 = vmatprep.subr.mxu0 0.0
      %v2056 = vand.u32 %v1259, 4294901760
      %v2057 = vsub.f32 %v1259, %v2056
      %v2058 = vand.u32 %v2057, 4294901760
      %2059 = vmatpush2.msra.mxu0 %v2058
      %2060 = vmatprep.subr.mxu0 0.0
      %v2061 = vand.u32 %v1258, 4294901760
      %v2062 = vsub.f32 %v1258, %v2061
      %v2063 = vand.u32 %v2062, 4294901760
      %2064 = vmatpush2.msra.mxu0 %v2063
      %2065 = vmatprep.subr.mxu0 0.0
      %v2066 = vand.u32 %v1257, 4294901760
      %v2067 = vsub.f32 %v1257, %v2066
      %v2068 = vand.u32 %v2067, 4294901760
      %2069 = vmatpush2.msra.mxu0 %v2068
      %2070 = vmatprep.subr.mxu0 0.0
      %v2071 = vand.u32 %v1256, 4294901760
      %v2072 = vsub.f32 %v1256, %v2071
      %v2073 = vand.u32 %v2072, 4294901760
      %2074 = vmatpush2.msra.mxu0 %v2073
      %2075 = vmatprep.subr.mxu0 0.0
      %v2076 = vand.u32 %v1255, 4294901760
      %v2077 = vsub.f32 %v1255, %v2076
      %v2078 = vand.u32 %v2077, 4294901760
      %2079 = vmatpush2.msra.mxu0 %v2078
      %2080 = vmatprep.subr.mxu0 0.0
      %v2081 = vand.u32 %v1254, 4294901760
      %v2082 = vsub.f32 %v1254, %v2081
      %v2083 = vand.u32 %v2082, 4294901760
      %2084 = vmatpush2.msra.mxu0 %v2083
      %2085 = vmatprep.subr.mxu0 0.0
      %v2086 = vand.u32 %v1253, 4294901760
      %v2087 = vsub.f32 %v1253, %v2086
      %v2088 = vand.u32 %v2087, 4294901760
      %2089 = vmatpush2.msra.mxu0 %v2088
      %2090 = vmatprep.subr.mxu0 0.0
      %v2091 = vand.u32 %v1252, 4294901760
      %v2092 = vsub.f32 %v1252, %v2091
      %v2093 = vand.u32 %v2092, 4294901760
      %2094 = vmatpush2.msra.mxu0 %v2093
      %2095 = vmatprep.subr.mxu0 0.0
      %v2096 = vand.u32 %v1251, 4294901760
      %v2097 = vsub.f32 %v1251, %v2096
      %v2098 = vand.u32 %v2097, 4294901760
      %2099 = vmatpush2.msra.mxu0 %v2098
      %2100 = vmatprep.subr.mxu0 0.0
      %v2101 = vand.u32 %v1250, 4294901760
      %v2102 = vsub.f32 %v1250, %v2101
      %v2103 = vand.u32 %v2102, 4294901760
      %2104 = vmatpush2.msra.mxu0 %v2103
      %v2105 = vand.u32 %v1297, 4294901760
      %2106 = vmatprep.mubr.f32.mxu0 %v2105
      %v2107 = vand.u32 %v1294, 4294901760
      %2108 = vmatmul.mubr.f32.gmra.mxu0 %v2107
      %v2109 = vpop.f32.mrf.mxu0
      %v2110 = vadd.f32 %v1931, %v2109
      %v2111 = vpop.f32.mrf.mxu0
      %v2112 = vand.u32 %v1304, 4294901760
      %2113 = vmatprep.mubr.f32.mxu0 %v2112
      %v2114 = vand.u32 %v1302, 4294901760
      %2115 = vmatmul.mubr.f32.gmra.mxu0 %v2114
      %v2116 = vpop.f32.mrf.mxu0
      %v2117 = vadd.f32 %v1942, %v2116
      %v2118 = vpop.f32.mrf.mxu0
      %2119 = vdwg.mxu0
      %2120 = vmatprep.subr.mxu0 0.0
      %v2121 = vand.u32 %v1249, 4294901760
      %2122 = vmatpush1.msra.mxu0 %v2121
      %2123 = vmatprep.subr.mxu0 0.0
      %v2124 = vand.u32 %v1248, 4294901760
      %2125 = vmatpush1.msra.mxu0 %v2124
      %2126 = vmatprep.subr.mxu0 0.0
      %v2127 = vand.u32 %v1247, 4294901760
      %2128 = vmatpush1.msra.mxu0 %v2127
      %2129 = vmatprep.subr.mxu0 0.0
      %v2130 = vand.u32 %v1246, 4294901760
      %2131 = vmatpush1.msra.mxu0 %v2130
      %2132 = vmatprep.subr.mxu0 0.0
      %v2133 = vand.u32 %v1245, 4294901760
      %2134 = vmatpush1.msra.mxu0 %v2133
      %2135 = vmatprep.subr.mxu0 0.0
      %v2136 = vand.u32 %v1244, 4294901760
      %2137 = vmatpush1.msra.mxu0 %v2136
      %2138 = vmatprep.subr.mxu0 0.0
      %v2139 = vand.u32 %v1243, 4294901760
      %2140 = vmatpush1.msra.mxu0 %v2139
      %2141 = vmatprep.subr.mxu0 0.0
      %v2142 = vand.u32 %v1242, 4294901760
      %2143 = vmatpush1.msra.mxu0 %v2142
      %2144 = vmatprep.subr.mxu0 0.0
      %v2145 = vand.u32 %v1241, 4294901760
      %2146 = vmatpush1.msra.mxu0 %v2145
      %2147 = vmatprep.subr.mxu0 0.0
      %v2148 = vand.u32 %v1240, 4294901760
      %2149 = vmatpush1.msra.mxu0 %v2148
      %2150 = vmatprep.subr.mxu0 0.0
      %v2151 = vand.u32 %v1239, 4294901760
      %2152 = vmatpush1.msra.mxu0 %v2151
      %2153 = vmatprep.subr.mxu0 0.0
      %v2154 = vand.u32 %v1238, 4294901760
      %2155 = vmatpush1.msra.mxu0 %v2154
      %2156 = vmatprep.subr.mxu0 0.0
      %v2157 = vand.u32 %v1237, 4294901760
      %2158 = vmatpush1.msra.mxu0 %v2157
      %2159 = vmatprep.subr.mxu0 0.0
      %v2160 = vand.u32 %v1236, 4294901760
      %2161 = vmatpush1.msra.mxu0 %v2160
      %2162 = vmatprep.subr.mxu0 0.0
      %v2163 = vand.u32 %v1235, 4294901760
      %2164 = vmatpush1.msra.mxu0 %v2163
      %2165 = vmatprep.subr.mxu0 0.0
      %v2166 = vand.u32 %v1234, 4294901760
      %2167 = vmatpush1.msra.mxu0 %v2166
      %2168 = vmatprep.subr.mxu0 0.0
      %v2169 = vand.u32 %v1265, 4294901760
      %2170 = vmatpush2.msra.mxu0 %v2169
      %2171 = vmatprep.subr.mxu0 0.0
      %v2172 = vand.u32 %v1264, 4294901760
      %2173 = vmatpush2.msra.mxu0 %v2172
      %2174 = vmatprep.subr.mxu0 0.0
      %v2175 = vand.u32 %v1263, 4294901760
      %2176 = vmatpush2.msra.mxu0 %v2175
      %2177 = vmatprep.subr.mxu0 0.0
      %v2178 = vand.u32 %v1262, 4294901760
      %2179 = vmatpush2.msra.mxu0 %v2178
      %2180 = vmatprep.subr.mxu0 0.0
      %v2181 = vand.u32 %v1261, 4294901760
      %2182 = vmatpush2.msra.mxu0 %v2181
      %2183 = vmatprep.subr.mxu0 0.0
      %v2184 = vand.u32 %v1260, 4294901760
      %2185 = vmatpush2.msra.mxu0 %v2184
      %2186 = vmatprep.subr.mxu0 0.0
      %v2187 = vand.u32 %v1259, 4294901760
      %2188 = vmatpush2.msra.mxu0 %v2187
      %2189 = vmatprep.subr.mxu0 0.0
      %v2190 = vand.u32 %v1258, 4294901760
      %2191 = vmatpush2.msra.mxu0 %v2190
      %2192 = vmatprep.subr.mxu0 0.0
      %v2193 = vand.u32 %v1257, 4294901760
      %2194 = vmatpush2.msra.mxu0 %v2193
      %2195 = vmatprep.subr.mxu0 0.0
      %v2196 = vand.u32 %v1256, 4294901760
      %2197 = vmatpush2.msra.mxu0 %v2196
      %2198 = vmatprep.subr.mxu0 0.0
      %v2199 = vand.u32 %v1255, 4294901760
      %2200 = vmatpush2.msra.mxu0 %v2199
      %2201 = vmatprep.subr.mxu0 0.0
      %v2202 = vand.u32 %v1254, 4294901760
      %2203 = vmatpush2.msra.mxu0 %v2202
      %2204 = vmatprep.subr.mxu0 0.0
      %v2205 = vand.u32 %v1253, 4294901760
      %2206 = vmatpush2.msra.mxu0 %v2205
      %2207 = vmatprep.subr.mxu0 0.0
      %v2208 = vand.u32 %v1252, 4294901760
      %2209 = vmatpush2.msra.mxu0 %v2208
      %2210 = vmatprep.subr.mxu0 0.0
      %v2211 = vand.u32 %v1251, 4294901760
      %2212 = vmatpush2.msra.mxu0 %v2211
      %2213 = vmatprep.subr.mxu0 0.0
      %v2214 = vand.u32 %v1250, 4294901760
      %2215 = vmatpush2.msra.mxu0 %v2214
      %v2216 = vand.u32 %v1297, 4294901760
      %2217 = vmatprep.mubr.f32.mxu0 %v2216
      %v2218 = vand.u32 %v1294, 4294901760
      %2219 = vmatmul.mubr.f32.gmra.mxu0 %v2218
      %v2220 = vpop.f32.mrf.mxu0
      %v2221 = vadd.f32 %v2110, %v2220
      %v2222 = vpop.f32.mrf.mxu0
      %v2223 = vand.u32 %v1304, 4294901760
      %2224 = vmatprep.mubr.f32.mxu0 %v2223
      %v2225 = vand.u32 %v1302, 4294901760
      %2226 = vmatmul.mubr.f32.gmra.mxu0 %v2225
      %v2227 = vpop.f32.mrf.mxu0
      %v2228 = vadd.f32 %v2117, %v2227
      %v2229 = vpop.f32.mrf.mxu0
      %2230 = vdwg.mxu0
      %2231 = vmatprep.subr.mxu0 0.0
      %v2232 = vand.u32 %v1281, 4294901760
      %2233 = vmatpush1.msra.mxu0 %v2232
      %2234 = vmatprep.subr.mxu0 0.0
      %v2235 = vand.u32 %v1280, 4294901760
      %2236 = vmatpush1.msra.mxu0 %v2235
      %2237 = vmatprep.subr.mxu0 0.0
      %v2238 = vand.u32 %v1279, 4294901760
      %2239 = vmatpush1.msra.mxu0 %v2238
      %2240 = vmatprep.subr.mxu0 0.0
      %v2241 = vand.u32 %v1278, 4294901760
      %2242 = vmatpush1.msra.mxu0 %v2241
      %2243 = vmatprep.subr.mxu0 0.0
      %v2244 = vand.u32 %v1277, 4294901760
      %2245 = vmatpush1.msra.mxu0 %v2244
      %2246 = vmatprep.subr.mxu0 0.0
      %v2247 = vand.u32 %v1276, 4294901760
      %2248 = vmatpush1.msra.mxu0 %v2247
      %2249 = vmatprep.subr.mxu0 0.0
      %v2250 = vand.u32 %v1275, 4294901760
      %2251 = vmatpush1.msra.mxu0 %v2250
      %2252 = vmatprep.subr.mxu0 0.0
      %v2253 = vand.u32 %v1274, 4294901760
      %2254 = vmatpush1.msra.mxu0 %v2253
      %2255 = vmatprep.subr.mxu0 0.0
      %v2256 = vand.u32 %v1273, 4294901760
      %2257 = vmatpush1.msra.mxu0 %v2256
      %2258 = vmatprep.subr.mxu0 0.0
      %v2259 = vand.u32 %v1272, 4294901760
      %2260 = vmatpush1.msra.mxu0 %v2259
      %2261 = vmatprep.subr.mxu0 0.0
      %v2262 = vand.u32 %v1271, 4294901760
      %2263 = vmatpush1.msra.mxu0 %v2262
      %2264 = vmatprep.subr.mxu0 0.0
      %v2265 = vand.u32 %v1270, 4294901760
      %2266 = vmatpush1.msra.mxu0 %v2265
      %2267 = vmatprep.subr.mxu0 0.0
      %v2268 = vand.u32 %v1269, 4294901760
      %2269 = vmatpush1.msra.mxu0 %v2268
      %2270 = vmatprep.subr.mxu0 0.0
      %v2271 = vand.u32 %v1268, 4294901760
      %2272 = vmatpush1.msra.mxu0 %v2271
      %2273 = vmatprep.subr.mxu0 0.0
      %v2274 = vand.u32 %v1267, 4294901760
      %2275 = vmatpush1.msra.mxu0 %v2274
      %2276 = vmatprep.subr.mxu0 0.0
      %v2277 = vand.u32 %v1266, 4294901760
      %2278 = vmatpush1.msra.mxu0 %v2277
      %2279 = vmatprep.subr.mxu0 0.0
      %2280 = vmatpush2.msra.mxu0 0.0
      %2281 = vmatprep.subr.mxu0 0.0
      %2282 = vmatpush2.msra.mxu0 0.0
      %2283 = vmatprep.subr.mxu0 0.0
      %2284 = vmatpush2.msra.mxu0 0.0
      %2285 = vmatprep.subr.mxu0 0.0
      %2286 = vmatpush2.msra.mxu0 0.0
      %2287 = vmatprep.subr.mxu0 0.0
      %2288 = vmatpush2.msra.mxu0 0.0
      %2289 = vmatprep.subr.mxu0 0.0
      %2290 = vmatpush2.msra.mxu0 0.0
      %2291 = vmatprep.subr.mxu0 0.0
      %2292 = vmatpush2.msra.mxu0 0.0
      %2293 = vmatprep.subr.mxu0 0.0
      %2294 = vmatpush2.msra.mxu0 0.0
      %2295 = vmatprep.subr.mxu0 0.0
      %2296 = vmatpush2.msra.mxu0 0.0
      %2297 = vmatprep.subr.mxu0 0.0
      %2298 = vmatpush2.msra.mxu0 0.0
      %2299 = vmatprep.subr.mxu0 0.0
      %2300 = vmatpush2.msra.mxu0 0.0
      %2301 = vmatprep.subr.mxu0 0.0
      %2302 = vmatpush2.msra.mxu0 0.0
      %2303 = vmatprep.subr.mxu0 0.0
      %2304 = vmatpush2.msra.mxu0 0.0
      %2305 = vmatprep.subr.mxu0 0.0
      %2306 = vmatpush2.msra.mxu0 0.0
      %2307 = vmatprep.subr.mxu0 0.0
      %2308 = vmatpush2.msra.mxu0 0.0
      %2309 = vmatprep.subr.mxu0 0.0
      %2310 = vmatpush2.msra.mxu0 0.0
      %2311 = vmatprep.mubr.f32.mxu0 0.0
      %v2312 = vand.u32 %v1300, 4294901760
      %v2313 = vsub.f32 %v1300, %v2312
      %v2314 = vand.u32 %v2313, 4294901760
      %v2315 = vsub.f32 %v2313, %v2314
      %v2316 = vand.u32 %v2315, 4294901760
      %2317 = vmatmul.mubr.f32.gmra.mxu0 %v2316
      %v2318 = vpop.f32.mrf.mxu0
      %v2319 = vadd.f32 %v2221, %v2318
      %v2320 = vpop.f32.mrf.mxu0
      %2321 = vmatprep.mubr.f32.mxu0 0.0
      %v2322 = vand.u32 %v1306, 4294901760
      %v2323 = vsub.f32 %v1306, %v2322
      %v2324 = vand.u32 %v2323, 4294901760
      %v2325 = vsub.f32 %v2323, %v2324
      %v2326 = vand.u32 %v2325, 4294901760
      %2327 = vmatmul.mubr.f32.gmra.mxu0 %v2326
      %v2328 = vpop.f32.mrf.mxu0
      %v2329 = vadd.f32 %v2228, %v2328
      %v2330 = vpop.f32.mrf.mxu0
      %2331 = vdwg.mxu0
      %2332 = vmatprep.subr.mxu0 0.0
      %v2333 = vand.u32 %v1281, 4294901760
      %v2334 = vsub.f32 %v1281, %v2333
      %v2335 = vand.u32 %v2334, 4294901760
      %v2336 = vsub.f32 %v2334, %v2335
      %v2337 = vand.u32 %v2336, 4294901760
      %2338 = vmatpush1.msra.mxu0 %v2337
      %2339 = vmatprep.subr.mxu0 0.0
      %v2340 = vand.u32 %v1280, 4294901760
      %v2341 = vsub.f32 %v1280, %v2340
      %v2342 = vand.u32 %v2341, 4294901760
      %v2343 = vsub.f32 %v2341, %v2342
      %v2344 = vand.u32 %v2343, 4294901760
      %2345 = vmatpush1.msra.mxu0 %v2344
      %2346 = vmatprep.subr.mxu0 0.0
      %v2347 = vand.u32 %v1279, 4294901760
      %v2348 = vsub.f32 %v1279, %v2347
      %v2349 = vand.u32 %v2348, 4294901760
      %v2350 = vsub.f32 %v2348, %v2349
      %v2351 = vand.u32 %v2350, 4294901760
      %2352 = vmatpush1.msra.mxu0 %v2351
      %2353 = vmatprep.subr.mxu0 0.0
      %v2354 = vand.u32 %v1278, 4294901760
      %v2355 = vsub.f32 %v1278, %v2354
      %v2356 = vand.u32 %v2355, 4294901760
      %v2357 = vsub.f32 %v2355, %v2356
      %v2358 = vand.u32 %v2357, 4294901760
      %2359 = vmatpush1.msra.mxu0 %v2358
      %2360 = vmatprep.subr.mxu0 0.0
      %v2361 = vand.u32 %v1277, 4294901760
      %v2362 = vsub.f32 %v1277, %v2361
      %v2363 = vand.u32 %v2362, 4294901760
      %v2364 = vsub.f32 %v2362, %v2363
      %v2365 = vand.u32 %v2364, 4294901760
      %2366 = vmatpush1.msra.mxu0 %v2365
      %2367 = vmatprep.subr.mxu0 0.0
      %v2368 = vand.u32 %v1276, 4294901760
      %v2369 = vsub.f32 %v1276, %v2368
      %v2370 = vand.u32 %v2369, 4294901760
      %v2371 = vsub.f32 %v2369, %v2370
      %v2372 = vand.u32 %v2371, 4294901760
      %2373 = vmatpush1.msra.mxu0 %v2372
      %2374 = vmatprep.subr.mxu0 0.0
      %v2375 = vand.u32 %v1275, 4294901760
      %v2376 = vsub.f32 %v1275, %v2375
      %v2377 = vand.u32 %v2376, 4294901760
      %v2378 = vsub.f32 %v2376, %v2377
      %v2379 = vand.u32 %v2378, 4294901760
      %2380 = vmatpush1.msra.mxu0 %v2379
      %2381 = vmatprep.subr.mxu0 0.0
      %v2382 = vand.u32 %v1274, 4294901760
      %v2383 = vsub.f32 %v1274, %v2382
      %v2384 = vand.u32 %v2383, 4294901760
      %v2385 = vsub.f32 %v2383, %v2384
      %v2386 = vand.u32 %v2385, 4294901760
      %2387 = vmatpush1.msra.mxu0 %v2386
      %2388 = vmatprep.subr.mxu0 0.0
      %v2389 = vand.u32 %v1273, 4294901760
      %v2390 = vsub.f32 %v1273, %v2389
      %v2391 = vand.u32 %v2390, 4294901760
      %v2392 = vsub.f32 %v2390, %v2391
      %v2393 = vand.u32 %v2392, 4294901760
      %2394 = vmatpush1.msra.mxu0 %v2393
      %2395 = vmatprep.subr.mxu0 0.0
      %v2396 = vand.u32 %v1272, 4294901760
      %v2397 = vsub.f32 %v1272, %v2396
      %v2398 = vand.u32 %v2397, 4294901760
      %v2399 = vsub.f32 %v2397, %v2398
      %v2400 = vand.u32 %v2399, 4294901760
      %2401 = vmatpush1.msra.mxu0 %v2400
      %2402 = vmatprep.subr.mxu0 0.0
      %v2403 = vand.u32 %v1271, 4294901760
      %v2404 = vsub.f32 %v1271, %v2403
      %v2405 = vand.u32 %v2404, 4294901760
      %v2406 = vsub.f32 %v2404, %v2405
      %v2407 = vand.u32 %v2406, 4294901760
      %2408 = vmatpush1.msra.mxu0 %v2407
      %2409 = vmatprep.subr.mxu0 0.0
      %v2410 = vand.u32 %v1270, 4294901760
      %v2411 = vsub.f32 %v1270, %v2410
      %v2412 = vand.u32 %v2411, 4294901760
      %v2413 = vsub.f32 %v2411, %v2412
      %v2414 = vand.u32 %v2413, 4294901760
      %2415 = vmatpush1.msra.mxu0 %v2414
      %2416 = vmatprep.subr.mxu0 0.0
      %v2417 = vand.u32 %v1269, 4294901760
      %v2418 = vsub.f32 %v1269, %v2417
      %v2419 = vand.u32 %v2418, 4294901760
      %v2420 = vsub.f32 %v2418, %v2419
      %v2421 = vand.u32 %v2420, 4294901760
      %2422 = vmatpush1.msra.mxu0 %v2421
      %2423 = vmatprep.subr.mxu0 0.0
      %v2424 = vand.u32 %v1268, 4294901760
      %v2425 = vsub.f32 %v1268, %v2424
      %v2426 = vand.u32 %v2425, 4294901760
      %v2427 = vsub.f32 %v2425, %v2426
      %v2428 = vand.u32 %v2427, 4294901760
      %2429 = vmatpush1.msra.mxu0 %v2428
      %2430 = vmatprep.subr.mxu0 0.0
      %v2431 = vand.u32 %v1267, 4294901760
      %v2432 = vsub.f32 %v1267, %v2431
      %v2433 = vand.u32 %v2432, 4294901760
      %v2434 = vsub.f32 %v2432, %v2433
      %v2435 = vand.u32 %v2434, 4294901760
      %2436 = vmatpush1.msra.mxu0 %v2435
      %2437 = vmatprep.subr.mxu0 0.0
      %v2438 = vand.u32 %v1266, 4294901760
      %v2439 = vsub.f32 %v1266, %v2438
      %v2440 = vand.u32 %v2439, 4294901760
      %v2441 = vsub.f32 %v2439, %v2440
      %v2442 = vand.u32 %v2441, 4294901760
      %2443 = vmatpush1.msra.mxu0 %v2442
      %2444 = vmatprep.subr.mxu0 0.0
      %2445 = vmatpush2.msra.mxu0 0.0
      %2446 = vmatprep.subr.mxu0 0.0
      %2447 = vmatpush2.msra.mxu0 0.0
      %2448 = vmatprep.subr.mxu0 0.0
      %2449 = vmatpush2.msra.mxu0 0.0
      %2450 = vmatprep.subr.mxu0 0.0
      %2451 = vmatpush2.msra.mxu0 0.0
      %2452 = vmatprep.subr.mxu0 0.0
      %2453 = vmatpush2.msra.mxu0 0.0
      %2454 = vmatprep.subr.mxu0 0.0
      %2455 = vmatpush2.msra.mxu0 0.0
      %2456 = vmatprep.subr.mxu0 0.0
      %2457 = vmatpush2.msra.mxu0 0.0
      %2458 = vmatprep.subr.mxu0 0.0
      %2459 = vmatpush2.msra.mxu0 0.0
      %2460 = vmatprep.subr.mxu0 0.0
      %2461 = vmatpush2.msra.mxu0 0.0
      %2462 = vmatprep.subr.mxu0 0.0
      %2463 = vmatpush2.msra.mxu0 0.0
      %2464 = vmatprep.subr.mxu0 0.0
      %2465 = vmatpush2.msra.mxu0 0.0
      %2466 = vmatprep.subr.mxu0 0.0
      %2467 = vmatpush2.msra.mxu0 0.0
      %2468 = vmatprep.subr.mxu0 0.0
      %2469 = vmatpush2.msra.mxu0 0.0
      %2470 = vmatprep.subr.mxu0 0.0
      %2471 = vmatpush2.msra.mxu0 0.0
      %2472 = vmatprep.subr.mxu0 0.0
      %2473 = vmatpush2.msra.mxu0 0.0
      %2474 = vmatprep.subr.mxu0 0.0
      %2475 = vmatpush2.msra.mxu0 0.0
      %2476 = vmatprep.mubr.f32.mxu0 0.0
      %v2477 = vand.u32 %v1300, 4294901760
      %2478 = vmatmul.mubr.f32.gmra.mxu0 %v2477
      %v2479 = vpop.f32.mrf.mxu0
      %v2480 = vadd.f32 %v2319, %v2479
      %v2481 = vpop.f32.mrf.mxu0
      %2482 = vmatprep.mubr.f32.mxu0 0.0
      %v2483 = vand.u32 %v1306, 4294901760
      %2484 = vmatmul.mubr.f32.gmra.mxu0 %v2483
      %v2485 = vpop.f32.mrf.mxu0
      %v2486 = vadd.f32 %v2329, %v2485
      %v2487 = vpop.f32.mrf.mxu0
      %2488 = vdwg.mxu0
      %2489 = vmatprep.subr.mxu0 0.0
      %v2490 = vand.u32 %v1281, 4294901760
      %v2491 = vsub.f32 %v1281, %v2490
      %2492 = vmatpush1.msra.mxu0 %v2491
      %2493 = vmatprep.subr.mxu0 0.0
      %v2494 = vand.u32 %v1280, 4294901760
      %v2495 = vsub.f32 %v1280, %v2494
      %2496 = vmatpush1.msra.mxu0 %v2495
      %2497 = vmatprep.subr.mxu0 0.0
      %v2498 = vand.u32 %v1279, 4294901760
      %v2499 = vsub.f32 %v1279, %v2498
      %2500 = vmatpush1.msra.mxu0 %v2499
      %2501 = vmatprep.subr.mxu0 0.0
      %v2502 = vand.u32 %v1278, 4294901760
      %v2503 = vsub.f32 %v1278, %v2502
      %2504 = vmatpush1.msra.mxu0 %v2503
      %2505 = vmatprep.subr.mxu0 0.0
      %v2506 = vand.u32 %v1277, 4294901760
      %v2507 = vsub.f32 %v1277, %v2506
      %2508 = vmatpush1.msra.mxu0 %v2507
      %2509 = vmatprep.subr.mxu0 0.0
      %v2510 = vand.u32 %v1276, 4294901760
      %v2511 = vsub.f32 %v1276, %v2510
      %2512 = vmatpush1.msra.mxu0 %v2511
      %2513 = vmatprep.subr.mxu0 0.0
      %v2514 = vand.u32 %v1275, 4294901760
      %v2515 = vsub.f32 %v1275, %v2514
      %2516 = vmatpush1.msra.mxu0 %v2515
      %2517 = vmatprep.subr.mxu0 0.0
      %v2518 = vand.u32 %v1274, 4294901760
      %v2519 = vsub.f32 %v1274, %v2518
      %2520 = vmatpush1.msra.mxu0 %v2519
      %2521 = vmatprep.subr.mxu0 0.0
      %v2522 = vand.u32 %v1273, 4294901760
      %v2523 = vsub.f32 %v1273, %v2522
      %2524 = vmatpush1.msra.mxu0 %v2523
      %2525 = vmatprep.subr.mxu0 0.0
      %v2526 = vand.u32 %v1272, 4294901760
      %v2527 = vsub.f32 %v1272, %v2526
      %2528 = vmatpush1.msra.mxu0 %v2527
      %2529 = vmatprep.subr.mxu0 0.0
      %v2530 = vand.u32 %v1271, 4294901760
      %v2531 = vsub.f32 %v1271, %v2530
      %2532 = vmatpush1.msra.mxu0 %v2531
      %2533 = vmatprep.subr.mxu0 0.0
      %v2534 = vand.u32 %v1270, 4294901760
      %v2535 = vsub.f32 %v1270, %v2534
      %2536 = vmatpush1.msra.mxu0 %v2535
      %2537 = vmatprep.subr.mxu0 0.0
      %v2538 = vand.u32 %v1269, 4294901760
      %v2539 = vsub.f32 %v1269, %v2538
      %2540 = vmatpush1.msra.mxu0 %v2539
      %2541 = vmatprep.subr.mxu0 0.0
      %v2542 = vand.u32 %v1268, 4294901760
      %v2543 = vsub.f32 %v1268, %v2542
      %2544 = vmatpush1.msra.mxu0 %v2543
      %2545 = vmatprep.subr.mxu0 0.0
      %v2546 = vand.u32 %v1267, 4294901760
      %v2547 = vsub.f32 %v1267, %v2546
      %2548 = vmatpush1.msra.mxu0 %v2547
      %2549 = vmatprep.subr.mxu0 0.0
      %v2550 = vand.u32 %v1266, 4294901760
      %v2551 = vsub.f32 %v1266, %v2550
      %2552 = vmatpush1.msra.mxu0 %v2551
      %2553 = vmatprep.subr.mxu0 0.0
      %2554 = vmatpush2.msra.mxu0 0.0
      %2555 = vmatprep.subr.mxu0 0.0
      %2556 = vmatpush2.msra.mxu0 0.0
      %2557 = vmatprep.subr.mxu0 0.0
      %2558 = vmatpush2.msra.mxu0 0.0
      %2559 = vmatprep.subr.mxu0 0.0
      %2560 = vmatpush2.msra.mxu0 0.0
      %2561 = vmatprep.subr.mxu0 0.0
      %2562 = vmatpush2.msra.mxu0 0.0
      %2563 = vmatprep.subr.mxu0 0.0
      %2564 = vmatpush2.msra.mxu0 0.0
      %2565 = vmatprep.subr.mxu0 0.0
      %2566 = vmatpush2.msra.mxu0 0.0
      %2567 = vmatprep.subr.mxu0 0.0
      %2568 = vmatpush2.msra.mxu0 0.0
      %2569 = vmatprep.subr.mxu0 0.0
      %2570 = vmatpush2.msra.mxu0 0.0
      %2571 = vmatprep.subr.mxu0 0.0
      %2572 = vmatpush2.msra.mxu0 0.0
      %2573 = vmatprep.subr.mxu0 0.0
      %2574 = vmatpush2.msra.mxu0 0.0
      %2575 = vmatprep.subr.mxu0 0.0
      %2576 = vmatpush2.msra.mxu0 0.0
      %2577 = vmatprep.subr.mxu0 0.0
      %2578 = vmatpush2.msra.mxu0 0.0
      %2579 = vmatprep.subr.mxu0 0.0
      %2580 = vmatpush2.msra.mxu0 0.0
      %2581 = vmatprep.subr.mxu0 0.0
      %2582 = vmatpush2.msra.mxu0 0.0
      %2583 = vmatprep.subr.mxu0 0.0
      %2584 = vmatpush2.msra.mxu0 0.0
      %2585 = vmatprep.mubr.f32.mxu0 0.0
      %v2586 = vand.u32 %v1300, 4294901760
      %v2587 = vsub.f32 %v1300, %v2586
      %2588 = vmatmul.mubr.f32.gmra.mxu0 %v2587
      %v2589 = vpop.f32.mrf.mxu0
      %v2590 = vadd.f32 %v2480, %v2589
      %v2591 = vpop.f32.mrf.mxu0
      %2592 = vmatprep.mubr.f32.mxu0 0.0
      %v2593 = vand.u32 %v1306, 4294901760
      %v2594 = vsub.f32 %v1306, %v2593
      %2595 = vmatmul.mubr.f32.gmra.mxu0 %v2594
      %v2596 = vpop.f32.mrf.mxu0
      %v2597 = vadd.f32 %v2486, %v2596
      %v2598 = vpop.f32.mrf.mxu0
      %2599 = vdwg.mxu0
      %2600 = vmatprep.subr.mxu0 0.0
      %v2601 = vand.u32 %v1281, 4294901760
      %2602 = vmatpush1.msra.mxu0 %v2601
      %2603 = vmatprep.subr.mxu0 0.0
      %v2604 = vand.u32 %v1280, 4294901760
      %2605 = vmatpush1.msra.mxu0 %v2604
      %2606 = vmatprep.subr.mxu0 0.0
      %v2607 = vand.u32 %v1279, 4294901760
      %2608 = vmatpush1.msra.mxu0 %v2607
      %2609 = vmatprep.subr.mxu0 0.0
      %v2610 = vand.u32 %v1278, 4294901760
      %2611 = vmatpush1.msra.mxu0 %v2610
      %2612 = vmatprep.subr.mxu0 0.0
      %v2613 = vand.u32 %v1277, 4294901760
      %2614 = vmatpush1.msra.mxu0 %v2613
      %2615 = vmatprep.subr.mxu0 0.0
      %v2616 = vand.u32 %v1276, 4294901760
      %2617 = vmatpush1.msra.mxu0 %v2616
      %2618 = vmatprep.subr.mxu0 0.0
      %v2619 = vand.u32 %v1275, 4294901760
      %2620 = vmatpush1.msra.mxu0 %v2619
      %2621 = vmatprep.subr.mxu0 0.0
      %v2622 = vand.u32 %v1274, 4294901760
      %2623 = vmatpush1.msra.mxu0 %v2622
      %2624 = vmatprep.subr.mxu0 0.0
      %v2625 = vand.u32 %v1273, 4294901760
      %2626 = vmatpush1.msra.mxu0 %v2625
      %2627 = vmatprep.subr.mxu0 0.0
      %v2628 = vand.u32 %v1272, 4294901760
      %2629 = vmatpush1.msra.mxu0 %v2628
      %2630 = vmatprep.subr.mxu0 0.0
      %v2631 = vand.u32 %v1271, 4294901760
      %2632 = vmatpush1.msra.mxu0 %v2631
      %2633 = vmatprep.subr.mxu0 0.0
      %v2634 = vand.u32 %v1270, 4294901760
      %2635 = vmatpush1.msra.mxu0 %v2634
      %2636 = vmatprep.subr.mxu0 0.0
      %v2637 = vand.u32 %v1269, 4294901760
      %2638 = vmatpush1.msra.mxu0 %v2637
      %2639 = vmatprep.subr.mxu0 0.0
      %v2640 = vand.u32 %v1268, 4294901760
      %2641 = vmatpush1.msra.mxu0 %v2640
      %2642 = vmatprep.subr.mxu0 0.0
      %v2643 = vand.u32 %v1267, 4294901760
      %2644 = vmatpush1.msra.mxu0 %v2643
      %2645 = vmatprep.subr.mxu0 0.0
      %v2646 = vand.u32 %v1266, 4294901760
      %2647 = vmatpush1.msra.mxu0 %v2646
      %2648 = vmatprep.subr.mxu0 0.0
      %2649 = vmatpush2.msra.mxu0 0.0
      %2650 = vmatprep.subr.mxu0 0.0
      %2651 = vmatpush2.msra.mxu0 0.0
      %2652 = vmatprep.subr.mxu0 0.0
      %2653 = vmatpush2.msra.mxu0 0.0
      %2654 = vmatprep.subr.mxu0 0.0
      %2655 = vmatpush2.msra.mxu0 0.0
      %2656 = vmatprep.subr.mxu0 0.0
      %2657 = vmatpush2.msra.mxu0 0.0
      %2658 = vmatprep.subr.mxu0 0.0
      %2659 = vmatpush2.msra.mxu0 0.0
      %2660 = vmatprep.subr.mxu0 0.0
      %2661 = vmatpush2.msra.mxu0 0.0
      %2662 = vmatprep.subr.mxu0 0.0
      %2663 = vmatpush2.msra.mxu0 0.0
      %2664 = vmatprep.subr.mxu0 0.0
      %2665 = vmatpush2.msra.mxu0 0.0
      %2666 = vmatprep.subr.mxu0 0.0
      %2667 = vmatpush2.msra.mxu0 0.0
      %2668 = vmatprep.subr.mxu0 0.0
      %2669 = vmatpush2.msra.mxu0 0.0
      %2670 = vmatprep.subr.mxu0 0.0
      %2671 = vmatpush2.msra.mxu0 0.0
      %2672 = vmatprep.subr.mxu0 0.0
      %2673 = vmatpush2.msra.mxu0 0.0
      %2674 = vmatprep.subr.mxu0 0.0
      %2675 = vmatpush2.msra.mxu0 0.0
      %2676 = vmatprep.subr.mxu0 0.0
      %2677 = vmatpush2.msra.mxu0 0.0
      %2678 = vmatprep.subr.mxu0 0.0
      %2679 = vmatpush2.msra.mxu0 0.0
      %2680 = vmatprep.mubr.f32.mxu0 0.0
      %v2681 = vand.u32 %v1300, 4294901760
      %v2682 = vsub.f32 %v1300, %v2681
      %v2683 = vand.u32 %v2682, 4294901760
      %2684 = vmatmul.mubr.f32.gmra.mxu0 %v2683
      %v2685 = vpop.f32.mrf.mxu0
      %v2686 = vadd.f32 %v2590, %v2685
      %v2687 = vpop.f32.mrf.mxu0
      %2688 = vmatprep.mubr.f32.mxu0 0.0
      %v2689 = vand.u32 %v1306, 4294901760
      %v2690 = vsub.f32 %v1306, %v2689
      %v2691 = vand.u32 %v2690, 4294901760
      %2692 = vmatmul.mubr.f32.gmra.mxu0 %v2691
      %v2693 = vpop.f32.mrf.mxu0
      %v2694 = vadd.f32 %v2597, %v2693
      %v2695 = vpop.f32.mrf.mxu0
      %2696 = vdwg.mxu0
      %2697 = vmatprep.subr.mxu0 0.0
      %v2698 = vand.u32 %v1281, 4294901760
      %v2699 = vsub.f32 %v1281, %v2698
      %v2700 = vand.u32 %v2699, 4294901760
      %2701 = vmatpush1.msra.mxu0 %v2700
      %2702 = vmatprep.subr.mxu0 0.0
      %v2703 = vand.u32 %v1280, 4294901760
      %v2704 = vsub.f32 %v1280, %v2703
      %v2705 = vand.u32 %v2704, 4294901760
      %2706 = vmatpush1.msra.mxu0 %v2705
      %2707 = vmatprep.subr.mxu0 0.0
      %v2708 = vand.u32 %v1279, 4294901760
      %v2709 = vsub.f32 %v1279, %v2708
      %v2710 = vand.u32 %v2709, 4294901760
      %2711 = vmatpush1.msra.mxu0 %v2710
      %2712 = vmatprep.subr.mxu0 0.0
      %v2713 = vand.u32 %v1278, 4294901760
      %v2714 = vsub.f32 %v1278, %v2713
      %v2715 = vand.u32 %v2714, 4294901760
      %2716 = vmatpush1.msra.mxu0 %v2715
      %2717 = vmatprep.subr.mxu0 0.0
      %v2718 = vand.u32 %v1277, 4294901760
      %v2719 = vsub.f32 %v1277, %v2718
      %v2720 = vand.u32 %v2719, 4294901760
      %2721 = vmatpush1.msra.mxu0 %v2720
      %2722 = vmatprep.subr.mxu0 0.0
      %v2723 = vand.u32 %v1276, 4294901760
      %v2724 = vsub.f32 %v1276, %v2723
      %v2725 = vand.u32 %v2724, 4294901760
      %2726 = vmatpush1.msra.mxu0 %v2725
      %2727 = vmatprep.subr.mxu0 0.0
      %v2728 = vand.u32 %v1275, 4294901760
      %v2729 = vsub.f32 %v1275, %v2728
      %v2730 = vand.u32 %v2729, 4294901760
      %2731 = vmatpush1.msra.mxu0 %v2730
      %2732 = vmatprep.subr.mxu0 0.0
      %v2733 = vand.u32 %v1274, 4294901760
      %v2734 = vsub.f32 %v1274, %v2733
      %v2735 = vand.u32 %v2734, 4294901760
      %2736 = vmatpush1.msra.mxu0 %v2735
      %2737 = vmatprep.subr.mxu0 0.0
      %v2738 = vand.u32 %v1273, 4294901760
      %v2739 = vsub.f32 %v1273, %v2738
      %v2740 = vand.u32 %v2739, 4294901760
      %2741 = vmatpush1.msra.mxu0 %v2740
      %2742 = vmatprep.subr.mxu0 0.0
      %v2743 = vand.u32 %v1272, 4294901760
      %v2744 = vsub.f32 %v1272, %v2743
      %v2745 = vand.u32 %v2744, 4294901760
      %2746 = vmatpush1.msra.mxu0 %v2745
      %2747 = vmatprep.subr.mxu0 0.0
      %v2748 = vand.u32 %v1271, 4294901760
      %v2749 = vsub.f32 %v1271, %v2748
      %v2750 = vand.u32 %v2749, 4294901760
      %2751 = vmatpush1.msra.mxu0 %v2750
      %2752 = vmatprep.subr.mxu0 0.0
      %v2753 = vand.u32 %v1270, 4294901760
      %v2754 = vsub.f32 %v1270, %v2753
      %v2755 = vand.u32 %v2754, 4294901760
      %2756 = vmatpush1.msra.mxu0 %v2755
      %2757 = vmatprep.subr.mxu0 0.0
      %v2758 = vand.u32 %v1269, 4294901760
      %v2759 = vsub.f32 %v1269, %v2758
      %v2760 = vand.u32 %v2759, 4294901760
      %2761 = vmatpush1.msra.mxu0 %v2760
      %2762 = vmatprep.subr.mxu0 0.0
      %v2763 = vand.u32 %v1268, 4294901760
      %v2764 = vsub.f32 %v1268, %v2763
      %v2765 = vand.u32 %v2764, 4294901760
      %2766 = vmatpush1.msra.mxu0 %v2765
      %2767 = vmatprep.subr.mxu0 0.0
      %v2768 = vand.u32 %v1267, 4294901760
      %v2769 = vsub.f32 %v1267, %v2768
      %v2770 = vand.u32 %v2769, 4294901760
      %2771 = vmatpush1.msra.mxu0 %v2770
      %2772 = vmatprep.subr.mxu0 0.0
      %v2773 = vand.u32 %v1266, 4294901760
      %v2774 = vsub.f32 %v1266, %v2773
      %v2775 = vand.u32 %v2774, 4294901760
      %2776 = vmatpush1.msra.mxu0 %v2775
      %2777 = vmatprep.subr.mxu0 0.0
      %2778 = vmatpush2.msra.mxu0 0.0
      %2779 = vmatprep.subr.mxu0 0.0
      %2780 = vmatpush2.msra.mxu0 0.0
      %2781 = vmatprep.subr.mxu0 0.0
      %2782 = vmatpush2.msra.mxu0 0.0
      %2783 = vmatprep.subr.mxu0 0.0
      %2784 = vmatpush2.msra.mxu0 0.0
      %2785 = vmatprep.subr.mxu0 0.0
      %2786 = vmatpush2.msra.mxu0 0.0
      %2787 = vmatprep.subr.mxu0 0.0
      %2788 = vmatpush2.msra.mxu0 0.0
      %2789 = vmatprep.subr.mxu0 0.0
      %2790 = vmatpush2.msra.mxu0 0.0
      %2791 = vmatprep.subr.mxu0 0.0
      %2792 = vmatpush2.msra.mxu0 0.0
      %2793 = vmatprep.subr.mxu0 0.0
      %2794 = vmatpush2.msra.mxu0 0.0
      %2795 = vmatprep.subr.mxu0 0.0
      %2796 = vmatpush2.msra.mxu0 0.0
      %2797 = vmatprep.subr.mxu0 0.0
      %2798 = vmatpush2.msra.mxu0 0.0
      %2799 = vmatprep.subr.mxu0 0.0
      %2800 = vmatpush2.msra.mxu0 0.0
      %2801 = vmatprep.subr.mxu0 0.0
      %2802 = vmatpush2.msra.mxu0 0.0
      %2803 = vmatprep.subr.mxu0 0.0
      %2804 = vmatpush2.msra.mxu0 0.0
      %2805 = vmatprep.subr.mxu0 0.0
      %2806 = vmatpush2.msra.mxu0 0.0
      %2807 = vmatprep.subr.mxu0 0.0
      %2808 = vmatpush2.msra.mxu0 0.0
      %2809 = vmatprep.mubr.f32.mxu0 0.0
      %v2810 = vand.u32 %v1300, 4294901760
      %2811 = vmatmul.mubr.f32.gmra.mxu0 %v2810
      %v2812 = vpop.f32.mrf.mxu0
      %v2813 = vadd.f32 %v2686, %v2812
      %v2814 = vpop.f32.mrf.mxu0
      %2815 = vmatprep.mubr.f32.mxu0 0.0
      %v2816 = vand.u32 %v1306, 4294901760
      %2817 = vmatmul.mubr.f32.gmra.mxu0 %v2816
      %v2818 = vpop.f32.mrf.mxu0
      %v2819 = vadd.f32 %v2694, %v2818
      %v2820 = vpop.f32.mrf.mxu0
      %2821 = vdwg.mxu0
      %2822 = vmatprep.subr.mxu0 0.0
      %v2823 = vand.u32 %v1281, 4294901760
      %2824 = vmatpush1.msra.mxu0 %v2823
      %2825 = vmatprep.subr.mxu0 0.0
      %v2826 = vand.u32 %v1280, 4294901760
      %2827 = vmatpush1.msra.mxu0 %v2826
      %2828 = vmatprep.subr.mxu0 0.0
      %v2829 = vand.u32 %v1279, 4294901760
      %2830 = vmatpush1.msra.mxu0 %v2829
      %2831 = vmatprep.subr.mxu0 0.0
      %v2832 = vand.u32 %v1278, 4294901760
      %2833 = vmatpush1.msra.mxu0 %v2832
      %2834 = vmatprep.subr.mxu0 0.0
      %v2835 = vand.u32 %v1277, 4294901760
      %2836 = vmatpush1.msra.mxu0 %v2835
      %2837 = vmatprep.subr.mxu0 0.0
      %v2838 = vand.u32 %v1276, 4294901760
      %2839 = vmatpush1.msra.mxu0 %v2838
      %2840 = vmatprep.subr.mxu0 0.0
      %v2841 = vand.u32 %v1275, 4294901760
      %2842 = vmatpush1.msra.mxu0 %v2841
      %2843 = vmatprep.subr.mxu0 0.0
      %v2844 = vand.u32 %v1274, 4294901760
      %2845 = vmatpush1.msra.mxu0 %v2844
      %2846 = vmatprep.subr.mxu0 0.0
      %v2847 = vand.u32 %v1273, 4294901760
      %2848 = vmatpush1.msra.mxu0 %v2847
      %2849 = vmatprep.subr.mxu0 0.0
      %v2850 = vand.u32 %v1272, 4294901760
      %2851 = vmatpush1.msra.mxu0 %v2850
      %2852 = vmatprep.subr.mxu0 0.0
      %v2853 = vand.u32 %v1271, 4294901760
      %2854 = vmatpush1.msra.mxu0 %v2853
      %2855 = vmatprep.subr.mxu0 0.0
      %v2856 = vand.u32 %v1270, 4294901760
      %2857 = vmatpush1.msra.mxu0 %v2856
      %2858 = vmatprep.subr.mxu0 0.0
      %v2859 = vand.u32 %v1269, 4294901760
      %2860 = vmatpush1.msra.mxu0 %v2859
      %2861 = vmatprep.subr.mxu0 0.0
      %v2862 = vand.u32 %v1268, 4294901760
      %2863 = vmatpush1.msra.mxu0 %v2862
      %2864 = vmatprep.subr.mxu0 0.0
      %v2865 = vand.u32 %v1267, 4294901760
      %2866 = vmatpush1.msra.mxu0 %v2865
      %2867 = vmatprep.subr.mxu0 0.0
      %v2868 = vand.u32 %v1266, 4294901760
      %2869 = vmatpush1.msra.mxu0 %v2868
      %2870 = vmatprep.subr.mxu0 0.0
      %2871 = vmatpush2.msra.mxu0 0.0
      %2872 = vmatprep.subr.mxu0 0.0
      %2873 = vmatpush2.msra.mxu0 0.0
      %2874 = vmatprep.subr.mxu0 0.0
      %2875 = vmatpush2.msra.mxu0 0.0
      %2876 = vmatprep.subr.mxu0 0.0
      %2877 = vmatpush2.msra.mxu0 0.0
      %2878 = vmatprep.subr.mxu0 0.0
      %2879 = vmatpush2.msra.mxu0 0.0
      %2880 = vmatprep.subr.mxu0 0.0
      %2881 = vmatpush2.msra.mxu0 0.0
      %2882 = vmatprep.subr.mxu0 0.0
      %2883 = vmatpush2.msra.mxu0 0.0
      %2884 = vmatprep.subr.mxu0 0.0
      %2885 = vmatpush2.msra.mxu0 0.0
      %2886 = vmatprep.subr.mxu0 0.0
      %2887 = vmatpush2.msra.mxu0 0.0
      %2888 = vmatprep.subr.mxu0 0.0
      %2889 = vmatpush2.msra.mxu0 0.0
      %2890 = vmatprep.subr.mxu0 0.0
      %2891 = vmatpush2.msra.mxu0 0.0
      %2892 = vmatprep.subr.mxu0 0.0
      %2893 = vmatpush2.msra.mxu0 0.0
      %2894 = vmatprep.subr.mxu0 0.0
      %2895 = vmatpush2.msra.mxu0 0.0
      %2896 = vmatprep.subr.mxu0 0.0
      %2897 = vmatpush2.msra.mxu0 0.0
      %2898 = vmatprep.subr.mxu0 0.0
      %2899 = vmatpush2.msra.mxu0 0.0
      %2900 = vmatprep.subr.mxu0 0.0
      %2901 = vmatpush2.msra.mxu0 0.0
      %2902 = vmatprep.mubr.f32.mxu0 0.0
      %v2903 = vand.u32 %v1300, 4294901760
      %2904 = vmatmul.mubr.f32.gmra.mxu0 %v2903
      %v2905 = vpop.f32.mrf.mxu0
      %v2906 = vadd.f32 %v2813, %v2905
      %v2907 = vpop.f32.mrf.mxu0
      %2908 = vmatprep.mubr.f32.mxu0 0.0
      %v2909 = vand.u32 %v1306, 4294901760
      %2910 = vmatmul.mubr.f32.gmra.mxu0 %v2909
      %v2911 = vpop.f32.mrf.mxu0
      %v2912 = vadd.f32 %v2819, %v2911
      %v2913 = vpop.f32.mrf.mxu0
      %2914 = vdwg.mxu0
      %2915 = vmatprep.subr.mxu0 0.0
      %v2916 = vand.u32 %v1194, 4294901760
      %2917 = vmatpush1.msra.mxu0 %v2916
      %2918 = vmatprep.subr.mxu0 0.0
      %v2919 = vand.u32 %v1193, 4294901760
      %2920 = vmatpush1.msra.mxu0 %v2919
      %2921 = vmatprep.subr.mxu0 0.0
      %v2922 = vand.u32 %v1192, 4294901760
      %2923 = vmatpush1.msra.mxu0 %v2922
      %2924 = vmatprep.subr.mxu0 0.0
      %v2925 = vand.u32 %v1191, 4294901760
      %2926 = vmatpush1.msra.mxu0 %v2925
      %2927 = vmatprep.subr.mxu0 0.0
      %v2928 = vand.u32 %v1190, 4294901760
      %2929 = vmatpush1.msra.mxu0 %v2928
      %2930 = vmatprep.subr.mxu0 0.0
      %v2931 = vand.u32 %v1189, 4294901760
      %2932 = vmatpush1.msra.mxu0 %v2931
      %2933 = vmatprep.subr.mxu0 0.0
      %v2934 = vand.u32 %v1188, 4294901760
      %2935 = vmatpush1.msra.mxu0 %v2934
      %2936 = vmatprep.subr.mxu0 0.0
      %v2937 = vand.u32 %v1187, 4294901760
      %2938 = vmatpush1.msra.mxu0 %v2937
      %2939 = vmatprep.subr.mxu0 0.0
      %v2940 = vand.u32 %v1186, 4294901760
      %2941 = vmatpush1.msra.mxu0 %v2940
      %2942 = vmatprep.subr.mxu0 0.0
      %v2943 = vand.u32 %v1185, 4294901760
      %2944 = vmatpush1.msra.mxu0 %v2943
      %2945 = vmatprep.subr.mxu0 0.0
      %v2946 = vand.u32 %v1184, 4294901760
      %2947 = vmatpush1.msra.mxu0 %v2946
      %2948 = vmatprep.subr.mxu0 0.0
      %v2949 = vand.u32 %v1183, 4294901760
      %2950 = vmatpush1.msra.mxu0 %v2949
      %2951 = vmatprep.subr.mxu0 0.0
      %v2952 = vand.u32 %v1182, 4294901760
      %2953 = vmatpush1.msra.mxu0 %v2952
      %2954 = vmatprep.subr.mxu0 0.0
      %v2955 = vand.u32 %v1181, 4294901760
      %2956 = vmatpush1.msra.mxu0 %v2955
      %2957 = vmatprep.subr.mxu0 0.0
      %v2958 = vand.u32 %v1180, 4294901760
      %2959 = vmatpush1.msra.mxu0 %v2958
      %2960 = vmatprep.subr.mxu0 0.0
      %v2961 = vand.u32 %v1179, 4294901760
      %2962 = vmatpush1.msra.mxu0 %v2961
      %2963 = vmatprep.subr.mxu0 0.0
      %v2964 = vand.u32 %v1210, 4294901760
      %2965 = vmatpush2.msra.mxu0 %v2964
      %2966 = vmatprep.subr.mxu0 0.0
      %v2967 = vand.u32 %v1209, 4294901760
      %2968 = vmatpush2.msra.mxu0 %v2967
      %2969 = vmatprep.subr.mxu0 0.0
      %v2970 = vand.u32 %v1208, 4294901760
      %2971 = vmatpush2.msra.mxu0 %v2970
      %2972 = vmatprep.subr.mxu0 0.0
      %v2973 = vand.u32 %v1207, 4294901760
      %2974 = vmatpush2.msra.mxu0 %v2973
      %2975 = vmatprep.subr.mxu0 0.0
      %v2976 = vand.u32 %v1206, 4294901760
      %2977 = vmatpush2.msra.mxu0 %v2976
      %2978 = vmatprep.subr.mxu0 0.0
      %v2979 = vand.u32 %v1205, 4294901760
      %2980 = vmatpush2.msra.mxu0 %v2979
      %2981 = vmatprep.subr.mxu0 0.0
      %v2982 = vand.u32 %v1204, 4294901760
      %2983 = vmatpush2.msra.mxu0 %v2982
      %2984 = vmatprep.subr.mxu0 0.0
      %v2985 = vand.u32 %v1203, 4294901760
      %2986 = vmatpush2.msra.mxu0 %v2985
      %2987 = vmatprep.subr.mxu0 0.0
      %v2988 = vand.u32 %v1202, 4294901760
      %2989 = vmatpush2.msra.mxu0 %v2988
      %2990 = vmatprep.subr.mxu0 0.0
      %v2991 = vand.u32 %v1201, 4294901760
      %2992 = vmatpush2.msra.mxu0 %v2991
      %2993 = vmatprep.subr.mxu0 0.0
      %v2994 = vand.u32 %v1200, 4294901760
      %2995 = vmatpush2.msra.mxu0 %v2994
      %2996 = vmatprep.subr.mxu0 0.0
      %v2997 = vand.u32 %v1199, 4294901760
      %2998 = vmatpush2.msra.mxu0 %v2997
      %2999 = vmatprep.subr.mxu0 0.0
      %v3000 = vand.u32 %v1198, 4294901760
      %3001 = vmatpush2.msra.mxu0 %v3000
      %3002 = vmatprep.subr.mxu0 0.0
      %v3003 = vand.u32 %v1197, 4294901760
      %3004 = vmatpush2.msra.mxu0 %v3003
      %3005 = vmatprep.subr.mxu0 0.0
      %v3006 = vand.u32 %v1196, 4294901760
      %3007 = vmatpush2.msra.mxu0 %v3006
      %3008 = vmatprep.subr.mxu0 0.0
      %v3009 = vand.u32 %v1195, 4294901760
      %3010 = vmatpush2.msra.mxu0 %v3009
      %v3011 = vand.u32 %v1174, 4294901760
      %v3012 = vsub.f32 %v1174, %v3011
      %v3013 = vand.u32 %v3012, 4294901760
      %v3014 = vsub.f32 %v3012, %v3013
      %v3015 = vand.u32 %v3014, 4294901760
      %3016 = vmatprep.mubr.f32.mxu0 %v3015
      %v3017 = vand.u32 %v1173, 4294901760
      %v3018 = vsub.f32 %v1173, %v3017
      %v3019 = vand.u32 %v3018, 4294901760
      %v3020 = vsub.f32 %v3018, %v3019
      %v3021 = vand.u32 %v3020, 4294901760
      %3022 = vmatmul.mubr.f32.gmra.mxu0 %v3021
      %v3023 = vpop.f32.mrf.mxu0
      %v3024 = vadd.f32 %v2906, %v3023
      %v3025 = vpop.f32.mrf.mxu0
      %v3026 = vand.u32 %v1177, 4294901760
      %v3027 = vsub.f32 %v1177, %v3026
      %v3028 = vand.u32 %v3027, 4294901760
      %v3029 = vsub.f32 %v3027, %v3028
      %v3030 = vand.u32 %v3029, 4294901760
      %3031 = vmatprep.mubr.f32.mxu0 %v3030
      %v3032 = vand.u32 %v1176, 4294901760
      %v3033 = vsub.f32 %v1176, %v3032
      %v3034 = vand.u32 %v3033, 4294901760
      %v3035 = vsub.f32 %v3033, %v3034
      %v3036 = vand.u32 %v3035, 4294901760
      %3037 = vmatmul.mubr.f32.gmra.mxu0 %v3036
      %v3038 = vpop.f32.mrf.mxu0
      %v3039 = vadd.f32 %v2912, %v3038
      %v3040 = vpop.f32.mrf.mxu0
      %3041 = vdwg.mxu0
      %3042 = vmatprep.subr.mxu0 0.0
      %v3043 = vand.u32 %v1194, 4294901760
      %v3044 = vsub.f32 %v1194, %v3043
      %v3045 = vand.u32 %v3044, 4294901760
      %v3046 = vsub.f32 %v3044, %v3045
      %v3047 = vand.u32 %v3046, 4294901760
      %3048 = vmatpush1.msra.mxu0 %v3047
      %3049 = vmatprep.subr.mxu0 0.0
      %v3050 = vand.u32 %v1193, 4294901760
      %v3051 = vsub.f32 %v1193, %v3050
      %v3052 = vand.u32 %v3051, 4294901760
      %v3053 = vsub.f32 %v3051, %v3052
      %v3054 = vand.u32 %v3053, 4294901760
      %3055 = vmatpush1.msra.mxu0 %v3054
      %3056 = vmatprep.subr.mxu0 0.0
      %v3057 = vand.u32 %v1192, 4294901760
      %v3058 = vsub.f32 %v1192, %v3057
      %v3059 = vand.u32 %v3058, 4294901760
      %v3060 = vsub.f32 %v3058, %v3059
      %v3061 = vand.u32 %v3060, 4294901760
      %3062 = vmatpush1.msra.mxu0 %v3061
      %3063 = vmatprep.subr.mxu0 0.0
      %v3064 = vand.u32 %v1191, 4294901760
      %v3065 = vsub.f32 %v1191, %v3064
      %v3066 = vand.u32 %v3065, 4294901760
      %v3067 = vsub.f32 %v3065, %v3066
      %v3068 = vand.u32 %v3067, 4294901760
      %3069 = vmatpush1.msra.mxu0 %v3068
      %3070 = vmatprep.subr.mxu0 0.0
      %v3071 = vand.u32 %v1190, 4294901760
      %v3072 = vsub.f32 %v1190, %v3071
      %v3073 = vand.u32 %v3072, 4294901760
      %v3074 = vsub.f32 %v3072, %v3073
      %v3075 = vand.u32 %v3074, 4294901760
      %3076 = vmatpush1.msra.mxu0 %v3075
      %3077 = vmatprep.subr.mxu0 0.0
      %v3078 = vand.u32 %v1189, 4294901760
      %v3079 = vsub.f32 %v1189, %v3078
      %v3080 = vand.u32 %v3079, 4294901760
      %v3081 = vsub.f32 %v3079, %v3080
      %v3082 = vand.u32 %v3081, 4294901760
      %3083 = vmatpush1.msra.mxu0 %v3082
      %3084 = vmatprep.subr.mxu0 0.0
      %v3085 = vand.u32 %v1188, 4294901760
      %v3086 = vsub.f32 %v1188, %v3085
      %v3087 = vand.u32 %v3086, 4294901760
      %v3088 = vsub.f32 %v3086, %v3087
      %v3089 = vand.u32 %v3088, 4294901760
      %3090 = vmatpush1.msra.mxu0 %v3089
      %3091 = vmatprep.subr.mxu0 0.0
      %v3092 = vand.u32 %v1187, 4294901760
      %v3093 = vsub.f32 %v1187, %v3092
      %v3094 = vand.u32 %v3093, 4294901760
      %v3095 = vsub.f32 %v3093, %v3094
      %v3096 = vand.u32 %v3095, 4294901760
      %3097 = vmatpush1.msra.mxu0 %v3096
      %3098 = vmatprep.subr.mxu0 0.0
      %v3099 = vand.u32 %v1186, 4294901760
      %v3100 = vsub.f32 %v1186, %v3099
      %v3101 = vand.u32 %v3100, 4294901760
      %v3102 = vsub.f32 %v3100, %v3101
      %v3103 = vand.u32 %v3102, 4294901760
      %3104 = vmatpush1.msra.mxu0 %v3103
      %3105 = vmatprep.subr.mxu0 0.0
      %v3106 = vand.u32 %v1185, 4294901760
      %v3107 = vsub.f32 %v1185, %v3106
      %v3108 = vand.u32 %v3107, 4294901760
      %v3109 = vsub.f32 %v3107, %v3108
      %v3110 = vand.u32 %v3109, 4294901760
      %3111 = vmatpush1.msra.mxu0 %v3110
      %3112 = vmatprep.subr.mxu0 0.0
      %v3113 = vand.u32 %v1184, 4294901760
      %v3114 = vsub.f32 %v1184, %v3113
      %v3115 = vand.u32 %v3114, 4294901760
      %v3116 = vsub.f32 %v3114, %v3115
      %v3117 = vand.u32 %v3116, 4294901760
      %3118 = vmatpush1.msra.mxu0 %v3117
      %3119 = vmatprep.subr.mxu0 0.0
      %v3120 = vand.u32 %v1183, 4294901760
      %v3121 = vsub.f32 %v1183, %v3120
      %v3122 = vand.u32 %v3121, 4294901760
      %v3123 = vsub.f32 %v3121, %v3122
      %v3124 = vand.u32 %v3123, 4294901760
      %3125 = vmatpush1.msra.mxu0 %v3124
      %3126 = vmatprep.subr.mxu0 0.0
      %v3127 = vand.u32 %v1182, 4294901760
      %v3128 = vsub.f32 %v1182, %v3127
      %v3129 = vand.u32 %v3128, 4294901760
      %v3130 = vsub.f32 %v3128, %v3129
      %v3131 = vand.u32 %v3130, 4294901760
      %3132 = vmatpush1.msra.mxu0 %v3131
      %3133 = vmatprep.subr.mxu0 0.0
      %v3134 = vand.u32 %v1181, 4294901760
      %v3135 = vsub.f32 %v1181, %v3134
      %v3136 = vand.u32 %v3135, 4294901760
      %v3137 = vsub.f32 %v3135, %v3136
      %v3138 = vand.u32 %v3137, 4294901760
      %3139 = vmatpush1.msra.mxu0 %v3138
      %3140 = vmatprep.subr.mxu0 0.0
      %v3141 = vand.u32 %v1180, 4294901760
      %v3142 = vsub.f32 %v1180, %v3141
      %v3143 = vand.u32 %v3142, 4294901760
      %v3144 = vsub.f32 %v3142, %v3143
      %v3145 = vand.u32 %v3144, 4294901760
      %3146 = vmatpush1.msra.mxu0 %v3145
      %3147 = vmatprep.subr.mxu0 0.0
      %v3148 = vand.u32 %v1179, 4294901760
      %v3149 = vsub.f32 %v1179, %v3148
      %v3150 = vand.u32 %v3149, 4294901760
      %v3151 = vsub.f32 %v3149, %v3150
      %v3152 = vand.u32 %v3151, 4294901760
      %3153 = vmatpush1.msra.mxu0 %v3152
      %3154 = vmatprep.subr.mxu0 0.0
      %v3155 = vand.u32 %v1210, 4294901760
      %v3156 = vsub.f32 %v1210, %v3155
      %v3157 = vand.u32 %v3156, 4294901760
      %v3158 = vsub.f32 %v3156, %v3157
      %v3159 = vand.u32 %v3158, 4294901760
      %3160 = vmatpush2.msra.mxu0 %v3159
      %3161 = vmatprep.subr.mxu0 0.0
      %v3162 = vand.u32 %v1209, 4294901760
      %v3163 = vsub.f32 %v1209, %v3162
      %v3164 = vand.u32 %v3163, 4294901760
      %v3165 = vsub.f32 %v3163, %v3164
      %v3166 = vand.u32 %v3165, 4294901760
      %3167 = vmatpush2.msra.mxu0 %v3166
      %3168 = vmatprep.subr.mxu0 0.0
      %v3169 = vand.u32 %v1208, 4294901760
      %v3170 = vsub.f32 %v1208, %v3169
      %v3171 = vand.u32 %v3170, 4294901760
      %v3172 = vsub.f32 %v3170, %v3171
      %v3173 = vand.u32 %v3172, 4294901760
      %3174 = vmatpush2.msra.mxu0 %v3173
      %3175 = vmatprep.subr.mxu0 0.0
      %v3176 = vand.u32 %v1207, 4294901760
      %v3177 = vsub.f32 %v1207, %v3176
      %v3178 = vand.u32 %v3177, 4294901760
      %v3179 = vsub.f32 %v3177, %v3178
      %v3180 = vand.u32 %v3179, 4294901760
      %3181 = vmatpush2.msra.mxu0 %v3180
      %3182 = vmatprep.subr.mxu0 0.0
      %v3183 = vand.u32 %v1206, 4294901760
      %v3184 = vsub.f32 %v1206, %v3183
      %v3185 = vand.u32 %v3184, 4294901760
      %v3186 = vsub.f32 %v3184, %v3185
      %v3187 = vand.u32 %v3186, 4294901760
      %3188 = vmatpush2.msra.mxu0 %v3187
      %3189 = vmatprep.subr.mxu0 0.0
      %v3190 = vand.u32 %v1205, 4294901760
      %v3191 = vsub.f32 %v1205, %v3190
      %v3192 = vand.u32 %v3191, 4294901760
      %v3193 = vsub.f32 %v3191, %v3192
      %v3194 = vand.u32 %v3193, 4294901760
      %3195 = vmatpush2.msra.mxu0 %v3194
      %3196 = vmatprep.subr.mxu0 0.0
      %v3197 = vand.u32 %v1204, 4294901760
      %v3198 = vsub.f32 %v1204, %v3197
      %v3199 = vand.u32 %v3198, 4294901760
      %v3200 = vsub.f32 %v3198, %v3199
      %v3201 = vand.u32 %v3200, 4294901760
      %3202 = vmatpush2.msra.mxu0 %v3201
      %3203 = vmatprep.subr.mxu0 0.0
      %v3204 = vand.u32 %v1203, 4294901760
      %v3205 = vsub.f32 %v1203, %v3204
      %v3206 = vand.u32 %v3205, 4294901760
      %v3207 = vsub.f32 %v3205, %v3206
      %v3208 = vand.u32 %v3207, 4294901760
      %3209 = vmatpush2.msra.mxu0 %v3208
      %3210 = vmatprep.subr.mxu0 0.0
      %v3211 = vand.u32 %v1202, 4294901760
      %v3212 = vsub.f32 %v1202, %v3211
      %v3213 = vand.u32 %v3212, 4294901760
      %v3214 = vsub.f32 %v3212, %v3213
      %v3215 = vand.u32 %v3214, 4294901760
      %3216 = vmatpush2.msra.mxu0 %v3215
      %3217 = vmatprep.subr.mxu0 0.0
      %v3218 = vand.u32 %v1201, 4294901760
      %v3219 = vsub.f32 %v1201, %v3218
      %v3220 = vand.u32 %v3219, 4294901760
      %v3221 = vsub.f32 %v3219, %v3220
      %v3222 = vand.u32 %v3221, 4294901760
      %3223 = vmatpush2.msra.mxu0 %v3222
      %3224 = vmatprep.subr.mxu0 0.0
      %v3225 = vand.u32 %v1200, 4294901760
      %v3226 = vsub.f32 %v1200, %v3225
      %v3227 = vand.u32 %v3226, 4294901760
      %v3228 = vsub.f32 %v3226, %v3227
      %v3229 = vand.u32 %v3228, 4294901760
      %3230 = vmatpush2.msra.mxu0 %v3229
      %3231 = vmatprep.subr.mxu0 0.0
      %v3232 = vand.u32 %v1199, 4294901760
      %v3233 = vsub.f32 %v1199, %v3232
      %v3234 = vand.u32 %v3233, 4294901760
      %v3235 = vsub.f32 %v3233, %v3234
      %v3236 = vand.u32 %v3235, 4294901760
      %3237 = vmatpush2.msra.mxu0 %v3236
      %3238 = vmatprep.subr.mxu0 0.0
      %v3239 = vand.u32 %v1198, 4294901760
      %v3240 = vsub.f32 %v1198, %v3239
      %v3241 = vand.u32 %v3240, 4294901760
      %v3242 = vsub.f32 %v3240, %v3241
      %v3243 = vand.u32 %v3242, 4294901760
      %3244 = vmatpush2.msra.mxu0 %v3243
      %3245 = vmatprep.subr.mxu0 0.0
      %v3246 = vand.u32 %v1197, 4294901760
      %v3247 = vsub.f32 %v1197, %v3246
      %v3248 = vand.u32 %v3247, 4294901760
      %v3249 = vsub.f32 %v3247, %v3248
      %v3250 = vand.u32 %v3249, 4294901760
      %3251 = vmatpush2.msra.mxu0 %v3250
      %3252 = vmatprep.subr.mxu0 0.0
      %v3253 = vand.u32 %v1196, 4294901760
      %v3254 = vsub.f32 %v1196, %v3253
      %v3255 = vand.u32 %v3254, 4294901760
      %v3256 = vsub.f32 %v3254, %v3255
      %v3257 = vand.u32 %v3256, 4294901760
      %3258 = vmatpush2.msra.mxu0 %v3257
      %3259 = vmatprep.subr.mxu0 0.0
      %v3260 = vand.u32 %v1195, 4294901760
      %v3261 = vsub.f32 %v1195, %v3260
      %v3262 = vand.u32 %v3261, 4294901760
      %v3263 = vsub.f32 %v3261, %v3262
      %v3264 = vand.u32 %v3263, 4294901760
      %3265 = vmatpush2.msra.mxu0 %v3264
      %v3266 = vand.u32 %v1174, 4294901760
      %3267 = vmatprep.mubr.f32.mxu0 %v3266
      %v3268 = vand.u32 %v1173, 4294901760
      %3269 = vmatmul.mubr.f32.gmra.mxu0 %v3268
      %v3270 = vpop.f32.mrf.mxu0
      %v3271 = vadd.f32 %v3024, %v3270
      %v3272 = vpop.f32.mrf.mxu0
      %v3273 = vand.u32 %v1177, 4294901760
      %3274 = vmatprep.mubr.f32.mxu0 %v3273
      %v3275 = vand.u32 %v1176, 4294901760
      %3276 = vmatmul.mubr.f32.gmra.mxu0 %v3275
      %v3277 = vpop.f32.mrf.mxu0
      %v3278 = vadd.f32 %v3039, %v3277
      %v3279 = vpop.f32.mrf.mxu0
      %3280 = vdwg.mxu0
      %3281 = vmatprep.subr.mxu0 0.0
      %v3282 = vand.u32 %v1194, 4294901760
      %v3283 = vsub.f32 %v1194, %v3282
      %3284 = vmatpush1.msra.mxu0 %v3283
      %3285 = vmatprep.subr.mxu0 0.0
      %v3286 = vand.u32 %v1193, 4294901760
      %v3287 = vsub.f32 %v1193, %v3286
      %3288 = vmatpush1.msra.mxu0 %v3287
      %3289 = vmatprep.subr.mxu0 0.0
      %v3290 = vand.u32 %v1192, 4294901760
      %v3291 = vsub.f32 %v1192, %v3290
      %3292 = vmatpush1.msra.mxu0 %v3291
      %3293 = vmatprep.subr.mxu0 0.0
      %v3294 = vand.u32 %v1191, 4294901760
      %v3295 = vsub.f32 %v1191, %v3294
      %3296 = vmatpush1.msra.mxu0 %v3295
      %3297 = vmatprep.subr.mxu0 0.0
      %v3298 = vand.u32 %v1190, 4294901760
      %v3299 = vsub.f32 %v1190, %v3298
      %3300 = vmatpush1.msra.mxu0 %v3299
      %3301 = vmatprep.subr.mxu0 0.0
      %v3302 = vand.u32 %v1189, 4294901760
      %v3303 = vsub.f32 %v1189, %v3302
      %3304 = vmatpush1.msra.mxu0 %v3303
      %3305 = vmatprep.subr.mxu0 0.0
      %v3306 = vand.u32 %v1188, 4294901760
      %v3307 = vsub.f32 %v1188, %v3306
      %3308 = vmatpush1.msra.mxu0 %v3307
      %3309 = vmatprep.subr.mxu0 0.0
      %v3310 = vand.u32 %v1187, 4294901760
      %v3311 = vsub.f32 %v1187, %v3310
      %3312 = vmatpush1.msra.mxu0 %v3311
      %3313 = vmatprep.subr.mxu0 0.0
      %v3314 = vand.u32 %v1186, 4294901760
      %v3315 = vsub.f32 %v1186, %v3314
      %3316 = vmatpush1.msra.mxu0 %v3315
      %3317 = vmatprep.subr.mxu0 0.0
      %v3318 = vand.u32 %v1185, 4294901760
      %v3319 = vsub.f32 %v1185, %v3318
      %3320 = vmatpush1.msra.mxu0 %v3319
      %3321 = vmatprep.subr.mxu0 0.0
      %v3322 = vand.u32 %v1184, 4294901760
      %v3323 = vsub.f32 %v1184, %v3322
      %3324 = vmatpush1.msra.mxu0 %v3323
      %3325 = vmatprep.subr.mxu0 0.0
      %v3326 = vand.u32 %v1183, 4294901760
      %v3327 = vsub.f32 %v1183, %v3326
      %3328 = vmatpush1.msra.mxu0 %v3327
      %3329 = vmatprep.subr.mxu0 0.0
      %v3330 = vand.u32 %v1182, 4294901760
      %v3331 = vsub.f32 %v1182, %v3330
      %3332 = vmatpush1.msra.mxu0 %v3331
      %3333 = vmatprep.subr.mxu0 0.0
      %v3334 = vand.u32 %v1181, 4294901760
      %v3335 = vsub.f32 %v1181, %v3334
      %3336 = vmatpush1.msra.mxu0 %v3335
      %3337 = vmatprep.subr.mxu0 0.0
      %v3338 = vand.u32 %v1180, 4294901760
      %v3339 = vsub.f32 %v1180, %v3338
      %3340 = vmatpush1.msra.mxu0 %v3339
      %3341 = vmatprep.subr.mxu0 0.0
      %v3342 = vand.u32 %v1179, 4294901760
      %v3343 = vsub.f32 %v1179, %v3342
      %3344 = vmatpush1.msra.mxu0 %v3343
      %3345 = vmatprep.subr.mxu0 0.0
      %v3346 = vand.u32 %v1210, 4294901760
      %v3347 = vsub.f32 %v1210, %v3346
      %3348 = vmatpush2.msra.mxu0 %v3347
      %3349 = vmatprep.subr.mxu0 0.0
      %v3350 = vand.u32 %v1209, 4294901760
      %v3351 = vsub.f32 %v1209, %v3350
      %3352 = vmatpush2.msra.mxu0 %v3351
      %3353 = vmatprep.subr.mxu0 0.0
      %v3354 = vand.u32 %v1208, 4294901760
      %v3355 = vsub.f32 %v1208, %v3354
      %3356 = vmatpush2.msra.mxu0 %v3355
      %3357 = vmatprep.subr.mxu0 0.0
      %v3358 = vand.u32 %v1207, 4294901760
      %v3359 = vsub.f32 %v1207, %v3358
      %3360 = vmatpush2.msra.mxu0 %v3359
      %3361 = vmatprep.subr.mxu0 0.0
      %v3362 = vand.u32 %v1206, 4294901760
      %v3363 = vsub.f32 %v1206, %v3362
      %3364 = vmatpush2.msra.mxu0 %v3363
      %3365 = vmatprep.subr.mxu0 0.0
      %v3366 = vand.u32 %v1205, 4294901760
      %v3367 = vsub.f32 %v1205, %v3366
      %3368 = vmatpush2.msra.mxu0 %v3367
      %3369 = vmatprep.subr.mxu0 0.0
      %v3370 = vand.u32 %v1204, 4294901760
      %v3371 = vsub.f32 %v1204, %v3370
      %3372 = vmatpush2.msra.mxu0 %v3371
      %3373 = vmatprep.subr.mxu0 0.0
      %v3374 = vand.u32 %v1203, 4294901760
      %v3375 = vsub.f32 %v1203, %v3374
      %3376 = vmatpush2.msra.mxu0 %v3375
      %3377 = vmatprep.subr.mxu0 0.0
      %v3378 = vand.u32 %v1202, 4294901760
      %v3379 = vsub.f32 %v1202, %v3378
      %3380 = vmatpush2.msra.mxu0 %v3379
      %3381 = vmatprep.subr.mxu0 0.0
      %v3382 = vand.u32 %v1201, 4294901760
      %v3383 = vsub.f32 %v1201, %v3382
      %3384 = vmatpush2.msra.mxu0 %v3383
      %3385 = vmatprep.subr.mxu0 0.0
      %v3386 = vand.u32 %v1200, 4294901760
      %v3387 = vsub.f32 %v1200, %v3386
      %3388 = vmatpush2.msra.mxu0 %v3387
      %3389 = vmatprep.subr.mxu0 0.0
      %v3390 = vand.u32 %v1199, 4294901760
      %v3391 = vsub.f32 %v1199, %v3390
      %3392 = vmatpush2.msra.mxu0 %v3391
      %3393 = vmatprep.subr.mxu0 0.0
      %v3394 = vand.u32 %v1198, 4294901760
      %v3395 = vsub.f32 %v1198, %v3394
      %3396 = vmatpush2.msra.mxu0 %v3395
      %3397 = vmatprep.subr.mxu0 0.0
      %v3398 = vand.u32 %v1197, 4294901760
      %v3399 = vsub.f32 %v1197, %v3398
      %3400 = vmatpush2.msra.mxu0 %v3399
      %3401 = vmatprep.subr.mxu0 0.0
      %v3402 = vand.u32 %v1196, 4294901760
      %v3403 = vsub.f32 %v1196, %v3402
      %3404 = vmatpush2.msra.mxu0 %v3403
      %3405 = vmatprep.subr.mxu0 0.0
      %v3406 = vand.u32 %v1195, 4294901760
      %v3407 = vsub.f32 %v1195, %v3406
      %3408 = vmatpush2.msra.mxu0 %v3407
      %v3409 = vand.u32 %v1174, 4294901760
      %v3410 = vsub.f32 %v1174, %v3409
      %3411 = vmatprep.mubr.f32.mxu0 %v3410
      %v3412 = vand.u32 %v1173, 4294901760
      %v3413 = vsub.f32 %v1173, %v3412
      %3414 = vmatmul.mubr.f32.gmra.mxu0 %v3413
      %v3415 = vpop.f32.mrf.mxu0
      %v3416 = vadd.f32 %v3271, %v3415
      %v3417 = vpop.f32.mrf.mxu0
      %v3418 = vand.u32 %v1177, 4294901760
      %v3419 = vsub.f32 %v1177, %v3418
      %3420 = vmatprep.mubr.f32.mxu0 %v3419
      %v3421 = vand.u32 %v1176, 4294901760
      %v3422 = vsub.f32 %v1176, %v3421
      %3423 = vmatmul.mubr.f32.gmra.mxu0 %v3422
      %v3424 = vpop.f32.mrf.mxu0
      %v3425 = vadd.f32 %v3278, %v3424
      %v3426 = vpop.f32.mrf.mxu0
      %3427 = vdwg.mxu0
      %3428 = vmatprep.subr.mxu0 0.0
      %v3429 = vand.u32 %v1194, 4294901760
      %3430 = vmatpush1.msra.mxu0 %v3429
      %3431 = vmatprep.subr.mxu0 0.0
      %v3432 = vand.u32 %v1193, 4294901760
      %3433 = vmatpush1.msra.mxu0 %v3432
      %3434 = vmatprep.subr.mxu0 0.0
      %v3435 = vand.u32 %v1192, 4294901760
      %3436 = vmatpush1.msra.mxu0 %v3435
      %3437 = vmatprep.subr.mxu0 0.0
      %v3438 = vand.u32 %v1191, 4294901760
      %3439 = vmatpush1.msra.mxu0 %v3438
      %3440 = vmatprep.subr.mxu0 0.0
      %v3441 = vand.u32 %v1190, 4294901760
      %3442 = vmatpush1.msra.mxu0 %v3441
      %3443 = vmatprep.subr.mxu0 0.0
      %v3444 = vand.u32 %v1189, 4294901760
      %3445 = vmatpush1.msra.mxu0 %v3444
      %3446 = vmatprep.subr.mxu0 0.0
      %v3447 = vand.u32 %v1188, 4294901760
      %3448 = vmatpush1.msra.mxu0 %v3447
      %3449 = vmatprep.subr.mxu0 0.0
      %v3450 = vand.u32 %v1187, 4294901760
      %3451 = vmatpush1.msra.mxu0 %v3450
      %3452 = vmatprep.subr.mxu0 0.0
      %v3453 = vand.u32 %v1186, 4294901760
      %3454 = vmatpush1.msra.mxu0 %v3453
      %3455 = vmatprep.subr.mxu0 0.0
      %v3456 = vand.u32 %v1185, 4294901760
      %3457 = vmatpush1.msra.mxu0 %v3456
      %3458 = vmatprep.subr.mxu0 0.0
      %v3459 = vand.u32 %v1184, 4294901760
      %3460 = vmatpush1.msra.mxu0 %v3459
      %3461 = vmatprep.subr.mxu0 0.0
      %v3462 = vand.u32 %v1183, 4294901760
      %3463 = vmatpush1.msra.mxu0 %v3462
      %3464 = vmatprep.subr.mxu0 0.0
      %v3465 = vand.u32 %v1182, 4294901760
      %3466 = vmatpush1.msra.mxu0 %v3465
      %3467 = vmatprep.subr.mxu0 0.0
      %v3468 = vand.u32 %v1181, 4294901760
      %3469 = vmatpush1.msra.mxu0 %v3468
      %3470 = vmatprep.subr.mxu0 0.0
      %v3471 = vand.u32 %v1180, 4294901760
      %3472 = vmatpush1.msra.mxu0 %v3471
      %3473 = vmatprep.subr.mxu0 0.0
      %v3474 = vand.u32 %v1179, 4294901760
      %3475 = vmatpush1.msra.mxu0 %v3474
      %3476 = vmatprep.subr.mxu0 0.0
      %v3477 = vand.u32 %v1210, 4294901760
      %3478 = vmatpush2.msra.mxu0 %v3477
      %3479 = vmatprep.subr.mxu0 0.0
      %v3480 = vand.u32 %v1209, 4294901760
      %3481 = vmatpush2.msra.mxu0 %v3480
      %3482 = vmatprep.subr.mxu0 0.0
      %v3483 = vand.u32 %v1208, 4294901760
      %3484 = vmatpush2.msra.mxu0 %v3483
      %3485 = vmatprep.subr.mxu0 0.0
      %v3486 = vand.u32 %v1207, 4294901760
      %3487 = vmatpush2.msra.mxu0 %v3486
      %3488 = vmatprep.subr.mxu0 0.0
      %v3489 = vand.u32 %v1206, 4294901760
      %3490 = vmatpush2.msra.mxu0 %v3489
      %3491 = vmatprep.subr.mxu0 0.0
      %v3492 = vand.u32 %v1205, 4294901760
      %3493 = vmatpush2.msra.mxu0 %v3492
      %3494 = vmatprep.subr.mxu0 0.0
      %v3495 = vand.u32 %v1204, 4294901760
      %3496 = vmatpush2.msra.mxu0 %v3495
      %3497 = vmatprep.subr.mxu0 0.0
      %v3498 = vand.u32 %v1203, 4294901760
      %3499 = vmatpush2.msra.mxu0 %v3498
      %3500 = vmatprep.subr.mxu0 0.0
      %v3501 = vand.u32 %v1202, 4294901760
      %3502 = vmatpush2.msra.mxu0 %v3501
      %3503 = vmatprep.subr.mxu0 0.0
      %v3504 = vand.u32 %v1201, 4294901760
      %3505 = vmatpush2.msra.mxu0 %v3504
      %3506 = vmatprep.subr.mxu0 0.0
      %v3507 = vand.u32 %v1200, 4294901760
      %3508 = vmatpush2.msra.mxu0 %v3507
      %3509 = vmatprep.subr.mxu0 0.0
      %v3510 = vand.u32 %v1199, 4294901760
      %3511 = vmatpush2.msra.mxu0 %v3510
      %3512 = vmatprep.subr.mxu0 0.0
      %v3513 = vand.u32 %v1198, 4294901760
      %3514 = vmatpush2.msra.mxu0 %v3513
      %3515 = vmatprep.subr.mxu0 0.0
      %v3516 = vand.u32 %v1197, 4294901760
      %3517 = vmatpush2.msra.mxu0 %v3516
      %3518 = vmatprep.subr.mxu0 0.0
      %v3519 = vand.u32 %v1196, 4294901760
      %3520 = vmatpush2.msra.mxu0 %v3519
      %3521 = vmatprep.subr.mxu0 0.0
      %v3522 = vand.u32 %v1195, 4294901760
      %3523 = vmatpush2.msra.mxu0 %v3522
      %v3524 = vand.u32 %v1174, 4294901760
      %v3525 = vsub.f32 %v1174, %v3524
      %v3526 = vand.u32 %v3525, 4294901760
      %3527 = vmatprep.mubr.f32.mxu0 %v3526
      %v3528 = vand.u32 %v1173, 4294901760
      %v3529 = vsub.f32 %v1173, %v3528
      %v3530 = vand.u32 %v3529, 4294901760
      %3531 = vmatmul.mubr.f32.gmra.mxu0 %v3530
      %v3532 = vpop.f32.mrf.mxu0
      %v3533 = vadd.f32 %v3416, %v3532
      %v3534 = vpop.f32.mrf.mxu0
      %v3535 = vand.u32 %v1177, 4294901760
      %v3536 = vsub.f32 %v1177, %v3535
      %v3537 = vand.u32 %v3536, 4294901760
      %3538 = vmatprep.mubr.f32.mxu0 %v3537
      %v3539 = vand.u32 %v1176, 4294901760
      %v3540 = vsub.f32 %v1176, %v3539
      %v3541 = vand.u32 %v3540, 4294901760
      %3542 = vmatmul.mubr.f32.gmra.mxu0 %v3541
      %v3543 = vpop.f32.mrf.mxu0
      %v3544 = vadd.f32 %v3425, %v3543
      %v3545 = vpop.f32.mrf.mxu0
      %3546 = vdwg.mxu0
      %3547 = vmatprep.subr.mxu0 0.0
      %v3548 = vand.u32 %v1194, 4294901760
      %v3549 = vsub.f32 %v1194, %v3548
      %v3550 = vand.u32 %v3549, 4294901760
      %3551 = vmatpush1.msra.mxu0 %v3550
      %3552 = vmatprep.subr.mxu0 0.0
      %v3553 = vand.u32 %v1193, 4294901760
      %v3554 = vsub.f32 %v1193, %v3553
      %v3555 = vand.u32 %v3554, 4294901760
      %3556 = vmatpush1.msra.mxu0 %v3555
      %3557 = vmatprep.subr.mxu0 0.0
      %v3558 = vand.u32 %v1192, 4294901760
      %v3559 = vsub.f32 %v1192, %v3558
      %v3560 = vand.u32 %v3559, 4294901760
      %3561 = vmatpush1.msra.mxu0 %v3560
      %3562 = vmatprep.subr.mxu0 0.0
      %v3563 = vand.u32 %v1191, 4294901760
      %v3564 = vsub.f32 %v1191, %v3563
      %v3565 = vand.u32 %v3564, 4294901760
      %3566 = vmatpush1.msra.mxu0 %v3565
      %3567 = vmatprep.subr.mxu0 0.0
      %v3568 = vand.u32 %v1190, 4294901760
      %v3569 = vsub.f32 %v1190, %v3568
      %v3570 = vand.u32 %v3569, 4294901760
      %3571 = vmatpush1.msra.mxu0 %v3570
      %3572 = vmatprep.subr.mxu0 0.0
      %v3573 = vand.u32 %v1189, 4294901760
      %v3574 = vsub.f32 %v1189, %v3573
      %v3575 = vand.u32 %v3574, 4294901760
      %3576 = vmatpush1.msra.mxu0 %v3575
      %3577 = vmatprep.subr.mxu0 0.0
      %v3578 = vand.u32 %v1188, 4294901760
      %v3579 = vsub.f32 %v1188, %v3578
      %v3580 = vand.u32 %v3579, 4294901760
      %3581 = vmatpush1.msra.mxu0 %v3580
      %3582 = vmatprep.subr.mxu0 0.0
      %v3583 = vand.u32 %v1187, 4294901760
      %v3584 = vsub.f32 %v1187, %v3583
      %v3585 = vand.u32 %v3584, 4294901760
      %3586 = vmatpush1.msra.mxu0 %v3585
      %3587 = vmatprep.subr.mxu0 0.0
      %v3588 = vand.u32 %v1186, 4294901760
      %v3589 = vsub.f32 %v1186, %v3588
      %v3590 = vand.u32 %v3589, 4294901760
      %3591 = vmatpush1.msra.mxu0 %v3590
      %3592 = vmatprep.subr.mxu0 0.0
      %v3593 = vand.u32 %v1185, 4294901760
      %v3594 = vsub.f32 %v1185, %v3593
      %v3595 = vand.u32 %v3594, 4294901760
      %3596 = vmatpush1.msra.mxu0 %v3595
      %3597 = vmatprep.subr.mxu0 0.0
      %v3598 = vand.u32 %v1184, 4294901760
      %v3599 = vsub.f32 %v1184, %v3598
      %v3600 = vand.u32 %v3599, 4294901760
      %3601 = vmatpush1.msra.mxu0 %v3600
      %3602 = vmatprep.subr.mxu0 0.0
      %v3603 = vand.u32 %v1183, 4294901760
      %v3604 = vsub.f32 %v1183, %v3603
      %v3605 = vand.u32 %v3604, 4294901760
      %3606 = vmatpush1.msra.mxu0 %v3605
      %3607 = vmatprep.subr.mxu0 0.0
      %v3608 = vand.u32 %v1182, 4294901760
      %v3609 = vsub.f32 %v1182, %v3608
      %v3610 = vand.u32 %v3609, 4294901760
      %3611 = vmatpush1.msra.mxu0 %v3610
      %3612 = vmatprep.subr.mxu0 0.0
      %v3613 = vand.u32 %v1181, 4294901760
      %v3614 = vsub.f32 %v1181, %v3613
      %v3615 = vand.u32 %v3614, 4294901760
      %3616 = vmatpush1.msra.mxu0 %v3615
      %3617 = vmatprep.subr.mxu0 0.0
      %v3618 = vand.u32 %v1180, 4294901760
      %v3619 = vsub.f32 %v1180, %v3618
      %v3620 = vand.u32 %v3619, 4294901760
      %3621 = vmatpush1.msra.mxu0 %v3620
      %3622 = vmatprep.subr.mxu0 0.0
      %v3623 = vand.u32 %v1179, 4294901760
      %v3624 = vsub.f32 %v1179, %v3623
      %v3625 = vand.u32 %v3624, 4294901760
      %3626 = vmatpush1.msra.mxu0 %v3625
      %3627 = vmatprep.subr.mxu0 0.0
      %v3628 = vand.u32 %v1210, 4294901760
      %v3629 = vsub.f32 %v1210, %v3628
      %v3630 = vand.u32 %v3629, 4294901760
      %3631 = vmatpush2.msra.mxu0 %v3630
      %3632 = vmatprep.subr.mxu0 0.0
      %v3633 = vand.u32 %v1209, 4294901760
      %v3634 = vsub.f32 %v1209, %v3633
      %v3635 = vand.u32 %v3634, 4294901760
      %3636 = vmatpush2.msra.mxu0 %v3635
      %3637 = vmatprep.subr.mxu0 0.0
      %v3638 = vand.u32 %v1208, 4294901760
      %v3639 = vsub.f32 %v1208, %v3638
      %v3640 = vand.u32 %v3639, 4294901760
      %3641 = vmatpush2.msra.mxu0 %v3640
      %3642 = vmatprep.subr.mxu0 0.0
      %v3643 = vand.u32 %v1207, 4294901760
      %v3644 = vsub.f32 %v1207, %v3643
      %v3645 = vand.u32 %v3644, 4294901760
      %3646 = vmatpush2.msra.mxu0 %v3645
      %3647 = vmatprep.subr.mxu0 0.0
      %v3648 = vand.u32 %v1206, 4294901760
      %v3649 = vsub.f32 %v1206, %v3648
      %v3650 = vand.u32 %v3649, 4294901760
      %3651 = vmatpush2.msra.mxu0 %v3650
      %3652 = vmatprep.subr.mxu0 0.0
      %v3653 = vand.u32 %v1205, 4294901760
      %v3654 = vsub.f32 %v1205, %v3653
      %v3655 = vand.u32 %v3654, 4294901760
      %3656 = vmatpush2.msra.mxu0 %v3655
      %3657 = vmatprep.subr.mxu0 0.0
      %v3658 = vand.u32 %v1204, 4294901760
      %v3659 = vsub.f32 %v1204, %v3658
      %v3660 = vand.u32 %v3659, 4294901760
      %3661 = vmatpush2.msra.mxu0 %v3660
      %3662 = vmatprep.subr.mxu0 0.0
      %v3663 = vand.u32 %v1203, 4294901760
      %v3664 = vsub.f32 %v1203, %v3663
      %v3665 = vand.u32 %v3664, 4294901760
      %3666 = vmatpush2.msra.mxu0 %v3665
      %3667 = vmatprep.subr.mxu0 0.0
      %v3668 = vand.u32 %v1202, 4294901760
      %v3669 = vsub.f32 %v1202, %v3668
      %v3670 = vand.u32 %v3669, 4294901760
      %3671 = vmatpush2.msra.mxu0 %v3670
      %3672 = vmatprep.subr.mxu0 0.0
      %v3673 = vand.u32 %v1201, 4294901760
      %v3674 = vsub.f32 %v1201, %v3673
      %v3675 = vand.u32 %v3674, 4294901760
      %3676 = vmatpush2.msra.mxu0 %v3675
      %3677 = vmatprep.subr.mxu0 0.0
      %v3678 = vand.u32 %v1200, 4294901760
      %v3679 = vsub.f32 %v1200, %v3678
      %v3680 = vand.u32 %v3679, 4294901760
      %3681 = vmatpush2.msra.mxu0 %v3680
      %3682 = vmatprep.subr.mxu0 0.0
      %v3683 = vand.u32 %v1199, 4294901760
      %v3684 = vsub.f32 %v1199, %v3683
      %v3685 = vand.u32 %v3684, 4294901760
      %3686 = vmatpush2.msra.mxu0 %v3685
      %3687 = vmatprep.subr.mxu0 0.0
      %v3688 = vand.u32 %v1198, 4294901760
      %v3689 = vsub.f32 %v1198, %v3688
      %v3690 = vand.u32 %v3689, 4294901760
      %3691 = vmatpush2.msra.mxu0 %v3690
      %3692 = vmatprep.subr.mxu0 0.0
      %v3693 = vand.u32 %v1197, 4294901760
      %v3694 = vsub.f32 %v1197, %v3693
      %v3695 = vand.u32 %v3694, 4294901760
      %3696 = vmatpush2.msra.mxu0 %v3695
      %3697 = vmatprep.subr.mxu0 0.0
      %v3698 = vand.u32 %v1196, 4294901760
      %v3699 = vsub.f32 %v1196, %v3698
      %v3700 = vand.u32 %v3699, 4294901760
      %3701 = vmatpush2.msra.mxu0 %v3700
      %3702 = vmatprep.subr.mxu0 0.0
      %v3703 = vand.u32 %v1195, 4294901760
      %v3704 = vsub.f32 %v1195, %v3703
      %v3705 = vand.u32 %v3704, 4294901760
      %3706 = vmatpush2.msra.mxu0 %v3705
      %v3707 = vand.u32 %v1174, 4294901760
      %3708 = vmatprep.mubr.f32.mxu0 %v3707
      %v3709 = vand.u32 %v1173, 4294901760
      %3710 = vmatmul.mubr.f32.gmra.mxu0 %v3709
      %v3711 = vpop.f32.mrf.mxu0
      %v3712 = vadd.f32 %v3533, %v3711
      %v3713 = vpop.f32.mrf.mxu0
      %v3714 = vand.u32 %v1177, 4294901760
      %3715 = vmatprep.mubr.f32.mxu0 %v3714
      %v3716 = vand.u32 %v1176, 4294901760
      %3717 = vmatmul.mubr.f32.gmra.mxu0 %v3716
      %v3718 = vpop.f32.mrf.mxu0
      %v3719 = vadd.f32 %v3544, %v3718
      %v3720 = vpop.f32.mrf.mxu0
      %3721 = vdwg.mxu0
      %3722 = vmatprep.subr.mxu0 0.0
      %v3723 = vand.u32 %v1194, 4294901760
      %3724 = vmatpush1.msra.mxu0 %v3723
      %3725 = vmatprep.subr.mxu0 0.0
      %v3726 = vand.u32 %v1193, 4294901760
      %3727 = vmatpush1.msra.mxu0 %v3726
      %3728 = vmatprep.subr.mxu0 0.0
      %v3729 = vand.u32 %v1192, 4294901760
      %3730 = vmatpush1.msra.mxu0 %v3729
      %3731 = vmatprep.subr.mxu0 0.0
      %v3732 = vand.u32 %v1191, 4294901760
      %3733 = vmatpush1.msra.mxu0 %v3732
      %3734 = vmatprep.subr.mxu0 0.0
      %v3735 = vand.u32 %v1190, 4294901760
      %3736 = vmatpush1.msra.mxu0 %v3735
      %3737 = vmatprep.subr.mxu0 0.0
      %v3738 = vand.u32 %v1189, 4294901760
      %3739 = vmatpush1.msra.mxu0 %v3738
      %3740 = vmatprep.subr.mxu0 0.0
      %v3741 = vand.u32 %v1188, 4294901760
      %3742 = vmatpush1.msra.mxu0 %v3741
      %3743 = vmatprep.subr.mxu0 0.0
      %v3744 = vand.u32 %v1187, 4294901760
      %3745 = vmatpush1.msra.mxu0 %v3744
      %3746 = vmatprep.subr.mxu0 0.0
      %v3747 = vand.u32 %v1186, 4294901760
      %3748 = vmatpush1.msra.mxu0 %v3747
      %3749 = vmatprep.subr.mxu0 0.0
      %v3750 = vand.u32 %v1185, 4294901760
      %3751 = vmatpush1.msra.mxu0 %v3750
      %3752 = vmatprep.subr.mxu0 0.0
      %v3753 = vand.u32 %v1184, 4294901760
      %3754 = vmatpush1.msra.mxu0 %v3753
      %3755 = vmatprep.subr.mxu0 0.0
      %v3756 = vand.u32 %v1183, 4294901760
      %3757 = vmatpush1.msra.mxu0 %v3756
      %3758 = vmatprep.subr.mxu0 0.0
      %v3759 = vand.u32 %v1182, 4294901760
      %3760 = vmatpush1.msra.mxu0 %v3759
      %3761 = vmatprep.subr.mxu0 0.0
      %v3762 = vand.u32 %v1181, 4294901760
      %3763 = vmatpush1.msra.mxu0 %v3762
      %3764 = vmatprep.subr.mxu0 0.0
      %v3765 = vand.u32 %v1180, 4294901760
      %3766 = vmatpush1.msra.mxu0 %v3765
      %3767 = vmatprep.subr.mxu0 0.0
      %v3768 = vand.u32 %v1179, 4294901760
      %3769 = vmatpush1.msra.mxu0 %v3768
      %3770 = vmatprep.subr.mxu0 0.0
      %v3771 = vand.u32 %v1210, 4294901760
      %3772 = vmatpush2.msra.mxu0 %v3771
      %3773 = vmatprep.subr.mxu0 0.0
      %v3774 = vand.u32 %v1209, 4294901760
      %3775 = vmatpush2.msra.mxu0 %v3774
      %3776 = vmatprep.subr.mxu0 0.0
      %v3777 = vand.u32 %v1208, 4294901760
      %3778 = vmatpush2.msra.mxu0 %v3777
      %3779 = vmatprep.subr.mxu0 0.0
      %v3780 = vand.u32 %v1207, 4294901760
      %3781 = vmatpush2.msra.mxu0 %v3780
      %3782 = vmatprep.subr.mxu0 0.0
      %v3783 = vand.u32 %v1206, 4294901760
      %3784 = vmatpush2.msra.mxu0 %v3783
      %3785 = vmatprep.subr.mxu0 0.0
      %v3786 = vand.u32 %v1205, 4294901760
      %3787 = vmatpush2.msra.mxu0 %v3786
      %3788 = vmatprep.subr.mxu0 0.0
      %v3789 = vand.u32 %v1204, 4294901760
      %3790 = vmatpush2.msra.mxu0 %v3789
      %3791 = vmatprep.subr.mxu0 0.0
      %v3792 = vand.u32 %v1203, 4294901760
      %3793 = vmatpush2.msra.mxu0 %v3792
      %3794 = vmatprep.subr.mxu0 0.0
      %v3795 = vand.u32 %v1202, 4294901760
      %3796 = vmatpush2.msra.mxu0 %v3795
      %3797 = vmatprep.subr.mxu0 0.0
      %v3798 = vand.u32 %v1201, 4294901760
      %3799 = vmatpush2.msra.mxu0 %v3798
      %3800 = vmatprep.subr.mxu0 0.0
      %v3801 = vand.u32 %v1200, 4294901760
      %3802 = vmatpush2.msra.mxu0 %v3801
      %3803 = vmatprep.subr.mxu0 0.0
      %v3804 = vand.u32 %v1199, 4294901760
      %3805 = vmatpush2.msra.mxu0 %v3804
      %3806 = vmatprep.subr.mxu0 0.0
      %v3807 = vand.u32 %v1198, 4294901760
      %3808 = vmatpush2.msra.mxu0 %v3807
      %3809 = vmatprep.subr.mxu0 0.0
      %v3810 = vand.u32 %v1197, 4294901760
      %3811 = vmatpush2.msra.mxu0 %v3810
      %3812 = vmatprep.subr.mxu0 0.0
      %v3813 = vand.u32 %v1196, 4294901760
      %3814 = vmatpush2.msra.mxu0 %v3813
      %3815 = vmatprep.subr.mxu0 0.0
      %v3816 = vand.u32 %v1195, 4294901760
      %3817 = vmatpush2.msra.mxu0 %v3816
      %v3818 = vand.u32 %v1174, 4294901760
      %3819 = vmatprep.mubr.f32.mxu0 %v3818
      %v3820 = vand.u32 %v1173, 4294901760
      %3821 = vmatmul.mubr.f32.gmra.mxu0 %v3820
      %v3822 = vpop.f32.mrf.mxu0
      %v3823 = vadd.f32 %v3712, %v3822
      %v3824 = vpop.f32.mrf.mxu0
      %v3825 = vand.u32 %v1177, 4294901760
      %3826 = vmatprep.mubr.f32.mxu0 %v3825
      %v3827 = vand.u32 %v1176, 4294901760
      %3828 = vmatmul.mubr.f32.gmra.mxu0 %v3827
      %v3829 = vpop.f32.mrf.mxu0
      %v3830 = vadd.f32 %v3719, %v3829
      %v3831 = vpop.f32.mrf.mxu0
      %3832 = vdwg.mxu0
      %3833 = vmatprep.subr.mxu0 0.0
      %v3834 = vand.u32 %v1226, 4294901760
      %3835 = vmatpush1.msra.mxu0 %v3834
      %3836 = vmatprep.subr.mxu0 0.0
      %v3837 = vand.u32 %v1225, 4294901760
      %3838 = vmatpush1.msra.mxu0 %v3837
      %3839 = vmatprep.subr.mxu0 0.0
      %v3840 = vand.u32 %v1224, 4294901760
      %3841 = vmatpush1.msra.mxu0 %v3840
      %3842 = vmatprep.subr.mxu0 0.0
      %v3843 = vand.u32 %v1223, 4294901760
      %3844 = vmatpush1.msra.mxu0 %v3843
      %3845 = vmatprep.subr.mxu0 0.0
      %v3846 = vand.u32 %v1222, 4294901760
      %3847 = vmatpush1.msra.mxu0 %v3846
      %3848 = vmatprep.subr.mxu0 0.0
      %v3849 = vand.u32 %v1221, 4294901760
      %3850 = vmatpush1.msra.mxu0 %v3849
      %3851 = vmatprep.subr.mxu0 0.0
      %v3852 = vand.u32 %v1220, 4294901760
      %3853 = vmatpush1.msra.mxu0 %v3852
      %3854 = vmatprep.subr.mxu0 0.0
      %v3855 = vand.u32 %v1219, 4294901760
      %3856 = vmatpush1.msra.mxu0 %v3855
      %3857 = vmatprep.subr.mxu0 0.0
      %v3858 = vand.u32 %v1218, 4294901760
      %3859 = vmatpush1.msra.mxu0 %v3858
      %3860 = vmatprep.subr.mxu0 0.0
      %v3861 = vand.u32 %v1217, 4294901760
      %3862 = vmatpush1.msra.mxu0 %v3861
      %3863 = vmatprep.subr.mxu0 0.0
      %v3864 = vand.u32 %v1216, 4294901760
      %3865 = vmatpush1.msra.mxu0 %v3864
      %3866 = vmatprep.subr.mxu0 0.0
      %v3867 = vand.u32 %v1215, 4294901760
      %3868 = vmatpush1.msra.mxu0 %v3867
      %3869 = vmatprep.subr.mxu0 0.0
      %v3870 = vand.u32 %v1214, 4294901760
      %3871 = vmatpush1.msra.mxu0 %v3870
      %3872 = vmatprep.subr.mxu0 0.0
      %v3873 = vand.u32 %v1213, 4294901760
      %3874 = vmatpush1.msra.mxu0 %v3873
      %3875 = vmatprep.subr.mxu0 0.0
      %v3876 = vand.u32 %v1212, 4294901760
      %3877 = vmatpush1.msra.mxu0 %v3876
      %3878 = vmatprep.subr.mxu0 0.0
      %v3879 = vand.u32 %v1211, 4294901760
      %3880 = vmatpush1.msra.mxu0 %v3879
      %3881 = vmatprep.subr.mxu0 0.0
      %3882 = vmatpush2.msra.mxu0 0.0
      %3883 = vmatprep.subr.mxu0 0.0
      %3884 = vmatpush2.msra.mxu0 0.0
      %3885 = vmatprep.subr.mxu0 0.0
      %3886 = vmatpush2.msra.mxu0 0.0
      %3887 = vmatprep.subr.mxu0 0.0
      %3888 = vmatpush2.msra.mxu0 0.0
      %3889 = vmatprep.subr.mxu0 0.0
      %3890 = vmatpush2.msra.mxu0 0.0
      %3891 = vmatprep.subr.mxu0 0.0
      %3892 = vmatpush2.msra.mxu0 0.0
      %3893 = vmatprep.subr.mxu0 0.0
      %3894 = vmatpush2.msra.mxu0 0.0
      %3895 = vmatprep.subr.mxu0 0.0
      %3896 = vmatpush2.msra.mxu0 0.0
      %3897 = vmatprep.subr.mxu0 0.0
      %3898 = vmatpush2.msra.mxu0 0.0
      %3899 = vmatprep.subr.mxu0 0.0
      %3900 = vmatpush2.msra.mxu0 0.0
      %3901 = vmatprep.subr.mxu0 0.0
      %3902 = vmatpush2.msra.mxu0 0.0
      %3903 = vmatprep.subr.mxu0 0.0
      %3904 = vmatpush2.msra.mxu0 0.0
      %3905 = vmatprep.subr.mxu0 0.0
      %3906 = vmatpush2.msra.mxu0 0.0
      %3907 = vmatprep.subr.mxu0 0.0
      %3908 = vmatpush2.msra.mxu0 0.0
      %3909 = vmatprep.subr.mxu0 0.0
      %3910 = vmatpush2.msra.mxu0 0.0
      %3911 = vmatprep.subr.mxu0 0.0
      %3912 = vmatpush2.msra.mxu0 0.0
      %3913 = vmatprep.mubr.f32.mxu0 0.0
      %v3914 = vand.u32 %v1175, 4294901760
      %v3915 = vsub.f32 %v1175, %v3914
      %v3916 = vand.u32 %v3915, 4294901760
      %v3917 = vsub.f32 %v3915, %v3916
      %v3918 = vand.u32 %v3917, 4294901760
      %3919 = vmatmul.mubr.f32.gmra.mxu0 %v3918
      %v3920 = vpop.f32.mrf.mxu0
      %v3921 = vadd.f32 %v3823, %v3920
      %v3922 = vpop.f32.mrf.mxu0
      %3923 = vmatprep.mubr.f32.mxu0 0.0
      %v3924 = vand.u32 %v1178, 4294901760
      %v3925 = vsub.f32 %v1178, %v3924
      %v3926 = vand.u32 %v3925, 4294901760
      %v3927 = vsub.f32 %v3925, %v3926
      %v3928 = vand.u32 %v3927, 4294901760
      %3929 = vmatmul.mubr.f32.gmra.mxu0 %v3928
      %v3930 = vpop.f32.mrf.mxu0
      %v3931 = vadd.f32 %v3830, %v3930
      %v3932 = vpop.f32.mrf.mxu0
      %3933 = vdwg.mxu0
      %3934 = vmatprep.subr.mxu0 0.0
      %v3935 = vand.u32 %v1226, 4294901760
      %v3936 = vsub.f32 %v1226, %v3935
      %v3937 = vand.u32 %v3936, 4294901760
      %v3938 = vsub.f32 %v3936, %v3937
      %v3939 = vand.u32 %v3938, 4294901760
      %3940 = vmatpush1.msra.mxu0 %v3939
      %3941 = vmatprep.subr.mxu0 0.0
      %v3942 = vand.u32 %v1225, 4294901760
      %v3943 = vsub.f32 %v1225, %v3942
      %v3944 = vand.u32 %v3943, 4294901760
      %v3945 = vsub.f32 %v3943, %v3944
      %v3946 = vand.u32 %v3945, 4294901760
      %3947 = vmatpush1.msra.mxu0 %v3946
      %3948 = vmatprep.subr.mxu0 0.0
      %v3949 = vand.u32 %v1224, 4294901760
      %v3950 = vsub.f32 %v1224, %v3949
      %v3951 = vand.u32 %v3950, 4294901760
      %v3952 = vsub.f32 %v3950, %v3951
      %v3953 = vand.u32 %v3952, 4294901760
      %3954 = vmatpush1.msra.mxu0 %v3953
      %3955 = vmatprep.subr.mxu0 0.0
      %v3956 = vand.u32 %v1223, 4294901760
      %v3957 = vsub.f32 %v1223, %v3956
      %v3958 = vand.u32 %v3957, 4294901760
      %v3959 = vsub.f32 %v3957, %v3958
      %v3960 = vand.u32 %v3959, 4294901760
      %3961 = vmatpush1.msra.mxu0 %v3960
      %3962 = vmatprep.subr.mxu0 0.0
      %v3963 = vand.u32 %v1222, 4294901760
      %v3964 = vsub.f32 %v1222, %v3963
      %v3965 = vand.u32 %v3964, 4294901760
      %v3966 = vsub.f32 %v3964, %v3965
      %v3967 = vand.u32 %v3966, 4294901760
      %3968 = vmatpush1.msra.mxu0 %v3967
      %3969 = vmatprep.subr.mxu0 0.0
      %v3970 = vand.u32 %v1221, 4294901760
      %v3971 = vsub.f32 %v1221, %v3970
      %v3972 = vand.u32 %v3971, 4294901760
      %v3973 = vsub.f32 %v3971, %v3972
      %v3974 = vand.u32 %v3973, 4294901760
      %3975 = vmatpush1.msra.mxu0 %v3974
      %3976 = vmatprep.subr.mxu0 0.0
      %v3977 = vand.u32 %v1220, 4294901760
      %v3978 = vsub.f32 %v1220, %v3977
      %v3979 = vand.u32 %v3978, 4294901760
      %v3980 = vsub.f32 %v3978, %v3979
      %v3981 = vand.u32 %v3980, 4294901760
      %3982 = vmatpush1.msra.mxu0 %v3981
      %3983 = vmatprep.subr.mxu0 0.0
      %v3984 = vand.u32 %v1219, 4294901760
      %v3985 = vsub.f32 %v1219, %v3984
      %v3986 = vand.u32 %v3985, 4294901760
      %v3987 = vsub.f32 %v3985, %v3986
      %v3988 = vand.u32 %v3987, 4294901760
      %3989 = vmatpush1.msra.mxu0 %v3988
      %3990 = vmatprep.subr.mxu0 0.0
      %v3991 = vand.u32 %v1218, 4294901760
      %v3992 = vsub.f32 %v1218, %v3991
      %v3993 = vand.u32 %v3992, 4294901760
      %v3994 = vsub.f32 %v3992, %v3993
      %v3995 = vand.u32 %v3994, 4294901760
      %3996 = vmatpush1.msra.mxu0 %v3995
      %3997 = vmatprep.subr.mxu0 0.0
      %v3998 = vand.u32 %v1217, 4294901760
      %v3999 = vsub.f32 %v1217, %v3998
      %v4000 = vand.u32 %v3999, 4294901760
      %v4001 = vsub.f32 %v3999, %v4000
      %v4002 = vand.u32 %v4001, 4294901760
      %4003 = vmatpush1.msra.mxu0 %v4002
      %4004 = vmatprep.subr.mxu0 0.0
      %v4005 = vand.u32 %v1216, 4294901760
      %v4006 = vsub.f32 %v1216, %v4005
      %v4007 = vand.u32 %v4006, 4294901760
      %v4008 = vsub.f32 %v4006, %v4007
      %v4009 = vand.u32 %v4008, 4294901760
      %4010 = vmatpush1.msra.mxu0 %v4009
      %4011 = vmatprep.subr.mxu0 0.0
      %v4012 = vand.u32 %v1215, 4294901760
      %v4013 = vsub.f32 %v1215, %v4012
      %v4014 = vand.u32 %v4013, 4294901760
      %v4015 = vsub.f32 %v4013, %v4014
      %v4016 = vand.u32 %v4015, 4294901760
      %4017 = vmatpush1.msra.mxu0 %v4016
      %4018 = vmatprep.subr.mxu0 0.0
      %v4019 = vand.u32 %v1214, 4294901760
      %v4020 = vsub.f32 %v1214, %v4019
      %v4021 = vand.u32 %v4020, 4294901760
      %v4022 = vsub.f32 %v4020, %v4021
      %v4023 = vand.u32 %v4022, 4294901760
      %4024 = vmatpush1.msra.mxu0 %v4023
      %4025 = vmatprep.subr.mxu0 0.0
      %v4026 = vand.u32 %v1213, 4294901760
      %v4027 = vsub.f32 %v1213, %v4026
      %v4028 = vand.u32 %v4027, 4294901760
      %v4029 = vsub.f32 %v4027, %v4028
      %v4030 = vand.u32 %v4029, 4294901760
      %4031 = vmatpush1.msra.mxu0 %v4030
      %4032 = vmatprep.subr.mxu0 0.0
      %v4033 = vand.u32 %v1212, 4294901760
      %v4034 = vsub.f32 %v1212, %v4033
      %v4035 = vand.u32 %v4034, 4294901760
      %v4036 = vsub.f32 %v4034, %v4035
      %v4037 = vand.u32 %v4036, 4294901760
      %4038 = vmatpush1.msra.mxu0 %v4037
      %4039 = vmatprep.subr.mxu0 0.0
      %v4040 = vand.u32 %v1211, 4294901760
      %v4041 = vsub.f32 %v1211, %v4040
      %v4042 = vand.u32 %v4041, 4294901760
      %v4043 = vsub.f32 %v4041, %v4042
      %v4044 = vand.u32 %v4043, 4294901760
      %4045 = vmatpush1.msra.mxu0 %v4044
      %4046 = vmatprep.subr.mxu0 0.0
      %4047 = vmatpush2.msra.mxu0 0.0
      %4048 = vmatprep.subr.mxu0 0.0
      %4049 = vmatpush2.msra.mxu0 0.0
      %4050 = vmatprep.subr.mxu0 0.0
      %4051 = vmatpush2.msra.mxu0 0.0
      %4052 = vmatprep.subr.mxu0 0.0
      %4053 = vmatpush2.msra.mxu0 0.0
      %4054 = vmatprep.subr.mxu0 0.0
      %4055 = vmatpush2.msra.mxu0 0.0
      %4056 = vmatprep.subr.mxu0 0.0
      %4057 = vmatpush2.msra.mxu0 0.0
      %4058 = vmatprep.subr.mxu0 0.0
      %4059 = vmatpush2.msra.mxu0 0.0
      %4060 = vmatprep.subr.mxu0 0.0
      %4061 = vmatpush2.msra.mxu0 0.0
      %4062 = vmatprep.subr.mxu0 0.0
      %4063 = vmatpush2.msra.mxu0 0.0
      %4064 = vmatprep.subr.mxu0 0.0
      %4065 = vmatpush2.msra.mxu0 0.0
      %4066 = vmatprep.subr.mxu0 0.0
      %4067 = vmatpush2.msra.mxu0 0.0
      %4068 = vmatprep.subr.mxu0 0.0
      %4069 = vmatpush2.msra.mxu0 0.0
      %4070 = vmatprep.subr.mxu0 0.0
      %4071 = vmatpush2.msra.mxu0 0.0
      %4072 = vmatprep.subr.mxu0 0.0
      %4073 = vmatpush2.msra.mxu0 0.0
      %4074 = vmatprep.subr.mxu0 0.0
      %4075 = vmatpush2.msra.mxu0 0.0
      %4076 = vmatprep.subr.mxu0 0.0
      %4077 = vmatpush2.msra.mxu0 0.0
      %4078 = vmatprep.mubr.f32.mxu0 0.0
      %v4079 = vand.u32 %v1175, 4294901760
      %4080 = vmatmul.mubr.f32.gmra.mxu0 %v4079
      %v4081 = vpop.f32.mrf.mxu0
      %v4082 = vadd.f32 %v3921, %v4081
      %v4083 = vpop.f32.mrf.mxu0
      %4084 = vmatprep.mubr.f32.mxu0 0.0
      %v4085 = vand.u32 %v1178, 4294901760
      %4086 = vmatmul.mubr.f32.gmra.mxu0 %v4085
      %v4087 = vpop.f32.mrf.mxu0
      %v4088 = vadd.f32 %v3931, %v4087
      %v4089 = vpop.f32.mrf.mxu0
      %4090 = vdwg.mxu0
      %4091 = vmatprep.subr.mxu0 0.0
      %v4092 = vand.u32 %v1226, 4294901760
      %v4093 = vsub.f32 %v1226, %v4092
      %4094 = vmatpush1.msra.mxu0 %v4093
      %4095 = vmatprep.subr.mxu0 0.0
      %v4096 = vand.u32 %v1225, 4294901760
      %v4097 = vsub.f32 %v1225, %v4096
      %4098 = vmatpush1.msra.mxu0 %v4097
      %4099 = vmatprep.subr.mxu0 0.0
      %v4100 = vand.u32 %v1224, 4294901760
      %v4101 = vsub.f32 %v1224, %v4100
      %4102 = vmatpush1.msra.mxu0 %v4101
      %4103 = vmatprep.subr.mxu0 0.0
      %v4104 = vand.u32 %v1223, 4294901760
      %v4105 = vsub.f32 %v1223, %v4104
      %4106 = vmatpush1.msra.mxu0 %v4105
      %4107 = vmatprep.subr.mxu0 0.0
      %v4108 = vand.u32 %v1222, 4294901760
      %v4109 = vsub.f32 %v1222, %v4108
      %4110 = vmatpush1.msra.mxu0 %v4109
      %4111 = vmatprep.subr.mxu0 0.0
      %v4112 = vand.u32 %v1221, 4294901760
      %v4113 = vsub.f32 %v1221, %v4112
      %4114 = vmatpush1.msra.mxu0 %v4113
      %4115 = vmatprep.subr.mxu0 0.0
      %v4116 = vand.u32 %v1220, 4294901760
      %v4117 = vsub.f32 %v1220, %v4116
      %4118 = vmatpush1.msra.mxu0 %v4117
      %4119 = vmatprep.subr.mxu0 0.0
      %v4120 = vand.u32 %v1219, 4294901760
      %v4121 = vsub.f32 %v1219, %v4120
      %4122 = vmatpush1.msra.mxu0 %v4121
      %4123 = vmatprep.subr.mxu0 0.0
      %v4124 = vand.u32 %v1218, 4294901760
      %v4125 = vsub.f32 %v1218, %v4124
      %4126 = vmatpush1.msra.mxu0 %v4125
      %4127 = vmatprep.subr.mxu0 0.0
      %v4128 = vand.u32 %v1217, 4294901760
      %v4129 = vsub.f32 %v1217, %v4128
      %4130 = vmatpush1.msra.mxu0 %v4129
      %4131 = vmatprep.subr.mxu0 0.0
      %v4132 = vand.u32 %v1216, 4294901760
      %v4133 = vsub.f32 %v1216, %v4132
      %4134 = vmatpush1.msra.mxu0 %v4133
      %4135 = vmatprep.subr.mxu0 0.0
      %v4136 = vand.u32 %v1215, 4294901760
      %v4137 = vsub.f32 %v1215, %v4136
      %4138 = vmatpush1.msra.mxu0 %v4137
      %4139 = vmatprep.subr.mxu0 0.0
      %v4140 = vand.u32 %v1214, 4294901760
      %v4141 = vsub.f32 %v1214, %v4140
      %4142 = vmatpush1.msra.mxu0 %v4141
      %4143 = vmatprep.subr.mxu0 0.0
      %v4144 = vand.u32 %v1213, 4294901760
      %v4145 = vsub.f32 %v1213, %v4144
      %4146 = vmatpush1.msra.mxu0 %v4145
      %4147 = vmatprep.subr.mxu0 0.0
      %v4148 = vand.u32 %v1212, 4294901760
      %v4149 = vsub.f32 %v1212, %v4148
      %4150 = vmatpush1.msra.mxu0 %v4149
      %4151 = vmatprep.subr.mxu0 0.0
      %v4152 = vand.u32 %v1211, 4294901760
      %v4153 = vsub.f32 %v1211, %v4152
      %4154 = vmatpush1.msra.mxu0 %v4153
      %4155 = vmatprep.subr.mxu0 0.0
      %4156 = vmatpush2.msra.mxu0 0.0
      %4157 = vmatprep.subr.mxu0 0.0
      %4158 = vmatpush2.msra.mxu0 0.0
      %4159 = vmatprep.subr.mxu0 0.0
      %4160 = vmatpush2.msra.mxu0 0.0
      %4161 = vmatprep.subr.mxu0 0.0
      %4162 = vmatpush2.msra.mxu0 0.0
      %4163 = vmatprep.subr.mxu0 0.0
      %4164 = vmatpush2.msra.mxu0 0.0
      %4165 = vmatprep.subr.mxu0 0.0
      %4166 = vmatpush2.msra.mxu0 0.0
      %4167 = vmatprep.subr.mxu0 0.0
      %4168 = vmatpush2.msra.mxu0 0.0
      %4169 = vmatprep.subr.mxu0 0.0
      %4170 = vmatpush2.msra.mxu0 0.0
      %4171 = vmatprep.subr.mxu0 0.0
      %4172 = vmatpush2.msra.mxu0 0.0
      %4173 = vmatprep.subr.mxu0 0.0
      %4174 = vmatpush2.msra.mxu0 0.0
      %4175 = vmatprep.subr.mxu0 0.0
      %4176 = vmatpush2.msra.mxu0 0.0
      %4177 = vmatprep.subr.mxu0 0.0
      %4178 = vmatpush2.msra.mxu0 0.0
      %4179 = vmatprep.subr.mxu0 0.0
      %4180 = vmatpush2.msra.mxu0 0.0
      %4181 = vmatprep.subr.mxu0 0.0
      %4182 = vmatpush2.msra.mxu0 0.0
      %4183 = vmatprep.subr.mxu0 0.0
      %4184 = vmatpush2.msra.mxu0 0.0
      %4185 = vmatprep.subr.mxu0 0.0
      %4186 = vmatpush2.msra.mxu0 0.0
      %4187 = vmatprep.mubr.f32.mxu0 0.0
      %v4188 = vand.u32 %v1175, 4294901760
      %v4189 = vsub.f32 %v1175, %v4188
      %4190 = vmatmul.mubr.f32.gmra.mxu0 %v4189
      %v4191 = vpop.f32.mrf.mxu0
      %v4192 = vadd.f32 %v4082, %v4191
      %v4193 = vpop.f32.mrf.mxu0
      %4194 = vmatprep.mubr.f32.mxu0 0.0
      %v4195 = vand.u32 %v1178, 4294901760
      %v4196 = vsub.f32 %v1178, %v4195
      %4197 = vmatmul.mubr.f32.gmra.mxu0 %v4196
      %v4198 = vpop.f32.mrf.mxu0
      %v4199 = vadd.f32 %v4088, %v4198
      %v4200 = vpop.f32.mrf.mxu0
      %4201 = vdwg.mxu0
      %4202 = vmatprep.subr.mxu0 0.0
      %v4203 = vand.u32 %v1226, 4294901760
      %4204 = vmatpush1.msra.mxu0 %v4203
      %4205 = vmatprep.subr.mxu0 0.0
      %v4206 = vand.u32 %v1225, 4294901760
      %4207 = vmatpush1.msra.mxu0 %v4206
      %4208 = vmatprep.subr.mxu0 0.0
      %v4209 = vand.u32 %v1224, 4294901760
      %4210 = vmatpush1.msra.mxu0 %v4209
      %4211 = vmatprep.subr.mxu0 0.0
      %v4212 = vand.u32 %v1223, 4294901760
      %4213 = vmatpush1.msra.mxu0 %v4212
      %4214 = vmatprep.subr.mxu0 0.0
      %v4215 = vand.u32 %v1222, 4294901760
      %4216 = vmatpush1.msra.mxu0 %v4215
      %4217 = vmatprep.subr.mxu0 0.0
      %v4218 = vand.u32 %v1221, 4294901760
      %4219 = vmatpush1.msra.mxu0 %v4218
      %4220 = vmatprep.subr.mxu0 0.0
      %v4221 = vand.u32 %v1220, 4294901760
      %4222 = vmatpush1.msra.mxu0 %v4221
      %4223 = vmatprep.subr.mxu0 0.0
      %v4224 = vand.u32 %v1219, 4294901760
      %4225 = vmatpush1.msra.mxu0 %v4224
      %4226 = vmatprep.subr.mxu0 0.0
      %v4227 = vand.u32 %v1218, 4294901760
      %4228 = vmatpush1.msra.mxu0 %v4227
      %4229 = vmatprep.subr.mxu0 0.0
      %v4230 = vand.u32 %v1217, 4294901760
      %4231 = vmatpush1.msra.mxu0 %v4230
      %4232 = vmatprep.subr.mxu0 0.0
      %v4233 = vand.u32 %v1216, 4294901760
      %4234 = vmatpush1.msra.mxu0 %v4233
      %4235 = vmatprep.subr.mxu0 0.0
      %v4236 = vand.u32 %v1215, 4294901760
      %4237 = vmatpush1.msra.mxu0 %v4236
      %4238 = vmatprep.subr.mxu0 0.0
      %v4239 = vand.u32 %v1214, 4294901760
      %4240 = vmatpush1.msra.mxu0 %v4239
      %4241 = vmatprep.subr.mxu0 0.0
      %v4242 = vand.u32 %v1213, 4294901760
      %4243 = vmatpush1.msra.mxu0 %v4242
      %4244 = vmatprep.subr.mxu0 0.0
      %v4245 = vand.u32 %v1212, 4294901760
      %4246 = vmatpush1.msra.mxu0 %v4245
      %4247 = vmatprep.subr.mxu0 0.0
      %v4248 = vand.u32 %v1211, 4294901760
      %4249 = vmatpush1.msra.mxu0 %v4248
      %4250 = vmatprep.subr.mxu0 0.0
      %4251 = vmatpush2.msra.mxu0 0.0
      %4252 = vmatprep.subr.mxu0 0.0
      %4253 = vmatpush2.msra.mxu0 0.0
      %4254 = vmatprep.subr.mxu0 0.0
      %4255 = vmatpush2.msra.mxu0 0.0
      %4256 = vmatprep.subr.mxu0 0.0
      %4257 = vmatpush2.msra.mxu0 0.0
      %4258 = vmatprep.subr.mxu0 0.0
      %4259 = vmatpush2.msra.mxu0 0.0
      %4260 = vmatprep.subr.mxu0 0.0
      %4261 = vmatpush2.msra.mxu0 0.0
      %4262 = vmatprep.subr.mxu0 0.0
      %4263 = vmatpush2.msra.mxu0 0.0
      %4264 = vmatprep.subr.mxu0 0.0
      %4265 = vmatpush2.msra.mxu0 0.0
      %4266 = vmatprep.subr.mxu0 0.0
      %4267 = vmatpush2.msra.mxu0 0.0
      %4268 = vmatprep.subr.mxu0 0.0
      %4269 = vmatpush2.msra.mxu0 0.0
      %4270 = vmatprep.subr.mxu0 0.0
      %4271 = vmatpush2.msra.mxu0 0.0
      %4272 = vmatprep.subr.mxu0 0.0
      %4273 = vmatpush2.msra.mxu0 0.0
      %4274 = vmatprep.subr.mxu0 0.0
      %4275 = vmatpush2.msra.mxu0 0.0
      %4276 = vmatprep.subr.mxu0 0.0
      %4277 = vmatpush2.msra.mxu0 0.0
      %4278 = vmatprep.subr.mxu0 0.0
      %4279 = vmatpush2.msra.mxu0 0.0
      %4280 = vmatprep.subr.mxu0 0.0
      %4281 = vmatpush2.msra.mxu0 0.0
      %4282 = vmatprep.mubr.f32.mxu0 0.0
      %v4283 = vand.u32 %v1175, 4294901760
      %v4284 = vsub.f32 %v1175, %v4283
      %v4285 = vand.u32 %v4284, 4294901760
      %4286 = vmatmul.mubr.f32.gmra.mxu0 %v4285
      %v4287 = vpop.f32.mrf.mxu0
      %v4288 = vadd.f32 %v4192, %v4287
      %v4289 = vpop.f32.mrf.mxu0
      %4290 = vmatprep.mubr.f32.mxu0 0.0
      %v4291 = vand.u32 %v1178, 4294901760
      %v4292 = vsub.f32 %v1178, %v4291
      %v4293 = vand.u32 %v4292, 4294901760
      %4294 = vmatmul.mubr.f32.gmra.mxu0 %v4293
      %v4295 = vpop.f32.mrf.mxu0
      %v4296 = vadd.f32 %v4199, %v4295
      %v4297 = vpop.f32.mrf.mxu0
      %4298 = vdwg.mxu0
      %4299 = vmatprep.subr.mxu0 0.0
      %v4300 = vand.u32 %v1226, 4294901760
      %v4301 = vsub.f32 %v1226, %v4300
      %v4302 = vand.u32 %v4301, 4294901760
      %4303 = vmatpush1.msra.mxu0 %v4302
      %4304 = vmatprep.subr.mxu0 0.0
      %v4305 = vand.u32 %v1225, 4294901760
      %v4306 = vsub.f32 %v1225, %v4305
      %v4307 = vand.u32 %v4306, 4294901760
      %4308 = vmatpush1.msra.mxu0 %v4307
      %4309 = vmatprep.subr.mxu0 0.0
      %v4310 = vand.u32 %v1224, 4294901760
      %v4311 = vsub.f32 %v1224, %v4310
      %v4312 = vand.u32 %v4311, 4294901760
      %4313 = vmatpush1.msra.mxu0 %v4312
      %4314 = vmatprep.subr.mxu0 0.0
      %v4315 = vand.u32 %v1223, 4294901760
      %v4316 = vsub.f32 %v1223, %v4315
      %v4317 = vand.u32 %v4316, 4294901760
      %4318 = vmatpush1.msra.mxu0 %v4317
      %4319 = vmatprep.subr.mxu0 0.0
      %v4320 = vand.u32 %v1222, 4294901760
      %v4321 = vsub.f32 %v1222, %v4320
      %v4322 = vand.u32 %v4321, 4294901760
      %4323 = vmatpush1.msra.mxu0 %v4322
      %4324 = vmatprep.subr.mxu0 0.0
      %v4325 = vand.u32 %v1221, 4294901760
      %v4326 = vsub.f32 %v1221, %v4325
      %v4327 = vand.u32 %v4326, 4294901760
      %4328 = vmatpush1.msra.mxu0 %v4327
      %4329 = vmatprep.subr.mxu0 0.0
      %v4330 = vand.u32 %v1220, 4294901760
      %v4331 = vsub.f32 %v1220, %v4330
      %v4332 = vand.u32 %v4331, 4294901760
      %4333 = vmatpush1.msra.mxu0 %v4332
      %4334 = vmatprep.subr.mxu0 0.0
      %v4335 = vand.u32 %v1219, 4294901760
      %v4336 = vsub.f32 %v1219, %v4335
      %v4337 = vand.u32 %v4336, 4294901760
      %4338 = vmatpush1.msra.mxu0 %v4337
      %4339 = vmatprep.subr.mxu0 0.0
      %v4340 = vand.u32 %v1218, 4294901760
      %v4341 = vsub.f32 %v1218, %v4340
      %v4342 = vand.u32 %v4341, 4294901760
      %4343 = vmatpush1.msra.mxu0 %v4342
      %4344 = vmatprep.subr.mxu0 0.0
      %v4345 = vand.u32 %v1217, 4294901760
      %v4346 = vsub.f32 %v1217, %v4345
      %v4347 = vand.u32 %v4346, 4294901760
      %4348 = vmatpush1.msra.mxu0 %v4347
      %4349 = vmatprep.subr.mxu0 0.0
      %v4350 = vand.u32 %v1216, 4294901760
      %v4351 = vsub.f32 %v1216, %v4350
      %v4352 = vand.u32 %v4351, 4294901760
      %4353 = vmatpush1.msra.mxu0 %v4352
      %4354 = vmatprep.subr.mxu0 0.0
      %v4355 = vand.u32 %v1215, 4294901760
      %v4356 = vsub.f32 %v1215, %v4355
      %v4357 = vand.u32 %v4356, 4294901760
      %4358 = vmatpush1.msra.mxu0 %v4357
      %4359 = vmatprep.subr.mxu0 0.0
      %v4360 = vand.u32 %v1214, 4294901760
      %v4361 = vsub.f32 %v1214, %v4360
      %v4362 = vand.u32 %v4361, 4294901760
      %4363 = vmatpush1.msra.mxu0 %v4362
      %4364 = vmatprep.subr.mxu0 0.0
      %v4365 = vand.u32 %v1213, 4294901760
      %v4366 = vsub.f32 %v1213, %v4365
      %v4367 = vand.u32 %v4366, 4294901760
      %4368 = vmatpush1.msra.mxu0 %v4367
      %4369 = vmatprep.subr.mxu0 0.0
      %v4370 = vand.u32 %v1212, 4294901760
      %v4371 = vsub.f32 %v1212, %v4370
      %v4372 = vand.u32 %v4371, 4294901760
      %4373 = vmatpush1.msra.mxu0 %v4372
      %4374 = vmatprep.subr.mxu0 0.0
      %v4375 = vand.u32 %v1211, 4294901760
      %v4376 = vsub.f32 %v1211, %v4375
      %v4377 = vand.u32 %v4376, 4294901760
      %4378 = vmatpush1.msra.mxu0 %v4377
      %4379 = vmatprep.subr.mxu0 0.0
      %4380 = vmatpush2.msra.mxu0 0.0
      %4381 = vmatprep.subr.mxu0 0.0
      %4382 = vmatpush2.msra.mxu0 0.0
      %4383 = vmatprep.subr.mxu0 0.0
      %4384 = vmatpush2.msra.mxu0 0.0
      %4385 = vmatprep.subr.mxu0 0.0
      %4386 = vmatpush2.msra.mxu0 0.0
      %4387 = vmatprep.subr.mxu0 0.0
      %4388 = vmatpush2.msra.mxu0 0.0
      %4389 = vmatprep.subr.mxu0 0.0
      %4390 = vmatpush2.msra.mxu0 0.0
      %4391 = vmatprep.subr.mxu0 0.0
      %4392 = vmatpush2.msra.mxu0 0.0
      %4393 = vmatprep.subr.mxu0 0.0
      %4394 = vmatpush2.msra.mxu0 0.0
      %4395 = vmatprep.subr.mxu0 0.0
      %4396 = vmatpush2.msra.mxu0 0.0
      %4397 = vmatprep.subr.mxu0 0.0
      %4398 = vmatpush2.msra.mxu0 0.0
      %4399 = vmatprep.subr.mxu0 0.0
      %4400 = vmatpush2.msra.mxu0 0.0
      %4401 = vmatprep.subr.mxu0 0.0
      %4402 = vmatpush2.msra.mxu0 0.0
      %4403 = vmatprep.subr.mxu0 0.0
      %4404 = vmatpush2.msra.mxu0 0.0
      %4405 = vmatprep.subr.mxu0 0.0
      %4406 = vmatpush2.msra.mxu0 0.0
      %4407 = vmatprep.subr.mxu0 0.0
      %4408 = vmatpush2.msra.mxu0 0.0
      %4409 = vmatprep.subr.mxu0 0.0
      %4410 = vmatpush2.msra.mxu0 0.0
      %4411 = vmatprep.mubr.f32.mxu0 0.0
      %v4412 = vand.u32 %v1175, 4294901760
      %4413 = vmatmul.mubr.f32.gmra.mxu0 %v4412
      %v4414 = vpop.f32.mrf.mxu0
      %v4415 = vadd.f32 %v4288, %v4414
      %v4416 = vpop.f32.mrf.mxu0
      %4417 = vmatprep.mubr.f32.mxu0 0.0
      %v4418 = vand.u32 %v1178, 4294901760
      %4419 = vmatmul.mubr.f32.gmra.mxu0 %v4418
      %v4420 = vpop.f32.mrf.mxu0
      %v4421 = vadd.f32 %v4296, %v4420
      %v4422 = vpop.f32.mrf.mxu0
      %4423 = vdwg.mxu0
      %4424 = vmatprep.subr.mxu0 0.0
      %v4425 = vand.u32 %v1226, 4294901760
      %4426 = vmatpush1.msra.mxu0 %v4425
      %4427 = vmatprep.subr.mxu0 0.0
      %v4428 = vand.u32 %v1225, 4294901760
      %4429 = vmatpush1.msra.mxu0 %v4428
      %4430 = vmatprep.subr.mxu0 0.0
      %v4431 = vand.u32 %v1224, 4294901760
      %4432 = vmatpush1.msra.mxu0 %v4431
      %4433 = vmatprep.subr.mxu0 0.0
      %v4434 = vand.u32 %v1223, 4294901760
      %4435 = vmatpush1.msra.mxu0 %v4434
      %4436 = vmatprep.subr.mxu0 0.0
      %v4437 = vand.u32 %v1222, 4294901760
      %4438 = vmatpush1.msra.mxu0 %v4437
      %4439 = vmatprep.subr.mxu0 0.0
      %v4440 = vand.u32 %v1221, 4294901760
      %4441 = vmatpush1.msra.mxu0 %v4440
      %4442 = vmatprep.subr.mxu0 0.0
      %v4443 = vand.u32 %v1220, 4294901760
      %4444 = vmatpush1.msra.mxu0 %v4443
      %4445 = vmatprep.subr.mxu0 0.0
      %v4446 = vand.u32 %v1219, 4294901760
      %4447 = vmatpush1.msra.mxu0 %v4446
      %4448 = vmatprep.subr.mxu0 0.0
      %v4449 = vand.u32 %v1218, 4294901760
      %4450 = vmatpush1.msra.mxu0 %v4449
      %4451 = vmatprep.subr.mxu0 0.0
      %v4452 = vand.u32 %v1217, 4294901760
      %4453 = vmatpush1.msra.mxu0 %v4452
      %4454 = vmatprep.subr.mxu0 0.0
      %v4455 = vand.u32 %v1216, 4294901760
      %4456 = vmatpush1.msra.mxu0 %v4455
      %4457 = vmatprep.subr.mxu0 0.0
      %v4458 = vand.u32 %v1215, 4294901760
      %4459 = vmatpush1.msra.mxu0 %v4458
      %4460 = vmatprep.subr.mxu0 0.0
      %v4461 = vand.u32 %v1214, 4294901760
      %4462 = vmatpush1.msra.mxu0 %v4461
      %4463 = vmatprep.subr.mxu0 0.0
      %v4464 = vand.u32 %v1213, 4294901760
      %4465 = vmatpush1.msra.mxu0 %v4464
      %4466 = vmatprep.subr.mxu0 0.0
      %v4467 = vand.u32 %v1212, 4294901760
      %4468 = vmatpush1.msra.mxu0 %v4467
      %4469 = vmatprep.subr.mxu0 0.0
      %v4470 = vand.u32 %v1211, 4294901760
      %4471 = vmatpush1.msra.mxu0 %v4470
      %4472 = vmatprep.subr.mxu0 0.0
      %4473 = vmatpush2.msra.mxu0 0.0
      %4474 = vmatprep.subr.mxu0 0.0
      %4475 = vmatpush2.msra.mxu0 0.0
      %4476 = vmatprep.subr.mxu0 0.0
      %4477 = vmatpush2.msra.mxu0 0.0
      %4478 = vmatprep.subr.mxu0 0.0
      %4479 = vmatpush2.msra.mxu0 0.0
      %4480 = vmatprep.subr.mxu0 0.0
      %4481 = vmatpush2.msra.mxu0 0.0
      %4482 = vmatprep.subr.mxu0 0.0
      %4483 = vmatpush2.msra.mxu0 0.0
      %4484 = vmatprep.subr.mxu0 0.0
      %4485 = vmatpush2.msra.mxu0 0.0
      %4486 = vmatprep.subr.mxu0 0.0
      %4487 = vmatpush2.msra.mxu0 0.0
      %4488 = vmatprep.subr.mxu0 0.0
      %4489 = vmatpush2.msra.mxu0 0.0
      %4490 = vmatprep.subr.mxu0 0.0
      %4491 = vmatpush2.msra.mxu0 0.0
      %4492 = vmatprep.subr.mxu0 0.0
      %4493 = vmatpush2.msra.mxu0 0.0
      %4494 = vmatprep.subr.mxu0 0.0
      %4495 = vmatpush2.msra.mxu0 0.0
      %4496 = vmatprep.subr.mxu0 0.0
      %4497 = vmatpush2.msra.mxu0 0.0
      %4498 = vmatprep.subr.mxu0 0.0
      %4499 = vmatpush2.msra.mxu0 0.0
      %4500 = vmatprep.subr.mxu0 0.0
      %4501 = vmatpush2.msra.mxu0 0.0
      %4502 = vmatprep.subr.mxu0 0.0
      %4503 = vmatpush2.msra.mxu0 0.0
      %4504 = vmatprep.mubr.f32.mxu0 0.0
      %v4505 = vand.u32 %v1175, 4294901760
      %4506 = vmatmul.mubr.f32.gmra.mxu0 %v4505
      %v4507 = vpop.f32.mrf.mxu0
      %v4508 = vadd.f32 %v4415, %v4507
      %v4509 = vpop.f32.mrf.mxu0
      %4510 = vmatprep.mubr.f32.mxu0 0.0
      %v4511 = vand.u32 %v1178, 4294901760
      %4512 = vmatmul.mubr.f32.gmra.mxu0 %v4511
      %v4513 = vpop.f32.mrf.mxu0
      %v4514 = vadd.f32 %v4421, %v4513
      %v4515 = vpop.f32.mrf.mxu0
      %4516 = vdwg.mxu0
      %v4517 = vld [vmem:[#allocation2] sm:$0xfc]
      %v4518 = vld [vmem:[#allocation2 + $0x8] sm:$0xfc]
      %v4519 = vld [vmem:[#allocation2 + $0x10] sm:$0xfc]
      %v4520 = vld [vmem:[#allocation2 + $0x30] sm:$0x3]
      %v4521 = vld [vmem:[#allocation2 + $0x38] sm:$0x3]
      %v4522 = vld [vmem:[#allocation2 + $0x40] sm:$0x3]
      %s4523 = scalar_lea.vmem %s5, 768
      %v4524 = vld [vmem:[%s4523] sm:$0xff]
      %v4525 = vld [vmem:[%s4523 + $0x8] sm:$0xff]
      %v4526 = vld [vmem:[%s4523 + $0x10] sm:$0xff]
      %v4527 = vld [vmem:[%s4523 + $0x18] sm:$0xff]
      %v4528 = vld [vmem:[%s4523 + $0x20] sm:$0xff]
      %v4529 = vld [vmem:[%s4523 + $0x28] sm:$0xff]
      %v4530 = vld [vmem:[%s4523 + $0x30] sm:$0xff]
      %v4531 = vld [vmem:[%s4523 + $0x38] sm:$0xff]
      %v4532 = vld [vmem:[%s4523 + $0x40] sm:$0xff]
      %v4533 = vld [vmem:[%s4523 + $0x48] sm:$0xff]
      %v4534 = vld [vmem:[%s4523 + $0x50] sm:$0xff]
      %v4535 = vld [vmem:[%s4523 + $0x58] sm:$0xff]
      %v4536 = vld [vmem:[%s4523 + $0x60] sm:$0xff]
      %v4537 = vld [vmem:[%s4523 + $0x68] sm:$0xff]
      %v4538 = vld [vmem:[%s4523 + $0x70] sm:$0xff]
      %v4539 = vld [vmem:[%s4523 + $0x78] sm:$0xff]
      %v4540 = vld [vmem:[%s4523 + $0x80] sm:$0xff]
      %v4541 = vld [vmem:[%s4523 + $0x88] sm:$0xff]
      %v4542 = vld [vmem:[%s4523 + $0x90] sm:$0xff]
      %v4543 = vld [vmem:[%s4523 + $0x98] sm:$0xff]
      %v4544 = vld [vmem:[%s4523 + $0xa0] sm:$0xff]
      %v4545 = vld [vmem:[%s4523 + $0xa8] sm:$0xff]
      %v4546 = vld [vmem:[%s4523 + $0xb0] sm:$0xff]
      %v4547 = vld [vmem:[%s4523 + $0xb8] sm:$0xff]
      %v4548 = vld [vmem:[%s4523 + $0xc0] sm:$0xff]
      %v4549 = vld [vmem:[%s4523 + $0xc8] sm:$0xff]
      %v4550 = vld [vmem:[%s4523 + $0xd0] sm:$0xff]
      %v4551 = vld [vmem:[%s4523 + $0xd8] sm:$0xff]
      %v4552 = vld [vmem:[%s4523 + $0xe0] sm:$0xff]
      %v4553 = vld [vmem:[%s4523 + $0xe8] sm:$0xff]
      %v4554 = vld [vmem:[%s4523 + $0xf0] sm:$0xff]
      %v4555 = vld [vmem:[%s4523 + $0xf8] sm:$0xff]
      %v4556 = vld [vmem:[%s4523 + $0x100] sm:$0xff]
      %v4557 = vld [vmem:[%s4523 + $0x108] sm:$0xff]
      %v4558 = vld [vmem:[%s4523 + $0x110] sm:$0xff]
      %v4559 = vld [vmem:[%s4523 + $0x118] sm:$0xff]
      %v4560 = vld [vmem:[%s4523 + $0x120] sm:$0xff]
      %v4561 = vld [vmem:[%s4523 + $0x128] sm:$0xff]
      %v4562 = vld [vmem:[%s4523 + $0x130] sm:$0xff]
      %v4563 = vld [vmem:[%s4523 + $0x138] sm:$0xff]
      %v4564 = vld [vmem:[%s4523 + $0x140] sm:$0xff]
      %v4565 = vld [vmem:[%s4523 + $0x148] sm:$0xff]
      %v4566 = vld [vmem:[%s4523 + $0x150] sm:$0xff]
      %v4567 = vld [vmem:[%s4523 + $0x158] sm:$0xff]
      %v4568 = vld [vmem:[%s4523 + $0x160] sm:$0xff]
      %v4569 = vld [vmem:[%s4523 + $0x168] sm:$0xff]
      %v4570 = vld [vmem:[%s4523 + $0x170] sm:$0xff]
      %v4571 = vld [vmem:[%s4523 + $0x178] sm:$0xff]
      %vm4578 = vcmask 1045504
      %v4579 = vrot.slane %v4517, 2
      %v4580 = vrot.slane %v1176, 2
      %v4581 = vsel %vm4578, %v4579, %v4580
      %v4582 = vrot.slane %v4518, 2
      %v4583 = vrot.slane %v1177, 2
      %v4584 = vsel %vm4578, %v4582, %v4583
      %v4585 = vrot.slane %v4519, 2
      %v4586 = vrot.slane %v1178, 2
      %v4587 = vsel %vm4578, %v4585, %v4586
      %v4588 = vrot.slane %v4520, 2
      %v4589 = vsel %vm4578, %v4580, %v4588
      %v4590 = vrot.slane %v4521, 2
      %v4591 = vsel %vm4578, %v4583, %v4590
      %v4592 = vrot.slane %v4522, 2
      %v4593 = vsel %vm4578, %v4586, %v4592
      %4600 = vmatprep.subr.mxu0 0.0
      %v4601 = vand.u32 %v4539, 4294901760
      %4602 = vmatpush1.msra.mxu0 %v4601
      %4603 = vmatprep.subr.mxu0 0.0
      %v4604 = vand.u32 %v4538, 4294901760
      %4605 = vmatpush1.msra.mxu0 %v4604
      %4606 = vmatprep.subr.mxu0 0.0
      %v4607 = vand.u32 %v4537, 4294901760
      %4608 = vmatpush1.msra.mxu0 %v4607
      %4609 = vmatprep.subr.mxu0 0.0
      %v4610 = vand.u32 %v4536, 4294901760
      %4611 = vmatpush1.msra.mxu0 %v4610
      %4612 = vmatprep.subr.mxu0 0.0
      %v4613 = vand.u32 %v4535, 4294901760
      %4614 = vmatpush1.msra.mxu0 %v4613
      %4615 = vmatprep.subr.mxu0 0.0
      %v4616 = vand.u32 %v4534, 4294901760
      %4617 = vmatpush1.msra.mxu0 %v4616
      %4618 = vmatprep.subr.mxu0 0.0
      %v4619 = vand.u32 %v4533, 4294901760
      %4620 = vmatpush1.msra.mxu0 %v4619
      %4621 = vmatprep.subr.mxu0 0.0
      %v4622 = vand.u32 %v4532, 4294901760
      %4623 = vmatpush1.msra.mxu0 %v4622
      %4624 = vmatprep.subr.mxu0 0.0
      %v4625 = vand.u32 %v4531, 4294901760
      %4626 = vmatpush1.msra.mxu0 %v4625
      %4627 = vmatprep.subr.mxu0 0.0
      %v4628 = vand.u32 %v4530, 4294901760
      %4629 = vmatpush1.msra.mxu0 %v4628
      %4630 = vmatprep.subr.mxu0 0.0
      %v4631 = vand.u32 %v4529, 4294901760
      %4632 = vmatpush1.msra.mxu0 %v4631
      %4633 = vmatprep.subr.mxu0 0.0
      %v4634 = vand.u32 %v4528, 4294901760
      %4635 = vmatpush1.msra.mxu0 %v4634
      %4636 = vmatprep.subr.mxu0 0.0
      %v4637 = vand.u32 %v4527, 4294901760
      %4638 = vmatpush1.msra.mxu0 %v4637
      %4639 = vmatprep.subr.mxu0 0.0
      %v4640 = vand.u32 %v4526, 4294901760
      %4641 = vmatpush1.msra.mxu0 %v4640
      %4642 = vmatprep.subr.mxu0 0.0
      %v4643 = vand.u32 %v4525, 4294901760
      %4644 = vmatpush1.msra.mxu0 %v4643
      %4645 = vmatprep.subr.mxu0 0.0
      %v4646 = vand.u32 %v4524, 4294901760
      %4647 = vmatpush1.msra.mxu0 %v4646
      %4648 = vmatprep.subr.mxu0 0.0
      %v4649 = vand.u32 %v4555, 4294901760
      %4650 = vmatpush2.msra.mxu0 %v4649
      %4651 = vmatprep.subr.mxu0 0.0
      %v4652 = vand.u32 %v4554, 4294901760
      %4653 = vmatpush2.msra.mxu0 %v4652
      %4654 = vmatprep.subr.mxu0 0.0
      %v4655 = vand.u32 %v4553, 4294901760
      %4656 = vmatpush2.msra.mxu0 %v4655
      %4657 = vmatprep.subr.mxu0 0.0
      %v4658 = vand.u32 %v4552, 4294901760
      %4659 = vmatpush2.msra.mxu0 %v4658
      %4660 = vmatprep.subr.mxu0 0.0
      %v4661 = vand.u32 %v4551, 4294901760
      %4662 = vmatpush2.msra.mxu0 %v4661
      %4663 = vmatprep.subr.mxu0 0.0
      %v4664 = vand.u32 %v4550, 4294901760
      %4665 = vmatpush2.msra.mxu0 %v4664
      %4666 = vmatprep.subr.mxu0 0.0
      %v4667 = vand.u32 %v4549, 4294901760
      %4668 = vmatpush2.msra.mxu0 %v4667
      %4669 = vmatprep.subr.mxu0 0.0
      %v4670 = vand.u32 %v4548, 4294901760
      %4671 = vmatpush2.msra.mxu0 %v4670
      %4672 = vmatprep.subr.mxu0 0.0
      %v4673 = vand.u32 %v4547, 4294901760
      %4674 = vmatpush2.msra.mxu0 %v4673
      %4675 = vmatprep.subr.mxu0 0.0
      %v4676 = vand.u32 %v4546, 4294901760
      %4677 = vmatpush2.msra.mxu0 %v4676
      %4678 = vmatprep.subr.mxu0 0.0
      %v4679 = vand.u32 %v4545, 4294901760
      %4680 = vmatpush2.msra.mxu0 %v4679
      %4681 = vmatprep.subr.mxu0 0.0
      %v4682 = vand.u32 %v4544, 4294901760
      %4683 = vmatpush2.msra.mxu0 %v4682
      %4684 = vmatprep.subr.mxu0 0.0
      %v4685 = vand.u32 %v4543, 4294901760
      %4686 = vmatpush2.msra.mxu0 %v4685
      %4687 = vmatprep.subr.mxu0 0.0
      %v4688 = vand.u32 %v4542, 4294901760
      %4689 = vmatpush2.msra.mxu0 %v4688
      %4690 = vmatprep.subr.mxu0 0.0
      %v4691 = vand.u32 %v4541, 4294901760
      %4692 = vmatpush2.msra.mxu0 %v4691
      %4693 = vmatprep.subr.mxu0 0.0
      %v4694 = vand.u32 %v4540, 4294901760
      %4695 = vmatpush2.msra.mxu0 %v4694
      %v4696 = vand.u32 %v4584, 4294901760
      %v4697 = vsub.f32 %v4584, %v4696
      %v4698 = vand.u32 %v4697, 4294901760
      %v4699 = vsub.f32 %v4697, %v4698
      %v4700 = vand.u32 %v4699, 4294901760
      %4701 = vmatprep.mubr.f32.mxu0 %v4700
      %v4702 = vand.u32 %v4581, 4294901760
      %v4703 = vsub.f32 %v4581, %v4702
      %v4704 = vand.u32 %v4703, 4294901760
      %v4705 = vsub.f32 %v4703, %v4704
      %v4706 = vand.u32 %v4705, 4294901760
      %4707 = vmatmul.mubr.f32.gmra.mxu0 %v4706
      %v4708 = vpop.f32.mrf.mxu0
      %v4709 = vadd.f32 0.0, %v4708
      %v4710 = vpop.f32.mrf.mxu0
      %v4711 = vand.u32 %v4591, 4294901760
      %v4712 = vsub.f32 %v4591, %v4711
      %v4713 = vand.u32 %v4712, 4294901760
      %v4714 = vsub.f32 %v4712, %v4713
      %v4715 = vand.u32 %v4714, 4294901760
      %4716 = vmatprep.mubr.f32.mxu0 %v4715
      %v4717 = vand.u32 %v4589, 4294901760
      %v4718 = vsub.f32 %v4589, %v4717
      %v4719 = vand.u32 %v4718, 4294901760
      %v4720 = vsub.f32 %v4718, %v4719
      %v4721 = vand.u32 %v4720, 4294901760
      %4722 = vmatmul.mubr.f32.gmra.mxu0 %v4721
      %v4723 = vpop.f32.mrf.mxu0
      %v4724 = vadd.f32 0.0, %v4723
      %v4725 = vpop.f32.mrf.mxu0
      %4726 = vdwg.mxu0
      %4727 = vmatprep.subr.mxu0 0.0
      %v4728 = vand.u32 %v4539, 4294901760
      %v4729 = vsub.f32 %v4539, %v4728
      %v4730 = vand.u32 %v4729, 4294901760
      %v4731 = vsub.f32 %v4729, %v4730
      %v4732 = vand.u32 %v4731, 4294901760
      %4733 = vmatpush1.msra.mxu0 %v4732
      %4734 = vmatprep.subr.mxu0 0.0
      %v4735 = vand.u32 %v4538, 4294901760
      %v4736 = vsub.f32 %v4538, %v4735
      %v4737 = vand.u32 %v4736, 4294901760
      %v4738 = vsub.f32 %v4736, %v4737
      %v4739 = vand.u32 %v4738, 4294901760
      %4740 = vmatpush1.msra.mxu0 %v4739
      %4741 = vmatprep.subr.mxu0 0.0
      %v4742 = vand.u32 %v4537, 4294901760
      %v4743 = vsub.f32 %v4537, %v4742
      %v4744 = vand.u32 %v4743, 4294901760
      %v4745 = vsub.f32 %v4743, %v4744
      %v4746 = vand.u32 %v4745, 4294901760
      %4747 = vmatpush1.msra.mxu0 %v4746
      %4748 = vmatprep.subr.mxu0 0.0
      %v4749 = vand.u32 %v4536, 4294901760
      %v4750 = vsub.f32 %v4536, %v4749
      %v4751 = vand.u32 %v4750, 4294901760
      %v4752 = vsub.f32 %v4750, %v4751
      %v4753 = vand.u32 %v4752, 4294901760
      %4754 = vmatpush1.msra.mxu0 %v4753
      %4755 = vmatprep.subr.mxu0 0.0
      %v4756 = vand.u32 %v4535, 4294901760
      %v4757 = vsub.f32 %v4535, %v4756
      %v4758 = vand.u32 %v4757, 4294901760
      %v4759 = vsub.f32 %v4757, %v4758
      %v4760 = vand.u32 %v4759, 4294901760
      %4761 = vmatpush1.msra.mxu0 %v4760
      %4762 = vmatprep.subr.mxu0 0.0
      %v4763 = vand.u32 %v4534, 4294901760
      %v4764 = vsub.f32 %v4534, %v4763
      %v4765 = vand.u32 %v4764, 4294901760
      %v4766 = vsub.f32 %v4764, %v4765
      %v4767 = vand.u32 %v4766, 4294901760
      %4768 = vmatpush1.msra.mxu0 %v4767
      %4769 = vmatprep.subr.mxu0 0.0
      %v4770 = vand.u32 %v4533, 4294901760
      %v4771 = vsub.f32 %v4533, %v4770
      %v4772 = vand.u32 %v4771, 4294901760
      %v4773 = vsub.f32 %v4771, %v4772
      %v4774 = vand.u32 %v4773, 4294901760
      %4775 = vmatpush1.msra.mxu0 %v4774
      %4776 = vmatprep.subr.mxu0 0.0
      %v4777 = vand.u32 %v4532, 4294901760
      %v4778 = vsub.f32 %v4532, %v4777
      %v4779 = vand.u32 %v4778, 4294901760
      %v4780 = vsub.f32 %v4778, %v4779
      %v4781 = vand.u32 %v4780, 4294901760
      %4782 = vmatpush1.msra.mxu0 %v4781
      %4783 = vmatprep.subr.mxu0 0.0
      %v4784 = vand.u32 %v4531, 4294901760
      %v4785 = vsub.f32 %v4531, %v4784
      %v4786 = vand.u32 %v4785, 4294901760
      %v4787 = vsub.f32 %v4785, %v4786
      %v4788 = vand.u32 %v4787, 4294901760
      %4789 = vmatpush1.msra.mxu0 %v4788
      %4790 = vmatprep.subr.mxu0 0.0
      %v4791 = vand.u32 %v4530, 4294901760
      %v4792 = vsub.f32 %v4530, %v4791
      %v4793 = vand.u32 %v4792, 4294901760
      %v4794 = vsub.f32 %v4792, %v4793
      %v4795 = vand.u32 %v4794, 4294901760
      %4796 = vmatpush1.msra.mxu0 %v4795
      %4797 = vmatprep.subr.mxu0 0.0
      %v4798 = vand.u32 %v4529, 4294901760
      %v4799 = vsub.f32 %v4529, %v4798
      %v4800 = vand.u32 %v4799, 4294901760
      %v4801 = vsub.f32 %v4799, %v4800
      %v4802 = vand.u32 %v4801, 4294901760
      %4803 = vmatpush1.msra.mxu0 %v4802
      %4804 = vmatprep.subr.mxu0 0.0
      %v4805 = vand.u32 %v4528, 4294901760
      %v4806 = vsub.f32 %v4528, %v4805
      %v4807 = vand.u32 %v4806, 4294901760
      %v4808 = vsub.f32 %v4806, %v4807
      %v4809 = vand.u32 %v4808, 4294901760
      %4810 = vmatpush1.msra.mxu0 %v4809
      %4811 = vmatprep.subr.mxu0 0.0
      %v4812 = vand.u32 %v4527, 4294901760
      %v4813 = vsub.f32 %v4527, %v4812
      %v4814 = vand.u32 %v4813, 4294901760
      %v4815 = vsub.f32 %v4813, %v4814
      %v4816 = vand.u32 %v4815, 4294901760
      %4817 = vmatpush1.msra.mxu0 %v4816
      %4818 = vmatprep.subr.mxu0 0.0
      %v4819 = vand.u32 %v4526, 4294901760
      %v4820 = vsub.f32 %v4526, %v4819
      %v4821 = vand.u32 %v4820, 4294901760
      %v4822 = vsub.f32 %v4820, %v4821
      %v4823 = vand.u32 %v4822, 4294901760
      %4824 = vmatpush1.msra.mxu0 %v4823
      %4825 = vmatprep.subr.mxu0 0.0
      %v4826 = vand.u32 %v4525, 4294901760
      %v4827 = vsub.f32 %v4525, %v4826
      %v4828 = vand.u32 %v4827, 4294901760
      %v4829 = vsub.f32 %v4827, %v4828
      %v4830 = vand.u32 %v4829, 4294901760
      %4831 = vmatpush1.msra.mxu0 %v4830
      %4832 = vmatprep.subr.mxu0 0.0
      %v4833 = vand.u32 %v4524, 4294901760
      %v4834 = vsub.f32 %v4524, %v4833
      %v4835 = vand.u32 %v4834, 4294901760
      %v4836 = vsub.f32 %v4834, %v4835
      %v4837 = vand.u32 %v4836, 4294901760
      %4838 = vmatpush1.msra.mxu0 %v4837
      %4839 = vmatprep.subr.mxu0 0.0
      %v4840 = vand.u32 %v4555, 4294901760
      %v4841 = vsub.f32 %v4555, %v4840
      %v4842 = vand.u32 %v4841, 4294901760
      %v4843 = vsub.f32 %v4841, %v4842
      %v4844 = vand.u32 %v4843, 4294901760
      %4845 = vmatpush2.msra.mxu0 %v4844
      %4846 = vmatprep.subr.mxu0 0.0
      %v4847 = vand.u32 %v4554, 4294901760
      %v4848 = vsub.f32 %v4554, %v4847
      %v4849 = vand.u32 %v4848, 4294901760
      %v4850 = vsub.f32 %v4848, %v4849
      %v4851 = vand.u32 %v4850, 4294901760
      %4852 = vmatpush2.msra.mxu0 %v4851
      %4853 = vmatprep.subr.mxu0 0.0
      %v4854 = vand.u32 %v4553, 4294901760
      %v4855 = vsub.f32 %v4553, %v4854
      %v4856 = vand.u32 %v4855, 4294901760
      %v4857 = vsub.f32 %v4855, %v4856
      %v4858 = vand.u32 %v4857, 4294901760
      %4859 = vmatpush2.msra.mxu0 %v4858
      %4860 = vmatprep.subr.mxu0 0.0
      %v4861 = vand.u32 %v4552, 4294901760
      %v4862 = vsub.f32 %v4552, %v4861
      %v4863 = vand.u32 %v4862, 4294901760
      %v4864 = vsub.f32 %v4862, %v4863
      %v4865 = vand.u32 %v4864, 4294901760
      %4866 = vmatpush2.msra.mxu0 %v4865
      %4867 = vmatprep.subr.mxu0 0.0
      %v4868 = vand.u32 %v4551, 4294901760
      %v4869 = vsub.f32 %v4551, %v4868
      %v4870 = vand.u32 %v4869, 4294901760
      %v4871 = vsub.f32 %v4869, %v4870
      %v4872 = vand.u32 %v4871, 4294901760
      %4873 = vmatpush2.msra.mxu0 %v4872
      %4874 = vmatprep.subr.mxu0 0.0
      %v4875 = vand.u32 %v4550, 4294901760
      %v4876 = vsub.f32 %v4550, %v4875
      %v4877 = vand.u32 %v4876, 4294901760
      %v4878 = vsub.f32 %v4876, %v4877
      %v4879 = vand.u32 %v4878, 4294901760
      %4880 = vmatpush2.msra.mxu0 %v4879
      %4881 = vmatprep.subr.mxu0 0.0
      %v4882 = vand.u32 %v4549, 4294901760
      %v4883 = vsub.f32 %v4549, %v4882
      %v4884 = vand.u32 %v4883, 4294901760
      %v4885 = vsub.f32 %v4883, %v4884
      %v4886 = vand.u32 %v4885, 4294901760
      %4887 = vmatpush2.msra.mxu0 %v4886
      %4888 = vmatprep.subr.mxu0 0.0
      %v4889 = vand.u32 %v4548, 4294901760
      %v4890 = vsub.f32 %v4548, %v4889
      %v4891 = vand.u32 %v4890, 4294901760
      %v4892 = vsub.f32 %v4890, %v4891
      %v4893 = vand.u32 %v4892, 4294901760
      %4894 = vmatpush2.msra.mxu0 %v4893
      %4895 = vmatprep.subr.mxu0 0.0
      %v4896 = vand.u32 %v4547, 4294901760
      %v4897 = vsub.f32 %v4547, %v4896
      %v4898 = vand.u32 %v4897, 4294901760
      %v4899 = vsub.f32 %v4897, %v4898
      %v4900 = vand.u32 %v4899, 4294901760
      %4901 = vmatpush2.msra.mxu0 %v4900
      %4902 = vmatprep.subr.mxu0 0.0
      %v4903 = vand.u32 %v4546, 4294901760
      %v4904 = vsub.f32 %v4546, %v4903
      %v4905 = vand.u32 %v4904, 4294901760
      %v4906 = vsub.f32 %v4904, %v4905
      %v4907 = vand.u32 %v4906, 4294901760
      %4908 = vmatpush2.msra.mxu0 %v4907
      %4909 = vmatprep.subr.mxu0 0.0
      %v4910 = vand.u32 %v4545, 4294901760
      %v4911 = vsub.f32 %v4545, %v4910
      %v4912 = vand.u32 %v4911, 4294901760
      %v4913 = vsub.f32 %v4911, %v4912
      %v4914 = vand.u32 %v4913, 4294901760
      %4915 = vmatpush2.msra.mxu0 %v4914
      %4916 = vmatprep.subr.mxu0 0.0
      %v4917 = vand.u32 %v4544, 4294901760
      %v4918 = vsub.f32 %v4544, %v4917
      %v4919 = vand.u32 %v4918, 4294901760
      %v4920 = vsub.f32 %v4918, %v4919
      %v4921 = vand.u32 %v4920, 4294901760
      %4922 = vmatpush2.msra.mxu0 %v4921
      %4923 = vmatprep.subr.mxu0 0.0
      %v4924 = vand.u32 %v4543, 4294901760
      %v4925 = vsub.f32 %v4543, %v4924
      %v4926 = vand.u32 %v4925, 4294901760
      %v4927 = vsub.f32 %v4925, %v4926
      %v4928 = vand.u32 %v4927, 4294901760
      %4929 = vmatpush2.msra.mxu0 %v4928
      %4930 = vmatprep.subr.mxu0 0.0
      %v4931 = vand.u32 %v4542, 4294901760
      %v4932 = vsub.f32 %v4542, %v4931
      %v4933 = vand.u32 %v4932, 4294901760
      %v4934 = vsub.f32 %v4932, %v4933
      %v4935 = vand.u32 %v4934, 4294901760
      %4936 = vmatpush2.msra.mxu0 %v4935
      %4937 = vmatprep.subr.mxu0 0.0
      %v4938 = vand.u32 %v4541, 4294901760
      %v4939 = vsub.f32 %v4541, %v4938
      %v4940 = vand.u32 %v4939, 4294901760
      %v4941 = vsub.f32 %v4939, %v4940
      %v4942 = vand.u32 %v4941, 4294901760
      %4943 = vmatpush2.msra.mxu0 %v4942
      %4944 = vmatprep.subr.mxu0 0.0
      %v4945 = vand.u32 %v4540, 4294901760
      %v4946 = vsub.f32 %v4540, %v4945
      %v4947 = vand.u32 %v4946, 4294901760
      %v4948 = vsub.f32 %v4946, %v4947
      %v4949 = vand.u32 %v4948, 4294901760
      %4950 = vmatpush2.msra.mxu0 %v4949
      %v4951 = vand.u32 %v4584, 4294901760
      %4952 = vmatprep.mubr.f32.mxu0 %v4951
      %v4953 = vand.u32 %v4581, 4294901760
      %4954 = vmatmul.mubr.f32.gmra.mxu0 %v4953
      %v4955 = vpop.f32.mrf.mxu0
      %v4956 = vadd.f32 %v4709, %v4955
      %v4957 = vpop.f32.mrf.mxu0
      %v4958 = vand.u32 %v4591, 4294901760
      %4959 = vmatprep.mubr.f32.mxu0 %v4958
      %v4960 = vand.u32 %v4589, 4294901760
      %4961 = vmatmul.mubr.f32.gmra.mxu0 %v4960
      %v4962 = vpop.f32.mrf.mxu0
      %v4963 = vadd.f32 %v4724, %v4962
      %v4964 = vpop.f32.mrf.mxu0
      %4965 = vdwg.mxu0
      %4966 = vmatprep.subr.mxu0 0.0
      %v4967 = vand.u32 %v4539, 4294901760
      %v4968 = vsub.f32 %v4539, %v4967
      %4969 = vmatpush1.msra.mxu0 %v4968
      %4970 = vmatprep.subr.mxu0 0.0
      %v4971 = vand.u32 %v4538, 4294901760
      %v4972 = vsub.f32 %v4538, %v4971
      %4973 = vmatpush1.msra.mxu0 %v4972
      %4974 = vmatprep.subr.mxu0 0.0
      %v4975 = vand.u32 %v4537, 4294901760
      %v4976 = vsub.f32 %v4537, %v4975
      %4977 = vmatpush1.msra.mxu0 %v4976
      %4978 = vmatprep.subr.mxu0 0.0
      %v4979 = vand.u32 %v4536, 4294901760
      %v4980 = vsub.f32 %v4536, %v4979
      %4981 = vmatpush1.msra.mxu0 %v4980
      %4982 = vmatprep.subr.mxu0 0.0
      %v4983 = vand.u32 %v4535, 4294901760
      %v4984 = vsub.f32 %v4535, %v4983
      %4985 = vmatpush1.msra.mxu0 %v4984
      %4986 = vmatprep.subr.mxu0 0.0
      %v4987 = vand.u32 %v4534, 4294901760
      %v4988 = vsub.f32 %v4534, %v4987
      %4989 = vmatpush1.msra.mxu0 %v4988
      %4990 = vmatprep.subr.mxu0 0.0
      %v4991 = vand.u32 %v4533, 4294901760
      %v4992 = vsub.f32 %v4533, %v4991
      %4993 = vmatpush1.msra.mxu0 %v4992
      %4994 = vmatprep.subr.mxu0 0.0
      %v4995 = vand.u32 %v4532, 4294901760
      %v4996 = vsub.f32 %v4532, %v4995
      %4997 = vmatpush1.msra.mxu0 %v4996
      %4998 = vmatprep.subr.mxu0 0.0
      %v4999 = vand.u32 %v4531, 4294901760
      %v5000 = vsub.f32 %v4531, %v4999
      %5001 = vmatpush1.msra.mxu0 %v5000
      %5002 = vmatprep.subr.mxu0 0.0
      %v5003 = vand.u32 %v4530, 4294901760
      %v5004 = vsub.f32 %v4530, %v5003
      %5005 = vmatpush1.msra.mxu0 %v5004
      %5006 = vmatprep.subr.mxu0 0.0
      %v5007 = vand.u32 %v4529, 4294901760
      %v5008 = vsub.f32 %v4529, %v5007
      %5009 = vmatpush1.msra.mxu0 %v5008
      %5010 = vmatprep.subr.mxu0 0.0
      %v5011 = vand.u32 %v4528, 4294901760
      %v5012 = vsub.f32 %v4528, %v5011
      %5013 = vmatpush1.msra.mxu0 %v5012
      %5014 = vmatprep.subr.mxu0 0.0
      %v5015 = vand.u32 %v4527, 4294901760
      %v5016 = vsub.f32 %v4527, %v5015
      %5017 = vmatpush1.msra.mxu0 %v5016
      %5018 = vmatprep.subr.mxu0 0.0
      %v5019 = vand.u32 %v4526, 4294901760
      %v5020 = vsub.f32 %v4526, %v5019
      %5021 = vmatpush1.msra.mxu0 %v5020
      %5022 = vmatprep.subr.mxu0 0.0
      %v5023 = vand.u32 %v4525, 4294901760
      %v5024 = vsub.f32 %v4525, %v5023
      %5025 = vmatpush1.msra.mxu0 %v5024
      %5026 = vmatprep.subr.mxu0 0.0
      %v5027 = vand.u32 %v4524, 4294901760
      %v5028 = vsub.f32 %v4524, %v5027
      %5029 = vmatpush1.msra.mxu0 %v5028
      %5030 = vmatprep.subr.mxu0 0.0
      %v5031 = vand.u32 %v4555, 4294901760
      %v5032 = vsub.f32 %v4555, %v5031
      %5033 = vmatpush2.msra.mxu0 %v5032
      %5034 = vmatprep.subr.mxu0 0.0
      %v5035 = vand.u32 %v4554, 4294901760
      %v5036 = vsub.f32 %v4554, %v5035
      %5037 = vmatpush2.msra.mxu0 %v5036
      %5038 = vmatprep.subr.mxu0 0.0
      %v5039 = vand.u32 %v4553, 4294901760
      %v5040 = vsub.f32 %v4553, %v5039
      %5041 = vmatpush2.msra.mxu0 %v5040
      %5042 = vmatprep.subr.mxu0 0.0
      %v5043 = vand.u32 %v4552, 4294901760
      %v5044 = vsub.f32 %v4552, %v5043
      %5045 = vmatpush2.msra.mxu0 %v5044
      %5046 = vmatprep.subr.mxu0 0.0
      %v5047 = vand.u32 %v4551, 4294901760
      %v5048 = vsub.f32 %v4551, %v5047
      %5049 = vmatpush2.msra.mxu0 %v5048
      %5050 = vmatprep.subr.mxu0 0.0
      %v5051 = vand.u32 %v4550, 4294901760
      %v5052 = vsub.f32 %v4550, %v5051
      %5053 = vmatpush2.msra.mxu0 %v5052
      %5054 = vmatprep.subr.mxu0 0.0
      %v5055 = vand.u32 %v4549, 4294901760
      %v5056 = vsub.f32 %v4549, %v5055
      %5057 = vmatpush2.msra.mxu0 %v5056
      %5058 = vmatprep.subr.mxu0 0.0
      %v5059 = vand.u32 %v4548, 4294901760
      %v5060 = vsub.f32 %v4548, %v5059
      %5061 = vmatpush2.msra.mxu0 %v5060
      %5062 = vmatprep.subr.mxu0 0.0
      %v5063 = vand.u32 %v4547, 4294901760
      %v5064 = vsub.f32 %v4547, %v5063
      %5065 = vmatpush2.msra.mxu0 %v5064
      %5066 = vmatprep.subr.mxu0 0.0
      %v5067 = vand.u32 %v4546, 4294901760
      %v5068 = vsub.f32 %v4546, %v5067
      %5069 = vmatpush2.msra.mxu0 %v5068
      %5070 = vmatprep.subr.mxu0 0.0
      %v5071 = vand.u32 %v4545, 4294901760
      %v5072 = vsub.f32 %v4545, %v5071
      %5073 = vmatpush2.msra.mxu0 %v5072
      %5074 = vmatprep.subr.mxu0 0.0
      %v5075 = vand.u32 %v4544, 4294901760
      %v5076 = vsub.f32 %v4544, %v5075
      %5077 = vmatpush2.msra.mxu0 %v5076
      %5078 = vmatprep.subr.mxu0 0.0
      %v5079 = vand.u32 %v4543, 4294901760
      %v5080 = vsub.f32 %v4543, %v5079
      %5081 = vmatpush2.msra.mxu0 %v5080
      %5082 = vmatprep.subr.mxu0 0.0
      %v5083 = vand.u32 %v4542, 4294901760
      %v5084 = vsub.f32 %v4542, %v5083
      %5085 = vmatpush2.msra.mxu0 %v5084
      %5086 = vmatprep.subr.mxu0 0.0
      %v5087 = vand.u32 %v4541, 4294901760
      %v5088 = vsub.f32 %v4541, %v5087
      %5089 = vmatpush2.msra.mxu0 %v5088
      %5090 = vmatprep.subr.mxu0 0.0
      %v5091 = vand.u32 %v4540, 4294901760
      %v5092 = vsub.f32 %v4540, %v5091
      %5093 = vmatpush2.msra.mxu0 %v5092
      %v5094 = vand.u32 %v4584, 4294901760
      %v5095 = vsub.f32 %v4584, %v5094
      %5096 = vmatprep.mubr.f32.mxu0 %v5095
      %v5097 = vand.u32 %v4581, 4294901760
      %v5098 = vsub.f32 %v4581, %v5097
      %5099 = vmatmul.mubr.f32.gmra.mxu0 %v5098
      %v5100 = vpop.f32.mrf.mxu0
      %v5101 = vadd.f32 %v4956, %v5100
      %v5102 = vpop.f32.mrf.mxu0
      %v5103 = vand.u32 %v4591, 4294901760
      %v5104 = vsub.f32 %v4591, %v5103
      %5105 = vmatprep.mubr.f32.mxu0 %v5104
      %v5106 = vand.u32 %v4589, 4294901760
      %v5107 = vsub.f32 %v4589, %v5106
      %5108 = vmatmul.mubr.f32.gmra.mxu0 %v5107
      %v5109 = vpop.f32.mrf.mxu0
      %v5110 = vadd.f32 %v4963, %v5109
      %v5111 = vpop.f32.mrf.mxu0
      %5112 = vdwg.mxu0
      %5113 = vmatprep.subr.mxu0 0.0
      %v5114 = vand.u32 %v4539, 4294901760
      %5115 = vmatpush1.msra.mxu0 %v5114
      %5116 = vmatprep.subr.mxu0 0.0
      %v5117 = vand.u32 %v4538, 4294901760
      %5118 = vmatpush1.msra.mxu0 %v5117
      %5119 = vmatprep.subr.mxu0 0.0
      %v5120 = vand.u32 %v4537, 4294901760
      %5121 = vmatpush1.msra.mxu0 %v5120
      %5122 = vmatprep.subr.mxu0 0.0
      %v5123 = vand.u32 %v4536, 4294901760
      %5124 = vmatpush1.msra.mxu0 %v5123
      %5125 = vmatprep.subr.mxu0 0.0
      %v5126 = vand.u32 %v4535, 4294901760
      %5127 = vmatpush1.msra.mxu0 %v5126
      %5128 = vmatprep.subr.mxu0 0.0
      %v5129 = vand.u32 %v4534, 4294901760
      %5130 = vmatpush1.msra.mxu0 %v5129
      %5131 = vmatprep.subr.mxu0 0.0
      %v5132 = vand.u32 %v4533, 4294901760
      %5133 = vmatpush1.msra.mxu0 %v5132
      %5134 = vmatprep.subr.mxu0 0.0
      %v5135 = vand.u32 %v4532, 4294901760
      %5136 = vmatpush1.msra.mxu0 %v5135
      %5137 = vmatprep.subr.mxu0 0.0
      %v5138 = vand.u32 %v4531, 4294901760
      %5139 = vmatpush1.msra.mxu0 %v5138
      %5140 = vmatprep.subr.mxu0 0.0
      %v5141 = vand.u32 %v4530, 4294901760
      %5142 = vmatpush1.msra.mxu0 %v5141
      %5143 = vmatprep.subr.mxu0 0.0
      %v5144 = vand.u32 %v4529, 4294901760
      %5145 = vmatpush1.msra.mxu0 %v5144
      %5146 = vmatprep.subr.mxu0 0.0
      %v5147 = vand.u32 %v4528, 4294901760
      %5148 = vmatpush1.msra.mxu0 %v5147
      %5149 = vmatprep.subr.mxu0 0.0
      %v5150 = vand.u32 %v4527, 4294901760
      %5151 = vmatpush1.msra.mxu0 %v5150
      %5152 = vmatprep.subr.mxu0 0.0
      %v5153 = vand.u32 %v4526, 4294901760
      %5154 = vmatpush1.msra.mxu0 %v5153
      %5155 = vmatprep.subr.mxu0 0.0
      %v5156 = vand.u32 %v4525, 4294901760
      %5157 = vmatpush1.msra.mxu0 %v5156
      %5158 = vmatprep.subr.mxu0 0.0
      %v5159 = vand.u32 %v4524, 4294901760
      %5160 = vmatpush1.msra.mxu0 %v5159
      %5161 = vmatprep.subr.mxu0 0.0
      %v5162 = vand.u32 %v4555, 4294901760
      %5163 = vmatpush2.msra.mxu0 %v5162
      %5164 = vmatprep.subr.mxu0 0.0
      %v5165 = vand.u32 %v4554, 4294901760
      %5166 = vmatpush2.msra.mxu0 %v5165
      %5167 = vmatprep.subr.mxu0 0.0
      %v5168 = vand.u32 %v4553, 4294901760
      %5169 = vmatpush2.msra.mxu0 %v5168
      %5170 = vmatprep.subr.mxu0 0.0
      %v5171 = vand.u32 %v4552, 4294901760
      %5172 = vmatpush2.msra.mxu0 %v5171
      %5173 = vmatprep.subr.mxu0 0.0
      %v5174 = vand.u32 %v4551, 4294901760
      %5175 = vmatpush2.msra.mxu0 %v5174
      %5176 = vmatprep.subr.mxu0 0.0
      %v5177 = vand.u32 %v4550, 4294901760
      %5178 = vmatpush2.msra.mxu0 %v5177
      %5179 = vmatprep.subr.mxu0 0.0
      %v5180 = vand.u32 %v4549, 4294901760
      %5181 = vmatpush2.msra.mxu0 %v5180
      %5182 = vmatprep.subr.mxu0 0.0
      %v5183 = vand.u32 %v4548, 4294901760
      %5184 = vmatpush2.msra.mxu0 %v5183
      %5185 = vmatprep.subr.mxu0 0.0
      %v5186 = vand.u32 %v4547, 4294901760
      %5187 = vmatpush2.msra.mxu0 %v5186
      %5188 = vmatprep.subr.mxu0 0.0
      %v5189 = vand.u32 %v4546, 4294901760
      %5190 = vmatpush2.msra.mxu0 %v5189
      %5191 = vmatprep.subr.mxu0 0.0
      %v5192 = vand.u32 %v4545, 4294901760
      %5193 = vmatpush2.msra.mxu0 %v5192
      %5194 = vmatprep.subr.mxu0 0.0
      %v5195 = vand.u32 %v4544, 4294901760
      %5196 = vmatpush2.msra.mxu0 %v5195
      %5197 = vmatprep.subr.mxu0 0.0
      %v5198 = vand.u32 %v4543, 4294901760
      %5199 = vmatpush2.msra.mxu0 %v5198
      %5200 = vmatprep.subr.mxu0 0.0
      %v5201 = vand.u32 %v4542, 4294901760
      %5202 = vmatpush2.msra.mxu0 %v5201
      %5203 = vmatprep.subr.mxu0 0.0
      %v5204 = vand.u32 %v4541, 4294901760
      %5205 = vmatpush2.msra.mxu0 %v5204
      %5206 = vmatprep.subr.mxu0 0.0
      %v5207 = vand.u32 %v4540, 4294901760
      %5208 = vmatpush2.msra.mxu0 %v5207
      %v5209 = vand.u32 %v4584, 4294901760
      %v5210 = vsub.f32 %v4584, %v5209
      %v5211 = vand.u32 %v5210, 4294901760
      %5212 = vmatprep.mubr.f32.mxu0 %v5211
      %v5213 = vand.u32 %v4581, 4294901760
      %v5214 = vsub.f32 %v4581, %v5213
      %v5215 = vand.u32 %v5214, 4294901760
      %5216 = vmatmul.mubr.f32.gmra.mxu0 %v5215
      %v5217 = vpop.f32.mrf.mxu0
      %v5218 = vadd.f32 %v5101, %v5217
      %v5219 = vpop.f32.mrf.mxu0
      %v5220 = vand.u32 %v4591, 4294901760
      %v5221 = vsub.f32 %v4591, %v5220
      %v5222 = vand.u32 %v5221, 4294901760
      %5223 = vmatprep.mubr.f32.mxu0 %v5222
      %v5224 = vand.u32 %v4589, 4294901760
      %v5225 = vsub.f32 %v4589, %v5224
      %v5226 = vand.u32 %v5225, 4294901760
      %5227 = vmatmul.mubr.f32.gmra.mxu0 %v5226
      %v5228 = vpop.f32.mrf.mxu0
      %v5229 = vadd.f32 %v5110, %v5228
      %v5230 = vpop.f32.mrf.mxu0
      %5231 = vdwg.mxu0
      %5232 = vmatprep.subr.mxu0 0.0
      %v5233 = vand.u32 %v4539, 4294901760
      %v5234 = vsub.f32 %v4539, %v5233
      %v5235 = vand.u32 %v5234, 4294901760
      %5236 = vmatpush1.msra.mxu0 %v5235
      %5237 = vmatprep.subr.mxu0 0.0
      %v5238 = vand.u32 %v4538, 4294901760
      %v5239 = vsub.f32 %v4538, %v5238
      %v5240 = vand.u32 %v5239, 4294901760
      %5241 = vmatpush1.msra.mxu0 %v5240
      %5242 = vmatprep.subr.mxu0 0.0
      %v5243 = vand.u32 %v4537, 4294901760
      %v5244 = vsub.f32 %v4537, %v5243
      %v5245 = vand.u32 %v5244, 4294901760
      %5246 = vmatpush1.msra.mxu0 %v5245
      %5247 = vmatprep.subr.mxu0 0.0
      %v5248 = vand.u32 %v4536, 4294901760
      %v5249 = vsub.f32 %v4536, %v5248
      %v5250 = vand.u32 %v5249, 4294901760
      %5251 = vmatpush1.msra.mxu0 %v5250
      %5252 = vmatprep.subr.mxu0 0.0
      %v5253 = vand.u32 %v4535, 4294901760
      %v5254 = vsub.f32 %v4535, %v5253
      %v5255 = vand.u32 %v5254, 4294901760
      %5256 = vmatpush1.msra.mxu0 %v5255
      %5257 = vmatprep.subr.mxu0 0.0
      %v5258 = vand.u32 %v4534, 4294901760
      %v5259 = vsub.f32 %v4534, %v5258
      %v5260 = vand.u32 %v5259, 4294901760
      %5261 = vmatpush1.msra.mxu0 %v5260
      %5262 = vmatprep.subr.mxu0 0.0
      %v5263 = vand.u32 %v4533, 4294901760
      %v5264 = vsub.f32 %v4533, %v5263
      %v5265 = vand.u32 %v5264, 4294901760
      %5266 = vmatpush1.msra.mxu0 %v5265
      %5267 = vmatprep.subr.mxu0 0.0
      %v5268 = vand.u32 %v4532, 4294901760
      %v5269 = vsub.f32 %v4532, %v5268
      %v5270 = vand.u32 %v5269, 4294901760
      %5271 = vmatpush1.msra.mxu0 %v5270
      %5272 = vmatprep.subr.mxu0 0.0
      %v5273 = vand.u32 %v4531, 4294901760
      %v5274 = vsub.f32 %v4531, %v5273
      %v5275 = vand.u32 %v5274, 4294901760
      %5276 = vmatpush1.msra.mxu0 %v5275
      %5277 = vmatprep.subr.mxu0 0.0
      %v5278 = vand.u32 %v4530, 4294901760
      %v5279 = vsub.f32 %v4530, %v5278
      %v5280 = vand.u32 %v5279, 4294901760
      %5281 = vmatpush1.msra.mxu0 %v5280
      %5282 = vmatprep.subr.mxu0 0.0
      %v5283 = vand.u32 %v4529, 4294901760
      %v5284 = vsub.f32 %v4529, %v5283
      %v5285 = vand.u32 %v5284, 4294901760
      %5286 = vmatpush1.msra.mxu0 %v5285
      %5287 = vmatprep.subr.mxu0 0.0
      %v5288 = vand.u32 %v4528, 4294901760
      %v5289 = vsub.f32 %v4528, %v5288
      %v5290 = vand.u32 %v5289, 4294901760
      %5291 = vmatpush1.msra.mxu0 %v5290
      %5292 = vmatprep.subr.mxu0 0.0
      %v5293 = vand.u32 %v4527, 4294901760
      %v5294 = vsub.f32 %v4527, %v5293
      %v5295 = vand.u32 %v5294, 4294901760
      %5296 = vmatpush1.msra.mxu0 %v5295
      %5297 = vmatprep.subr.mxu0 0.0
      %v5298 = vand.u32 %v4526, 4294901760
      %v5299 = vsub.f32 %v4526, %v5298
      %v5300 = vand.u32 %v5299, 4294901760
      %5301 = vmatpush1.msra.mxu0 %v5300
      %5302 = vmatprep.subr.mxu0 0.0
      %v5303 = vand.u32 %v4525, 4294901760
      %v5304 = vsub.f32 %v4525, %v5303
      %v5305 = vand.u32 %v5304, 4294901760
      %5306 = vmatpush1.msra.mxu0 %v5305
      %5307 = vmatprep.subr.mxu0 0.0
      %v5308 = vand.u32 %v4524, 4294901760
      %v5309 = vsub.f32 %v4524, %v5308
      %v5310 = vand.u32 %v5309, 4294901760
      %5311 = vmatpush1.msra.mxu0 %v5310
      %5312 = vmatprep.subr.mxu0 0.0
      %v5313 = vand.u32 %v4555, 4294901760
      %v5314 = vsub.f32 %v4555, %v5313
      %v5315 = vand.u32 %v5314, 4294901760
      %5316 = vmatpush2.msra.mxu0 %v5315
      %5317 = vmatprep.subr.mxu0 0.0
      %v5318 = vand.u32 %v4554, 4294901760
      %v5319 = vsub.f32 %v4554, %v5318
      %v5320 = vand.u32 %v5319, 4294901760
      %5321 = vmatpush2.msra.mxu0 %v5320
      %5322 = vmatprep.subr.mxu0 0.0
      %v5323 = vand.u32 %v4553, 4294901760
      %v5324 = vsub.f32 %v4553, %v5323
      %v5325 = vand.u32 %v5324, 4294901760
      %5326 = vmatpush2.msra.mxu0 %v5325
      %5327 = vmatprep.subr.mxu0 0.0
      %v5328 = vand.u32 %v4552, 4294901760
      %v5329 = vsub.f32 %v4552, %v5328
      %v5330 = vand.u32 %v5329, 4294901760
      %5331 = vmatpush2.msra.mxu0 %v5330
      %5332 = vmatprep.subr.mxu0 0.0
      %v5333 = vand.u32 %v4551, 4294901760
      %v5334 = vsub.f32 %v4551, %v5333
      %v5335 = vand.u32 %v5334, 4294901760
      %5336 = vmatpush2.msra.mxu0 %v5335
      %5337 = vmatprep.subr.mxu0 0.0
      %v5338 = vand.u32 %v4550, 4294901760
      %v5339 = vsub.f32 %v4550, %v5338
      %v5340 = vand.u32 %v5339, 4294901760
      %5341 = vmatpush2.msra.mxu0 %v5340
      %5342 = vmatprep.subr.mxu0 0.0
      %v5343 = vand.u32 %v4549, 4294901760
      %v5344 = vsub.f32 %v4549, %v5343
      %v5345 = vand.u32 %v5344, 4294901760
      %5346 = vmatpush2.msra.mxu0 %v5345
      %5347 = vmatprep.subr.mxu0 0.0
      %v5348 = vand.u32 %v4548, 4294901760
      %v5349 = vsub.f32 %v4548, %v5348
      %v5350 = vand.u32 %v5349, 4294901760
      %5351 = vmatpush2.msra.mxu0 %v5350
      %5352 = vmatprep.subr.mxu0 0.0
      %v5353 = vand.u32 %v4547, 4294901760
      %v5354 = vsub.f32 %v4547, %v5353
      %v5355 = vand.u32 %v5354, 4294901760
      %5356 = vmatpush2.msra.mxu0 %v5355
      %5357 = vmatprep.subr.mxu0 0.0
      %v5358 = vand.u32 %v4546, 4294901760
      %v5359 = vsub.f32 %v4546, %v5358
      %v5360 = vand.u32 %v5359, 4294901760
      %5361 = vmatpush2.msra.mxu0 %v5360
      %5362 = vmatprep.subr.mxu0 0.0
      %v5363 = vand.u32 %v4545, 4294901760
      %v5364 = vsub.f32 %v4545, %v5363
      %v5365 = vand.u32 %v5364, 4294901760
      %5366 = vmatpush2.msra.mxu0 %v5365
      %5367 = vmatprep.subr.mxu0 0.0
      %v5368 = vand.u32 %v4544, 4294901760
      %v5369 = vsub.f32 %v4544, %v5368
      %v5370 = vand.u32 %v5369, 4294901760
      %5371 = vmatpush2.msra.mxu0 %v5370
      %5372 = vmatprep.subr.mxu0 0.0
      %v5373 = vand.u32 %v4543, 4294901760
      %v5374 = vsub.f32 %v4543, %v5373
      %v5375 = vand.u32 %v5374, 4294901760
      %5376 = vmatpush2.msra.mxu0 %v5375
      %5377 = vmatprep.subr.mxu0 0.0
      %v5378 = vand.u32 %v4542, 4294901760
      %v5379 = vsub.f32 %v4542, %v5378
      %v5380 = vand.u32 %v5379, 4294901760
      %5381 = vmatpush2.msra.mxu0 %v5380
      %5382 = vmatprep.subr.mxu0 0.0
      %v5383 = vand.u32 %v4541, 4294901760
      %v5384 = vsub.f32 %v4541, %v5383
      %v5385 = vand.u32 %v5384, 4294901760
      %5386 = vmatpush2.msra.mxu0 %v5385
      %5387 = vmatprep.subr.mxu0 0.0
      %v5388 = vand.u32 %v4540, 4294901760
      %v5389 = vsub.f32 %v4540, %v5388
      %v5390 = vand.u32 %v5389, 4294901760
      %5391 = vmatpush2.msra.mxu0 %v5390
      %v5392 = vand.u32 %v4584, 4294901760
      %5393 = vmatprep.mubr.f32.mxu0 %v5392
      %v5394 = vand.u32 %v4581, 4294901760
      %5395 = vmatmul.mubr.f32.gmra.mxu0 %v5394
      %v5396 = vpop.f32.mrf.mxu0
      %v5397 = vadd.f32 %v5218, %v5396
      %v5398 = vpop.f32.mrf.mxu0
      %v5399 = vand.u32 %v4591, 4294901760
      %5400 = vmatprep.mubr.f32.mxu0 %v5399
      %v5401 = vand.u32 %v4589, 4294901760
      %5402 = vmatmul.mubr.f32.gmra.mxu0 %v5401
      %v5403 = vpop.f32.mrf.mxu0
      %v5404 = vadd.f32 %v5229, %v5403
      %v5405 = vpop.f32.mrf.mxu0
      %5406 = vdwg.mxu0
      %5407 = vmatprep.subr.mxu0 0.0
      %v5408 = vand.u32 %v4539, 4294901760
      %5409 = vmatpush1.msra.mxu0 %v5408
      %5410 = vmatprep.subr.mxu0 0.0
      %v5411 = vand.u32 %v4538, 4294901760
      %5412 = vmatpush1.msra.mxu0 %v5411
      %5413 = vmatprep.subr.mxu0 0.0
      %v5414 = vand.u32 %v4537, 4294901760
      %5415 = vmatpush1.msra.mxu0 %v5414
      %5416 = vmatprep.subr.mxu0 0.0
      %v5417 = vand.u32 %v4536, 4294901760
      %5418 = vmatpush1.msra.mxu0 %v5417
      %5419 = vmatprep.subr.mxu0 0.0
      %v5420 = vand.u32 %v4535, 4294901760
      %5421 = vmatpush1.msra.mxu0 %v5420
      %5422 = vmatprep.subr.mxu0 0.0
      %v5423 = vand.u32 %v4534, 4294901760
      %5424 = vmatpush1.msra.mxu0 %v5423
      %5425 = vmatprep.subr.mxu0 0.0
      %v5426 = vand.u32 %v4533, 4294901760
      %5427 = vmatpush1.msra.mxu0 %v5426
      %5428 = vmatprep.subr.mxu0 0.0
      %v5429 = vand.u32 %v4532, 4294901760
      %5430 = vmatpush1.msra.mxu0 %v5429
      %5431 = vmatprep.subr.mxu0 0.0
      %v5432 = vand.u32 %v4531, 4294901760
      %5433 = vmatpush1.msra.mxu0 %v5432
      %5434 = vmatprep.subr.mxu0 0.0
      %v5435 = vand.u32 %v4530, 4294901760
      %5436 = vmatpush1.msra.mxu0 %v5435
      %5437 = vmatprep.subr.mxu0 0.0
      %v5438 = vand.u32 %v4529, 4294901760
      %5439 = vmatpush1.msra.mxu0 %v5438
      %5440 = vmatprep.subr.mxu0 0.0
      %v5441 = vand.u32 %v4528, 4294901760
      %5442 = vmatpush1.msra.mxu0 %v5441
      %5443 = vmatprep.subr.mxu0 0.0
      %v5444 = vand.u32 %v4527, 4294901760
      %5445 = vmatpush1.msra.mxu0 %v5444
      %5446 = vmatprep.subr.mxu0 0.0
      %v5447 = vand.u32 %v4526, 4294901760
      %5448 = vmatpush1.msra.mxu0 %v5447
      %5449 = vmatprep.subr.mxu0 0.0
      %v5450 = vand.u32 %v4525, 4294901760
      %5451 = vmatpush1.msra.mxu0 %v5450
      %5452 = vmatprep.subr.mxu0 0.0
      %v5453 = vand.u32 %v4524, 4294901760
      %5454 = vmatpush1.msra.mxu0 %v5453
      %5455 = vmatprep.subr.mxu0 0.0
      %v5456 = vand.u32 %v4555, 4294901760
      %5457 = vmatpush2.msra.mxu0 %v5456
      %5458 = vmatprep.subr.mxu0 0.0
      %v5459 = vand.u32 %v4554, 4294901760
      %5460 = vmatpush2.msra.mxu0 %v5459
      %5461 = vmatprep.subr.mxu0 0.0
      %v5462 = vand.u32 %v4553, 4294901760
      %5463 = vmatpush2.msra.mxu0 %v5462
      %5464 = vmatprep.subr.mxu0 0.0
      %v5465 = vand.u32 %v4552, 4294901760
      %5466 = vmatpush2.msra.mxu0 %v5465
      %5467 = vmatprep.subr.mxu0 0.0
      %v5468 = vand.u32 %v4551, 4294901760
      %5469 = vmatpush2.msra.mxu0 %v5468
      %5470 = vmatprep.subr.mxu0 0.0
      %v5471 = vand.u32 %v4550, 4294901760
      %5472 = vmatpush2.msra.mxu0 %v5471
      %5473 = vmatprep.subr.mxu0 0.0
      %v5474 = vand.u32 %v4549, 4294901760
      %5475 = vmatpush2.msra.mxu0 %v5474
      %5476 = vmatprep.subr.mxu0 0.0
      %v5477 = vand.u32 %v4548, 4294901760
      %5478 = vmatpush2.msra.mxu0 %v5477
      %5479 = vmatprep.subr.mxu0 0.0
      %v5480 = vand.u32 %v4547, 4294901760
      %5481 = vmatpush2.msra.mxu0 %v5480
      %5482 = vmatprep.subr.mxu0 0.0
      %v5483 = vand.u32 %v4546, 4294901760
      %5484 = vmatpush2.msra.mxu0 %v5483
      %5485 = vmatprep.subr.mxu0 0.0
      %v5486 = vand.u32 %v4545, 4294901760
      %5487 = vmatpush2.msra.mxu0 %v5486
      %5488 = vmatprep.subr.mxu0 0.0
      %v5489 = vand.u32 %v4544, 4294901760
      %5490 = vmatpush2.msra.mxu0 %v5489
      %5491 = vmatprep.subr.mxu0 0.0
      %v5492 = vand.u32 %v4543, 4294901760
      %5493 = vmatpush2.msra.mxu0 %v5492
      %5494 = vmatprep.subr.mxu0 0.0
      %v5495 = vand.u32 %v4542, 4294901760
      %5496 = vmatpush2.msra.mxu0 %v5495
      %5497 = vmatprep.subr.mxu0 0.0
      %v5498 = vand.u32 %v4541, 4294901760
      %5499 = vmatpush2.msra.mxu0 %v5498
      %5500 = vmatprep.subr.mxu0 0.0
      %v5501 = vand.u32 %v4540, 4294901760
      %5502 = vmatpush2.msra.mxu0 %v5501
      %v5503 = vand.u32 %v4584, 4294901760
      %5504 = vmatprep.mubr.f32.mxu0 %v5503
      %v5505 = vand.u32 %v4581, 4294901760
      %5506 = vmatmul.mubr.f32.gmra.mxu0 %v5505
      %v5507 = vpop.f32.mrf.mxu0
      %v5508 = vadd.f32 %v5397, %v5507
      %v5509 = vpop.f32.mrf.mxu0
      %v5510 = vand.u32 %v4591, 4294901760
      %5511 = vmatprep.mubr.f32.mxu0 %v5510
      %v5512 = vand.u32 %v4589, 4294901760
      %5513 = vmatmul.mubr.f32.gmra.mxu0 %v5512
      %v5514 = vpop.f32.mrf.mxu0
      %v5515 = vadd.f32 %v5404, %v5514
      %v5516 = vpop.f32.mrf.mxu0
      %5517 = vdwg.mxu0
      %5518 = vmatprep.subr.mxu0 0.0
      %v5519 = vand.u32 %v4571, 4294901760
      %5520 = vmatpush1.msra.mxu0 %v5519
      %5521 = vmatprep.subr.mxu0 0.0
      %v5522 = vand.u32 %v4570, 4294901760
      %5523 = vmatpush1.msra.mxu0 %v5522
      %5524 = vmatprep.subr.mxu0 0.0
      %v5525 = vand.u32 %v4569, 4294901760
      %5526 = vmatpush1.msra.mxu0 %v5525
      %5527 = vmatprep.subr.mxu0 0.0
      %v5528 = vand.u32 %v4568, 4294901760
      %5529 = vmatpush1.msra.mxu0 %v5528
      %5530 = vmatprep.subr.mxu0 0.0
      %v5531 = vand.u32 %v4567, 4294901760
      %5532 = vmatpush1.msra.mxu0 %v5531
      %5533 = vmatprep.subr.mxu0 0.0
      %v5534 = vand.u32 %v4566, 4294901760
      %5535 = vmatpush1.msra.mxu0 %v5534
      %5536 = vmatprep.subr.mxu0 0.0
      %v5537 = vand.u32 %v4565, 4294901760
      %5538 = vmatpush1.msra.mxu0 %v5537
      %5539 = vmatprep.subr.mxu0 0.0
      %v5540 = vand.u32 %v4564, 4294901760
      %5541 = vmatpush1.msra.mxu0 %v5540
      %5542 = vmatprep.subr.mxu0 0.0
      %v5543 = vand.u32 %v4563, 4294901760
      %5544 = vmatpush1.msra.mxu0 %v5543
      %5545 = vmatprep.subr.mxu0 0.0
      %v5546 = vand.u32 %v4562, 4294901760
      %5547 = vmatpush1.msra.mxu0 %v5546
      %5548 = vmatprep.subr.mxu0 0.0
      %v5549 = vand.u32 %v4561, 4294901760
      %5550 = vmatpush1.msra.mxu0 %v5549
      %5551 = vmatprep.subr.mxu0 0.0
      %v5552 = vand.u32 %v4560, 4294901760
      %5553 = vmatpush1.msra.mxu0 %v5552
      %5554 = vmatprep.subr.mxu0 0.0
      %v5555 = vand.u32 %v4559, 4294901760
      %5556 = vmatpush1.msra.mxu0 %v5555
      %5557 = vmatprep.subr.mxu0 0.0
      %v5558 = vand.u32 %v4558, 4294901760
      %5559 = vmatpush1.msra.mxu0 %v5558
      %5560 = vmatprep.subr.mxu0 0.0
      %v5561 = vand.u32 %v4557, 4294901760
      %5562 = vmatpush1.msra.mxu0 %v5561
      %5563 = vmatprep.subr.mxu0 0.0
      %v5564 = vand.u32 %v4556, 4294901760
      %5565 = vmatpush1.msra.mxu0 %v5564
      %5566 = vmatprep.subr.mxu0 0.0
      %5567 = vmatpush2.msra.mxu0 0.0
      %5568 = vmatprep.subr.mxu0 0.0
      %5569 = vmatpush2.msra.mxu0 0.0
      %5570 = vmatprep.subr.mxu0 0.0
      %5571 = vmatpush2.msra.mxu0 0.0
      %5572 = vmatprep.subr.mxu0 0.0
      %5573 = vmatpush2.msra.mxu0 0.0
      %5574 = vmatprep.subr.mxu0 0.0
      %5575 = vmatpush2.msra.mxu0 0.0
      %5576 = vmatprep.subr.mxu0 0.0
      %5577 = vmatpush2.msra.mxu0 0.0
      %5578 = vmatprep.subr.mxu0 0.0
      %5579 = vmatpush2.msra.mxu0 0.0
      %5580 = vmatprep.subr.mxu0 0.0
      %5581 = vmatpush2.msra.mxu0 0.0
      %5582 = vmatprep.subr.mxu0 0.0
      %5583 = vmatpush2.msra.mxu0 0.0
      %5584 = vmatprep.subr.mxu0 0.0
      %5585 = vmatpush2.msra.mxu0 0.0
      %5586 = vmatprep.subr.mxu0 0.0
      %5587 = vmatpush2.msra.mxu0 0.0
      %5588 = vmatprep.subr.mxu0 0.0
      %5589 = vmatpush2.msra.mxu0 0.0
      %5590 = vmatprep.subr.mxu0 0.0
      %5591 = vmatpush2.msra.mxu0 0.0
      %5592 = vmatprep.subr.mxu0 0.0
      %5593 = vmatpush2.msra.mxu0 0.0
      %5594 = vmatprep.subr.mxu0 0.0
      %5595 = vmatpush2.msra.mxu0 0.0
      %5596 = vmatprep.subr.mxu0 0.0
      %5597 = vmatpush2.msra.mxu0 0.0
      %5598 = vmatprep.mubr.f32.mxu0 0.0
      %v5599 = vand.u32 %v4587, 4294901760
      %v5600 = vsub.f32 %v4587, %v5599
      %v5601 = vand.u32 %v5600, 4294901760
      %v5602 = vsub.f32 %v5600, %v5601
      %v5603 = vand.u32 %v5602, 4294901760
      %5604 = vmatmul.mubr.f32.gmra.mxu0 %v5603
      %v5605 = vpop.f32.mrf.mxu0
      %v5606 = vadd.f32 %v5508, %v5605
      %v5607 = vpop.f32.mrf.mxu0
      %5608 = vmatprep.mubr.f32.mxu0 0.0
      %v5609 = vand.u32 %v4593, 4294901760
      %v5610 = vsub.f32 %v4593, %v5609
      %v5611 = vand.u32 %v5610, 4294901760
      %v5612 = vsub.f32 %v5610, %v5611
      %v5613 = vand.u32 %v5612, 4294901760
      %5614 = vmatmul.mubr.f32.gmra.mxu0 %v5613
      %v5615 = vpop.f32.mrf.mxu0
      %v5616 = vadd.f32 %v5515, %v5615
      %v5617 = vpop.f32.mrf.mxu0
      %5618 = vdwg.mxu0
      %5619 = vmatprep.subr.mxu0 0.0
      %v5620 = vand.u32 %v4571, 4294901760
      %v5621 = vsub.f32 %v4571, %v5620
      %v5622 = vand.u32 %v5621, 4294901760
      %v5623 = vsub.f32 %v5621, %v5622
      %v5624 = vand.u32 %v5623, 4294901760
      %5625 = vmatpush1.msra.mxu0 %v5624
      %5626 = vmatprep.subr.mxu0 0.0
      %v5627 = vand.u32 %v4570, 4294901760
      %v5628 = vsub.f32 %v4570, %v5627
      %v5629 = vand.u32 %v5628, 4294901760
      %v5630 = vsub.f32 %v5628, %v5629
      %v5631 = vand.u32 %v5630, 4294901760
      %5632 = vmatpush1.msra.mxu0 %v5631
      %5633 = vmatprep.subr.mxu0 0.0
      %v5634 = vand.u32 %v4569, 4294901760
      %v5635 = vsub.f32 %v4569, %v5634
      %v5636 = vand.u32 %v5635, 4294901760
      %v5637 = vsub.f32 %v5635, %v5636
      %v5638 = vand.u32 %v5637, 4294901760
      %5639 = vmatpush1.msra.mxu0 %v5638
      %5640 = vmatprep.subr.mxu0 0.0
      %v5641 = vand.u32 %v4568, 4294901760
      %v5642 = vsub.f32 %v4568, %v5641
      %v5643 = vand.u32 %v5642, 4294901760
      %v5644 = vsub.f32 %v5642, %v5643
      %v5645 = vand.u32 %v5644, 4294901760
      %5646 = vmatpush1.msra.mxu0 %v5645
      %5647 = vmatprep.subr.mxu0 0.0
      %v5648 = vand.u32 %v4567, 4294901760
      %v5649 = vsub.f32 %v4567, %v5648
      %v5650 = vand.u32 %v5649, 4294901760
      %v5651 = vsub.f32 %v5649, %v5650
      %v5652 = vand.u32 %v5651, 4294901760
      %5653 = vmatpush1.msra.mxu0 %v5652
      %5654 = vmatprep.subr.mxu0 0.0
      %v5655 = vand.u32 %v4566, 4294901760
      %v5656 = vsub.f32 %v4566, %v5655
      %v5657 = vand.u32 %v5656, 4294901760
      %v5658 = vsub.f32 %v5656, %v5657
      %v5659 = vand.u32 %v5658, 4294901760
      %5660 = vmatpush1.msra.mxu0 %v5659
      %5661 = vmatprep.subr.mxu0 0.0
      %v5662 = vand.u32 %v4565, 4294901760
      %v5663 = vsub.f32 %v4565, %v5662
      %v5664 = vand.u32 %v5663, 4294901760
      %v5665 = vsub.f32 %v5663, %v5664
      %v5666 = vand.u32 %v5665, 4294901760
      %5667 = vmatpush1.msra.mxu0 %v5666
      %5668 = vmatprep.subr.mxu0 0.0
      %v5669 = vand.u32 %v4564, 4294901760
      %v5670 = vsub.f32 %v4564, %v5669
      %v5671 = vand.u32 %v5670, 4294901760
      %v5672 = vsub.f32 %v5670, %v5671
      %v5673 = vand.u32 %v5672, 4294901760
      %5674 = vmatpush1.msra.mxu0 %v5673
      %5675 = vmatprep.subr.mxu0 0.0
      %v5676 = vand.u32 %v4563, 4294901760
      %v5677 = vsub.f32 %v4563, %v5676
      %v5678 = vand.u32 %v5677, 4294901760
      %v5679 = vsub.f32 %v5677, %v5678
      %v5680 = vand.u32 %v5679, 4294901760
      %5681 = vmatpush1.msra.mxu0 %v5680
      %5682 = vmatprep.subr.mxu0 0.0
      %v5683 = vand.u32 %v4562, 4294901760
      %v5684 = vsub.f32 %v4562, %v5683
      %v5685 = vand.u32 %v5684, 4294901760
      %v5686 = vsub.f32 %v5684, %v5685
      %v5687 = vand.u32 %v5686, 4294901760
      %5688 = vmatpush1.msra.mxu0 %v5687
      %5689 = vmatprep.subr.mxu0 0.0
      %v5690 = vand.u32 %v4561, 4294901760
      %v5691 = vsub.f32 %v4561, %v5690
      %v5692 = vand.u32 %v5691, 4294901760
      %v5693 = vsub.f32 %v5691, %v5692
      %v5694 = vand.u32 %v5693, 4294901760
      %5695 = vmatpush1.msra.mxu0 %v5694
      %5696 = vmatprep.subr.mxu0 0.0
      %v5697 = vand.u32 %v4560, 4294901760
      %v5698 = vsub.f32 %v4560, %v5697
      %v5699 = vand.u32 %v5698, 4294901760
      %v5700 = vsub.f32 %v5698, %v5699
      %v5701 = vand.u32 %v5700, 4294901760
      %5702 = vmatpush1.msra.mxu0 %v5701
      %5703 = vmatprep.subr.mxu0 0.0
      %v5704 = vand.u32 %v4559, 4294901760
      %v5705 = vsub.f32 %v4559, %v5704
      %v5706 = vand.u32 %v5705, 4294901760
      %v5707 = vsub.f32 %v5705, %v5706
      %v5708 = vand.u32 %v5707, 4294901760
      %5709 = vmatpush1.msra.mxu0 %v5708
      %5710 = vmatprep.subr.mxu0 0.0
      %v5711 = vand.u32 %v4558, 4294901760
      %v5712 = vsub.f32 %v4558, %v5711
      %v5713 = vand.u32 %v5712, 4294901760
      %v5714 = vsub.f32 %v5712, %v5713
      %v5715 = vand.u32 %v5714, 4294901760
      %5716 = vmatpush1.msra.mxu0 %v5715
      %5717 = vmatprep.subr.mxu0 0.0
      %v5718 = vand.u32 %v4557, 4294901760
      %v5719 = vsub.f32 %v4557, %v5718
      %v5720 = vand.u32 %v5719, 4294901760
      %v5721 = vsub.f32 %v5719, %v5720
      %v5722 = vand.u32 %v5721, 4294901760
      %5723 = vmatpush1.msra.mxu0 %v5722
      %5724 = vmatprep.subr.mxu0 0.0
      %v5725 = vand.u32 %v4556, 4294901760
      %v5726 = vsub.f32 %v4556, %v5725
      %v5727 = vand.u32 %v5726, 4294901760
      %v5728 = vsub.f32 %v5726, %v5727
      %v5729 = vand.u32 %v5728, 4294901760
      %5730 = vmatpush1.msra.mxu0 %v5729
      %5731 = vmatprep.subr.mxu0 0.0
      %5732 = vmatpush2.msra.mxu0 0.0
      %5733 = vmatprep.subr.mxu0 0.0
      %5734 = vmatpush2.msra.mxu0 0.0
      %5735 = vmatprep.subr.mxu0 0.0
      %5736 = vmatpush2.msra.mxu0 0.0
      %5737 = vmatprep.subr.mxu0 0.0
      %5738 = vmatpush2.msra.mxu0 0.0
      %5739 = vmatprep.subr.mxu0 0.0
      %5740 = vmatpush2.msra.mxu0 0.0
      %5741 = vmatprep.subr.mxu0 0.0
      %5742 = vmatpush2.msra.mxu0 0.0
      %5743 = vmatprep.subr.mxu0 0.0
      %5744 = vmatpush2.msra.mxu0 0.0
      %5745 = vmatprep.subr.mxu0 0.0
      %5746 = vmatpush2.msra.mxu0 0.0
      %5747 = vmatprep.subr.mxu0 0.0
      %5748 = vmatpush2.msra.mxu0 0.0
      %5749 = vmatprep.subr.mxu0 0.0
      %5750 = vmatpush2.msra.mxu0 0.0
      %5751 = vmatprep.subr.mxu0 0.0
      %5752 = vmatpush2.msra.mxu0 0.0
      %5753 = vmatprep.subr.mxu0 0.0
      %5754 = vmatpush2.msra.mxu0 0.0
      %5755 = vmatprep.subr.mxu0 0.0
      %5756 = vmatpush2.msra.mxu0 0.0
      %5757 = vmatprep.subr.mxu0 0.0
      %5758 = vmatpush2.msra.mxu0 0.0
      %5759 = vmatprep.subr.mxu0 0.0
      %5760 = vmatpush2.msra.mxu0 0.0
      %5761 = vmatprep.subr.mxu0 0.0
      %5762 = vmatpush2.msra.mxu0 0.0
      %5763 = vmatprep.mubr.f32.mxu0 0.0
      %v5764 = vand.u32 %v4587, 4294901760
      %5765 = vmatmul.mubr.f32.gmra.mxu0 %v5764
      %v5766 = vpop.f32.mrf.mxu0
      %v5767 = vadd.f32 %v5606, %v5766
      %v5768 = vpop.f32.mrf.mxu0
      %5769 = vmatprep.mubr.f32.mxu0 0.0
      %v5770 = vand.u32 %v4593, 4294901760
      %5771 = vmatmul.mubr.f32.gmra.mxu0 %v5770
      %v5772 = vpop.f32.mrf.mxu0
      %v5773 = vadd.f32 %v5616, %v5772
      %v5774 = vpop.f32.mrf.mxu0
      %5775 = vdwg.mxu0
      %5776 = vmatprep.subr.mxu0 0.0
      %v5777 = vand.u32 %v4571, 4294901760
      %v5778 = vsub.f32 %v4571, %v5777
      %5779 = vmatpush1.msra.mxu0 %v5778
      %5780 = vmatprep.subr.mxu0 0.0
      %v5781 = vand.u32 %v4570, 4294901760
      %v5782 = vsub.f32 %v4570, %v5781
      %5783 = vmatpush1.msra.mxu0 %v5782
      %5784 = vmatprep.subr.mxu0 0.0
      %v5785 = vand.u32 %v4569, 4294901760
      %v5786 = vsub.f32 %v4569, %v5785
      %5787 = vmatpush1.msra.mxu0 %v5786
      %5788 = vmatprep.subr.mxu0 0.0
      %v5789 = vand.u32 %v4568, 4294901760
      %v5790 = vsub.f32 %v4568, %v5789
      %5791 = vmatpush1.msra.mxu0 %v5790
      %5792 = vmatprep.subr.mxu0 0.0
      %v5793 = vand.u32 %v4567, 4294901760
      %v5794 = vsub.f32 %v4567, %v5793
      %5795 = vmatpush1.msra.mxu0 %v5794
      %5796 = vmatprep.subr.mxu0 0.0
      %v5797 = vand.u32 %v4566, 4294901760
      %v5798 = vsub.f32 %v4566, %v5797
      %5799 = vmatpush1.msra.mxu0 %v5798
      %5800 = vmatprep.subr.mxu0 0.0
      %v5801 = vand.u32 %v4565, 4294901760
      %v5802 = vsub.f32 %v4565, %v5801
      %5803 = vmatpush1.msra.mxu0 %v5802
      %5804 = vmatprep.subr.mxu0 0.0
      %v5805 = vand.u32 %v4564, 4294901760
      %v5806 = vsub.f32 %v4564, %v5805
      %5807 = vmatpush1.msra.mxu0 %v5806
      %5808 = vmatprep.subr.mxu0 0.0
      %v5809 = vand.u32 %v4563, 4294901760
      %v5810 = vsub.f32 %v4563, %v5809
      %5811 = vmatpush1.msra.mxu0 %v5810
      %5812 = vmatprep.subr.mxu0 0.0
      %v5813 = vand.u32 %v4562, 4294901760
      %v5814 = vsub.f32 %v4562, %v5813
      %5815 = vmatpush1.msra.mxu0 %v5814
      %5816 = vmatprep.subr.mxu0 0.0
      %v5817 = vand.u32 %v4561, 4294901760
      %v5818 = vsub.f32 %v4561, %v5817
      %5819 = vmatpush1.msra.mxu0 %v5818
      %5820 = vmatprep.subr.mxu0 0.0
      %v5821 = vand.u32 %v4560, 4294901760
      %v5822 = vsub.f32 %v4560, %v5821
      %5823 = vmatpush1.msra.mxu0 %v5822
      %5824 = vmatprep.subr.mxu0 0.0
      %v5825 = vand.u32 %v4559, 4294901760
      %v5826 = vsub.f32 %v4559, %v5825
      %5827 = vmatpush1.msra.mxu0 %v5826
      %5828 = vmatprep.subr.mxu0 0.0
      %v5829 = vand.u32 %v4558, 4294901760
      %v5830 = vsub.f32 %v4558, %v5829
      %5831 = vmatpush1.msra.mxu0 %v5830
      %5832 = vmatprep.subr.mxu0 0.0
      %v5833 = vand.u32 %v4557, 4294901760
      %v5834 = vsub.f32 %v4557, %v5833
      %5835 = vmatpush1.msra.mxu0 %v5834
      %5836 = vmatprep.subr.mxu0 0.0
      %v5837 = vand.u32 %v4556, 4294901760
      %v5838 = vsub.f32 %v4556, %v5837
      %5839 = vmatpush1.msra.mxu0 %v5838
      %5840 = vmatprep.subr.mxu0 0.0
      %5841 = vmatpush2.msra.mxu0 0.0
      %5842 = vmatprep.subr.mxu0 0.0
      %5843 = vmatpush2.msra.mxu0 0.0
      %5844 = vmatprep.subr.mxu0 0.0
      %5845 = vmatpush2.msra.mxu0 0.0
      %5846 = vmatprep.subr.mxu0 0.0
      %5847 = vmatpush2.msra.mxu0 0.0
      %5848 = vmatprep.subr.mxu0 0.0
      %5849 = vmatpush2.msra.mxu0 0.0
      %5850 = vmatprep.subr.mxu0 0.0
      %5851 = vmatpush2.msra.mxu0 0.0
      %5852 = vmatprep.subr.mxu0 0.0
      %5853 = vmatpush2.msra.mxu0 0.0
      %5854 = vmatprep.subr.mxu0 0.0
      %5855 = vmatpush2.msra.mxu0 0.0
      %5856 = vmatprep.subr.mxu0 0.0
      %5857 = vmatpush2.msra.mxu0 0.0
      %5858 = vmatprep.subr.mxu0 0.0
      %5859 = vmatpush2.msra.mxu0 0.0
      %5860 = vmatprep.subr.mxu0 0.0
      %5861 = vmatpush2.msra.mxu0 0.0
      %5862 = vmatprep.subr.mxu0 0.0
      %5863 = vmatpush2.msra.mxu0 0.0
      %5864 = vmatprep.subr.mxu0 0.0
      %5865 = vmatpush2.msra.mxu0 0.0
      %5866 = vmatprep.subr.mxu0 0.0
      %5867 = vmatpush2.msra.mxu0 0.0
      %5868 = vmatprep.subr.mxu0 0.0
      %5869 = vmatpush2.msra.mxu0 0.0
      %5870 = vmatprep.subr.mxu0 0.0
      %5871 = vmatpush2.msra.mxu0 0.0
      %5872 = vmatprep.mubr.f32.mxu0 0.0
      %v5873 = vand.u32 %v4587, 4294901760
      %v5874 = vsub.f32 %v4587, %v5873
      %5875 = vmatmul.mubr.f32.gmra.mxu0 %v5874
      %v5876 = vpop.f32.mrf.mxu0
      %v5877 = vadd.f32 %v5767, %v5876
      %v5878 = vpop.f32.mrf.mxu0
      %5879 = vmatprep.mubr.f32.mxu0 0.0
      %v5880 = vand.u32 %v4593, 4294901760
      %v5881 = vsub.f32 %v4593, %v5880
      %5882 = vmatmul.mubr.f32.gmra.mxu0 %v5881
      %v5883 = vpop.f32.mrf.mxu0
      %v5884 = vadd.f32 %v5773, %v5883
      %v5885 = vpop.f32.mrf.mxu0
      %5886 = vdwg.mxu0
      %5887 = vmatprep.subr.mxu0 0.0
      %v5888 = vand.u32 %v4571, 4294901760
      %5889 = vmatpush1.msra.mxu0 %v5888
      %5890 = vmatprep.subr.mxu0 0.0
      %v5891 = vand.u32 %v4570, 4294901760
      %5892 = vmatpush1.msra.mxu0 %v5891
      %5893 = vmatprep.subr.mxu0 0.0
      %v5894 = vand.u32 %v4569, 4294901760
      %5895 = vmatpush1.msra.mxu0 %v5894
      %5896 = vmatprep.subr.mxu0 0.0
      %v5897 = vand.u32 %v4568, 4294901760
      %5898 = vmatpush1.msra.mxu0 %v5897
      %5899 = vmatprep.subr.mxu0 0.0
      %v5900 = vand.u32 %v4567, 4294901760
      %5901 = vmatpush1.msra.mxu0 %v5900
      %5902 = vmatprep.subr.mxu0 0.0
      %v5903 = vand.u32 %v4566, 4294901760
      %5904 = vmatpush1.msra.mxu0 %v5903
      %5905 = vmatprep.subr.mxu0 0.0
      %v5906 = vand.u32 %v4565, 4294901760
      %5907 = vmatpush1.msra.mxu0 %v5906
      %5908 = vmatprep.subr.mxu0 0.0
      %v5909 = vand.u32 %v4564, 4294901760
      %5910 = vmatpush1.msra.mxu0 %v5909
      %5911 = vmatprep.subr.mxu0 0.0
      %v5912 = vand.u32 %v4563, 4294901760
      %5913 = vmatpush1.msra.mxu0 %v5912
      %5914 = vmatprep.subr.mxu0 0.0
      %v5915 = vand.u32 %v4562, 4294901760
      %5916 = vmatpush1.msra.mxu0 %v5915
      %5917 = vmatprep.subr.mxu0 0.0
      %v5918 = vand.u32 %v4561, 4294901760
      %5919 = vmatpush1.msra.mxu0 %v5918
      %5920 = vmatprep.subr.mxu0 0.0
      %v5921 = vand.u32 %v4560, 4294901760
      %5922 = vmatpush1.msra.mxu0 %v5921
      %5923 = vmatprep.subr.mxu0 0.0
      %v5924 = vand.u32 %v4559, 4294901760
      %5925 = vmatpush1.msra.mxu0 %v5924
      %5926 = vmatprep.subr.mxu0 0.0
      %v5927 = vand.u32 %v4558, 4294901760
      %5928 = vmatpush1.msra.mxu0 %v5927
      %5929 = vmatprep.subr.mxu0 0.0
      %v5930 = vand.u32 %v4557, 4294901760
      %5931 = vmatpush1.msra.mxu0 %v5930
      %5932 = vmatprep.subr.mxu0 0.0
      %v5933 = vand.u32 %v4556, 4294901760
      %5934 = vmatpush1.msra.mxu0 %v5933
      %5935 = vmatprep.subr.mxu0 0.0
      %5936 = vmatpush2.msra.mxu0 0.0
      %5937 = vmatprep.subr.mxu0 0.0
      %5938 = vmatpush2.msra.mxu0 0.0
      %5939 = vmatprep.subr.mxu0 0.0
      %5940 = vmatpush2.msra.mxu0 0.0
      %5941 = vmatprep.subr.mxu0 0.0
      %5942 = vmatpush2.msra.mxu0 0.0
      %5943 = vmatprep.subr.mxu0 0.0
      %5944 = vmatpush2.msra.mxu0 0.0
      %5945 = vmatprep.subr.mxu0 0.0
      %5946 = vmatpush2.msra.mxu0 0.0
      %5947 = vmatprep.subr.mxu0 0.0
      %5948 = vmatpush2.msra.mxu0 0.0
      %5949 = vmatprep.subr.mxu0 0.0
      %5950 = vmatpush2.msra.mxu0 0.0
      %5951 = vmatprep.subr.mxu0 0.0
      %5952 = vmatpush2.msra.mxu0 0.0
      %5953 = vmatprep.subr.mxu0 0.0
      %5954 = vmatpush2.msra.mxu0 0.0
      %5955 = vmatprep.subr.mxu0 0.0
      %5956 = vmatpush2.msra.mxu0 0.0
      %5957 = vmatprep.subr.mxu0 0.0
      %5958 = vmatpush2.msra.mxu0 0.0
      %5959 = vmatprep.subr.mxu0 0.0
      %5960 = vmatpush2.msra.mxu0 0.0
      %5961 = vmatprep.subr.mxu0 0.0
      %5962 = vmatpush2.msra.mxu0 0.0
      %5963 = vmatprep.subr.mxu0 0.0
      %5964 = vmatpush2.msra.mxu0 0.0
      %5965 = vmatprep.subr.mxu0 0.0
      %5966 = vmatpush2.msra.mxu0 0.0
      %5967 = vmatprep.mubr.f32.mxu0 0.0
      %v5968 = vand.u32 %v4587, 4294901760
      %v5969 = vsub.f32 %v4587, %v5968
      %v5970 = vand.u32 %v5969, 4294901760
      %5971 = vmatmul.mubr.f32.gmra.mxu0 %v5970
      %v5972 = vpop.f32.mrf.mxu0
      %v5973 = vadd.f32 %v5877, %v5972
      %v5974 = vpop.f32.mrf.mxu0
      %5975 = vmatprep.mubr.f32.mxu0 0.0
      %v5976 = vand.u32 %v4593, 4294901760
      %v5977 = vsub.f32 %v4593, %v5976
      %v5978 = vand.u32 %v5977, 4294901760
      %5979 = vmatmul.mubr.f32.gmra.mxu0 %v5978
      %v5980 = vpop.f32.mrf.mxu0
      %v5981 = vadd.f32 %v5884, %v5980
      %v5982 = vpop.f32.mrf.mxu0
      %5983 = vdwg.mxu0
      %5984 = vmatprep.subr.mxu0 0.0
      %v5985 = vand.u32 %v4571, 4294901760
      %v5986 = vsub.f32 %v4571, %v5985
      %v5987 = vand.u32 %v5986, 4294901760
      %5988 = vmatpush1.msra.mxu0 %v5987
      %5989 = vmatprep.subr.mxu0 0.0
      %v5990 = vand.u32 %v4570, 4294901760
      %v5991 = vsub.f32 %v4570, %v5990
      %v5992 = vand.u32 %v5991, 4294901760
      %5993 = vmatpush1.msra.mxu0 %v5992
      %5994 = vmatprep.subr.mxu0 0.0
      %v5995 = vand.u32 %v4569, 4294901760
      %v5996 = vsub.f32 %v4569, %v5995
      %v5997 = vand.u32 %v5996, 4294901760
      %5998 = vmatpush1.msra.mxu0 %v5997
      %5999 = vmatprep.subr.mxu0 0.0
      %v6000 = vand.u32 %v4568, 4294901760
      %v6001 = vsub.f32 %v4568, %v6000
      %v6002 = vand.u32 %v6001, 4294901760
      %6003 = vmatpush1.msra.mxu0 %v6002
      %6004 = vmatprep.subr.mxu0 0.0
      %v6005 = vand.u32 %v4567, 4294901760
      %v6006 = vsub.f32 %v4567, %v6005
      %v6007 = vand.u32 %v6006, 4294901760
      %6008 = vmatpush1.msra.mxu0 %v6007
      %6009 = vmatprep.subr.mxu0 0.0
      %v6010 = vand.u32 %v4566, 4294901760
      %v6011 = vsub.f32 %v4566, %v6010
      %v6012 = vand.u32 %v6011, 4294901760
      %6013 = vmatpush1.msra.mxu0 %v6012
      %6014 = vmatprep.subr.mxu0 0.0
      %v6015 = vand.u32 %v4565, 4294901760
      %v6016 = vsub.f32 %v4565, %v6015
      %v6017 = vand.u32 %v6016, 4294901760
      %6018 = vmatpush1.msra.mxu0 %v6017
      %6019 = vmatprep.subr.mxu0 0.0
      %v6020 = vand.u32 %v4564, 4294901760
      %v6021 = vsub.f32 %v4564, %v6020
      %v6022 = vand.u32 %v6021, 4294901760
      %6023 = vmatpush1.msra.mxu0 %v6022
      %6024 = vmatprep.subr.mxu0 0.0
      %v6025 = vand.u32 %v4563, 4294901760
      %v6026 = vsub.f32 %v4563, %v6025
      %v6027 = vand.u32 %v6026, 4294901760
      %6028 = vmatpush1.msra.mxu0 %v6027
      %6029 = vmatprep.subr.mxu0 0.0
      %v6030 = vand.u32 %v4562, 4294901760
      %v6031 = vsub.f32 %v4562, %v6030
      %v6032 = vand.u32 %v6031, 4294901760
      %6033 = vmatpush1.msra.mxu0 %v6032
      %6034 = vmatprep.subr.mxu0 0.0
      %v6035 = vand.u32 %v4561, 4294901760
      %v6036 = vsub.f32 %v4561, %v6035
      %v6037 = vand.u32 %v6036, 4294901760
      %6038 = vmatpush1.msra.mxu0 %v6037
      %6039 = vmatprep.subr.mxu0 0.0
      %v6040 = vand.u32 %v4560, 4294901760
      %v6041 = vsub.f32 %v4560, %v6040
      %v6042 = vand.u32 %v6041, 4294901760
      %6043 = vmatpush1.msra.mxu0 %v6042
      %6044 = vmatprep.subr.mxu0 0.0
      %v6045 = vand.u32 %v4559, 4294901760
      %v6046 = vsub.f32 %v4559, %v6045
      %v6047 = vand.u32 %v6046, 4294901760
      %6048 = vmatpush1.msra.mxu0 %v6047
      %6049 = vmatprep.subr.mxu0 0.0
      %v6050 = vand.u32 %v4558, 4294901760
      %v6051 = vsub.f32 %v4558, %v6050
      %v6052 = vand.u32 %v6051, 4294901760
      %6053 = vmatpush1.msra.mxu0 %v6052
      %6054 = vmatprep.subr.mxu0 0.0
      %v6055 = vand.u32 %v4557, 4294901760
      %v6056 = vsub.f32 %v4557, %v6055
      %v6057 = vand.u32 %v6056, 4294901760
      %6058 = vmatpush1.msra.mxu0 %v6057
      %6059 = vmatprep.subr.mxu0 0.0
      %v6060 = vand.u32 %v4556, 4294901760
      %v6061 = vsub.f32 %v4556, %v6060
      %v6062 = vand.u32 %v6061, 4294901760
      %6063 = vmatpush1.msra.mxu0 %v6062
      %6064 = vmatprep.subr.mxu0 0.0
      %6065 = vmatpush2.msra.mxu0 0.0
      %6066 = vmatprep.subr.mxu0 0.0
      %6067 = vmatpush2.msra.mxu0 0.0
      %6068 = vmatprep.subr.mxu0 0.0
      %6069 = vmatpush2.msra.mxu0 0.0
      %6070 = vmatprep.subr.mxu0 0.0
      %6071 = vmatpush2.msra.mxu0 0.0
      %6072 = vmatprep.subr.mxu0 0.0
      %6073 = vmatpush2.msra.mxu0 0.0
      %6074 = vmatprep.subr.mxu0 0.0
      %6075 = vmatpush2.msra.mxu0 0.0
      %6076 = vmatprep.subr.mxu0 0.0
      %6077 = vmatpush2.msra.mxu0 0.0
      %6078 = vmatprep.subr.mxu0 0.0
      %6079 = vmatpush2.msra.mxu0 0.0
      %6080 = vmatprep.subr.mxu0 0.0
      %6081 = vmatpush2.msra.mxu0 0.0
      %6082 = vmatprep.subr.mxu0 0.0
      %6083 = vmatpush2.msra.mxu0 0.0
      %6084 = vmatprep.subr.mxu0 0.0
      %6085 = vmatpush2.msra.mxu0 0.0
      %6086 = vmatprep.subr.mxu0 0.0
      %6087 = vmatpush2.msra.mxu0 0.0
      %6088 = vmatprep.subr.mxu0 0.0
      %6089 = vmatpush2.msra.mxu0 0.0
      %6090 = vmatprep.subr.mxu0 0.0
      %6091 = vmatpush2.msra.mxu0 0.0
      %6092 = vmatprep.subr.mxu0 0.0
      %6093 = vmatpush2.msra.mxu0 0.0
      %6094 = vmatprep.subr.mxu0 0.0
      %6095 = vmatpush2.msra.mxu0 0.0
      %6096 = vmatprep.mubr.f32.mxu0 0.0
      %v6097 = vand.u32 %v4587, 4294901760
      %6098 = vmatmul.mubr.f32.gmra.mxu0 %v6097
      %v6099 = vpop.f32.mrf.mxu0
      %v6100 = vadd.f32 %v5973, %v6099
      %v6101 = vpop.f32.mrf.mxu0
      %6102 = vmatprep.mubr.f32.mxu0 0.0
      %v6103 = vand.u32 %v4593, 4294901760
      %6104 = vmatmul.mubr.f32.gmra.mxu0 %v6103
      %v6105 = vpop.f32.mrf.mxu0
      %v6106 = vadd.f32 %v5981, %v6105
      %v6107 = vpop.f32.mrf.mxu0
      %6108 = vdwg.mxu0
      %6109 = vmatprep.subr.mxu0 0.0
      %v6110 = vand.u32 %v4571, 4294901760
      %6111 = vmatpush1.msra.mxu0 %v6110
      %6112 = vmatprep.subr.mxu0 0.0
      %v6113 = vand.u32 %v4570, 4294901760
      %6114 = vmatpush1.msra.mxu0 %v6113
      %6115 = vmatprep.subr.mxu0 0.0
      %v6116 = vand.u32 %v4569, 4294901760
      %6117 = vmatpush1.msra.mxu0 %v6116
      %6118 = vmatprep.subr.mxu0 0.0
      %v6119 = vand.u32 %v4568, 4294901760
      %6120 = vmatpush1.msra.mxu0 %v6119
      %6121 = vmatprep.subr.mxu0 0.0
      %v6122 = vand.u32 %v4567, 4294901760
      %6123 = vmatpush1.msra.mxu0 %v6122
      %6124 = vmatprep.subr.mxu0 0.0
      %v6125 = vand.u32 %v4566, 4294901760
      %6126 = vmatpush1.msra.mxu0 %v6125
      %6127 = vmatprep.subr.mxu0 0.0
      %v6128 = vand.u32 %v4565, 4294901760
      %6129 = vmatpush1.msra.mxu0 %v6128
      %6130 = vmatprep.subr.mxu0 0.0
      %v6131 = vand.u32 %v4564, 4294901760
      %6132 = vmatpush1.msra.mxu0 %v6131
      %6133 = vmatprep.subr.mxu0 0.0
      %v6134 = vand.u32 %v4563, 4294901760
      %6135 = vmatpush1.msra.mxu0 %v6134
      %6136 = vmatprep.subr.mxu0 0.0
      %v6137 = vand.u32 %v4562, 4294901760
      %6138 = vmatpush1.msra.mxu0 %v6137
      %6139 = vmatprep.subr.mxu0 0.0
      %v6140 = vand.u32 %v4561, 4294901760
      %6141 = vmatpush1.msra.mxu0 %v6140
      %6142 = vmatprep.subr.mxu0 0.0
      %v6143 = vand.u32 %v4560, 4294901760
      %6144 = vmatpush1.msra.mxu0 %v6143
      %6145 = vmatprep.subr.mxu0 0.0
      %v6146 = vand.u32 %v4559, 4294901760
      %6147 = vmatpush1.msra.mxu0 %v6146
      %6148 = vmatprep.subr.mxu0 0.0
      %v6149 = vand.u32 %v4558, 4294901760
      %6150 = vmatpush1.msra.mxu0 %v6149
      %6151 = vmatprep.subr.mxu0 0.0
      %v6152 = vand.u32 %v4557, 4294901760
      %6153 = vmatpush1.msra.mxu0 %v6152
      %6154 = vmatprep.subr.mxu0 0.0
      %v6155 = vand.u32 %v4556, 4294901760
      %6156 = vmatpush1.msra.mxu0 %v6155
      %6157 = vmatprep.subr.mxu0 0.0
      %6158 = vmatpush2.msra.mxu0 0.0
      %6159 = vmatprep.subr.mxu0 0.0
      %6160 = vmatpush2.msra.mxu0 0.0
      %6161 = vmatprep.subr.mxu0 0.0
      %6162 = vmatpush2.msra.mxu0 0.0
      %6163 = vmatprep.subr.mxu0 0.0
      %6164 = vmatpush2.msra.mxu0 0.0
      %6165 = vmatprep.subr.mxu0 0.0
      %6166 = vmatpush2.msra.mxu0 0.0
      %6167 = vmatprep.subr.mxu0 0.0
      %6168 = vmatpush2.msra.mxu0 0.0
      %6169 = vmatprep.subr.mxu0 0.0
      %6170 = vmatpush2.msra.mxu0 0.0
      %6171 = vmatprep.subr.mxu0 0.0
      %6172 = vmatpush2.msra.mxu0 0.0
      %6173 = vmatprep.subr.mxu0 0.0
      %6174 = vmatpush2.msra.mxu0 0.0
      %6175 = vmatprep.subr.mxu0 0.0
      %6176 = vmatpush2.msra.mxu0 0.0
      %6177 = vmatprep.subr.mxu0 0.0
      %6178 = vmatpush2.msra.mxu0 0.0
      %6179 = vmatprep.subr.mxu0 0.0
      %6180 = vmatpush2.msra.mxu0 0.0
      %6181 = vmatprep.subr.mxu0 0.0
      %6182 = vmatpush2.msra.mxu0 0.0
      %6183 = vmatprep.subr.mxu0 0.0
      %6184 = vmatpush2.msra.mxu0 0.0
      %6185 = vmatprep.subr.mxu0 0.0
      %6186 = vmatpush2.msra.mxu0 0.0
      %6187 = vmatprep.subr.mxu0 0.0
      %6188 = vmatpush2.msra.mxu0 0.0
      %6189 = vmatprep.mubr.f32.mxu0 0.0
      %v6190 = vand.u32 %v4587, 4294901760
      %6191 = vmatmul.mubr.f32.gmra.mxu0 %v6190
      %v6192 = vpop.f32.mrf.mxu0
      %v6193 = vadd.f32 %v6100, %v6192
      %v6194 = vpop.f32.mrf.mxu0
      %6195 = vmatprep.mubr.f32.mxu0 0.0
      %v6196 = vand.u32 %v4593, 4294901760
      %6197 = vmatmul.mubr.f32.gmra.mxu0 %v6196
      %v6198 = vpop.f32.mrf.mxu0
      %v6199 = vadd.f32 %v6106, %v6198
      %v6200 = vpop.f32.mrf.mxu0
      %6201 = vdwg.mxu0
      %v6202 = vadd.f32 %v4508, %v6193
      %v6203 = vadd.f32 %v4514, %v6199
      %v6204 = vld [vmem:[%s6] sm:$0x1]
      %v6206 = vlaneseq
      %v6207 = vshrl.u32 %v6206, 7
      %v6208 = vsub.s32 0, %v6207
      %v6209 = vrot.slane %v6204, %v6208
      %v6211 = vmul.f32 %v6202, %v6209
      %v6212 = vmul.f32 %v6203, %v6209
      %v6213 = vld [vmem:[%s7] sm:$0x1]
      %v6215 = vlaneseq
      %v6216 = vshrl.u32 %v6215, 7
      %v6217 = vsub.s32 0, %v6216
      %v6218 = vrot.slane %v6213, %v6217
      %v6220 = vadd.f32 %v6211, %v6218
      %v6221 = vadd.f32 %v6212, %v6218
      %v6222 = vmax.f32 %v6220, 0.0
      %v6223 = vmax.f32 %v6221, 0.0
      %6224 = vst [vmem:[#allocation3 + $0x1] sm:$0xff] %v6222
      %6225 = vst [vmem:[#allocation3 + $0x9] sm:$0xff] %v6223
      %v6226 = vld [vmem:[#allocation3] sm:$0xff]
      %v6227 = vld [vmem:[#allocation3 + $0x8] sm:$0xff]
      %v6228 = vld [vmem:[%s8] sm:$0xff]
      %v6229 = vld [vmem:[%s8 + $0x8] sm:$0xff]
      %v6230 = vld [vmem:[%s8 + $0x10] sm:$0xff]
      %v6231 = vld [vmem:[%s8 + $0x18] sm:$0xff]
      %v6232 = vld [vmem:[%s8 + $0x20] sm:$0xff]
      %v6233 = vld [vmem:[%s8 + $0x28] sm:$0xff]
      %v6234 = vld [vmem:[%s8 + $0x30] sm:$0xff]
      %v6235 = vld [vmem:[%s8 + $0x38] sm:$0xff]
      %v6236 = vld [vmem:[%s8 + $0x40] sm:$0xff]
      %v6237 = vld [vmem:[%s8 + $0x48] sm:$0xff]
      %v6238 = vld [vmem:[%s8 + $0x50] sm:$0xff]
      %v6239 = vld [vmem:[%s8 + $0x58] sm:$0xff]
      %v6240 = vld [vmem:[%s8 + $0x60] sm:$0xff]
      %v6241 = vld [vmem:[%s8 + $0x68] sm:$0xff]
      %v6242 = vld [vmem:[%s8 + $0x70] sm:$0xff]
      %v6243 = vld [vmem:[%s8 + $0x78] sm:$0xff]
      %v6244 = vld [vmem:[#allocation3 + $0x1] sm:$0xff]
      %v6245 = vld [vmem:[#allocation3 + $0x9] sm:$0xff]
      %s6246 = scalar_lea.vmem %s8, 128
      %v6247 = vld [vmem:[%s6246] sm:$0xff]
      %v6248 = vld [vmem:[%s6246 + $0x8] sm:$0xff]
      %v6249 = vld [vmem:[%s6246 + $0x10] sm:$0xff]
      %v6250 = vld [vmem:[%s6246 + $0x18] sm:$0xff]
      %v6251 = vld [vmem:[%s6246 + $0x20] sm:$0xff]
      %v6252 = vld [vmem:[%s6246 + $0x28] sm:$0xff]
      %v6253 = vld [vmem:[%s6246 + $0x30] sm:$0xff]
      %v6254 = vld [vmem:[%s6246 + $0x38] sm:$0xff]
      %v6255 = vld [vmem:[%s6246 + $0x40] sm:$0xff]
      %v6256 = vld [vmem:[%s6246 + $0x48] sm:$0xff]
      %v6257 = vld [vmem:[%s6246 + $0x50] sm:$0xff]
      %v6258 = vld [vmem:[%s6246 + $0x58] sm:$0xff]
      %v6259 = vld [vmem:[%s6246 + $0x60] sm:$0xff]
      %v6260 = vld [vmem:[%s6246 + $0x68] sm:$0xff]
      %v6261 = vld [vmem:[%s6246 + $0x70] sm:$0xff]
      %v6262 = vld [vmem:[%s6246 + $0x78] sm:$0xff]
      %6263 = vmatprep.subr.mxu0 0.0
      %v6264 = vand.u32 %v6262, 4294901760
      %6265 = vmatpush1.msra.mxu0 %v6264
      %6266 = vmatprep.subr.mxu0 0.0
      %v6267 = vand.u32 %v6261, 4294901760
      %6268 = vmatpush1.msra.mxu0 %v6267
      %6269 = vmatprep.subr.mxu0 0.0
      %v6270 = vand.u32 %v6260, 4294901760
      %6271 = vmatpush1.msra.mxu0 %v6270
      %6272 = vmatprep.subr.mxu0 0.0
      %v6273 = vand.u32 %v6259, 4294901760
      %6274 = vmatpush1.msra.mxu0 %v6273
      %6275 = vmatprep.subr.mxu0 0.0
      %v6276 = vand.u32 %v6258, 4294901760
      %6277 = vmatpush1.msra.mxu0 %v6276
      %6278 = vmatprep.subr.mxu0 0.0
      %v6279 = vand.u32 %v6257, 4294901760
      %6280 = vmatpush1.msra.mxu0 %v6279
      %6281 = vmatprep.subr.mxu0 0.0
      %v6282 = vand.u32 %v6256, 4294901760
      %6283 = vmatpush1.msra.mxu0 %v6282
      %6284 = vmatprep.subr.mxu0 0.0
      %v6285 = vand.u32 %v6255, 4294901760
      %6286 = vmatpush1.msra.mxu0 %v6285
      %6287 = vmatprep.subr.mxu0 0.0
      %v6288 = vand.u32 %v6254, 4294901760
      %6289 = vmatpush1.msra.mxu0 %v6288
      %6290 = vmatprep.subr.mxu0 0.0
      %v6291 = vand.u32 %v6253, 4294901760
      %6292 = vmatpush1.msra.mxu0 %v6291
      %6293 = vmatprep.subr.mxu0 0.0
      %v6294 = vand.u32 %v6252, 4294901760
      %6295 = vmatpush1.msra.mxu0 %v6294
      %6296 = vmatprep.subr.mxu0 0.0
      %v6297 = vand.u32 %v6251, 4294901760
      %6298 = vmatpush1.msra.mxu0 %v6297
      %6299 = vmatprep.subr.mxu0 0.0
      %v6300 = vand.u32 %v6250, 4294901760
      %6301 = vmatpush1.msra.mxu0 %v6300
      %6302 = vmatprep.subr.mxu0 0.0
      %v6303 = vand.u32 %v6249, 4294901760
      %6304 = vmatpush1.msra.mxu0 %v6303
      %6305 = vmatprep.subr.mxu0 0.0
      %v6306 = vand.u32 %v6248, 4294901760
      %6307 = vmatpush1.msra.mxu0 %v6306
      %6308 = vmatprep.subr.mxu0 0.0
      %v6309 = vand.u32 %v6247, 4294901760
      %6310 = vmatpush1.msra.mxu0 %v6309
      %6311 = vmatprep.subr.mxu0 0.0
      %6312 = vmatpush2.msra.mxu0 0.0
      %6313 = vmatprep.subr.mxu0 0.0
      %6314 = vmatpush2.msra.mxu0 0.0
      %6315 = vmatprep.subr.mxu0 0.0
      %6316 = vmatpush2.msra.mxu0 0.0
      %6317 = vmatprep.subr.mxu0 0.0
      %6318 = vmatpush2.msra.mxu0 0.0
      %6319 = vmatprep.subr.mxu0 0.0
      %6320 = vmatpush2.msra.mxu0 0.0
      %6321 = vmatprep.subr.mxu0 0.0
      %6322 = vmatpush2.msra.mxu0 0.0
      %6323 = vmatprep.subr.mxu0 0.0
      %6324 = vmatpush2.msra.mxu0 0.0
      %6325 = vmatprep.subr.mxu0 0.0
      %6326 = vmatpush2.msra.mxu0 0.0
      %6327 = vmatprep.subr.mxu0 0.0
      %6328 = vmatpush2.msra.mxu0 0.0
      %6329 = vmatprep.subr.mxu0 0.0
      %6330 = vmatpush2.msra.mxu0 0.0
      %6331 = vmatprep.subr.mxu0 0.0
      %6332 = vmatpush2.msra.mxu0 0.0
      %6333 = vmatprep.subr.mxu0 0.0
      %6334 = vmatpush2.msra.mxu0 0.0
      %6335 = vmatprep.subr.mxu0 0.0
      %6336 = vmatpush2.msra.mxu0 0.0
      %6337 = vmatprep.subr.mxu0 0.0
      %6338 = vmatpush2.msra.mxu0 0.0
      %6339 = vmatprep.subr.mxu0 0.0
      %6340 = vmatpush2.msra.mxu0 0.0
      %6341 = vmatprep.subr.mxu0 0.0
      %6342 = vmatpush2.msra.mxu0 0.0
      %6343 = vmatprep.mubr.f32.mxu0 0.0
      %v6344 = vand.u32 %v6244, 4294901760
      %v6345 = vsub.f32 %v6244, %v6344
      %v6346 = vand.u32 %v6345, 4294901760
      %v6347 = vsub.f32 %v6345, %v6346
      %v6348 = vand.u32 %v6347, 4294901760
      %6349 = vmatmul.mubr.f32.gmra.mxu0 %v6348
      %v6350 = vpop.f32.mrf.mxu0
      %v6351 = vadd.f32 0.0, %v6350
      %v6352 = vpop.f32.mrf.mxu0
      %6353 = vmatprep.mubr.f32.mxu0 0.0
      %v6354 = vand.u32 %v6245, 4294901760
      %v6355 = vsub.f32 %v6245, %v6354
      %v6356 = vand.u32 %v6355, 4294901760
      %v6357 = vsub.f32 %v6355, %v6356
      %v6358 = vand.u32 %v6357, 4294901760
      %6359 = vmatmul.mubr.f32.gmra.mxu0 %v6358
      %v6360 = vpop.f32.mrf.mxu0
      %v6361 = vadd.f32 0.0, %v6360
      %v6362 = vpop.f32.mrf.mxu0
      %6363 = vdwg.mxu0
      %6364 = vmatprep.subr.mxu0 0.0
      %v6365 = vand.u32 %v6262, 4294901760
      %v6366 = vsub.f32 %v6262, %v6365
      %v6367 = vand.u32 %v6366, 4294901760
      %v6368 = vsub.f32 %v6366, %v6367
      %v6369 = vand.u32 %v6368, 4294901760
      %6370 = vmatpush1.msra.mxu0 %v6369
      %6371 = vmatprep.subr.mxu0 0.0
      %v6372 = vand.u32 %v6261, 4294901760
      %v6373 = vsub.f32 %v6261, %v6372
      %v6374 = vand.u32 %v6373, 4294901760
      %v6375 = vsub.f32 %v6373, %v6374
      %v6376 = vand.u32 %v6375, 4294901760
      %6377 = vmatpush1.msra.mxu0 %v6376
      %6378 = vmatprep.subr.mxu0 0.0
      %v6379 = vand.u32 %v6260, 4294901760
      %v6380 = vsub.f32 %v6260, %v6379
      %v6381 = vand.u32 %v6380, 4294901760
      %v6382 = vsub.f32 %v6380, %v6381
      %v6383 = vand.u32 %v6382, 4294901760
      %6384 = vmatpush1.msra.mxu0 %v6383
      %6385 = vmatprep.subr.mxu0 0.0
      %v6386 = vand.u32 %v6259, 4294901760
      %v6387 = vsub.f32 %v6259, %v6386
      %v6388 = vand.u32 %v6387, 4294901760
      %v6389 = vsub.f32 %v6387, %v6388
      %v6390 = vand.u32 %v6389, 4294901760
      %6391 = vmatpush1.msra.mxu0 %v6390
      %6392 = vmatprep.subr.mxu0 0.0
      %v6393 = vand.u32 %v6258, 4294901760
      %v6394 = vsub.f32 %v6258, %v6393
      %v6395 = vand.u32 %v6394, 4294901760
      %v6396 = vsub.f32 %v6394, %v6395
      %v6397 = vand.u32 %v6396, 4294901760
      %6398 = vmatpush1.msra.mxu0 %v6397
      %6399 = vmatprep.subr.mxu0 0.0
      %v6400 = vand.u32 %v6257, 4294901760
      %v6401 = vsub.f32 %v6257, %v6400
      %v6402 = vand.u32 %v6401, 4294901760
      %v6403 = vsub.f32 %v6401, %v6402
      %v6404 = vand.u32 %v6403, 4294901760
      %6405 = vmatpush1.msra.mxu0 %v6404
      %6406 = vmatprep.subr.mxu0 0.0
      %v6407 = vand.u32 %v6256, 4294901760
      %v6408 = vsub.f32 %v6256, %v6407
      %v6409 = vand.u32 %v6408, 4294901760
      %v6410 = vsub.f32 %v6408, %v6409
      %v6411 = vand.u32 %v6410, 4294901760
      %6412 = vmatpush1.msra.mxu0 %v6411
      %6413 = vmatprep.subr.mxu0 0.0
      %v6414 = vand.u32 %v6255, 4294901760
      %v6415 = vsub.f32 %v6255, %v6414
      %v6416 = vand.u32 %v6415, 4294901760
      %v6417 = vsub.f32 %v6415, %v6416
      %v6418 = vand.u32 %v6417, 4294901760
      %6419 = vmatpush1.msra.mxu0 %v6418
      %6420 = vmatprep.subr.mxu0 0.0
      %v6421 = vand.u32 %v6254, 4294901760
      %v6422 = vsub.f32 %v6254, %v6421
      %v6423 = vand.u32 %v6422, 4294901760
      %v6424 = vsub.f32 %v6422, %v6423
      %v6425 = vand.u32 %v6424, 4294901760
      %6426 = vmatpush1.msra.mxu0 %v6425
      %6427 = vmatprep.subr.mxu0 0.0
      %v6428 = vand.u32 %v6253, 4294901760
      %v6429 = vsub.f32 %v6253, %v6428
      %v6430 = vand.u32 %v6429, 4294901760
      %v6431 = vsub.f32 %v6429, %v6430
      %v6432 = vand.u32 %v6431, 4294901760
      %6433 = vmatpush1.msra.mxu0 %v6432
      %6434 = vmatprep.subr.mxu0 0.0
      %v6435 = vand.u32 %v6252, 4294901760
      %v6436 = vsub.f32 %v6252, %v6435
      %v6437 = vand.u32 %v6436, 4294901760
      %v6438 = vsub.f32 %v6436, %v6437
      %v6439 = vand.u32 %v6438, 4294901760
      %6440 = vmatpush1.msra.mxu0 %v6439
      %6441 = vmatprep.subr.mxu0 0.0
      %v6442 = vand.u32 %v6251, 4294901760
      %v6443 = vsub.f32 %v6251, %v6442
      %v6444 = vand.u32 %v6443, 4294901760
      %v6445 = vsub.f32 %v6443, %v6444
      %v6446 = vand.u32 %v6445, 4294901760
      %6447 = vmatpush1.msra.mxu0 %v6446
      %6448 = vmatprep.subr.mxu0 0.0
      %v6449 = vand.u32 %v6250, 4294901760
      %v6450 = vsub.f32 %v6250, %v6449
      %v6451 = vand.u32 %v6450, 4294901760
      %v6452 = vsub.f32 %v6450, %v6451
      %v6453 = vand.u32 %v6452, 4294901760
      %6454 = vmatpush1.msra.mxu0 %v6453
      %6455 = vmatprep.subr.mxu0 0.0
      %v6456 = vand.u32 %v6249, 4294901760
      %v6457 = vsub.f32 %v6249, %v6456
      %v6458 = vand.u32 %v6457, 4294901760
      %v6459 = vsub.f32 %v6457, %v6458
      %v6460 = vand.u32 %v6459, 4294901760
      %6461 = vmatpush1.msra.mxu0 %v6460
      %6462 = vmatprep.subr.mxu0 0.0
      %v6463 = vand.u32 %v6248, 4294901760
      %v6464 = vsub.f32 %v6248, %v6463
      %v6465 = vand.u32 %v6464, 4294901760
      %v6466 = vsub.f32 %v6464, %v6465
      %v6467 = vand.u32 %v6466, 4294901760
      %6468 = vmatpush1.msra.mxu0 %v6467
      %6469 = vmatprep.subr.mxu0 0.0
      %v6470 = vand.u32 %v6247, 4294901760
      %v6471 = vsub.f32 %v6247, %v6470
      %v6472 = vand.u32 %v6471, 4294901760
      %v6473 = vsub.f32 %v6471, %v6472
      %v6474 = vand.u32 %v6473, 4294901760
      %6475 = vmatpush1.msra.mxu0 %v6474
      %6476 = vmatprep.subr.mxu0 0.0
      %6477 = vmatpush2.msra.mxu0 0.0
      %6478 = vmatprep.subr.mxu0 0.0
      %6479 = vmatpush2.msra.mxu0 0.0
      %6480 = vmatprep.subr.mxu0 0.0
      %6481 = vmatpush2.msra.mxu0 0.0
      %6482 = vmatprep.subr.mxu0 0.0
      %6483 = vmatpush2.msra.mxu0 0.0
      %6484 = vmatprep.subr.mxu0 0.0
      %6485 = vmatpush2.msra.mxu0 0.0
      %6486 = vmatprep.subr.mxu0 0.0
      %6487 = vmatpush2.msra.mxu0 0.0
      %6488 = vmatprep.subr.mxu0 0.0
      %6489 = vmatpush2.msra.mxu0 0.0
      %6490 = vmatprep.subr.mxu0 0.0
      %6491 = vmatpush2.msra.mxu0 0.0
      %6492 = vmatprep.subr.mxu0 0.0
      %6493 = vmatpush2.msra.mxu0 0.0
      %6494 = vmatprep.subr.mxu0 0.0
      %6495 = vmatpush2.msra.mxu0 0.0
      %6496 = vmatprep.subr.mxu0 0.0
      %6497 = vmatpush2.msra.mxu0 0.0
      %6498 = vmatprep.subr.mxu0 0.0
      %6499 = vmatpush2.msra.mxu0 0.0
      %6500 = vmatprep.subr.mxu0 0.0
      %6501 = vmatpush2.msra.mxu0 0.0
      %6502 = vmatprep.subr.mxu0 0.0
      %6503 = vmatpush2.msra.mxu0 0.0
      %6504 = vmatprep.subr.mxu0 0.0
      %6505 = vmatpush2.msra.mxu0 0.0
      %6506 = vmatprep.subr.mxu0 0.0
      %6507 = vmatpush2.msra.mxu0 0.0
      %6508 = vmatprep.mubr.f32.mxu0 0.0
      %v6509 = vand.u32 %v6244, 4294901760
      %6510 = vmatmul.mubr.f32.gmra.mxu0 %v6509
      %v6511 = vpop.f32.mrf.mxu0
      %v6512 = vadd.f32 %v6351, %v6511
      %v6513 = vpop.f32.mrf.mxu0
      %6514 = vmatprep.mubr.f32.mxu0 0.0
      %v6515 = vand.u32 %v6245, 4294901760
      %6516 = vmatmul.mubr.f32.gmra.mxu0 %v6515
      %v6517 = vpop.f32.mrf.mxu0
      %v6518 = vadd.f32 %v6361, %v6517
      %v6519 = vpop.f32.mrf.mxu0
      %6520 = vdwg.mxu0
      %6521 = vmatprep.subr.mxu0 0.0
      %v6522 = vand.u32 %v6262, 4294901760
      %v6523 = vsub.f32 %v6262, %v6522
      %6524 = vmatpush1.msra.mxu0 %v6523
      %6525 = vmatprep.subr.mxu0 0.0
      %v6526 = vand.u32 %v6261, 4294901760
      %v6527 = vsub.f32 %v6261, %v6526
      %6528 = vmatpush1.msra.mxu0 %v6527
      %6529 = vmatprep.subr.mxu0 0.0
      %v6530 = vand.u32 %v6260, 4294901760
      %v6531 = vsub.f32 %v6260, %v6530
      %6532 = vmatpush1.msra.mxu0 %v6531
      %6533 = vmatprep.subr.mxu0 0.0
      %v6534 = vand.u32 %v6259, 4294901760
      %v6535 = vsub.f32 %v6259, %v6534
      %6536 = vmatpush1.msra.mxu0 %v6535
      %6537 = vmatprep.subr.mxu0 0.0
      %v6538 = vand.u32 %v6258, 4294901760
      %v6539 = vsub.f32 %v6258, %v6538
      %6540 = vmatpush1.msra.mxu0 %v6539
      %6541 = vmatprep.subr.mxu0 0.0
      %v6542 = vand.u32 %v6257, 4294901760
      %v6543 = vsub.f32 %v6257, %v6542
      %6544 = vmatpush1.msra.mxu0 %v6543
      %6545 = vmatprep.subr.mxu0 0.0
      %v6546 = vand.u32 %v6256, 4294901760
      %v6547 = vsub.f32 %v6256, %v6546
      %6548 = vmatpush1.msra.mxu0 %v6547
      %6549 = vmatprep.subr.mxu0 0.0
      %v6550 = vand.u32 %v6255, 4294901760
      %v6551 = vsub.f32 %v6255, %v6550
      %6552 = vmatpush1.msra.mxu0 %v6551
      %6553 = vmatprep.subr.mxu0 0.0
      %v6554 = vand.u32 %v6254, 4294901760
      %v6555 = vsub.f32 %v6254, %v6554
      %6556 = vmatpush1.msra.mxu0 %v6555
      %6557 = vmatprep.subr.mxu0 0.0
      %v6558 = vand.u32 %v6253, 4294901760
      %v6559 = vsub.f32 %v6253, %v6558
      %6560 = vmatpush1.msra.mxu0 %v6559
      %6561 = vmatprep.subr.mxu0 0.0
      %v6562 = vand.u32 %v6252, 4294901760
      %v6563 = vsub.f32 %v6252, %v6562
      %6564 = vmatpush1.msra.mxu0 %v6563
      %6565 = vmatprep.subr.mxu0 0.0
      %v6566 = vand.u32 %v6251, 4294901760
      %v6567 = vsub.f32 %v6251, %v6566
      %6568 = vmatpush1.msra.mxu0 %v6567
      %6569 = vmatprep.subr.mxu0 0.0
      %v6570 = vand.u32 %v6250, 4294901760
      %v6571 = vsub.f32 %v6250, %v6570
      %6572 = vmatpush1.msra.mxu0 %v6571
      %6573 = vmatprep.subr.mxu0 0.0
      %v6574 = vand.u32 %v6249, 4294901760
      %v6575 = vsub.f32 %v6249, %v6574
      %6576 = vmatpush1.msra.mxu0 %v6575
      %6577 = vmatprep.subr.mxu0 0.0
      %v6578 = vand.u32 %v6248, 4294901760
      %v6579 = vsub.f32 %v6248, %v6578
      %6580 = vmatpush1.msra.mxu0 %v6579
      %6581 = vmatprep.subr.mxu0 0.0
      %v6582 = vand.u32 %v6247, 4294901760
      %v6583 = vsub.f32 %v6247, %v6582
      %6584 = vmatpush1.msra.mxu0 %v6583
      %6585 = vmatprep.subr.mxu0 0.0
      %6586 = vmatpush2.msra.mxu0 0.0
      %6587 = vmatprep.subr.mxu0 0.0
      %6588 = vmatpush2.msra.mxu0 0.0
      %6589 = vmatprep.subr.mxu0 0.0
      %6590 = vmatpush2.msra.mxu0 0.0
      %6591 = vmatprep.subr.mxu0 0.0
      %6592 = vmatpush2.msra.mxu0 0.0
      %6593 = vmatprep.subr.mxu0 0.0
      %6594 = vmatpush2.msra.mxu0 0.0
      %6595 = vmatprep.subr.mxu0 0.0
      %6596 = vmatpush2.msra.mxu0 0.0
      %6597 = vmatprep.subr.mxu0 0.0
      %6598 = vmatpush2.msra.mxu0 0.0
      %6599 = vmatprep.subr.mxu0 0.0
      %6600 = vmatpush2.msra.mxu0 0.0
      %6601 = vmatprep.subr.mxu0 0.0
      %6602 = vmatpush2.msra.mxu0 0.0
      %6603 = vmatprep.subr.mxu0 0.0
      %6604 = vmatpush2.msra.mxu0 0.0
      %6605 = vmatprep.subr.mxu0 0.0
      %6606 = vmatpush2.msra.mxu0 0.0
      %6607 = vmatprep.subr.mxu0 0.0
      %6608 = vmatpush2.msra.mxu0 0.0
      %6609 = vmatprep.subr.mxu0 0.0
      %6610 = vmatpush2.msra.mxu0 0.0
      %6611 = vmatprep.subr.mxu0 0.0
      %6612 = vmatpush2.msra.mxu0 0.0
      %6613 = vmatprep.subr.mxu0 0.0
      %6614 = vmatpush2.msra.mxu0 0.0
      %6615 = vmatprep.subr.mxu0 0.0
      %6616 = vmatpush2.msra.mxu0 0.0
      %6617 = vmatprep.mubr.f32.mxu0 0.0
      %v6618 = vand.u32 %v6244, 4294901760
      %v6619 = vsub.f32 %v6244, %v6618
      %6620 = vmatmul.mubr.f32.gmra.mxu0 %v6619
      %v6621 = vpop.f32.mrf.mxu0
      %v6622 = vadd.f32 %v6512, %v6621
      %v6623 = vpop.f32.mrf.mxu0
      %6624 = vmatprep.mubr.f32.mxu0 0.0
      %v6625 = vand.u32 %v6245, 4294901760
      %v6626 = vsub.f32 %v6245, %v6625
      %6627 = vmatmul.mubr.f32.gmra.mxu0 %v6626
      %v6628 = vpop.f32.mrf.mxu0
      %v6629 = vadd.f32 %v6518, %v6628
      %v6630 = vpop.f32.mrf.mxu0
      %6631 = vdwg.mxu0
      %6632 = vmatprep.subr.mxu0 0.0
      %v6633 = vand.u32 %v6262, 4294901760
      %6634 = vmatpush1.msra.mxu0 %v6633
      %6635 = vmatprep.subr.mxu0 0.0
      %v6636 = vand.u32 %v6261, 4294901760
      %6637 = vmatpush1.msra.mxu0 %v6636
      %6638 = vmatprep.subr.mxu0 0.0
      %v6639 = vand.u32 %v6260, 4294901760
      %6640 = vmatpush1.msra.mxu0 %v6639
      %6641 = vmatprep.subr.mxu0 0.0
      %v6642 = vand.u32 %v6259, 4294901760
      %6643 = vmatpush1.msra.mxu0 %v6642
      %6644 = vmatprep.subr.mxu0 0.0
      %v6645 = vand.u32 %v6258, 4294901760
      %6646 = vmatpush1.msra.mxu0 %v6645
      %6647 = vmatprep.subr.mxu0 0.0
      %v6648 = vand.u32 %v6257, 4294901760
      %6649 = vmatpush1.msra.mxu0 %v6648
      %6650 = vmatprep.subr.mxu0 0.0
      %v6651 = vand.u32 %v6256, 4294901760
      %6652 = vmatpush1.msra.mxu0 %v6651
      %6653 = vmatprep.subr.mxu0 0.0
      %v6654 = vand.u32 %v6255, 4294901760
      %6655 = vmatpush1.msra.mxu0 %v6654
      %6656 = vmatprep.subr.mxu0 0.0
      %v6657 = vand.u32 %v6254, 4294901760
      %6658 = vmatpush1.msra.mxu0 %v6657
      %6659 = vmatprep.subr.mxu0 0.0
      %v6660 = vand.u32 %v6253, 4294901760
      %6661 = vmatpush1.msra.mxu0 %v6660
      %6662 = vmatprep.subr.mxu0 0.0
      %v6663 = vand.u32 %v6252, 4294901760
      %6664 = vmatpush1.msra.mxu0 %v6663
      %6665 = vmatprep.subr.mxu0 0.0
      %v6666 = vand.u32 %v6251, 4294901760
      %6667 = vmatpush1.msra.mxu0 %v6666
      %6668 = vmatprep.subr.mxu0 0.0
      %v6669 = vand.u32 %v6250, 4294901760
      %6670 = vmatpush1.msra.mxu0 %v6669
      %6671 = vmatprep.subr.mxu0 0.0
      %v6672 = vand.u32 %v6249, 4294901760
      %6673 = vmatpush1.msra.mxu0 %v6672
      %6674 = vmatprep.subr.mxu0 0.0
      %v6675 = vand.u32 %v6248, 4294901760
      %6676 = vmatpush1.msra.mxu0 %v6675
      %6677 = vmatprep.subr.mxu0 0.0
      %v6678 = vand.u32 %v6247, 4294901760
      %6679 = vmatpush1.msra.mxu0 %v6678
      %6680 = vmatprep.subr.mxu0 0.0
      %6681 = vmatpush2.msra.mxu0 0.0
      %6682 = vmatprep.subr.mxu0 0.0
      %6683 = vmatpush2.msra.mxu0 0.0
      %6684 = vmatprep.subr.mxu0 0.0
      %6685 = vmatpush2.msra.mxu0 0.0
      %6686 = vmatprep.subr.mxu0 0.0
      %6687 = vmatpush2.msra.mxu0 0.0
      %6688 = vmatprep.subr.mxu0 0.0
      %6689 = vmatpush2.msra.mxu0 0.0
      %6690 = vmatprep.subr.mxu0 0.0
      %6691 = vmatpush2.msra.mxu0 0.0
      %6692 = vmatprep.subr.mxu0 0.0
      %6693 = vmatpush2.msra.mxu0 0.0
      %6694 = vmatprep.subr.mxu0 0.0
      %6695 = vmatpush2.msra.mxu0 0.0
      %6696 = vmatprep.subr.mxu0 0.0
      %6697 = vmatpush2.msra.mxu0 0.0
      %6698 = vmatprep.subr.mxu0 0.0
      %6699 = vmatpush2.msra.mxu0 0.0
      %6700 = vmatprep.subr.mxu0 0.0
      %6701 = vmatpush2.msra.mxu0 0.0
      %6702 = vmatprep.subr.mxu0 0.0
      %6703 = vmatpush2.msra.mxu0 0.0
      %6704 = vmatprep.subr.mxu0 0.0
      %6705 = vmatpush2.msra.mxu0 0.0
      %6706 = vmatprep.subr.mxu0 0.0
      %6707 = vmatpush2.msra.mxu0 0.0
      %6708 = vmatprep.subr.mxu0 0.0
      %6709 = vmatpush2.msra.mxu0 0.0
      %6710 = vmatprep.subr.mxu0 0.0
      %6711 = vmatpush2.msra.mxu0 0.0
      %6712 = vmatprep.mubr.f32.mxu0 0.0
      %v6713 = vand.u32 %v6244, 4294901760
      %v6714 = vsub.f32 %v6244, %v6713
      %v6715 = vand.u32 %v6714, 4294901760
      %6716 = vmatmul.mubr.f32.gmra.mxu0 %v6715
      %v6717 = vpop.f32.mrf.mxu0
      %v6718 = vadd.f32 %v6622, %v6717
      %v6719 = vpop.f32.mrf.mxu0
      %6720 = vmatprep.mubr.f32.mxu0 0.0
      %v6721 = vand.u32 %v6245, 4294901760
      %v6722 = vsub.f32 %v6245, %v6721
      %v6723 = vand.u32 %v6722, 4294901760
      %6724 = vmatmul.mubr.f32.gmra.mxu0 %v6723
      %v6725 = vpop.f32.mrf.mxu0
      %v6726 = vadd.f32 %v6629, %v6725
      %v6727 = vpop.f32.mrf.mxu0
      %6728 = vdwg.mxu0
      %6729 = vmatprep.subr.mxu0 0.0
      %v6730 = vand.u32 %v6262, 4294901760
      %v6731 = vsub.f32 %v6262, %v6730
      %v6732 = vand.u32 %v6731, 4294901760
      %6733 = vmatpush1.msra.mxu0 %v6732
      %6734 = vmatprep.subr.mxu0 0.0
      %v6735 = vand.u32 %v6261, 4294901760
      %v6736 = vsub.f32 %v6261, %v6735
      %v6737 = vand.u32 %v6736, 4294901760
      %6738 = vmatpush1.msra.mxu0 %v6737
      %6739 = vmatprep.subr.mxu0 0.0
      %v6740 = vand.u32 %v6260, 4294901760
      %v6741 = vsub.f32 %v6260, %v6740
      %v6742 = vand.u32 %v6741, 4294901760
      %6743 = vmatpush1.msra.mxu0 %v6742
      %6744 = vmatprep.subr.mxu0 0.0
      %v6745 = vand.u32 %v6259, 4294901760
      %v6746 = vsub.f32 %v6259, %v6745
      %v6747 = vand.u32 %v6746, 4294901760
      %6748 = vmatpush1.msra.mxu0 %v6747
      %6749 = vmatprep.subr.mxu0 0.0
      %v6750 = vand.u32 %v6258, 4294901760
      %v6751 = vsub.f32 %v6258, %v6750
      %v6752 = vand.u32 %v6751, 4294901760
      %6753 = vmatpush1.msra.mxu0 %v6752
      %6754 = vmatprep.subr.mxu0 0.0
      %v6755 = vand.u32 %v6257, 4294901760
      %v6756 = vsub.f32 %v6257, %v6755
      %v6757 = vand.u32 %v6756, 4294901760
      %6758 = vmatpush1.msra.mxu0 %v6757
      %6759 = vmatprep.subr.mxu0 0.0
      %v6760 = vand.u32 %v6256, 4294901760
      %v6761 = vsub.f32 %v6256, %v6760
      %v6762 = vand.u32 %v6761, 4294901760
      %6763 = vmatpush1.msra.mxu0 %v6762
      %6764 = vmatprep.subr.mxu0 0.0
      %v6765 = vand.u32 %v6255, 4294901760
      %v6766 = vsub.f32 %v6255, %v6765
      %v6767 = vand.u32 %v6766, 4294901760
      %6768 = vmatpush1.msra.mxu0 %v6767
      %6769 = vmatprep.subr.mxu0 0.0
      %v6770 = vand.u32 %v6254, 4294901760
      %v6771 = vsub.f32 %v6254, %v6770
      %v6772 = vand.u32 %v6771, 4294901760
      %6773 = vmatpush1.msra.mxu0 %v6772
      %6774 = vmatprep.subr.mxu0 0.0
      %v6775 = vand.u32 %v6253, 4294901760
      %v6776 = vsub.f32 %v6253, %v6775
      %v6777 = vand.u32 %v6776, 4294901760
      %6778 = vmatpush1.msra.mxu0 %v6777
      %6779 = vmatprep.subr.mxu0 0.0
      %v6780 = vand.u32 %v6252, 4294901760
      %v6781 = vsub.f32 %v6252, %v6780
      %v6782 = vand.u32 %v6781, 4294901760
      %6783 = vmatpush1.msra.mxu0 %v6782
      %6784 = vmatprep.subr.mxu0 0.0
      %v6785 = vand.u32 %v6251, 4294901760
      %v6786 = vsub.f32 %v6251, %v6785
      %v6787 = vand.u32 %v6786, 4294901760
      %6788 = vmatpush1.msra.mxu0 %v6787
      %6789 = vmatprep.subr.mxu0 0.0
      %v6790 = vand.u32 %v6250, 4294901760
      %v6791 = vsub.f32 %v6250, %v6790
      %v6792 = vand.u32 %v6791, 4294901760
      %6793 = vmatpush1.msra.mxu0 %v6792
      %6794 = vmatprep.subr.mxu0 0.0
      %v6795 = vand.u32 %v6249, 4294901760
      %v6796 = vsub.f32 %v6249, %v6795
      %v6797 = vand.u32 %v6796, 4294901760
      %6798 = vmatpush1.msra.mxu0 %v6797
      %6799 = vmatprep.subr.mxu0 0.0
      %v6800 = vand.u32 %v6248, 4294901760
      %v6801 = vsub.f32 %v6248, %v6800
      %v6802 = vand.u32 %v6801, 4294901760
      %6803 = vmatpush1.msra.mxu0 %v6802
      %6804 = vmatprep.subr.mxu0 0.0
      %v6805 = vand.u32 %v6247, 4294901760
      %v6806 = vsub.f32 %v6247, %v6805
      %v6807 = vand.u32 %v6806, 4294901760
      %6808 = vmatpush1.msra.mxu0 %v6807
      %6809 = vmatprep.subr.mxu0 0.0
      %6810 = vmatpush2.msra.mxu0 0.0
      %6811 = vmatprep.subr.mxu0 0.0
      %6812 = vmatpush2.msra.mxu0 0.0
      %6813 = vmatprep.subr.mxu0 0.0
      %6814 = vmatpush2.msra.mxu0 0.0
      %6815 = vmatprep.subr.mxu0 0.0
      %6816 = vmatpush2.msra.mxu0 0.0
      %6817 = vmatprep.subr.mxu0 0.0
      %6818 = vmatpush2.msra.mxu0 0.0
      %6819 = vmatprep.subr.mxu0 0.0
      %6820 = vmatpush2.msra.mxu0 0.0
      %6821 = vmatprep.subr.mxu0 0.0
      %6822 = vmatpush2.msra.mxu0 0.0
      %6823 = vmatprep.subr.mxu0 0.0
      %6824 = vmatpush2.msra.mxu0 0.0
      %6825 = vmatprep.subr.mxu0 0.0
      %6826 = vmatpush2.msra.mxu0 0.0
      %6827 = vmatprep.subr.mxu0 0.0
      %6828 = vmatpush2.msra.mxu0 0.0
      %6829 = vmatprep.subr.mxu0 0.0
      %6830 = vmatpush2.msra.mxu0 0.0
      %6831 = vmatprep.subr.mxu0 0.0
      %6832 = vmatpush2.msra.mxu0 0.0
      %6833 = vmatprep.subr.mxu0 0.0
      %6834 = vmatpush2.msra.mxu0 0.0
      %6835 = vmatprep.subr.mxu0 0.0
      %6836 = vmatpush2.msra.mxu0 0.0
      %6837 = vmatprep.subr.mxu0 0.0
      %6838 = vmatpush2.msra.mxu0 0.0
      %6839 = vmatprep.subr.mxu0 0.0
      %6840 = vmatpush2.msra.mxu0 0.0
      %6841 = vmatprep.mubr.f32.mxu0 0.0
      %v6842 = vand.u32 %v6244, 4294901760
      %6843 = vmatmul.mubr.f32.gmra.mxu0 %v6842
      %v6844 = vpop.f32.mrf.mxu0
      %v6845 = vadd.f32 %v6718, %v6844
      %v6846 = vpop.f32.mrf.mxu0
      %6847 = vmatprep.mubr.f32.mxu0 0.0
      %v6848 = vand.u32 %v6245, 4294901760
      %6849 = vmatmul.mubr.f32.gmra.mxu0 %v6848
      %v6850 = vpop.f32.mrf.mxu0
      %v6851 = vadd.f32 %v6726, %v6850
      %v6852 = vpop.f32.mrf.mxu0
      %6853 = vdwg.mxu0
      %6854 = vmatprep.subr.mxu0 0.0
      %v6855 = vand.u32 %v6262, 4294901760
      %6856 = vmatpush1.msra.mxu0 %v6855
      %6857 = vmatprep.subr.mxu0 0.0
      %v6858 = vand.u32 %v6261, 4294901760
      %6859 = vmatpush1.msra.mxu0 %v6858
      %6860 = vmatprep.subr.mxu0 0.0
      %v6861 = vand.u32 %v6260, 4294901760
      %6862 = vmatpush1.msra.mxu0 %v6861
      %6863 = vmatprep.subr.mxu0 0.0
      %v6864 = vand.u32 %v6259, 4294901760
      %6865 = vmatpush1.msra.mxu0 %v6864
      %6866 = vmatprep.subr.mxu0 0.0
      %v6867 = vand.u32 %v6258, 4294901760
      %6868 = vmatpush1.msra.mxu0 %v6867
      %6869 = vmatprep.subr.mxu0 0.0
      %v6870 = vand.u32 %v6257, 4294901760
      %6871 = vmatpush1.msra.mxu0 %v6870
      %6872 = vmatprep.subr.mxu0 0.0
      %v6873 = vand.u32 %v6256, 4294901760
      %6874 = vmatpush1.msra.mxu0 %v6873
      %6875 = vmatprep.subr.mxu0 0.0
      %v6876 = vand.u32 %v6255, 4294901760
      %6877 = vmatpush1.msra.mxu0 %v6876
      %6878 = vmatprep.subr.mxu0 0.0
      %v6879 = vand.u32 %v6254, 4294901760
      %6880 = vmatpush1.msra.mxu0 %v6879
      %6881 = vmatprep.subr.mxu0 0.0
      %v6882 = vand.u32 %v6253, 4294901760
      %6883 = vmatpush1.msra.mxu0 %v6882
      %6884 = vmatprep.subr.mxu0 0.0
      %v6885 = vand.u32 %v6252, 4294901760
      %6886 = vmatpush1.msra.mxu0 %v6885
      %6887 = vmatprep.subr.mxu0 0.0
      %v6888 = vand.u32 %v6251, 4294901760
      %6889 = vmatpush1.msra.mxu0 %v6888
      %6890 = vmatprep.subr.mxu0 0.0
      %v6891 = vand.u32 %v6250, 4294901760
      %6892 = vmatpush1.msra.mxu0 %v6891
      %6893 = vmatprep.subr.mxu0 0.0
      %v6894 = vand.u32 %v6249, 4294901760
      %6895 = vmatpush1.msra.mxu0 %v6894
      %6896 = vmatprep.subr.mxu0 0.0
      %v6897 = vand.u32 %v6248, 4294901760
      %6898 = vmatpush1.msra.mxu0 %v6897
      %6899 = vmatprep.subr.mxu0 0.0
      %v6900 = vand.u32 %v6247, 4294901760
      %6901 = vmatpush1.msra.mxu0 %v6900
      %6902 = vmatprep.subr.mxu0 0.0
      %6903 = vmatpush2.msra.mxu0 0.0
      %6904 = vmatprep.subr.mxu0 0.0
      %6905 = vmatpush2.msra.mxu0 0.0
      %6906 = vmatprep.subr.mxu0 0.0
      %6907 = vmatpush2.msra.mxu0 0.0
      %6908 = vmatprep.subr.mxu0 0.0
      %6909 = vmatpush2.msra.mxu0 0.0
      %6910 = vmatprep.subr.mxu0 0.0
      %6911 = vmatpush2.msra.mxu0 0.0
      %6912 = vmatprep.subr.mxu0 0.0
      %6913 = vmatpush2.msra.mxu0 0.0
      %6914 = vmatprep.subr.mxu0 0.0
      %6915 = vmatpush2.msra.mxu0 0.0
      %6916 = vmatprep.subr.mxu0 0.0
      %6917 = vmatpush2.msra.mxu0 0.0
      %6918 = vmatprep.subr.mxu0 0.0
      %6919 = vmatpush2.msra.mxu0 0.0
      %6920 = vmatprep.subr.mxu0 0.0
      %6921 = vmatpush2.msra.mxu0 0.0
      %6922 = vmatprep.subr.mxu0 0.0
      %6923 = vmatpush2.msra.mxu0 0.0
      %6924 = vmatprep.subr.mxu0 0.0
      %6925 = vmatpush2.msra.mxu0 0.0
      %6926 = vmatprep.subr.mxu0 0.0
      %6927 = vmatpush2.msra.mxu0 0.0
      %6928 = vmatprep.subr.mxu0 0.0
      %6929 = vmatpush2.msra.mxu0 0.0
      %6930 = vmatprep.subr.mxu0 0.0
      %6931 = vmatpush2.msra.mxu0 0.0
      %6932 = vmatprep.subr.mxu0 0.0
      %6933 = vmatpush2.msra.mxu0 0.0
      %6934 = vmatprep.mubr.f32.mxu0 0.0
      %v6935 = vand.u32 %v6244, 4294901760
      %6936 = vmatmul.mubr.f32.gmra.mxu0 %v6935
      %v6937 = vpop.f32.mrf.mxu0
      %v6938 = vadd.f32 %v6845, %v6937
      %v6939 = vpop.f32.mrf.mxu0
      %6940 = vmatprep.mubr.f32.mxu0 0.0
      %v6941 = vand.u32 %v6245, 4294901760
      %6942 = vmatmul.mubr.f32.gmra.mxu0 %v6941
      %v6943 = vpop.f32.mrf.mxu0
      %v6944 = vadd.f32 %v6851, %v6943
      %v6945 = vpop.f32.mrf.mxu0
      %6946 = vdwg.mxu0
      %6947 = vmatprep.subr.mxu0 0.0
      %v6948 = vand.u32 %v6243, 4294901760
      %6949 = vmatpush1.msra.mxu0 %v6948
      %6950 = vmatprep.subr.mxu0 0.0
      %v6951 = vand.u32 %v6242, 4294901760
      %6952 = vmatpush1.msra.mxu0 %v6951
      %6953 = vmatprep.subr.mxu0 0.0
      %v6954 = vand.u32 %v6241, 4294901760
      %6955 = vmatpush1.msra.mxu0 %v6954
      %6956 = vmatprep.subr.mxu0 0.0
      %v6957 = vand.u32 %v6240, 4294901760
      %6958 = vmatpush1.msra.mxu0 %v6957
      %6959 = vmatprep.subr.mxu0 0.0
      %v6960 = vand.u32 %v6239, 4294901760
      %6961 = vmatpush1.msra.mxu0 %v6960
      %6962 = vmatprep.subr.mxu0 0.0
      %v6963 = vand.u32 %v6238, 4294901760
      %6964 = vmatpush1.msra.mxu0 %v6963
      %6965 = vmatprep.subr.mxu0 0.0
      %v6966 = vand.u32 %v6237, 4294901760
      %6967 = vmatpush1.msra.mxu0 %v6966
      %6968 = vmatprep.subr.mxu0 0.0
      %v6969 = vand.u32 %v6236, 4294901760
      %6970 = vmatpush1.msra.mxu0 %v6969
      %6971 = vmatprep.subr.mxu0 0.0
      %v6972 = vand.u32 %v6235, 4294901760
      %6973 = vmatpush1.msra.mxu0 %v6972
      %6974 = vmatprep.subr.mxu0 0.0
      %v6975 = vand.u32 %v6234, 4294901760
      %6976 = vmatpush1.msra.mxu0 %v6975
      %6977 = vmatprep.subr.mxu0 0.0
      %v6978 = vand.u32 %v6233, 4294901760
      %6979 = vmatpush1.msra.mxu0 %v6978
      %6980 = vmatprep.subr.mxu0 0.0
      %v6981 = vand.u32 %v6232, 4294901760
      %6982 = vmatpush1.msra.mxu0 %v6981
      %6983 = vmatprep.subr.mxu0 0.0
      %v6984 = vand.u32 %v6231, 4294901760
      %6985 = vmatpush1.msra.mxu0 %v6984
      %6986 = vmatprep.subr.mxu0 0.0
      %v6987 = vand.u32 %v6230, 4294901760
      %6988 = vmatpush1.msra.mxu0 %v6987
      %6989 = vmatprep.subr.mxu0 0.0
      %v6990 = vand.u32 %v6229, 4294901760
      %6991 = vmatpush1.msra.mxu0 %v6990
      %6992 = vmatprep.subr.mxu0 0.0
      %v6993 = vand.u32 %v6228, 4294901760
      %6994 = vmatpush1.msra.mxu0 %v6993
      %6995 = vmatprep.subr.mxu0 0.0
      %6996 = vmatpush2.msra.mxu0 0.0
      %6997 = vmatprep.subr.mxu0 0.0
      %6998 = vmatpush2.msra.mxu0 0.0
      %6999 = vmatprep.subr.mxu0 0.0
      %7000 = vmatpush2.msra.mxu0 0.0
      %7001 = vmatprep.subr.mxu0 0.0
      %7002 = vmatpush2.msra.mxu0 0.0
      %7003 = vmatprep.subr.mxu0 0.0
      %7004 = vmatpush2.msra.mxu0 0.0
      %7005 = vmatprep.subr.mxu0 0.0
      %7006 = vmatpush2.msra.mxu0 0.0
      %7007 = vmatprep.subr.mxu0 0.0
      %7008 = vmatpush2.msra.mxu0 0.0
      %7009 = vmatprep.subr.mxu0 0.0
      %7010 = vmatpush2.msra.mxu0 0.0
      %7011 = vmatprep.subr.mxu0 0.0
      %7012 = vmatpush2.msra.mxu0 0.0
      %7013 = vmatprep.subr.mxu0 0.0
      %7014 = vmatpush2.msra.mxu0 0.0
      %7015 = vmatprep.subr.mxu0 0.0
      %7016 = vmatpush2.msra.mxu0 0.0
      %7017 = vmatprep.subr.mxu0 0.0
      %7018 = vmatpush2.msra.mxu0 0.0
      %7019 = vmatprep.subr.mxu0 0.0
      %7020 = vmatpush2.msra.mxu0 0.0
      %7021 = vmatprep.subr.mxu0 0.0
      %7022 = vmatpush2.msra.mxu0 0.0
      %7023 = vmatprep.subr.mxu0 0.0
      %7024 = vmatpush2.msra.mxu0 0.0
      %7025 = vmatprep.subr.mxu0 0.0
      %7026 = vmatpush2.msra.mxu0 0.0
      %7027 = vmatprep.mubr.f32.mxu0 0.0
      %v7028 = vand.u32 %v6226, 4294901760
      %v7029 = vsub.f32 %v6226, %v7028
      %v7030 = vand.u32 %v7029, 4294901760
      %v7031 = vsub.f32 %v7029, %v7030
      %v7032 = vand.u32 %v7031, 4294901760
      %7033 = vmatmul.mubr.f32.gmra.mxu0 %v7032
      %v7034 = vpop.f32.mrf.mxu0
      %v7035 = vadd.f32 %v6938, %v7034
      %v7036 = vpop.f32.mrf.mxu0
      %7037 = vmatprep.mubr.f32.mxu0 0.0
      %v7038 = vand.u32 %v6227, 4294901760
      %v7039 = vsub.f32 %v6227, %v7038
      %v7040 = vand.u32 %v7039, 4294901760
      %v7041 = vsub.f32 %v7039, %v7040
      %v7042 = vand.u32 %v7041, 4294901760
      %7043 = vmatmul.mubr.f32.gmra.mxu0 %v7042
      %v7044 = vpop.f32.mrf.mxu0
      %v7045 = vadd.f32 %v6944, %v7044
      %v7046 = vpop.f32.mrf.mxu0
      %7047 = vdwg.mxu0
      %7048 = vmatprep.subr.mxu0 0.0
      %v7049 = vand.u32 %v6243, 4294901760
      %v7050 = vsub.f32 %v6243, %v7049
      %v7051 = vand.u32 %v7050, 4294901760
      %v7052 = vsub.f32 %v7050, %v7051
      %v7053 = vand.u32 %v7052, 4294901760
      %7054 = vmatpush1.msra.mxu0 %v7053
      %7055 = vmatprep.subr.mxu0 0.0
      %v7056 = vand.u32 %v6242, 4294901760
      %v7057 = vsub.f32 %v6242, %v7056
      %v7058 = vand.u32 %v7057, 4294901760
      %v7059 = vsub.f32 %v7057, %v7058
      %v7060 = vand.u32 %v7059, 4294901760
      %7061 = vmatpush1.msra.mxu0 %v7060
      %7062 = vmatprep.subr.mxu0 0.0
      %v7063 = vand.u32 %v6241, 4294901760
      %v7064 = vsub.f32 %v6241, %v7063
      %v7065 = vand.u32 %v7064, 4294901760
      %v7066 = vsub.f32 %v7064, %v7065
      %v7067 = vand.u32 %v7066, 4294901760
      %7068 = vmatpush1.msra.mxu0 %v7067
      %7069 = vmatprep.subr.mxu0 0.0
      %v7070 = vand.u32 %v6240, 4294901760
      %v7071 = vsub.f32 %v6240, %v7070
      %v7072 = vand.u32 %v7071, 4294901760
      %v7073 = vsub.f32 %v7071, %v7072
      %v7074 = vand.u32 %v7073, 4294901760
      %7075 = vmatpush1.msra.mxu0 %v7074
      %7076 = vmatprep.subr.mxu0 0.0
      %v7077 = vand.u32 %v6239, 4294901760
      %v7078 = vsub.f32 %v6239, %v7077
      %v7079 = vand.u32 %v7078, 4294901760
      %v7080 = vsub.f32 %v7078, %v7079
      %v7081 = vand.u32 %v7080, 4294901760
      %7082 = vmatpush1.msra.mxu0 %v7081
      %7083 = vmatprep.subr.mxu0 0.0
      %v7084 = vand.u32 %v6238, 4294901760
      %v7085 = vsub.f32 %v6238, %v7084
      %v7086 = vand.u32 %v7085, 4294901760
      %v7087 = vsub.f32 %v7085, %v7086
      %v7088 = vand.u32 %v7087, 4294901760
      %7089 = vmatpush1.msra.mxu0 %v7088
      %7090 = vmatprep.subr.mxu0 0.0
      %v7091 = vand.u32 %v6237, 4294901760
      %v7092 = vsub.f32 %v6237, %v7091
      %v7093 = vand.u32 %v7092, 4294901760
      %v7094 = vsub.f32 %v7092, %v7093
      %v7095 = vand.u32 %v7094, 4294901760
      %7096 = vmatpush1.msra.mxu0 %v7095
      %7097 = vmatprep.subr.mxu0 0.0
      %v7098 = vand.u32 %v6236, 4294901760
      %v7099 = vsub.f32 %v6236, %v7098
      %v7100 = vand.u32 %v7099, 4294901760
      %v7101 = vsub.f32 %v7099, %v7100
      %v7102 = vand.u32 %v7101, 4294901760
      %7103 = vmatpush1.msra.mxu0 %v7102
      %7104 = vmatprep.subr.mxu0 0.0
      %v7105 = vand.u32 %v6235, 4294901760
      %v7106 = vsub.f32 %v6235, %v7105
      %v7107 = vand.u32 %v7106, 4294901760
      %v7108 = vsub.f32 %v7106, %v7107
      %v7109 = vand.u32 %v7108, 4294901760
      %7110 = vmatpush1.msra.mxu0 %v7109
      %7111 = vmatprep.subr.mxu0 0.0
      %v7112 = vand.u32 %v6234, 4294901760
      %v7113 = vsub.f32 %v6234, %v7112
      %v7114 = vand.u32 %v7113, 4294901760
      %v7115 = vsub.f32 %v7113, %v7114
      %v7116 = vand.u32 %v7115, 4294901760
      %7117 = vmatpush1.msra.mxu0 %v7116
      %7118 = vmatprep.subr.mxu0 0.0
      %v7119 = vand.u32 %v6233, 4294901760
      %v7120 = vsub.f32 %v6233, %v7119
      %v7121 = vand.u32 %v7120, 4294901760
      %v7122 = vsub.f32 %v7120, %v7121
      %v7123 = vand.u32 %v7122, 4294901760
      %7124 = vmatpush1.msra.mxu0 %v7123
      %7125 = vmatprep.subr.mxu0 0.0
      %v7126 = vand.u32 %v6232, 4294901760
      %v7127 = vsub.f32 %v6232, %v7126
      %v7128 = vand.u32 %v7127, 4294901760
      %v7129 = vsub.f32 %v7127, %v7128
      %v7130 = vand.u32 %v7129, 4294901760
      %7131 = vmatpush1.msra.mxu0 %v7130
      %7132 = vmatprep.subr.mxu0 0.0
      %v7133 = vand.u32 %v6231, 4294901760
      %v7134 = vsub.f32 %v6231, %v7133
      %v7135 = vand.u32 %v7134, 4294901760
      %v7136 = vsub.f32 %v7134, %v7135
      %v7137 = vand.u32 %v7136, 4294901760
      %7138 = vmatpush1.msra.mxu0 %v7137
      %7139 = vmatprep.subr.mxu0 0.0
      %v7140 = vand.u32 %v6230, 4294901760
      %v7141 = vsub.f32 %v6230, %v7140
      %v7142 = vand.u32 %v7141, 4294901760
      %v7143 = vsub.f32 %v7141, %v7142
      %v7144 = vand.u32 %v7143, 4294901760
      %7145 = vmatpush1.msra.mxu0 %v7144
      %7146 = vmatprep.subr.mxu0 0.0
      %v7147 = vand.u32 %v6229, 4294901760
      %v7148 = vsub.f32 %v6229, %v7147
      %v7149 = vand.u32 %v7148, 4294901760
      %v7150 = vsub.f32 %v7148, %v7149
      %v7151 = vand.u32 %v7150, 4294901760
      %7152 = vmatpush1.msra.mxu0 %v7151
      %7153 = vmatprep.subr.mxu0 0.0
      %v7154 = vand.u32 %v6228, 4294901760
      %v7155 = vsub.f32 %v6228, %v7154
      %v7156 = vand.u32 %v7155, 4294901760
      %v7157 = vsub.f32 %v7155, %v7156
      %v7158 = vand.u32 %v7157, 4294901760
      %7159 = vmatpush1.msra.mxu0 %v7158
      %7160 = vmatprep.subr.mxu0 0.0
      %7161 = vmatpush2.msra.mxu0 0.0
      %7162 = vmatprep.subr.mxu0 0.0
      %7163 = vmatpush2.msra.mxu0 0.0
      %7164 = vmatprep.subr.mxu0 0.0
      %7165 = vmatpush2.msra.mxu0 0.0
      %7166 = vmatprep.subr.mxu0 0.0
      %7167 = vmatpush2.msra.mxu0 0.0
      %7168 = vmatprep.subr.mxu0 0.0
      %7169 = vmatpush2.msra.mxu0 0.0
      %7170 = vmatprep.subr.mxu0 0.0
      %7171 = vmatpush2.msra.mxu0 0.0
      %7172 = vmatprep.subr.mxu0 0.0
      %7173 = vmatpush2.msra.mxu0 0.0
      %7174 = vmatprep.subr.mxu0 0.0
      %7175 = vmatpush2.msra.mxu0 0.0
      %7176 = vmatprep.subr.mxu0 0.0
      %7177 = vmatpush2.msra.mxu0 0.0
      %7178 = vmatprep.subr.mxu0 0.0
      %7179 = vmatpush2.msra.mxu0 0.0
      %7180 = vmatprep.subr.mxu0 0.0
      %7181 = vmatpush2.msra.mxu0 0.0
      %7182 = vmatprep.subr.mxu0 0.0
      %7183 = vmatpush2.msra.mxu0 0.0
      %7184 = vmatprep.subr.mxu0 0.0
      %7185 = vmatpush2.msra.mxu0 0.0
      %7186 = vmatprep.subr.mxu0 0.0
      %7187 = vmatpush2.msra.mxu0 0.0
      %7188 = vmatprep.subr.mxu0 0.0
      %7189 = vmatpush2.msra.mxu0 0.0
      %7190 = vmatprep.subr.mxu0 0.0
      %7191 = vmatpush2.msra.mxu0 0.0
      %7192 = vmatprep.mubr.f32.mxu0 0.0
      %v7193 = vand.u32 %v6226, 4294901760
      %7194 = vmatmul.mubr.f32.gmra.mxu0 %v7193
      %v7195 = vpop.f32.mrf.mxu0
      %v7196 = vadd.f32 %v7035, %v7195
      %v7197 = vpop.f32.mrf.mxu0
      %7198 = vmatprep.mubr.f32.mxu0 0.0
      %v7199 = vand.u32 %v6227, 4294901760
      %7200 = vmatmul.mubr.f32.gmra.mxu0 %v7199
      %v7201 = vpop.f32.mrf.mxu0
      %v7202 = vadd.f32 %v7045, %v7201
      %v7203 = vpop.f32.mrf.mxu0
      %7204 = vdwg.mxu0
      %7205 = vmatprep.subr.mxu0 0.0
      %v7206 = vand.u32 %v6243, 4294901760
      %v7207 = vsub.f32 %v6243, %v7206
      %7208 = vmatpush1.msra.mxu0 %v7207
      %7209 = vmatprep.subr.mxu0 0.0
      %v7210 = vand.u32 %v6242, 4294901760
      %v7211 = vsub.f32 %v6242, %v7210
      %7212 = vmatpush1.msra.mxu0 %v7211
      %7213 = vmatprep.subr.mxu0 0.0
      %v7214 = vand.u32 %v6241, 4294901760
      %v7215 = vsub.f32 %v6241, %v7214
      %7216 = vmatpush1.msra.mxu0 %v7215
      %7217 = vmatprep.subr.mxu0 0.0
      %v7218 = vand.u32 %v6240, 4294901760
      %v7219 = vsub.f32 %v6240, %v7218
      %7220 = vmatpush1.msra.mxu0 %v7219
      %7221 = vmatprep.subr.mxu0 0.0
      %v7222 = vand.u32 %v6239, 4294901760
      %v7223 = vsub.f32 %v6239, %v7222
      %7224 = vmatpush1.msra.mxu0 %v7223
      %7225 = vmatprep.subr.mxu0 0.0
      %v7226 = vand.u32 %v6238, 4294901760
      %v7227 = vsub.f32 %v6238, %v7226
      %7228 = vmatpush1.msra.mxu0 %v7227
      %7229 = vmatprep.subr.mxu0 0.0
      %v7230 = vand.u32 %v6237, 4294901760
      %v7231 = vsub.f32 %v6237, %v7230
      %7232 = vmatpush1.msra.mxu0 %v7231
      %7233 = vmatprep.subr.mxu0 0.0
      %v7234 = vand.u32 %v6236, 4294901760
      %v7235 = vsub.f32 %v6236, %v7234
      %7236 = vmatpush1.msra.mxu0 %v7235
      %7237 = vmatprep.subr.mxu0 0.0
      %v7238 = vand.u32 %v6235, 4294901760
      %v7239 = vsub.f32 %v6235, %v7238
      %7240 = vmatpush1.msra.mxu0 %v7239
      %7241 = vmatprep.subr.mxu0 0.0
      %v7242 = vand.u32 %v6234, 4294901760
      %v7243 = vsub.f32 %v6234, %v7242
      %7244 = vmatpush1.msra.mxu0 %v7243
      %7245 = vmatprep.subr.mxu0 0.0
      %v7246 = vand.u32 %v6233, 4294901760
      %v7247 = vsub.f32 %v6233, %v7246
      %7248 = vmatpush1.msra.mxu0 %v7247
      %7249 = vmatprep.subr.mxu0 0.0
      %v7250 = vand.u32 %v6232, 4294901760
      %v7251 = vsub.f32 %v6232, %v7250
      %7252 = vmatpush1.msra.mxu0 %v7251
      %7253 = vmatprep.subr.mxu0 0.0
      %v7254 = vand.u32 %v6231, 4294901760
      %v7255 = vsub.f32 %v6231, %v7254
      %7256 = vmatpush1.msra.mxu0 %v7255
      %7257 = vmatprep.subr.mxu0 0.0
      %v7258 = vand.u32 %v6230, 4294901760
      %v7259 = vsub.f32 %v6230, %v7258
      %7260 = vmatpush1.msra.mxu0 %v7259
      %7261 = vmatprep.subr.mxu0 0.0
      %v7262 = vand.u32 %v6229, 4294901760
      %v7263 = vsub.f32 %v6229, %v7262
      %7264 = vmatpush1.msra.mxu0 %v7263
      %7265 = vmatprep.subr.mxu0 0.0
      %v7266 = vand.u32 %v6228, 4294901760
      %v7267 = vsub.f32 %v6228, %v7266
      %7268 = vmatpush1.msra.mxu0 %v7267
      %7269 = vmatprep.subr.mxu0 0.0
      %7270 = vmatpush2.msra.mxu0 0.0
      %7271 = vmatprep.subr.mxu0 0.0
      %7272 = vmatpush2.msra.mxu0 0.0
      %7273 = vmatprep.subr.mxu0 0.0
      %7274 = vmatpush2.msra.mxu0 0.0
      %7275 = vmatprep.subr.mxu0 0.0
      %7276 = vmatpush2.msra.mxu0 0.0
      %7277 = vmatprep.subr.mxu0 0.0
      %7278 = vmatpush2.msra.mxu0 0.0
      %7279 = vmatprep.subr.mxu0 0.0
      %7280 = vmatpush2.msra.mxu0 0.0
      %7281 = vmatprep.subr.mxu0 0.0
      %7282 = vmatpush2.msra.mxu0 0.0
      %7283 = vmatprep.subr.mxu0 0.0
      %7284 = vmatpush2.msra.mxu0 0.0
      %7285 = vmatprep.subr.mxu0 0.0
      %7286 = vmatpush2.msra.mxu0 0.0
      %7287 = vmatprep.subr.mxu0 0.0
      %7288 = vmatpush2.msra.mxu0 0.0
      %7289 = vmatprep.subr.mxu0 0.0
      %7290 = vmatpush2.msra.mxu0 0.0
      %7291 = vmatprep.subr.mxu0 0.0
      %7292 = vmatpush2.msra.mxu0 0.0
      %7293 = vmatprep.subr.mxu0 0.0
      %7294 = vmatpush2.msra.mxu0 0.0
      %7295 = vmatprep.subr.mxu0 0.0
      %7296 = vmatpush2.msra.mxu0 0.0
      %7297 = vmatprep.subr.mxu0 0.0
      %7298 = vmatpush2.msra.mxu0 0.0
      %7299 = vmatprep.subr.mxu0 0.0
      %7300 = vmatpush2.msra.mxu0 0.0
      %7301 = vmatprep.mubr.f32.mxu0 0.0
      %v7302 = vand.u32 %v6226, 4294901760
      %v7303 = vsub.f32 %v6226, %v7302
      %7304 = vmatmul.mubr.f32.gmra.mxu0 %v7303
      %v7305 = vpop.f32.mrf.mxu0
      %v7306 = vadd.f32 %v7196, %v7305
      %v7307 = vpop.f32.mrf.mxu0
      %7308 = vmatprep.mubr.f32.mxu0 0.0
      %v7309 = vand.u32 %v6227, 4294901760
      %v7310 = vsub.f32 %v6227, %v7309
      %7311 = vmatmul.mubr.f32.gmra.mxu0 %v7310
      %v7312 = vpop.f32.mrf.mxu0
      %v7313 = vadd.f32 %v7202, %v7312
      %v7314 = vpop.f32.mrf.mxu0
      %7315 = vdwg.mxu0
      %7316 = vmatprep.subr.mxu0 0.0
      %v7317 = vand.u32 %v6243, 4294901760
      %7318 = vmatpush1.msra.mxu0 %v7317
      %7319 = vmatprep.subr.mxu0 0.0
      %v7320 = vand.u32 %v6242, 4294901760
      %7321 = vmatpush1.msra.mxu0 %v7320
      %7322 = vmatprep.subr.mxu0 0.0
      %v7323 = vand.u32 %v6241, 4294901760
      %7324 = vmatpush1.msra.mxu0 %v7323
      %7325 = vmatprep.subr.mxu0 0.0
      %v7326 = vand.u32 %v6240, 4294901760
      %7327 = vmatpush1.msra.mxu0 %v7326
      %7328 = vmatprep.subr.mxu0 0.0
      %v7329 = vand.u32 %v6239, 4294901760
      %7330 = vmatpush1.msra.mxu0 %v7329
      %7331 = vmatprep.subr.mxu0 0.0
      %v7332 = vand.u32 %v6238, 4294901760
      %7333 = vmatpush1.msra.mxu0 %v7332
      %7334 = vmatprep.subr.mxu0 0.0
      %v7335 = vand.u32 %v6237, 4294901760
      %7336 = vmatpush1.msra.mxu0 %v7335
      %7337 = vmatprep.subr.mxu0 0.0
      %v7338 = vand.u32 %v6236, 4294901760
      %7339 = vmatpush1.msra.mxu0 %v7338
      %7340 = vmatprep.subr.mxu0 0.0
      %v7341 = vand.u32 %v6235, 4294901760
      %7342 = vmatpush1.msra.mxu0 %v7341
      %7343 = vmatprep.subr.mxu0 0.0
      %v7344 = vand.u32 %v6234, 4294901760
      %7345 = vmatpush1.msra.mxu0 %v7344
      %7346 = vmatprep.subr.mxu0 0.0
      %v7347 = vand.u32 %v6233, 4294901760
      %7348 = vmatpush1.msra.mxu0 %v7347
      %7349 = vmatprep.subr.mxu0 0.0
      %v7350 = vand.u32 %v6232, 4294901760
      %7351 = vmatpush1.msra.mxu0 %v7350
      %7352 = vmatprep.subr.mxu0 0.0
      %v7353 = vand.u32 %v6231, 4294901760
      %7354 = vmatpush1.msra.mxu0 %v7353
      %7355 = vmatprep.subr.mxu0 0.0
      %v7356 = vand.u32 %v6230, 4294901760
      %7357 = vmatpush1.msra.mxu0 %v7356
      %7358 = vmatprep.subr.mxu0 0.0
      %v7359 = vand.u32 %v6229, 4294901760
      %7360 = vmatpush1.msra.mxu0 %v7359
      %7361 = vmatprep.subr.mxu0 0.0
      %v7362 = vand.u32 %v6228, 4294901760
      %7363 = vmatpush1.msra.mxu0 %v7362
      %7364 = vmatprep.subr.mxu0 0.0
      %7365 = vmatpush2.msra.mxu0 0.0
      %7366 = vmatprep.subr.mxu0 0.0
      %7367 = vmatpush2.msra.mxu0 0.0
      %7368 = vmatprep.subr.mxu0 0.0
      %7369 = vmatpush2.msra.mxu0 0.0
      %7370 = vmatprep.subr.mxu0 0.0
      %7371 = vmatpush2.msra.mxu0 0.0
      %7372 = vmatprep.subr.mxu0 0.0
      %7373 = vmatpush2.msra.mxu0 0.0
      %7374 = vmatprep.subr.mxu0 0.0
      %7375 = vmatpush2.msra.mxu0 0.0
      %7376 = vmatprep.subr.mxu0 0.0
      %7377 = vmatpush2.msra.mxu0 0.0
      %7378 = vmatprep.subr.mxu0 0.0
      %7379 = vmatpush2.msra.mxu0 0.0
      %7380 = vmatprep.subr.mxu0 0.0
      %7381 = vmatpush2.msra.mxu0 0.0
      %7382 = vmatprep.subr.mxu0 0.0
      %7383 = vmatpush2.msra.mxu0 0.0
      %7384 = vmatprep.subr.mxu0 0.0
      %7385 = vmatpush2.msra.mxu0 0.0
      %7386 = vmatprep.subr.mxu0 0.0
      %7387 = vmatpush2.msra.mxu0 0.0
      %7388 = vmatprep.subr.mxu0 0.0
      %7389 = vmatpush2.msra.mxu0 0.0
      %7390 = vmatprep.subr.mxu0 0.0
      %7391 = vmatpush2.msra.mxu0 0.0
      %7392 = vmatprep.subr.mxu0 0.0
      %7393 = vmatpush2.msra.mxu0 0.0
      %7394 = vmatprep.subr.mxu0 0.0
      %7395 = vmatpush2.msra.mxu0 0.0
      %7396 = vmatprep.mubr.f32.mxu0 0.0
      %v7397 = vand.u32 %v6226, 4294901760
      %v7398 = vsub.f32 %v6226, %v7397
      %v7399 = vand.u32 %v7398, 4294901760
      %7400 = vmatmul.mubr.f32.gmra.mxu0 %v7399
      %v7401 = vpop.f32.mrf.mxu0
      %v7402 = vadd.f32 %v7306, %v7401
      %v7403 = vpop.f32.mrf.mxu0
      %7404 = vmatprep.mubr.f32.mxu0 0.0
      %v7405 = vand.u32 %v6227, 4294901760
      %v7406 = vsub.f32 %v6227, %v7405
      %v7407 = vand.u32 %v7406, 4294901760
      %7408 = vmatmul.mubr.f32.gmra.mxu0 %v7407
      %v7409 = vpop.f32.mrf.mxu0
      %v7410 = vadd.f32 %v7313, %v7409
      %v7411 = vpop.f32.mrf.mxu0
      %7412 = vdwg.mxu0
      %7413 = vmatprep.subr.mxu0 0.0
      %v7414 = vand.u32 %v6243, 4294901760
      %v7415 = vsub.f32 %v6243, %v7414
      %v7416 = vand.u32 %v7415, 4294901760
      %7417 = vmatpush1.msra.mxu0 %v7416
      %7418 = vmatprep.subr.mxu0 0.0
      %v7419 = vand.u32 %v6242, 4294901760
      %v7420 = vsub.f32 %v6242, %v7419
      %v7421 = vand.u32 %v7420, 4294901760
      %7422 = vmatpush1.msra.mxu0 %v7421
      %7423 = vmatprep.subr.mxu0 0.0
      %v7424 = vand.u32 %v6241, 4294901760
      %v7425 = vsub.f32 %v6241, %v7424
      %v7426 = vand.u32 %v7425, 4294901760
      %7427 = vmatpush1.msra.mxu0 %v7426
      %7428 = vmatprep.subr.mxu0 0.0
      %v7429 = vand.u32 %v6240, 4294901760
      %v7430 = vsub.f32 %v6240, %v7429
      %v7431 = vand.u32 %v7430, 4294901760
      %7432 = vmatpush1.msra.mxu0 %v7431
      %7433 = vmatprep.subr.mxu0 0.0
      %v7434 = vand.u32 %v6239, 4294901760
      %v7435 = vsub.f32 %v6239, %v7434
      %v7436 = vand.u32 %v7435, 4294901760
      %7437 = vmatpush1.msra.mxu0 %v7436
      %7438 = vmatprep.subr.mxu0 0.0
      %v7439 = vand.u32 %v6238, 4294901760
      %v7440 = vsub.f32 %v6238, %v7439
      %v7441 = vand.u32 %v7440, 4294901760
      %7442 = vmatpush1.msra.mxu0 %v7441
      %7443 = vmatprep.subr.mxu0 0.0
      %v7444 = vand.u32 %v6237, 4294901760
      %v7445 = vsub.f32 %v6237, %v7444
      %v7446 = vand.u32 %v7445, 4294901760
      %7447 = vmatpush1.msra.mxu0 %v7446
      %7448 = vmatprep.subr.mxu0 0.0
      %v7449 = vand.u32 %v6236, 4294901760
      %v7450 = vsub.f32 %v6236, %v7449
      %v7451 = vand.u32 %v7450, 4294901760
      %7452 = vmatpush1.msra.mxu0 %v7451
      %7453 = vmatprep.subr.mxu0 0.0
      %v7454 = vand.u32 %v6235, 4294901760
      %v7455 = vsub.f32 %v6235, %v7454
      %v7456 = vand.u32 %v7455, 4294901760
      %7457 = vmatpush1.msra.mxu0 %v7456
      %7458 = vmatprep.subr.mxu0 0.0
      %v7459 = vand.u32 %v6234, 4294901760
      %v7460 = vsub.f32 %v6234, %v7459
      %v7461 = vand.u32 %v7460, 4294901760
      %7462 = vmatpush1.msra.mxu0 %v7461
      %7463 = vmatprep.subr.mxu0 0.0
      %v7464 = vand.u32 %v6233, 4294901760
      %v7465 = vsub.f32 %v6233, %v7464
      %v7466 = vand.u32 %v7465, 4294901760
      %7467 = vmatpush1.msra.mxu0 %v7466
      %7468 = vmatprep.subr.mxu0 0.0
      %v7469 = vand.u32 %v6232, 4294901760
      %v7470 = vsub.f32 %v6232, %v7469
      %v7471 = vand.u32 %v7470, 4294901760
      %7472 = vmatpush1.msra.mxu0 %v7471
      %7473 = vmatprep.subr.mxu0 0.0
      %v7474 = vand.u32 %v6231, 4294901760
      %v7475 = vsub.f32 %v6231, %v7474
      %v7476 = vand.u32 %v7475, 4294901760
      %7477 = vmatpush1.msra.mxu0 %v7476
      %7478 = vmatprep.subr.mxu0 0.0
      %v7479 = vand.u32 %v6230, 4294901760
      %v7480 = vsub.f32 %v6230, %v7479
      %v7481 = vand.u32 %v7480, 4294901760
      %7482 = vmatpush1.msra.mxu0 %v7481
      %7483 = vmatprep.subr.mxu0 0.0
      %v7484 = vand.u32 %v6229, 4294901760
      %v7485 = vsub.f32 %v6229, %v7484
      %v7486 = vand.u32 %v7485, 4294901760
      %7487 = vmatpush1.msra.mxu0 %v7486
      %7488 = vmatprep.subr.mxu0 0.0
      %v7489 = vand.u32 %v6228, 4294901760
      %v7490 = vsub.f32 %v6228, %v7489
      %v7491 = vand.u32 %v7490, 4294901760
      %7492 = vmatpush1.msra.mxu0 %v7491
      %7493 = vmatprep.subr.mxu0 0.0
      %7494 = vmatpush2.msra.mxu0 0.0
      %7495 = vmatprep.subr.mxu0 0.0
      %7496 = vmatpush2.msra.mxu0 0.0
      %7497 = vmatprep.subr.mxu0 0.0
      %7498 = vmatpush2.msra.mxu0 0.0
      %7499 = vmatprep.subr.mxu0 0.0
      %7500 = vmatpush2.msra.mxu0 0.0
      %7501 = vmatprep.subr.mxu0 0.0
      %7502 = vmatpush2.msra.mxu0 0.0
      %7503 = vmatprep.subr.mxu0 0.0
      %7504 = vmatpush2.msra.mxu0 0.0
      %7505 = vmatprep.subr.mxu0 0.0
      %7506 = vmatpush2.msra.mxu0 0.0
      %7507 = vmatprep.subr.mxu0 0.0
      %7508 = vmatpush2.msra.mxu0 0.0
      %7509 = vmatprep.subr.mxu0 0.0
      %7510 = vmatpush2.msra.mxu0 0.0
      %7511 = vmatprep.subr.mxu0 0.0
      %7512 = vmatpush2.msra.mxu0 0.0
      %7513 = vmatprep.subr.mxu0 0.0
      %7514 = vmatpush2.msra.mxu0 0.0
      %7515 = vmatprep.subr.mxu0 0.0
      %7516 = vmatpush2.msra.mxu0 0.0
      %7517 = vmatprep.subr.mxu0 0.0
      %7518 = vmatpush2.msra.mxu0 0.0
      %7519 = vmatprep.subr.mxu0 0.0
      %7520 = vmatpush2.msra.mxu0 0.0
      %7521 = vmatprep.subr.mxu0 0.0
      %7522 = vmatpush2.msra.mxu0 0.0
      %7523 = vmatprep.subr.mxu0 0.0
      %7524 = vmatpush2.msra.mxu0 0.0
      %7525 = vmatprep.mubr.f32.mxu0 0.0
      %v7526 = vand.u32 %v6226, 4294901760
      %7527 = vmatmul.mubr.f32.gmra.mxu0 %v7526
      %v7528 = vpop.f32.mrf.mxu0
      %v7529 = vadd.f32 %v7402, %v7528
      %v7530 = vpop.f32.mrf.mxu0
      %7531 = vmatprep.mubr.f32.mxu0 0.0
      %v7532 = vand.u32 %v6227, 4294901760
      %7533 = vmatmul.mubr.f32.gmra.mxu0 %v7532
      %v7534 = vpop.f32.mrf.mxu0
      %v7535 = vadd.f32 %v7410, %v7534
      %v7536 = vpop.f32.mrf.mxu0
      %7537 = vdwg.mxu0
      %7538 = vmatprep.subr.mxu0 0.0
      %v7539 = vand.u32 %v6243, 4294901760
      %7540 = vmatpush1.msra.mxu0 %v7539
      %7541 = vmatprep.subr.mxu0 0.0
      %v7542 = vand.u32 %v6242, 4294901760
      %7543 = vmatpush1.msra.mxu0 %v7542
      %7544 = vmatprep.subr.mxu0 0.0
      %v7545 = vand.u32 %v6241, 4294901760
      %7546 = vmatpush1.msra.mxu0 %v7545
      %7547 = vmatprep.subr.mxu0 0.0
      %v7548 = vand.u32 %v6240, 4294901760
      %7549 = vmatpush1.msra.mxu0 %v7548
      %7550 = vmatprep.subr.mxu0 0.0
      %v7551 = vand.u32 %v6239, 4294901760
      %7552 = vmatpush1.msra.mxu0 %v7551
      %7553 = vmatprep.subr.mxu0 0.0
      %v7554 = vand.u32 %v6238, 4294901760
      %7555 = vmatpush1.msra.mxu0 %v7554
      %7556 = vmatprep.subr.mxu0 0.0
      %v7557 = vand.u32 %v6237, 4294901760
      %7558 = vmatpush1.msra.mxu0 %v7557
      %7559 = vmatprep.subr.mxu0 0.0
      %v7560 = vand.u32 %v6236, 4294901760
      %7561 = vmatpush1.msra.mxu0 %v7560
      %7562 = vmatprep.subr.mxu0 0.0
      %v7563 = vand.u32 %v6235, 4294901760
      %7564 = vmatpush1.msra.mxu0 %v7563
      %7565 = vmatprep.subr.mxu0 0.0
      %v7566 = vand.u32 %v6234, 4294901760
      %7567 = vmatpush1.msra.mxu0 %v7566
      %7568 = vmatprep.subr.mxu0 0.0
      %v7569 = vand.u32 %v6233, 4294901760
      %7570 = vmatpush1.msra.mxu0 %v7569
      %7571 = vmatprep.subr.mxu0 0.0
      %v7572 = vand.u32 %v6232, 4294901760
      %7573 = vmatpush1.msra.mxu0 %v7572
      %7574 = vmatprep.subr.mxu0 0.0
      %v7575 = vand.u32 %v6231, 4294901760
      %7576 = vmatpush1.msra.mxu0 %v7575
      %7577 = vmatprep.subr.mxu0 0.0
      %v7578 = vand.u32 %v6230, 4294901760
      %7579 = vmatpush1.msra.mxu0 %v7578
      %7580 = vmatprep.subr.mxu0 0.0
      %v7581 = vand.u32 %v6229, 4294901760
      %7582 = vmatpush1.msra.mxu0 %v7581
      %7583 = vmatprep.subr.mxu0 0.0
      %v7584 = vand.u32 %v6228, 4294901760
      %7585 = vmatpush1.msra.mxu0 %v7584
      %7586 = vmatprep.subr.mxu0 0.0
      %7587 = vmatpush2.msra.mxu0 0.0
      %7588 = vmatprep.subr.mxu0 0.0
      %7589 = vmatpush2.msra.mxu0 0.0
      %7590 = vmatprep.subr.mxu0 0.0
      %7591 = vmatpush2.msra.mxu0 0.0
      %7592 = vmatprep.subr.mxu0 0.0
      %7593 = vmatpush2.msra.mxu0 0.0
      %7594 = vmatprep.subr.mxu0 0.0
      %7595 = vmatpush2.msra.mxu0 0.0
      %7596 = vmatprep.subr.mxu0 0.0
      %7597 = vmatpush2.msra.mxu0 0.0
      %7598 = vmatprep.subr.mxu0 0.0
      %7599 = vmatpush2.msra.mxu0 0.0
      %7600 = vmatprep.subr.mxu0 0.0
      %7601 = vmatpush2.msra.mxu0 0.0
      %7602 = vmatprep.subr.mxu0 0.0
      %7603 = vmatpush2.msra.mxu0 0.0
      %7604 = vmatprep.subr.mxu0 0.0
      %7605 = vmatpush2.msra.mxu0 0.0
      %7606 = vmatprep.subr.mxu0 0.0
      %7607 = vmatpush2.msra.mxu0 0.0
      %7608 = vmatprep.subr.mxu0 0.0
      %7609 = vmatpush2.msra.mxu0 0.0
      %7610 = vmatprep.subr.mxu0 0.0
      %7611 = vmatpush2.msra.mxu0 0.0
      %7612 = vmatprep.subr.mxu0 0.0
      %7613 = vmatpush2.msra.mxu0 0.0
      %7614 = vmatprep.subr.mxu0 0.0
      %7615 = vmatpush2.msra.mxu0 0.0
      %7616 = vmatprep.subr.mxu0 0.0
      %7617 = vmatpush2.msra.mxu0 0.0
      %7618 = vmatprep.mubr.f32.mxu0 0.0
      %v7619 = vand.u32 %v6226, 4294901760
      %7620 = vmatmul.mubr.f32.gmra.mxu0 %v7619
      %v7621 = vpop.f32.mrf.mxu0
      %v7622 = vadd.f32 %v7529, %v7621
      %v7623 = vpop.f32.mrf.mxu0
      %7624 = vmatprep.mubr.f32.mxu0 0.0
      %v7625 = vand.u32 %v6227, 4294901760
      %7626 = vmatmul.mubr.f32.gmra.mxu0 %v7625
      %v7627 = vpop.f32.mrf.mxu0
      %v7628 = vadd.f32 %v7535, %v7627
      %v7629 = vpop.f32.mrf.mxu0
      %7630 = vdwg.mxu0
      %v7631 = vld [vmem:[#allocation3 + $0x2] sm:$0xff]
      %v7632 = vld [vmem:[#allocation3 + $0xa] sm:$0xff]
      %s7633 = scalar_lea.vmem %s8, 256
      %v7634 = vld [vmem:[%s7633] sm:$0xff]
      %v7635 = vld [vmem:[%s7633 + $0x8] sm:$0xff]
      %v7636 = vld [vmem:[%s7633 + $0x10] sm:$0xff]
      %v7637 = vld [vmem:[%s7633 + $0x18] sm:$0xff]
      %v7638 = vld [vmem:[%s7633 + $0x20] sm:$0xff]
      %v7639 = vld [vmem:[%s7633 + $0x28] sm:$0xff]
      %v7640 = vld [vmem:[%s7633 + $0x30] sm:$0xff]
      %v7641 = vld [vmem:[%s7633 + $0x38] sm:$0xff]
      %v7642 = vld [vmem:[%s7633 + $0x40] sm:$0xff]
      %v7643 = vld [vmem:[%s7633 + $0x48] sm:$0xff]
      %v7644 = vld [vmem:[%s7633 + $0x50] sm:$0xff]
      %v7645 = vld [vmem:[%s7633 + $0x58] sm:$0xff]
      %v7646 = vld [vmem:[%s7633 + $0x60] sm:$0xff]
      %v7647 = vld [vmem:[%s7633 + $0x68] sm:$0xff]
      %v7648 = vld [vmem:[%s7633 + $0x70] sm:$0xff]
      %v7649 = vld [vmem:[%s7633 + $0x78] sm:$0xff]
      %7650 = vmatprep.subr.mxu0 0.0
      %v7651 = vand.u32 %v7649, 4294901760
      %7652 = vmatpush1.msra.mxu0 %v7651
      %7653 = vmatprep.subr.mxu0 0.0
      %v7654 = vand.u32 %v7648, 4294901760
      %7655 = vmatpush1.msra.mxu0 %v7654
      %7656 = vmatprep.subr.mxu0 0.0
      %v7657 = vand.u32 %v7647, 4294901760
      %7658 = vmatpush1.msra.mxu0 %v7657
      %7659 = vmatprep.subr.mxu0 0.0
      %v7660 = vand.u32 %v7646, 4294901760
      %7661 = vmatpush1.msra.mxu0 %v7660
      %7662 = vmatprep.subr.mxu0 0.0
      %v7663 = vand.u32 %v7645, 4294901760
      %7664 = vmatpush1.msra.mxu0 %v7663
      %7665 = vmatprep.subr.mxu0 0.0
      %v7666 = vand.u32 %v7644, 4294901760
      %7667 = vmatpush1.msra.mxu0 %v7666
      %7668 = vmatprep.subr.mxu0 0.0
      %v7669 = vand.u32 %v7643, 4294901760
      %7670 = vmatpush1.msra.mxu0 %v7669
      %7671 = vmatprep.subr.mxu0 0.0
      %v7672 = vand.u32 %v7642, 4294901760
      %7673 = vmatpush1.msra.mxu0 %v7672
      %7674 = vmatprep.subr.mxu0 0.0
      %v7675 = vand.u32 %v7641, 4294901760
      %7676 = vmatpush1.msra.mxu0 %v7675
      %7677 = vmatprep.subr.mxu0 0.0
      %v7678 = vand.u32 %v7640, 4294901760
      %7679 = vmatpush1.msra.mxu0 %v7678
      %7680 = vmatprep.subr.mxu0 0.0
      %v7681 = vand.u32 %v7639, 4294901760
      %7682 = vmatpush1.msra.mxu0 %v7681
      %7683 = vmatprep.subr.mxu0 0.0
      %v7684 = vand.u32 %v7638, 4294901760
      %7685 = vmatpush1.msra.mxu0 %v7684
      %7686 = vmatprep.subr.mxu0 0.0
      %v7687 = vand.u32 %v7637, 4294901760
      %7688 = vmatpush1.msra.mxu0 %v7687
      %7689 = vmatprep.subr.mxu0 0.0
      %v7690 = vand.u32 %v7636, 4294901760
      %7691 = vmatpush1.msra.mxu0 %v7690
      %7692 = vmatprep.subr.mxu0 0.0
      %v7693 = vand.u32 %v7635, 4294901760
      %7694 = vmatpush1.msra.mxu0 %v7693
      %7695 = vmatprep.subr.mxu0 0.0
      %v7696 = vand.u32 %v7634, 4294901760
      %7697 = vmatpush1.msra.mxu0 %v7696
      %7698 = vmatprep.subr.mxu0 0.0
      %7699 = vmatpush2.msra.mxu0 0.0
      %7700 = vmatprep.subr.mxu0 0.0
      %7701 = vmatpush2.msra.mxu0 0.0
      %7702 = vmatprep.subr.mxu0 0.0
      %7703 = vmatpush2.msra.mxu0 0.0
      %7704 = vmatprep.subr.mxu0 0.0
      %7705 = vmatpush2.msra.mxu0 0.0
      %7706 = vmatprep.subr.mxu0 0.0
      %7707 = vmatpush2.msra.mxu0 0.0
      %7708 = vmatprep.subr.mxu0 0.0
      %7709 = vmatpush2.msra.mxu0 0.0
      %7710 = vmatprep.subr.mxu0 0.0
      %7711 = vmatpush2.msra.mxu0 0.0
      %7712 = vmatprep.subr.mxu0 0.0
      %7713 = vmatpush2.msra.mxu0 0.0
      %7714 = vmatprep.subr.mxu0 0.0
      %7715 = vmatpush2.msra.mxu0 0.0
      %7716 = vmatprep.subr.mxu0 0.0
      %7717 = vmatpush2.msra.mxu0 0.0
      %7718 = vmatprep.subr.mxu0 0.0
      %7719 = vmatpush2.msra.mxu0 0.0
      %7720 = vmatprep.subr.mxu0 0.0
      %7721 = vmatpush2.msra.mxu0 0.0
      %7722 = vmatprep.subr.mxu0 0.0
      %7723 = vmatpush2.msra.mxu0 0.0
      %7724 = vmatprep.subr.mxu0 0.0
      %7725 = vmatpush2.msra.mxu0 0.0
      %7726 = vmatprep.subr.mxu0 0.0
      %7727 = vmatpush2.msra.mxu0 0.0
      %7728 = vmatprep.subr.mxu0 0.0
      %7729 = vmatpush2.msra.mxu0 0.0
      %7730 = vmatprep.mubr.f32.mxu0 0.0
      %v7731 = vand.u32 %v7631, 4294901760
      %v7732 = vsub.f32 %v7631, %v7731
      %v7733 = vand.u32 %v7732, 4294901760
      %v7734 = vsub.f32 %v7732, %v7733
      %v7735 = vand.u32 %v7734, 4294901760
      %7736 = vmatmul.mubr.f32.gmra.mxu0 %v7735
      %v7737 = vpop.f32.mrf.mxu0
      %v7738 = vadd.f32 0.0, %v7737
      %v7739 = vpop.f32.mrf.mxu0
      %7740 = vmatprep.mubr.f32.mxu0 0.0
      %v7741 = vand.u32 %v7632, 4294901760
      %v7742 = vsub.f32 %v7632, %v7741
      %v7743 = vand.u32 %v7742, 4294901760
      %v7744 = vsub.f32 %v7742, %v7743
      %v7745 = vand.u32 %v7744, 4294901760
      %7746 = vmatmul.mubr.f32.gmra.mxu0 %v7745
      %v7747 = vpop.f32.mrf.mxu0
      %v7748 = vadd.f32 0.0, %v7747
      %v7749 = vpop.f32.mrf.mxu0
      %7750 = vdwg.mxu0
      %7751 = vmatprep.subr.mxu0 0.0
      %v7752 = vand.u32 %v7649, 4294901760
      %v7753 = vsub.f32 %v7649, %v7752
      %v7754 = vand.u32 %v7753, 4294901760
      %v7755 = vsub.f32 %v7753, %v7754
      %v7756 = vand.u32 %v7755, 4294901760
      %7757 = vmatpush1.msra.mxu0 %v7756
      %7758 = vmatprep.subr.mxu0 0.0
      %v7759 = vand.u32 %v7648, 4294901760
      %v7760 = vsub.f32 %v7648, %v7759
      %v7761 = vand.u32 %v7760, 4294901760
      %v7762 = vsub.f32 %v7760, %v7761
      %v7763 = vand.u32 %v7762, 4294901760
      %7764 = vmatpush1.msra.mxu0 %v7763
      %7765 = vmatprep.subr.mxu0 0.0
      %v7766 = vand.u32 %v7647, 4294901760
      %v7767 = vsub.f32 %v7647, %v7766
      %v7768 = vand.u32 %v7767, 4294901760
      %v7769 = vsub.f32 %v7767, %v7768
      %v7770 = vand.u32 %v7769, 4294901760
      %7771 = vmatpush1.msra.mxu0 %v7770
      %7772 = vmatprep.subr.mxu0 0.0
      %v7773 = vand.u32 %v7646, 4294901760
      %v7774 = vsub.f32 %v7646, %v7773
      %v7775 = vand.u32 %v7774, 4294901760
      %v7776 = vsub.f32 %v7774, %v7775
      %v7777 = vand.u32 %v7776, 4294901760
      %7778 = vmatpush1.msra.mxu0 %v7777
      %7779 = vmatprep.subr.mxu0 0.0
      %v7780 = vand.u32 %v7645, 4294901760
      %v7781 = vsub.f32 %v7645, %v7780
      %v7782 = vand.u32 %v7781, 4294901760
      %v7783 = vsub.f32 %v7781, %v7782
      %v7784 = vand.u32 %v7783, 4294901760
      %7785 = vmatpush1.msra.mxu0 %v7784
      %7786 = vmatprep.subr.mxu0 0.0
      %v7787 = vand.u32 %v7644, 4294901760
      %v7788 = vsub.f32 %v7644, %v7787
      %v7789 = vand.u32 %v7788, 4294901760
      %v7790 = vsub.f32 %v7788, %v7789
      %v7791 = vand.u32 %v7790, 4294901760
      %7792 = vmatpush1.msra.mxu0 %v7791
      %7793 = vmatprep.subr.mxu0 0.0
      %v7794 = vand.u32 %v7643, 4294901760
      %v7795 = vsub.f32 %v7643, %v7794
      %v7796 = vand.u32 %v7795, 4294901760
      %v7797 = vsub.f32 %v7795, %v7796
      %v7798 = vand.u32 %v7797, 4294901760
      %7799 = vmatpush1.msra.mxu0 %v7798
      %7800 = vmatprep.subr.mxu0 0.0
      %v7801 = vand.u32 %v7642, 4294901760
      %v7802 = vsub.f32 %v7642, %v7801
      %v7803 = vand.u32 %v7802, 4294901760
      %v7804 = vsub.f32 %v7802, %v7803
      %v7805 = vand.u32 %v7804, 4294901760
      %7806 = vmatpush1.msra.mxu0 %v7805
      %7807 = vmatprep.subr.mxu0 0.0
      %v7808 = vand.u32 %v7641, 4294901760
      %v7809 = vsub.f32 %v7641, %v7808
      %v7810 = vand.u32 %v7809, 4294901760
      %v7811 = vsub.f32 %v7809, %v7810
      %v7812 = vand.u32 %v7811, 4294901760
      %7813 = vmatpush1.msra.mxu0 %v7812
      %7814 = vmatprep.subr.mxu0 0.0
      %v7815 = vand.u32 %v7640, 4294901760
      %v7816 = vsub.f32 %v7640, %v7815
      %v7817 = vand.u32 %v7816, 4294901760
      %v7818 = vsub.f32 %v7816, %v7817
      %v7819 = vand.u32 %v7818, 4294901760
      %7820 = vmatpush1.msra.mxu0 %v7819
      %7821 = vmatprep.subr.mxu0 0.0
      %v7822 = vand.u32 %v7639, 4294901760
      %v7823 = vsub.f32 %v7639, %v7822
      %v7824 = vand.u32 %v7823, 4294901760
      %v7825 = vsub.f32 %v7823, %v7824
      %v7826 = vand.u32 %v7825, 4294901760
      %7827 = vmatpush1.msra.mxu0 %v7826
      %7828 = vmatprep.subr.mxu0 0.0
      %v7829 = vand.u32 %v7638, 4294901760
      %v7830 = vsub.f32 %v7638, %v7829
      %v7831 = vand.u32 %v7830, 4294901760
      %v7832 = vsub.f32 %v7830, %v7831
      %v7833 = vand.u32 %v7832, 4294901760
      %7834 = vmatpush1.msra.mxu0 %v7833
      %7835 = vmatprep.subr.mxu0 0.0
      %v7836 = vand.u32 %v7637, 4294901760
      %v7837 = vsub.f32 %v7637, %v7836
      %v7838 = vand.u32 %v7837, 4294901760
      %v7839 = vsub.f32 %v7837, %v7838
      %v7840 = vand.u32 %v7839, 4294901760
      %7841 = vmatpush1.msra.mxu0 %v7840
      %7842 = vmatprep.subr.mxu0 0.0
      %v7843 = vand.u32 %v7636, 4294901760
      %v7844 = vsub.f32 %v7636, %v7843
      %v7845 = vand.u32 %v7844, 4294901760
      %v7846 = vsub.f32 %v7844, %v7845
      %v7847 = vand.u32 %v7846, 4294901760
      %7848 = vmatpush1.msra.mxu0 %v7847
      %7849 = vmatprep.subr.mxu0 0.0
      %v7850 = vand.u32 %v7635, 4294901760
      %v7851 = vsub.f32 %v7635, %v7850
      %v7852 = vand.u32 %v7851, 4294901760
      %v7853 = vsub.f32 %v7851, %v7852
      %v7854 = vand.u32 %v7853, 4294901760
      %7855 = vmatpush1.msra.mxu0 %v7854
      %7856 = vmatprep.subr.mxu0 0.0
      %v7857 = vand.u32 %v7634, 4294901760
      %v7858 = vsub.f32 %v7634, %v7857
      %v7859 = vand.u32 %v7858, 4294901760
      %v7860 = vsub.f32 %v7858, %v7859
      %v7861 = vand.u32 %v7860, 4294901760
      %7862 = vmatpush1.msra.mxu0 %v7861
      %7863 = vmatprep.subr.mxu0 0.0
      %7864 = vmatpush2.msra.mxu0 0.0
      %7865 = vmatprep.subr.mxu0 0.0
      %7866 = vmatpush2.msra.mxu0 0.0
      %7867 = vmatprep.subr.mxu0 0.0
      %7868 = vmatpush2.msra.mxu0 0.0
      %7869 = vmatprep.subr.mxu0 0.0
      %7870 = vmatpush2.msra.mxu0 0.0
      %7871 = vmatprep.subr.mxu0 0.0
      %7872 = vmatpush2.msra.mxu0 0.0
      %7873 = vmatprep.subr.mxu0 0.0
      %7874 = vmatpush2.msra.mxu0 0.0
      %7875 = vmatprep.subr.mxu0 0.0
      %7876 = vmatpush2.msra.mxu0 0.0
      %7877 = vmatprep.subr.mxu0 0.0
      %7878 = vmatpush2.msra.mxu0 0.0
      %7879 = vmatprep.subr.mxu0 0.0
      %7880 = vmatpush2.msra.mxu0 0.0
      %7881 = vmatprep.subr.mxu0 0.0
      %7882 = vmatpush2.msra.mxu0 0.0
      %7883 = vmatprep.subr.mxu0 0.0
      %7884 = vmatpush2.msra.mxu0 0.0
      %7885 = vmatprep.subr.mxu0 0.0
      %7886 = vmatpush2.msra.mxu0 0.0
      %7887 = vmatprep.subr.mxu0 0.0
      %7888 = vmatpush2.msra.mxu0 0.0
      %7889 = vmatprep.subr.mxu0 0.0
      %7890 = vmatpush2.msra.mxu0 0.0
      %7891 = vmatprep.subr.mxu0 0.0
      %7892 = vmatpush2.msra.mxu0 0.0
      %7893 = vmatprep.subr.mxu0 0.0
      %7894 = vmatpush2.msra.mxu0 0.0
      %7895 = vmatprep.mubr.f32.mxu0 0.0
      %v7896 = vand.u32 %v7631, 4294901760
      %7897 = vmatmul.mubr.f32.gmra.mxu0 %v7896
      %v7898 = vpop.f32.mrf.mxu0
      %v7899 = vadd.f32 %v7738, %v7898
      %v7900 = vpop.f32.mrf.mxu0
      %7901 = vmatprep.mubr.f32.mxu0 0.0
      %v7902 = vand.u32 %v7632, 4294901760
      %7903 = vmatmul.mubr.f32.gmra.mxu0 %v7902
      %v7904 = vpop.f32.mrf.mxu0
      %v7905 = vadd.f32 %v7748, %v7904
      %v7906 = vpop.f32.mrf.mxu0
      %7907 = vdwg.mxu0
      %7908 = vmatprep.subr.mxu0 0.0
      %v7909 = vand.u32 %v7649, 4294901760
      %v7910 = vsub.f32 %v7649, %v7909
      %7911 = vmatpush1.msra.mxu0 %v7910
      %7912 = vmatprep.subr.mxu0 0.0
      %v7913 = vand.u32 %v7648, 4294901760
      %v7914 = vsub.f32 %v7648, %v7913
      %7915 = vmatpush1.msra.mxu0 %v7914
      %7916 = vmatprep.subr.mxu0 0.0
      %v7917 = vand.u32 %v7647, 4294901760
      %v7918 = vsub.f32 %v7647, %v7917
      %7919 = vmatpush1.msra.mxu0 %v7918
      %7920 = vmatprep.subr.mxu0 0.0
      %v7921 = vand.u32 %v7646, 4294901760
      %v7922 = vsub.f32 %v7646, %v7921
      %7923 = vmatpush1.msra.mxu0 %v7922
      %7924 = vmatprep.subr.mxu0 0.0
      %v7925 = vand.u32 %v7645, 4294901760
      %v7926 = vsub.f32 %v7645, %v7925
      %7927 = vmatpush1.msra.mxu0 %v7926
      %7928 = vmatprep.subr.mxu0 0.0
      %v7929 = vand.u32 %v7644, 4294901760
      %v7930 = vsub.f32 %v7644, %v7929
      %7931 = vmatpush1.msra.mxu0 %v7930
      %7932 = vmatprep.subr.mxu0 0.0
      %v7933 = vand.u32 %v7643, 4294901760
      %v7934 = vsub.f32 %v7643, %v7933
      %7935 = vmatpush1.msra.mxu0 %v7934
      %7936 = vmatprep.subr.mxu0 0.0
      %v7937 = vand.u32 %v7642, 4294901760
      %v7938 = vsub.f32 %v7642, %v7937
      %7939 = vmatpush1.msra.mxu0 %v7938
      %7940 = vmatprep.subr.mxu0 0.0
      %v7941 = vand.u32 %v7641, 4294901760
      %v7942 = vsub.f32 %v7641, %v7941
      %7943 = vmatpush1.msra.mxu0 %v7942
      %7944 = vmatprep.subr.mxu0 0.0
      %v7945 = vand.u32 %v7640, 4294901760
      %v7946 = vsub.f32 %v7640, %v7945
      %7947 = vmatpush1.msra.mxu0 %v7946
      %7948 = vmatprep.subr.mxu0 0.0
      %v7949 = vand.u32 %v7639, 4294901760
      %v7950 = vsub.f32 %v7639, %v7949
      %7951 = vmatpush1.msra.mxu0 %v7950
      %7952 = vmatprep.subr.mxu0 0.0
      %v7953 = vand.u32 %v7638, 4294901760
      %v7954 = vsub.f32 %v7638, %v7953
      %7955 = vmatpush1.msra.mxu0 %v7954
      %7956 = vmatprep.subr.mxu0 0.0
      %v7957 = vand.u32 %v7637, 4294901760
      %v7958 = vsub.f32 %v7637, %v7957
      %7959 = vmatpush1.msra.mxu0 %v7958
      %7960 = vmatprep.subr.mxu0 0.0
      %v7961 = vand.u32 %v7636, 4294901760
      %v7962 = vsub.f32 %v7636, %v7961
      %7963 = vmatpush1.msra.mxu0 %v7962
      %7964 = vmatprep.subr.mxu0 0.0
      %v7965 = vand.u32 %v7635, 4294901760
      %v7966 = vsub.f32 %v7635, %v7965
      %7967 = vmatpush1.msra.mxu0 %v7966
      %7968 = vmatprep.subr.mxu0 0.0
      %v7969 = vand.u32 %v7634, 4294901760
      %v7970 = vsub.f32 %v7634, %v7969
      %7971 = vmatpush1.msra.mxu0 %v7970
      %7972 = vmatprep.subr.mxu0 0.0
      %7973 = vmatpush2.msra.mxu0 0.0
      %7974 = vmatprep.subr.mxu0 0.0
      %7975 = vmatpush2.msra.mxu0 0.0
      %7976 = vmatprep.subr.mxu0 0.0
      %7977 = vmatpush2.msra.mxu0 0.0
      %7978 = vmatprep.subr.mxu0 0.0
      %7979 = vmatpush2.msra.mxu0 0.0
      %7980 = vmatprep.subr.mxu0 0.0
      %7981 = vmatpush2.msra.mxu0 0.0
      %7982 = vmatprep.subr.mxu0 0.0
      %7983 = vmatpush2.msra.mxu0 0.0
      %7984 = vmatprep.subr.mxu0 0.0
      %7985 = vmatpush2.msra.mxu0 0.0
      %7986 = vmatprep.subr.mxu0 0.0
      %7987 = vmatpush2.msra.mxu0 0.0
      %7988 = vmatprep.subr.mxu0 0.0
      %7989 = vmatpush2.msra.mxu0 0.0
      %7990 = vmatprep.subr.mxu0 0.0
      %7991 = vmatpush2.msra.mxu0 0.0
      %7992 = vmatprep.subr.mxu0 0.0
      %7993 = vmatpush2.msra.mxu0 0.0
      %7994 = vmatprep.subr.mxu0 0.0
      %7995 = vmatpush2.msra.mxu0 0.0
      %7996 = vmatprep.subr.mxu0 0.0
      %7997 = vmatpush2.msra.mxu0 0.0
      %7998 = vmatprep.subr.mxu0 0.0
      %7999 = vmatpush2.msra.mxu0 0.0
      %8000 = vmatprep.subr.mxu0 0.0
      %8001 = vmatpush2.msra.mxu0 0.0
      %8002 = vmatprep.subr.mxu0 0.0
      %8003 = vmatpush2.msra.mxu0 0.0
      %8004 = vmatprep.mubr.f32.mxu0 0.0
      %v8005 = vand.u32 %v7631, 4294901760
      %v8006 = vsub.f32 %v7631, %v8005
      %8007 = vmatmul.mubr.f32.gmra.mxu0 %v8006
      %v8008 = vpop.f32.mrf.mxu0
      %v8009 = vadd.f32 %v7899, %v8008
      %v8010 = vpop.f32.mrf.mxu0
      %8011 = vmatprep.mubr.f32.mxu0 0.0
      %v8012 = vand.u32 %v7632, 4294901760
      %v8013 = vsub.f32 %v7632, %v8012
      %8014 = vmatmul.mubr.f32.gmra.mxu0 %v8013
      %v8015 = vpop.f32.mrf.mxu0
      %v8016 = vadd.f32 %v7905, %v8015
      %v8017 = vpop.f32.mrf.mxu0
      %8018 = vdwg.mxu0
      %8019 = vmatprep.subr.mxu0 0.0
      %v8020 = vand.u32 %v7649, 4294901760
      %8021 = vmatpush1.msra.mxu0 %v8020
      %8022 = vmatprep.subr.mxu0 0.0
      %v8023 = vand.u32 %v7648, 4294901760
      %8024 = vmatpush1.msra.mxu0 %v8023
      %8025 = vmatprep.subr.mxu0 0.0
      %v8026 = vand.u32 %v7647, 4294901760
      %8027 = vmatpush1.msra.mxu0 %v8026
      %8028 = vmatprep.subr.mxu0 0.0
      %v8029 = vand.u32 %v7646, 4294901760
      %8030 = vmatpush1.msra.mxu0 %v8029
      %8031 = vmatprep.subr.mxu0 0.0
      %v8032 = vand.u32 %v7645, 4294901760
      %8033 = vmatpush1.msra.mxu0 %v8032
      %8034 = vmatprep.subr.mxu0 0.0
      %v8035 = vand.u32 %v7644, 4294901760
      %8036 = vmatpush1.msra.mxu0 %v8035
      %8037 = vmatprep.subr.mxu0 0.0
      %v8038 = vand.u32 %v7643, 4294901760
      %8039 = vmatpush1.msra.mxu0 %v8038
      %8040 = vmatprep.subr.mxu0 0.0
      %v8041 = vand.u32 %v7642, 4294901760
      %8042 = vmatpush1.msra.mxu0 %v8041
      %8043 = vmatprep.subr.mxu0 0.0
      %v8044 = vand.u32 %v7641, 4294901760
      %8045 = vmatpush1.msra.mxu0 %v8044
      %8046 = vmatprep.subr.mxu0 0.0
      %v8047 = vand.u32 %v7640, 4294901760
      %8048 = vmatpush1.msra.mxu0 %v8047
      %8049 = vmatprep.subr.mxu0 0.0
      %v8050 = vand.u32 %v7639, 4294901760
      %8051 = vmatpush1.msra.mxu0 %v8050
      %8052 = vmatprep.subr.mxu0 0.0
      %v8053 = vand.u32 %v7638, 4294901760
      %8054 = vmatpush1.msra.mxu0 %v8053
      %8055 = vmatprep.subr.mxu0 0.0
      %v8056 = vand.u32 %v7637, 4294901760
      %8057 = vmatpush1.msra.mxu0 %v8056
      %8058 = vmatprep.subr.mxu0 0.0
      %v8059 = vand.u32 %v7636, 4294901760
      %8060 = vmatpush1.msra.mxu0 %v8059
      %8061 = vmatprep.subr.mxu0 0.0
      %v8062 = vand.u32 %v7635, 4294901760
      %8063 = vmatpush1.msra.mxu0 %v8062
      %8064 = vmatprep.subr.mxu0 0.0
      %v8065 = vand.u32 %v7634, 4294901760
      %8066 = vmatpush1.msra.mxu0 %v8065
      %8067 = vmatprep.subr.mxu0 0.0
      %8068 = vmatpush2.msra.mxu0 0.0
      %8069 = vmatprep.subr.mxu0 0.0
      %8070 = vmatpush2.msra.mxu0 0.0
      %8071 = vmatprep.subr.mxu0 0.0
      %8072 = vmatpush2.msra.mxu0 0.0
      %8073 = vmatprep.subr.mxu0 0.0
      %8074 = vmatpush2.msra.mxu0 0.0
      %8075 = vmatprep.subr.mxu0 0.0
      %8076 = vmatpush2.msra.mxu0 0.0
      %8077 = vmatprep.subr.mxu0 0.0
      %8078 = vmatpush2.msra.mxu0 0.0
      %8079 = vmatprep.subr.mxu0 0.0
      %8080 = vmatpush2.msra.mxu0 0.0
      %8081 = vmatprep.subr.mxu0 0.0
      %8082 = vmatpush2.msra.mxu0 0.0
      %8083 = vmatprep.subr.mxu0 0.0
      %8084 = vmatpush2.msra.mxu0 0.0
      %8085 = vmatprep.subr.mxu0 0.0
      %8086 = vmatpush2.msra.mxu0 0.0
      %8087 = vmatprep.subr.mxu0 0.0
      %8088 = vmatpush2.msra.mxu0 0.0
      %8089 = vmatprep.subr.mxu0 0.0
      %8090 = vmatpush2.msra.mxu0 0.0
      %8091 = vmatprep.subr.mxu0 0.0
      %8092 = vmatpush2.msra.mxu0 0.0
      %8093 = vmatprep.subr.mxu0 0.0
      %8094 = vmatpush2.msra.mxu0 0.0
      %8095 = vmatprep.subr.mxu0 0.0
      %8096 = vmatpush2.msra.mxu0 0.0
      %8097 = vmatprep.subr.mxu0 0.0
      %8098 = vmatpush2.msra.mxu0 0.0
      %8099 = vmatprep.mubr.f32.mxu0 0.0
      %v8100 = vand.u32 %v7631, 4294901760
      %v8101 = vsub.f32 %v7631, %v8100
      %v8102 = vand.u32 %v8101, 4294901760
      %8103 = vmatmul.mubr.f32.gmra.mxu0 %v8102
      %v8104 = vpop.f32.mrf.mxu0
      %v8105 = vadd.f32 %v8009, %v8104
      %v8106 = vpop.f32.mrf.mxu0
      %8107 = vmatprep.mubr.f32.mxu0 0.0
      %v8108 = vand.u32 %v7632, 4294901760
      %v8109 = vsub.f32 %v7632, %v8108
      %v8110 = vand.u32 %v8109, 4294901760
      %8111 = vmatmul.mubr.f32.gmra.mxu0 %v8110
      %v8112 = vpop.f32.mrf.mxu0
      %v8113 = vadd.f32 %v8016, %v8112
      %v8114 = vpop.f32.mrf.mxu0
      %8115 = vdwg.mxu0
      %8116 = vmatprep.subr.mxu0 0.0
      %v8117 = vand.u32 %v7649, 4294901760
      %v8118 = vsub.f32 %v7649, %v8117
      %v8119 = vand.u32 %v8118, 4294901760
      %8120 = vmatpush1.msra.mxu0 %v8119
      %8121 = vmatprep.subr.mxu0 0.0
      %v8122 = vand.u32 %v7648, 4294901760
      %v8123 = vsub.f32 %v7648, %v8122
      %v8124 = vand.u32 %v8123, 4294901760
      %8125 = vmatpush1.msra.mxu0 %v8124
      %8126 = vmatprep.subr.mxu0 0.0
      %v8127 = vand.u32 %v7647, 4294901760
      %v8128 = vsub.f32 %v7647, %v8127
      %v8129 = vand.u32 %v8128, 4294901760
      %8130 = vmatpush1.msra.mxu0 %v8129
      %8131 = vmatprep.subr.mxu0 0.0
      %v8132 = vand.u32 %v7646, 4294901760
      %v8133 = vsub.f32 %v7646, %v8132
      %v8134 = vand.u32 %v8133, 4294901760
      %8135 = vmatpush1.msra.mxu0 %v8134
      %8136 = vmatprep.subr.mxu0 0.0
      %v8137 = vand.u32 %v7645, 4294901760
      %v8138 = vsub.f32 %v7645, %v8137
      %v8139 = vand.u32 %v8138, 4294901760
      %8140 = vmatpush1.msra.mxu0 %v8139
      %8141 = vmatprep.subr.mxu0 0.0
      %v8142 = vand.u32 %v7644, 4294901760
      %v8143 = vsub.f32 %v7644, %v8142
      %v8144 = vand.u32 %v8143, 4294901760
      %8145 = vmatpush1.msra.mxu0 %v8144
      %8146 = vmatprep.subr.mxu0 0.0
      %v8147 = vand.u32 %v7643, 4294901760
      %v8148 = vsub.f32 %v7643, %v8147
      %v8149 = vand.u32 %v8148, 4294901760
      %8150 = vmatpush1.msra.mxu0 %v8149
      %8151 = vmatprep.subr.mxu0 0.0
      %v8152 = vand.u32 %v7642, 4294901760
      %v8153 = vsub.f32 %v7642, %v8152
      %v8154 = vand.u32 %v8153, 4294901760
      %8155 = vmatpush1.msra.mxu0 %v8154
      %8156 = vmatprep.subr.mxu0 0.0
      %v8157 = vand.u32 %v7641, 4294901760
      %v8158 = vsub.f32 %v7641, %v8157
      %v8159 = vand.u32 %v8158, 4294901760
      %8160 = vmatpush1.msra.mxu0 %v8159
      %8161 = vmatprep.subr.mxu0 0.0
      %v8162 = vand.u32 %v7640, 4294901760
      %v8163 = vsub.f32 %v7640, %v8162
      %v8164 = vand.u32 %v8163, 4294901760
      %8165 = vmatpush1.msra.mxu0 %v8164
      %8166 = vmatprep.subr.mxu0 0.0
      %v8167 = vand.u32 %v7639, 4294901760
      %v8168 = vsub.f32 %v7639, %v8167
      %v8169 = vand.u32 %v8168, 4294901760
      %8170 = vmatpush1.msra.mxu0 %v8169
      %8171 = vmatprep.subr.mxu0 0.0
      %v8172 = vand.u32 %v7638, 4294901760
      %v8173 = vsub.f32 %v7638, %v8172
      %v8174 = vand.u32 %v8173, 4294901760
      %8175 = vmatpush1.msra.mxu0 %v8174
      %8176 = vmatprep.subr.mxu0 0.0
      %v8177 = vand.u32 %v7637, 4294901760
      %v8178 = vsub.f32 %v7637, %v8177
      %v8179 = vand.u32 %v8178, 4294901760
      %8180 = vmatpush1.msra.mxu0 %v8179
      %8181 = vmatprep.subr.mxu0 0.0
      %v8182 = vand.u32 %v7636, 4294901760
      %v8183 = vsub.f32 %v7636, %v8182
      %v8184 = vand.u32 %v8183, 4294901760
      %8185 = vmatpush1.msra.mxu0 %v8184
      %8186 = vmatprep.subr.mxu0 0.0
      %v8187 = vand.u32 %v7635, 4294901760
      %v8188 = vsub.f32 %v7635, %v8187
      %v8189 = vand.u32 %v8188, 4294901760
      %8190 = vmatpush1.msra.mxu0 %v8189
      %8191 = vmatprep.subr.mxu0 0.0
      %v8192 = vand.u32 %v7634, 4294901760
      %v8193 = vsub.f32 %v7634, %v8192
      %v8194 = vand.u32 %v8193, 4294901760
      %8195 = vmatpush1.msra.mxu0 %v8194
      %8196 = vmatprep.subr.mxu0 0.0
      %8197 = vmatpush2.msra.mxu0 0.0
      %8198 = vmatprep.subr.mxu0 0.0
      %8199 = vmatpush2.msra.mxu0 0.0
      %8200 = vmatprep.subr.mxu0 0.0
      %8201 = vmatpush2.msra.mxu0 0.0
      %8202 = vmatprep.subr.mxu0 0.0
      %8203 = vmatpush2.msra.mxu0 0.0
      %8204 = vmatprep.subr.mxu0 0.0
      %8205 = vmatpush2.msra.mxu0 0.0
      %8206 = vmatprep.subr.mxu0 0.0
      %8207 = vmatpush2.msra.mxu0 0.0
      %8208 = vmatprep.subr.mxu0 0.0
      %8209 = vmatpush2.msra.mxu0 0.0
      %8210 = vmatprep.subr.mxu0 0.0
      %8211 = vmatpush2.msra.mxu0 0.0
      %8212 = vmatprep.subr.mxu0 0.0
      %8213 = vmatpush2.msra.mxu0 0.0
      %8214 = vmatprep.subr.mxu0 0.0
      %8215 = vmatpush2.msra.mxu0 0.0
      %8216 = vmatprep.subr.mxu0 0.0
      %8217 = vmatpush2.msra.mxu0 0.0
      %8218 = vmatprep.subr.mxu0 0.0
      %8219 = vmatpush2.msra.mxu0 0.0
      %8220 = vmatprep.subr.mxu0 0.0
      %8221 = vmatpush2.msra.mxu0 0.0
      %8222 = vmatprep.subr.mxu0 0.0
      %8223 = vmatpush2.msra.mxu0 0.0
      %8224 = vmatprep.subr.mxu0 0.0
      %8225 = vmatpush2.msra.mxu0 0.0
      %8226 = vmatprep.subr.mxu0 0.0
      %8227 = vmatpush2.msra.mxu0 0.0
      %8228 = vmatprep.mubr.f32.mxu0 0.0
      %v8229 = vand.u32 %v7631, 4294901760
      %8230 = vmatmul.mubr.f32.gmra.mxu0 %v8229
      %v8231 = vpop.f32.mrf.mxu0
      %v8232 = vadd.f32 %v8105, %v8231
      %v8233 = vpop.f32.mrf.mxu0
      %8234 = vmatprep.mubr.f32.mxu0 0.0
      %v8235 = vand.u32 %v7632, 4294901760
      %8236 = vmatmul.mubr.f32.gmra.mxu0 %v8235
      %v8237 = vpop.f32.mrf.mxu0
      %v8238 = vadd.f32 %v8113, %v8237
      %v8239 = vpop.f32.mrf.mxu0
      %8240 = vdwg.mxu0
      %8241 = vmatprep.subr.mxu0 0.0
      %v8242 = vand.u32 %v7649, 4294901760
      %8243 = vmatpush1.msra.mxu0 %v8242
      %8244 = vmatprep.subr.mxu0 0.0
      %v8245 = vand.u32 %v7648, 4294901760
      %8246 = vmatpush1.msra.mxu0 %v8245
      %8247 = vmatprep.subr.mxu0 0.0
      %v8248 = vand.u32 %v7647, 4294901760
      %8249 = vmatpush1.msra.mxu0 %v8248
      %8250 = vmatprep.subr.mxu0 0.0
      %v8251 = vand.u32 %v7646, 4294901760
      %8252 = vmatpush1.msra.mxu0 %v8251
      %8253 = vmatprep.subr.mxu0 0.0
      %v8254 = vand.u32 %v7645, 4294901760
      %8255 = vmatpush1.msra.mxu0 %v8254
      %8256 = vmatprep.subr.mxu0 0.0
      %v8257 = vand.u32 %v7644, 4294901760
      %8258 = vmatpush1.msra.mxu0 %v8257
      %8259 = vmatprep.subr.mxu0 0.0
      %v8260 = vand.u32 %v7643, 4294901760
      %8261 = vmatpush1.msra.mxu0 %v8260
      %8262 = vmatprep.subr.mxu0 0.0
      %v8263 = vand.u32 %v7642, 4294901760
      %8264 = vmatpush1.msra.mxu0 %v8263
      %8265 = vmatprep.subr.mxu0 0.0
      %v8266 = vand.u32 %v7641, 4294901760
      %8267 = vmatpush1.msra.mxu0 %v8266
      %8268 = vmatprep.subr.mxu0 0.0
      %v8269 = vand.u32 %v7640, 4294901760
      %8270 = vmatpush1.msra.mxu0 %v8269
      %8271 = vmatprep.subr.mxu0 0.0
      %v8272 = vand.u32 %v7639, 4294901760
      %8273 = vmatpush1.msra.mxu0 %v8272
      %8274 = vmatprep.subr.mxu0 0.0
      %v8275 = vand.u32 %v7638, 4294901760
      %8276 = vmatpush1.msra.mxu0 %v8275
      %8277 = vmatprep.subr.mxu0 0.0
      %v8278 = vand.u32 %v7637, 4294901760
      %8279 = vmatpush1.msra.mxu0 %v8278
      %8280 = vmatprep.subr.mxu0 0.0
      %v8281 = vand.u32 %v7636, 4294901760
      %8282 = vmatpush1.msra.mxu0 %v8281
      %8283 = vmatprep.subr.mxu0 0.0
      %v8284 = vand.u32 %v7635, 4294901760
      %8285 = vmatpush1.msra.mxu0 %v8284
      %8286 = vmatprep.subr.mxu0 0.0
      %v8287 = vand.u32 %v7634, 4294901760
      %8288 = vmatpush1.msra.mxu0 %v8287
      %8289 = vmatprep.subr.mxu0 0.0
      %8290 = vmatpush2.msra.mxu0 0.0
      %8291 = vmatprep.subr.mxu0 0.0
      %8292 = vmatpush2.msra.mxu0 0.0
      %8293 = vmatprep.subr.mxu0 0.0
      %8294 = vmatpush2.msra.mxu0 0.0
      %8295 = vmatprep.subr.mxu0 0.0
      %8296 = vmatpush2.msra.mxu0 0.0
      %8297 = vmatprep.subr.mxu0 0.0
      %8298 = vmatpush2.msra.mxu0 0.0
      %8299 = vmatprep.subr.mxu0 0.0
      %8300 = vmatpush2.msra.mxu0 0.0
      %8301 = vmatprep.subr.mxu0 0.0
      %8302 = vmatpush2.msra.mxu0 0.0
      %8303 = vmatprep.subr.mxu0 0.0
      %8304 = vmatpush2.msra.mxu0 0.0
      %8305 = vmatprep.subr.mxu0 0.0
      %8306 = vmatpush2.msra.mxu0 0.0
      %8307 = vmatprep.subr.mxu0 0.0
      %8308 = vmatpush2.msra.mxu0 0.0
      %8309 = vmatprep.subr.mxu0 0.0
      %8310 = vmatpush2.msra.mxu0 0.0
      %8311 = vmatprep.subr.mxu0 0.0
      %8312 = vmatpush2.msra.mxu0 0.0
      %8313 = vmatprep.subr.mxu0 0.0
      %8314 = vmatpush2.msra.mxu0 0.0
      %8315 = vmatprep.subr.mxu0 0.0
      %8316 = vmatpush2.msra.mxu0 0.0
      %8317 = vmatprep.subr.mxu0 0.0
      %8318 = vmatpush2.msra.mxu0 0.0
      %8319 = vmatprep.subr.mxu0 0.0
      %8320 = vmatpush2.msra.mxu0 0.0
      %8321 = vmatprep.mubr.f32.mxu0 0.0
      %v8322 = vand.u32 %v7631, 4294901760
      %8323 = vmatmul.mubr.f32.gmra.mxu0 %v8322
      %v8324 = vpop.f32.mrf.mxu0
      %v8325 = vadd.f32 %v8232, %v8324
      %v8326 = vpop.f32.mrf.mxu0
      %8327 = vmatprep.mubr.f32.mxu0 0.0
      %v8328 = vand.u32 %v7632, 4294901760
      %8329 = vmatmul.mubr.f32.gmra.mxu0 %v8328
      %v8330 = vpop.f32.mrf.mxu0
      %v8331 = vadd.f32 %v8238, %v8330
      %v8332 = vpop.f32.mrf.mxu0
      %8333 = vdwg.mxu0
      %v8334 = vadd.f32 %v7622, %v8325
      %v8335 = vadd.f32 %v7628, %v8331
      %v8336 = vld [vmem:[%s9] sm:$0x1]
      %v8338 = vlaneseq
      %v8339 = vshrl.u32 %v8338, 7
      %v8340 = vsub.s32 0, %v8339
      %v8341 = vrot.slane %v8336, %v8340
      %v8343 = vmul.f32 %v8334, %v8341
      %v8344 = vmul.f32 %v8335, %v8341
      %v8345 = vld [vmem:[%s10] sm:$0x1]
      %v8347 = vlaneseq
      %v8348 = vshrl.u32 %v8347, 7
      %v8349 = vsub.s32 0, %v8348
      %v8350 = vrot.slane %v8345, %v8349
      %v8352 = vadd.f32 %v8343, %v8350
      %v8353 = vadd.f32 %v8344, %v8350
      %v8354 = vmax.f32 %v8352, 0.0
      %v8355 = vmax.f32 %v8353, 0.0
      %8356 = vst [vmem:[%s423] sm:$0xff] %v8354
      %8357 = vst [vmem:[%s423 + $0x8] sm:$0xff] %v8355
      %p8358 = scmp.lt.s32.totalorder %s22, 1
      %s8359 = scalar_select %p8358, %s22, 1
      %s8360 = smul.addr %s8359, 2
      %s8361 = smul.addr %s8360, 8
      %s8362 = scalar_lea.vmem %s11, %s8361
      // Predicated region
      $region65: #{up_block_a_forward.1} parent=63 // pred_check
        %p8363 = pneg %p286
      $region66: #{up_block_a_forward.1} parent=63 // pred_check_branch
        %8365 = sbr.rel (%p8363) target = $region68
      $region67: #{up_block_a_forward.1} parent=63 // pred_region
        _
      $region68: #{up_block_a_forward.1} parent=63 // pred_fallthru
        _
    $region64: #{up_block_a_forward.1} parent=5 // pred_fallthru
      _
    %p8366 = scmp.le.s32.totalorder 2, %s17
    // Predicated region
    $region69: #{up_block_a_forward.1} parent=5 // pred_check
      %p8367 = pneg %p8366
    $region70: #{up_block_a_forward.1} parent=5 // pred_check_branch
      %8369 = sbr.rel (%p8367) target = $region72
    $region71: #{up_block_a_forward.1} parent=5 // pred_region
      %s8370 = ssub.s32 %s17, 2
      // Predicated region
      $region73: #{up_block_a_forward.1} parent=71 // pred_check
        %p8371 = pneg %p292
      $region74: #{up_block_a_forward.1} parent=71 // pred_check_branch
        %8373 = sbr.rel (%p8371) target = $region76
      $region75: #{up_block_a_forward.1} parent=71 // pred_region
        %p8374 = scmp.lt.s32.totalorder %s23, 1
        %s8375 = scalar_select %p8374, %s23, 1
        %s8376 = smul.addr %s8375, 2
        %s8377 = smul.addr %s8376, 8
        %s8378 = scalar_lea.vmem %s11, %s8377
      $region76: #{up_block_a_forward.1} parent=71 // pred_fallthru
        _
    $region72: #{up_block_a_forward.1} parent=5 // pred_fallthru
      _
  $region6: #{up_block_a_forward.1} parent=0 // loop_footer
    %s21 = sadd.s32 1, %s17
  $region7: #{up_block_a_forward.1} parent=0 // loop_footer_branch
    %16 = sbr.rel target = $region3
  $region8: #{up_block_a_forward.1} parent=0 // loop_exit
    _

</llo_original>
